<compile_context>
chip_gen: v6e
topology: v6e:2x2x1
jax: 0.10.0
libtpu: 0.0.40
codegen_flags: <defaults>
</compile_context>

<pallas_src>
import functools
import math

import jax
import jax.numpy as jnp
from jax import lax
from jax.experimental import pallas as pl
from jax.experimental.pallas import tpu as pltpu


def _round_up(x, m):
    return (x + m - 1) // m * m


def _cdiv(a, b):
    return (a + b - 1) // b


def _vmem_limit_bytes():
    """Generation-dependent VMEM budget: ~48 MiB on v7x, ~96 MiB on v5e/v6e."""
    try:
        cap = int(pltpu.get_tpu_info().vmem_capacity_bytes)
        return min(cap * 3 // 4, 100 * 1024 * 1024)
    except Exception:
        return 48 * 1024 * 1024  # conservative (v7x-safe) fallback


def _mha_kernel(scale, n_edges, steps_per_core,
                h_ref, e_ref, srcc_ref, dstc_ref, dstr_ref,
                wqkv_ref, bqkv_ref, we_ref, be_ref, msum_ref, mbc_ref,
                wv_ref, z_ref, eout_ref,
                qk_ref, v_ref):
    """Edge-tiled, core-split graph multi-head attention.

    Grid = (num_core_splits, steps_per_core); the edge axis is the inner
    ("arbitrary") axis, the leading axis is "parallel" (megacore on v7x).

    h_ref:     [Np, in_dim]          resident node features
    e_ref:     [TE, in_dim]          edge-feature tile
    srcc/dstc: [TE, 1] int32         edge endpoint ids (column layout, gathers)
    dstr:      [1, TE] int32         dst ids (row layout, transposed scatter)
    wqkv_ref:  [in_dim, 3*HDp]       fused (Q | K | V) weights, zero-padded
    we_ref:    [in_dim, HDp]         proj_e weights
    msum_ref:  [HDp, Hp]             lane -> head sum mask
    mbc_ref:   [Hp, HDp]             head -> lane broadcast mask
    wv_ref:    [Np, HDp]             resident per-core wV accumulator (output)
    z_ref:     [Np, Hp]              resident per-core z accumulator (output)
    eout_ref:  [TE, HDp]             edge-output tile
    qk_ref:    VMEM [Np, 2*HDp] f32  resident Q | K projections
    v_ref:     VMEM [Np, HDp]  bf16  resident V projection
    """
    f32 = jnp.float32
    bf16 = jnp.bfloat16
    hi = lax.Precision.HIGHEST          # exact f32 score path
    i = pl.program_id(1)
    te = e_ref.shape[0]
    np_ = h_ref.shape[0]
    hdp = we_ref.shape[1]

    # ---- first step of each core: fused Q|K|V projection kept resident,
    #      zero the resident node-side output blocks.
    @pl.when(i == 0)
    def _init():
        qkv = jnp.dot(h_ref[...], wqkv_ref[...], precision=hi,
                      preferred_element_type=f32) + bqkv_ref[...]
        qk_ref[...] = qkv[:, :2 * hdp]              # Q | K (f32 score path)
        v_ref[...] = qkv[:, 2 * hdp:].astype(bf16)  # V     (bf16 msg path)
        wv_ref[...] = jnp.zeros_like(wv_ref)
        z_ref[...] = jnp.zeros_like(z_ref)

    # ---- per-tile edge projection (score path -> f32 exact).
    pe = jnp.dot(e_ref[...], we_ref[...], precision=hi,
                 preferred_element_type=f32) + be_ref[...]          # [TE, HDp]

    # ---- gather node projections onto edges. One compare per endpoint, cast
    #      immediately before the consuming matmul (minimal live one-hot tiles).
    iota_en = lax.broadcasted_iota(jnp.int32, (te, np_), 1)
    q_dst = jnp.dot((iota_en == dstc_ref[...]).astype(f32), qk_ref[:, :hdp],
                    precision=hi, preferred_element_type=f32)
    src_cmp = iota_en == srcc_ref[...]
    k_src = jnp.dot(src_cmp.astype(f32), qk_ref[:, hdp:],
                    precision=hi, preferred_element_type=f32)
    # TODO(synk): on v5e, fold this K gather into the bf16 V gather (one
    # [TE,Np]x[Np,2*HDp] matmul) if a looser e_out tolerance is acceptable.
    v_src = jnp.dot(src_cmp.astype(bf16), v_ref[...],
                    preferred_element_type=f32)

    # ---- score = K_src * Q_dst / sqrt(D) * proj_e  -> e_out (lane-dense).
    score = (k_src * q_dst) * scale * pe                            # [TE, HDp]
    eout_ref[...] = score.astype(eout_ref.dtype)

    # ---- per-head sum (narrow Hp lanes), clip, exp.
    raw = jnp.dot(score, msum_ref[...], preferred_element_type=f32)  # [TE, Hp]
    s_h = jnp.exp(jnp.clip(raw, -5.0, 5.0))

    # ---- mask padded edge rows so they don't pollute the accumulators.
    edge0 = (pl.program_id(0) * steps_per_core + i) * te
    edge_idx = edge0 + lax.broadcasted_iota(jnp.int32, (te, 1), 0)
    s_h = jnp.where(edge_idx < n_edges, s_h, 0.0)

    # ---- broadcast s back to lanes for the weighted message.
    s_b = jnp.dot(s_h, mbc_ref[...], preferred_element_type=f32)     # [TE, HDp]
    msg = v_src * s_b

    # ---- scatter-add onto destination nodes: transposed one-hot [Np, TE]
    #      built directly from the [1, TE] id row -> plain MXU matmul.
    iota_ne = lax.broadcasted_iota(jnp.int32, (np_, te), 0)
    dst_t = (iota_ne == dstr_ref[...]).astype(bf16)                  # [Np, TE]
    scat = jnp.concatenate([msg, s_h], axis=1).astype(bf16)          # [TE, HDp+Hp]
    res = jnp.dot(dst_t, scat, preferred_element_type=f32)           # [Np, HDp+Hp]
    wv_ref[...] += res[:, :hdp]
    z_ref[...] += res[:, hdp:]


def multi_head_attention_layer(h, e, src_ids, dst_ids, params, num_heads,
                               out_dim, *, edge_tile=256, num_core_splits=2,
                               e_out_dtype=jnp.float32):
    """Returns (h_out [N, H, D], e_out [E, H, D])."""
    N, in_dim = h.shape
    E = e.shape[0]
    HD = num_heads * out_dim
    HDp = _round_up(max(HD, 128), 128)         # lane-dense feature axis
    Hp = _round_up(max(num_heads, 128), 128)   # narrow per-head (z) axis
    Np = _round_up(N, 8)
    C = max(1, int(num_core_splits))           # 2 -> split edges over v7x cores

    # Lane-dense edge tile (multiple of 128) and per-core step count.
    te = max(128, _round_up(min(edge_tile, max(E, 1)), 128))
    spc = _cdiv(_cdiv(E, C), te)
    Ep = C * spc * te

    f32 = jnp.float32

    def pad_w(w):
        return jnp.pad(w.astype(f32), ((0, 0), (0, HDp - HD)))

    def pad_b(b):
        return jnp.pad(b.astype(f32).reshape(1, HD), ((0, 0), (0, HDp - HD)))

    # Fused (Q | K | V) projection weights, zero-padded to HDp lanes each.
    wqkv = jnp.concatenate(
        [pad_w(params["wq"]), pad_w(params["wk"]), pad_w(params["wv"])], axis=1)
    bqkv = jnp.concatenate(
        [pad_b(params["bq"]), pad_b(params["bk"]), pad_b(params["bv"])], axis=1)
    we_p = pad_w(params["we"])
    be_p = pad_b(params["be"])

    # Head masks: lane -> head sum [HDp, Hp] and head -> lane broadcast [Hp, HDp].
    lane = jnp.arange(HDp)
    head_of_lane = jnp.where(lane < HD, lane // out_dim, -1)
    msum = (head_of_lane[:, None] == jnp.arange(Hp)[None, :]).astype(f32)
    mbc = msum.T

    h_p = jnp.pad(h.astype(f32), ((0, Np - N), (0, 0)))
    e_p = jnp.pad(e.astype(f32), ((0, Ep - E), (0, 0)))
    src_pad = jnp.pad(src_ids.astype(jnp.int32), (0, Ep - E))
    dst_pad = jnp.pad(dst_ids.astype(jnp.int32), (0, Ep - E))
    src_col = src_pad.reshape(Ep, 1)
    dst_col = dst_pad.reshape(Ep, 1)
    dst_row = dst_pad.reshape(1, Ep)

    scale = 1.0 / math.sqrt(float(out_dim))
    kernel = functools.partial(_mha_kernel, scale, E, spc)

    RES = pl.Buffered(1)   # single-buffer blocks whose index never changes

    grid_spec = pltpu.PrefetchScalarGridSpec(
        num_scalar_prefetch=0,
        grid=(C, spc),
        in_specs=[
            pl.BlockSpec((Np, in_dim), lambda c, i: (0, 0), pipeline_mode=RES),
            pl.BlockSpec((te, in_dim), lambda c, i: (c * spc + i, 0)),
            pl.BlockSpec((te, 1), lambda c, i: (c * spc + i, 0)),
            pl.BlockSpec((te, 1), lambda c, i: (c * spc + i, 0)),
            pl.BlockSpec((1, te), lambda c, i: (0, c * spc + i)),
            pl.BlockSpec((in_dim, 3 * HDp), lambda c, i: (0, 0), pipeline_mode=RES),
            pl.BlockSpec((1, 3 * HDp), lambda c, i: (0, 0), pipeline_mode=RES),
            pl.BlockSpec((in_dim, HDp), lambda c, i: (0, 0), pipeline_mode=RES),
            pl.BlockSpec((1, HDp), lambda c, i: (0, 0), pipeline_mode=RES),
            pl.BlockSpec((HDp, Hp), lambda c, i: (0, 0), pipeline_mode=RES),
            pl.BlockSpec((Hp, HDp), lambda c, i: (0, 0), pipeline_mode=RES),
        ],
        out_specs=(
            pl.BlockSpec((None, Np, HDp), lambda c, i: (c, 0, 0), pipeline_mode=RES),
            pl.BlockSpec((None, Np, Hp), lambda c, i: (c, 0, 0), pipeline_mode=RES),
            pl.BlockSpec((te, HDp), lambda c, i: (c * spc + i, 0)),
        ),
        scratch_shapes=[
            pltpu.VMEM((Np, 2 * HDp), jnp.float32),   # resident Q | K
            pltpu.VMEM((Np, HDp), jnp.bfloat16),      # resident V
        ],
    )

    # Advisory cost estimate for the XLA scheduler.
    flops = int(C * 2 * Np * in_dim * 3 * HDp
                + C * spc * (2 * te * in_dim * HDp          # proj_e
                             + 2 * te * Np * 3 * HDp        # gathers
                             + 2 * te * HDp * Hp * 2        # head sum + bcast
                             + 2 * te * Np * (HDp + Hp)))   # fused scatter
    transcendentals = int(C * spc * te * Hp)
    bytes_accessed = int(
        4 * (h_p.size + e_p.size + wqkv.size + bqkv.size + we_p.size
             + be_p.size + msum.size + mbc.size
             + src_col.size + dst_col.size + dst_row.size
             + C * Np * (HDp + Hp))
        + jnp.dtype(e_out_dtype).itemsize * Ep * HDp)

    # TODO(synk): add a node-axis (block-sparse) tiling path with scalar-
    # prefetched per-tile node ranges so graphs larger than resident-VMEM
    # node counts are supported.
    wv_part, z_part, eout = pl.pallas_call(
        kernel,
        out_shape=(jax.ShapeDtypeStruct((C, Np, HDp), jnp.float32),
                   jax.ShapeDtypeStruct((C, Np, Hp), jnp.float32),
                   jax.ShapeDtypeStruct((Ep, HDp), e_out_dtype)),
        grid_spec=grid_spec,
        compiler_params=pltpu.CompilerParams(
            dimension_semantics=("parallel", "arbitrary"),
            vmem_limit_bytes=_vmem_limit_bytes()),
        cost_estimate=pl.CostEstimate(flops=flops,
                                      transcendentals=transcendentals,
                                      bytes_accessed=bytes_accessed),
    )(h_p, e_p, src_col, dst_col, dst_row, wqkv, bqkv, we_p, be_p, msum, mbc)

    # Tiny cross-core combine + exact f32 normalize in XLA.
    wv = wv_part.sum(axis=0)[:N, :HD].reshape(N, num_heads, out_dim)
    z = z_part.sum(axis=0)[:N, :num_heads]
    h_out = wv / (z[:, :, None] + 1e-6)
    e_out = eout[:E, :HD].reshape(E, num_heads, out_dim)
    return h_out, e_out


def reference(h, e, src_ids, dst_ids, params, num_heads, out_dim):
    """Pure-JAX reference reproducing the PyTorch/DGL forward (exact f32)."""
    N, E = h.shape[0], e.shape[0]
    dot = functools.partial(jnp.dot, precision=lax.Precision.HIGHEST)
    Qh = (dot(h, params["wq"]) + params["bq"]).reshape(N, num_heads, out_dim)
    Kh = (dot(h, params["wk"]) + params["bk"]).reshape(N, num_heads, out_dim)
    Vh = (dot(h, params["wv"]) + params["bv"]).reshape(N, num_heads, out_dim)
    pe = (dot(e, params["we"]) + params["be"]).reshape(E, num_heads, out_dim)

    score = Kh[src_ids] * Qh[dst_ids]                      # src_dot_dst
    score = score / jnp.sqrt(jnp.float32(out_dim))         # scaling
    score = score * pe                                     # imp_exp_attn
    e_out = score                                          # out_edge_features
    s = jnp.exp(jnp.clip(score.sum(-1, keepdims=True), -5.0, 5.0))  # exp

    wV = jax.ops.segment_sum(Vh[src_ids] * s, dst_ids, num_segments=N)
    z = jax.ops.segment_sum(s, dst_ids, num_segments=N)
    return wV / (z + 1e-6), e_out


if __name__ == "__main__":
    # Small deterministic problem. E is not tile-aligned and spans several edge
    # tiles per core, so padding, masking, multi-step accumulation and the
    # 2-way core split are all exercised.
    N, E = 24, 700
    in_dim = 16
    num_heads, out_dim = 4, 8
    HD = num_heads * out_dim

    key = jax.random.PRNGKey(0)
    keys = jax.random.split(key, 10)

    h = jax.random.normal(keys[0], (N, in_dim), dtype=jnp.float32)
    e = jax.random.normal(keys[1], (E, in_dim), dtype=jnp.float32)
    src_ids = jnp.arange(E, dtype=jnp.int32) % N
    dst_ids = (3 * jnp.arange(E, dtype=jnp.int32) + 1) % N

    def init_linear(kw, kb):
        w = jax.random.normal(kw, (in_dim, HD), dtype=jnp.float32) / math.sqrt(in_dim)
        b = 0.1 * jax.random.normal(kb, (1, HD), dtype=jnp.float32)
        return w, b

    wq, bq = init_linear(keys[2], keys[3])
    wk, bk = init_linear(keys[4], keys[5])
    wv, bv = init_linear(keys[6], keys[7])
    we, be = init_linear(keys[8], keys[9])
    params = dict(wq=wq, bq=bq, wk=wk, bk=bk, wv=wv, bv=bv, we=we, be=be)

    h_out, e_out = multi_head_attention_layer(
        h, e, src_ids, dst_ids, params, num_heads, out_dim,
        edge_tile=128, num_core_splits=2)
    jax.block_until_ready((h_out, e_out))

    h_ref, e_ref = reference(h, e, src_ids, dst_ids, params, num_heads, out_dim)
    assert h_out.shape == (N, num_heads, out_dim)
    assert e_out.shape == (E, num_heads, out_dim)
    # Score path is exact f32 -> tight tolerance on e_out.
    assert jnp.allclose(e_out, e_ref, atol=1e-3, rtol=1e-3), \
        float(jnp.max(jnp.abs(e_out - e_ref)))
    # V / scatter path uses bf16 operands with f32 accumulation.
    assert jnp.allclose(h_out, h_ref, atol=2e-2, rtol=2e-2), \
        float(jnp.max(jnp.abs(h_out - h_ref)))

    print("KERNEL_OK")
</pallas_src>

<mosaic_0001>
module attributes {stable_mosaic.version = 11 : i64} {
  func.func @_mha_kernel(%arg0: i32, %arg1: i32, %arg2: memref<24x16xf32, #tpu.memory_space<vmem>>, %arg3: memref<128x16xf32, #tpu.memory_space<vmem>>, %arg4: memref<128x1xi32, #tpu.memory_space<vmem>>, %arg5: memref<128x1xi32, #tpu.memory_space<vmem>>, %arg6: memref<1x128xi32, #tpu.memory_space<vmem>>, %arg7: memref<16x384xf32, #tpu.memory_space<vmem>>, %arg8: memref<1x384xf32, #tpu.memory_space<vmem>>, %arg9: memref<16x128xf32, #tpu.memory_space<vmem>>, %arg10: memref<1x128xf32, #tpu.memory_space<vmem>>, %arg11: memref<128x128xf32, #tpu.memory_space<vmem>>, %arg12: memref<128x128xf32, #tpu.memory_space<vmem>>, %arg13: memref<1x24x128xf32, #tpu.memory_space<vmem>>, %arg14: memref<1x24x128xf32, #tpu.memory_space<vmem>>, %arg15: memref<128x128xf32, #tpu.memory_space<vmem>>, %arg16: memref<24x256xf32, #tpu.memory_space<vmem>>, %arg17: memref<24x128xbf16, #tpu.memory_space<vmem>>) attributes {dimension_semantics = [#tpu.dimension_semantics<parallel>, #tpu.dimension_semantics<arbitrary>], iteration_bounds = array<i64: 2, 3>, scalar_prefetch = 0 : i64, scratch_operands = 2 : i64, tpu.core_type = #tpu.core_type<tc>, window_params = [{pipeline_mode = #tpu.pipeline_mode<synchronous>, transform_indices = @transform_0, window_bounds = array<i64: 24, 16>}, {transform_indices = @transform_1, window_bounds = array<i64: 128, 16>}, {transform_indices = @transform_2, window_bounds = array<i64: 128, 1>}, {transform_indices = @transform_3, window_bounds = array<i64: 128, 1>}, {transform_indices = @transform_4, window_bounds = array<i64: 1, 128>}, {pipeline_mode = #tpu.pipeline_mode<synchronous>, transform_indices = @transform_5, window_bounds = array<i64: 16, 384>}, {pipeline_mode = #tpu.pipeline_mode<synchronous>, transform_indices = @transform_6, window_bounds = array<i64: 1, 384>}, {pipeline_mode = #tpu.pipeline_mode<synchronous>, transform_indices = @transform_7, window_bounds = array<i64: 16, 128>}, {pipeline_mode = #tpu.pipeline_mode<synchronous>, transform_indices = @transform_8, window_bounds = array<i64: 1, 128>}, {pipeline_mode = #tpu.pipeline_mode<synchronous>, transform_indices = @transform_9, window_bounds = array<i64: 128, 128>}, {pipeline_mode = #tpu.pipeline_mode<synchronous>, transform_indices = @transform_10, window_bounds = array<i64: 128, 128>}, {pipeline_mode = #tpu.pipeline_mode<synchronous>, transform_indices = @transform_11, window_bounds = array<i64: 1, 24, 128>}, {pipeline_mode = #tpu.pipeline_mode<synchronous>, transform_indices = @transform_12, window_bounds = array<i64: 1, 24, 128>}, {transform_indices = @transform_13, window_bounds = array<i64: 128, 128>}]} {
    %c0_i32 = arith.constant 0 : i32
    %0 = arith.cmpi eq, %arg1, %c0_i32 : i32
    %1 = arith.extui %0 : i1 to i32
    %c0_i32_0 = arith.constant 0 : i32
    %2 = arith.cmpi ne, %1, %c0_i32_0 : i32
    scf.if %2 {
      %c0_45 = arith.constant 0 : index
      %c0_46 = arith.constant 0 : index
      %80 = vector.load %arg2[%c0_45, %c0_46] : memref<24x16xf32, #tpu.memory_space<vmem>>, vector<24x16xf32>
      %c0_47 = arith.constant 0 : index
      %c0_48 = arith.constant 0 : index
      %81 = vector.load %arg7[%c0_47, %c0_48] : memref<16x384xf32, #tpu.memory_space<vmem>>, vector<16x384xf32>
      %cst_49 = arith.constant dense<0.000000e+00> : vector<24x384xf32>
      %82 = tpu.matmul %80, %81, %cst_49 {dimension_numbers = #tpu.dot_dimension_numbers<[1], [0], [0], [1], [0, 0, 1, 1], [], []>, precision = #tpu.contract_precision<fp32>} : vector<24x16xf32>, vector<16x384xf32>, vector<24x384xf32> -> vector<24x384xf32>
      %c0_50 = arith.constant 0 : index
      %c0_51 = arith.constant 0 : index
      %83 = vector.load %arg8[%c0_50, %c0_51] : memref<1x384xf32, #tpu.memory_space<vmem>>, vector<1x384xf32>
      %84 = vector.broadcast %83 : vector<1x384xf32> to vector<24x384xf32>
      %85 = arith.addf %82, %84 : vector<24x384xf32>
      %86 = vector.extract_strided_slice %85 {offsets = [0, 0], sizes = [24, 256], strides = [1, 1]} : vector<24x384xf32> to vector<24x256xf32>
      %c0_52 = arith.constant 0 : index
      %c0_53 = arith.constant 0 : index
      %87 = vector.load %arg16[%c0_52, %c0_53] : memref<24x256xf32, #tpu.memory_space<vmem>>, vector<24x256xf32>
      tpu.vector_store %arg16[%c0_52, %c0_53], %86 {strides = array<i32>} : memref<24x256xf32, #tpu.memory_space<vmem>>, vector<24x256xf32>,
      %88 = vector.extract_strided_slice %85 {offsets = [0, 256], sizes = [24, 128], strides = [1, 1]} : vector<24x384xf32> to vector<24x128xf32>
      %89 = arith.truncf %88 : vector<24x128xf32> to vector<24x128xbf16>
      %c0_54 = arith.constant 0 : index
      %c0_55 = arith.constant 0 : index
      %90 = vector.load %arg17[%c0_54, %c0_55] : memref<24x128xbf16, #tpu.memory_space<vmem>>, vector<24x128xbf16>
      tpu.vector_store %arg17[%c0_54, %c0_55], %89 {strides = array<i32>} : memref<24x128xbf16, #tpu.memory_space<vmem>>, vector<24x128xbf16>,
      %cst_56 = arith.constant 0.000000e+00 : f32
      %91 = vector.broadcast %cst_56 : f32 to vector<24x128xf32>
      %c0_57 = arith.constant 0 : index
      %c0_58 = arith.constant 0 : index
      %c0_59 = arith.constant 0 : index
      %92 = vector.load %arg13[%c0_57, %c0_58, %c0_59] : memref<1x24x128xf32, #tpu.memory_space<vmem>>, vector<1x24x128xf32>
      %93 = vector.shape_cast %92 : vector<1x24x128xf32> to vector<24x128xf32>
      %94 = vector.shape_cast %91 : vector<24x128xf32> to vector<1x24x128xf32>
      tpu.vector_store %arg13[%c0_57, %c0_58, %c0_59], %94 {strides = array<i32>} : memref<1x24x128xf32, #tpu.memory_space<vmem>>, vector<1x24x128xf32>,
      %cst_60 = arith.constant 0.000000e+00 : f32
      %95 = vector.broadcast %cst_60 : f32 to vector<24x128xf32>
      %c0_61 = arith.constant 0 : index
      %c0_62 = arith.constant 0 : index
      %c0_63 = arith.constant 0 : index
      %96 = vector.load %arg14[%c0_61, %c0_62, %c0_63] : memref<1x24x128xf32, #tpu.memory_space<vmem>>, vector<1x24x128xf32>
      %97 = vector.shape_cast %96 : vector<1x24x128xf32> to vector<24x128xf32>
      %98 = vector.shape_cast %95 : vector<24x128xf32> to vector<1x24x128xf32>
      tpu.vector_store %arg14[%c0_61, %c0_62, %c0_63], %98 {strides = array<i32>} : memref<1x24x128xf32, #tpu.memory_space<vmem>>, vector<1x24x128xf32>,
    } else {
    }
    %c0 = arith.constant 0 : index
    %c0_1 = arith.constant 0 : index
    %3 = vector.load %arg3[%c0, %c0_1] : memref<128x16xf32, #tpu.memory_space<vmem>>, vector<128x16xf32>
    %c0_2 = arith.constant 0 : index
    %c0_3 = arith.constant 0 : index
    %4 = vector.load %arg9[%c0_2, %c0_3] : memref<16x128xf32, #tpu.memory_space<vmem>>, vector<16x128xf32>
    %cst = arith.constant dense<0.000000e+00> : vector<128x128xf32>
    %5 = tpu.matmul %3, %4, %cst {dimension_numbers = #tpu.dot_dimension_numbers<[1], [0], [0], [1], [0, 0, 1, 1], [], []>, precision = #tpu.contract_precision<fp32>} : vector<128x16xf32>, vector<16x128xf32>, vector<128x128xf32> -> vector<128x128xf32>
    %c0_4 = arith.constant 0 : index
    %c0_5 = arith.constant 0 : index
    %6 = vector.load %arg10[%c0_4, %c0_5] : memref<1x128xf32, #tpu.memory_space<vmem>>, vector<1x128xf32>
    %7 = vector.broadcast %6 : vector<1x128xf32> to vector<128x128xf32>
    %8 = arith.addf %5, %7 : vector<128x128xf32>
    %9 = tpu.iota {dimensions = array<i32: 1>} : vector<128x24xi32>
    %c0_6 = arith.constant 0 : index
    %c0_7 = arith.constant 0 : index
    %10 = vector.load %arg5[%c0_6, %c0_7] : memref<128x1xi32, #tpu.memory_space<vmem>>, vector<128x1xi32>
    %11 = vector.broadcast %10 : vector<128x1xi32> to vector<128x24xi32>
    %12 = arith.cmpi eq, %9, %11 : vector<128x24xi32>
    %13 = arith.extui %12 : vector<128x24xi1> to vector<128x24xi32>
    %14 = arith.sitofp %13 : vector<128x24xi32> to vector<128x24xf32>
    %c0_8 = arith.constant 0 : index
    %c0_9 = arith.constant 0 : index
    %15 = vector.load %arg16[%c0_8, %c0_9] : memref<24x256xf32, #tpu.memory_space<vmem>>, vector<24x128xf32>
    %cst_10 = arith.constant dense<0.000000e+00> : vector<128x128xf32>
    %16 = tpu.matmul %14, %15, %cst_10 {dimension_numbers = #tpu.dot_dimension_numbers<[1], [0], [0], [1], [0, 0, 1, 1], [], []>, precision = #tpu.contract_precision<fp32>} : vector<128x24xf32>, vector<24x128xf32>, vector<128x128xf32> -> vector<128x128xf32>
    %c0_11 = arith.constant 0 : index
    %c0_12 = arith.constant 0 : index
    %17 = vector.load %arg4[%c0_11, %c0_12] : memref<128x1xi32, #tpu.memory_space<vmem>>, vector<128x1xi32>
    %18 = vector.broadcast %17 : vector<128x1xi32> to vector<128x24xi32>
    %19 = arith.cmpi eq, %9, %18 : vector<128x24xi32>
    %20 = arith.extui %19 : vector<128x24xi1> to vector<128x24xi32>
    %21 = arith.sitofp %20 : vector<128x24xi32> to vector<128x24xf32>
    %c0_13 = arith.constant 0 : index
    %c128 = arith.constant 128 : index
    %22 = vector.load %arg16[%c0_13, %c128] : memref<24x256xf32, #tpu.memory_space<vmem>>, vector<24x128xf32>
    %cst_14 = arith.constant dense<0.000000e+00> : vector<128x128xf32>
    %23 = tpu.matmul %21, %22, %cst_14 {dimension_numbers = #tpu.dot_dimension_numbers<[1], [0], [0], [1], [0, 0, 1, 1], [], []>, precision = #tpu.contract_precision<fp32>} : vector<128x24xf32>, vector<24x128xf32>, vector<128x128xf32> -> vector<128x128xf32>
    %24 = arith.extui %19 : vector<128x24xi1> to vector<128x24xi32>
    %25 = arith.sitofp %24 : vector<128x24xi32> to vector<128x24xf32>
    %26 = arith.truncf %25 : vector<128x24xf32> to vector<128x24xbf16>
    %c0_15 = arith.constant 0 : index
    %c0_16 = arith.constant 0 : index
    %27 = vector.load %arg17[%c0_15, %c0_16] : memref<24x128xbf16, #tpu.memory_space<vmem>>, vector<24x128xbf16>
    %cst_17 = arith.constant dense<0.000000e+00> : vector<128x128xf32>
    %28 = tpu.matmul %26, %27, %cst_17 {dimension_numbers = #tpu.dot_dimension_numbers<[1], [0], [0], [1], [0, 0, 1, 1], [], []>} : vector<128x24xbf16>, vector<24x128xbf16>, vector<128x128xf32> -> vector<128x128xf32>
    %29 = arith.mulf %23, %16 : vector<128x128xf32>
    %cst_18 = arith.constant 0.353553385 : f32
    %30 = vector.broadcast %cst_18 : f32 to vector<128x128xf32>
    %31 = arith.mulf %29, %30 : vector<128x128xf32>
    %32 = arith.mulf %31, %8 : vector<128x128xf32>
    %c0_19 = arith.constant 0 : index
    %c0_20 = arith.constant 0 : index
    %33 = vector.load %arg15[%c0_19, %c0_20] : memref<128x128xf32, #tpu.memory_space<vmem>>, vector<128x128xf32>
    tpu.vector_store %arg15[%c0_19, %c0_20], %32 {strides = array<i32>} : memref<128x128xf32, #tpu.memory_space<vmem>>, vector<128x128xf32>,
    %c0_21 = arith.constant 0 : index
    %c0_22 = arith.constant 0 : index
    %34 = vector.load %arg11[%c0_21, %c0_22] : memref<128x128xf32, #tpu.memory_space<vmem>>, vector<128x128xf32>
    %cst_23 = arith.constant dense<0.000000e+00> : vector<128x128xf32>
    %35 = tpu.matmul %32, %34, %cst_23 {dimension_numbers = #tpu.dot_dimension_numbers<[1], [0], [0], [1], [0, 0, 1, 1], [], []>} : vector<128x128xf32>, vector<128x128xf32>, vector<128x128xf32> -> vector<128x128xf32>
    %cst_24 = arith.constant -5.000000e+00 : f32
    %cst_25 = arith.constant 5.000000e+00 : f32
    %36 = vector.broadcast %cst_24 : f32 to vector<128x128xf32>
    %37 = arith.maximumf %36, %35 : vector<128x128xf32>
    %38 = vector.broadcast %cst_25 : f32 to vector<128x128xf32>
    %39 = arith.minimumf %38, %37 : vector<128x128xf32>
    %40 = math.exp %39 : vector<128x128xf32>
    %c3_i32 = arith.constant 3 : i32
    %41 = arith.muli %arg0, %c3_i32 : i32
    %42 = arith.addi %41, %arg1 : i32
    %c128_i32 = arith.constant 128 : i32
    %43 = arith.muli %42, %c128_i32 : i32
    %44 = tpu.iota {dimensions = array<i32: 0>} : vector<128x1xi32>
    %45 = vector.broadcast %43 : i32 to vector<128x1xi32>
    %46 = arith.addi %45, %44 : vector<128x1xi32>
    %c700_i32 = arith.constant 700 : i32
    %47 = vector.broadcast %c700_i32 : i32 to vector<128x1xi32>
    %48 = arith.cmpi slt, %46, %47 : vector<128x1xi32>
    %cst_26 = arith.constant 0.000000e+00 : f32
    %49 = vector.shape_cast %48 : vector<128x1xi1> to vector<128x1xi1>
    %50 = vector.broadcast %49 : vector<128x1xi1> to vector<128x128xi1>
    %51 = vector.broadcast %cst_26 : f32 to vector<128x128xf32>
    %52 = arith.select %50, %40, %51 : vector<128x128xi1>, vector<128x128xf32>
    %c0_27 = arith.constant 0 : index
    %c0_28 = arith.constant 0 : index
    %53 = vector.load %arg12[%c0_27, %c0_28] : memref<128x128xf32, #tpu.memory_space<vmem>>, vector<128x128xf32>
    %cst_29 = arith.constant dense<0.000000e+00> : vector<128x128xf32>
    %54 = tpu.matmul %52, %53, %cst_29 {dimension_numbers = #tpu.dot_dimension_numbers<[1], [0], [0], [1], [0, 0, 1, 1], [], []>} : vector<128x128xf32>, vector<128x128xf32>, vector<128x128xf32> -> vector<128x128xf32>
    %55 = arith.mulf %28, %54 : vector<128x128xf32>
    %56 = tpu.iota {dimensions = array<i32: 0>} : vector<24x128xi32>
    %c0_30 = arith.constant 0 : index
    %c0_31 = arith.constant 0 : index
    %57 = vector.load %arg6[%c0_30, %c0_31] : memref<1x128xi32, #tpu.memory_space<vmem>>, vector<1x128xi32>
    %58 = vector.broadcast %57 : vector<1x128xi32> to vector<24x128xi32>
    %59 = arith.cmpi eq, %56, %58 : vector<24x128xi32>
    %60 = arith.extui %59 : vector<24x128xi1> to vector<24x128xi32>
    %61 = arith.sitofp %60 : vector<24x128xi32> to vector<24x128xf32>
    %62 = arith.truncf %61 : vector<24x128xf32> to vector<24x128xbf16>
    %63 = tpu.concatenate %55, %52 in 1 : vector<128x128xf32>, vector<128x128xf32> -> vector<128x256xf32>
    %64 = arith.truncf %63 : vector<128x256xf32> to vector<128x256xbf16>
    %cst_32 = arith.constant dense<0.000000e+00> : vector<24x256xf32>
    %65 = tpu.matmul %62, %64, %cst_32 {dimension_numbers = #tpu.dot_dimension_numbers<[1], [0], [0], [1], [0, 0, 1, 1], [], []>} : vector<24x128xbf16>, vector<128x256xbf16>, vector<24x256xf32> -> vector<24x256xf32>
    %c0_33 = arith.constant 0 : index
    %c0_34 = arith.constant 0 : index
    %c0_35 = arith.constant 0 : index
    %66 = vector.load %arg13[%c0_33, %c0_34, %c0_35] : memref<1x24x128xf32, #tpu.memory_space<vmem>>, vector<1x24x128xf32>
    %67 = vector.shape_cast %66 : vector<1x24x128xf32> to vector<24x128xf32>
    %68 = vector.extract_strided_slice %65 {offsets = [0, 0], sizes = [24, 128], strides = [1, 1]} : vector<24x256xf32> to vector<24x128xf32>
    %69 = arith.addf %67, %68 : vector<24x128xf32>
    %c0_36 = arith.constant 0 : index
    %c0_37 = arith.constant 0 : index
    %c0_38 = arith.constant 0 : index
    %70 = vector.load %arg13[%c0_36, %c0_37, %c0_38] : memref<1x24x128xf32, #tpu.memory_space<vmem>>, vector<1x24x128xf32>
    %71 = vector.shape_cast %70 : vector<1x24x128xf32> to vector<24x128xf32>
    %72 = vector.shape_cast %69 : vector<24x128xf32> to vector<1x24x128xf32>
    tpu.vector_store %arg13[%c0_36, %c0_37, %c0_38], %72 {strides = array<i32>} : memref<1x24x128xf32, #tpu.memory_space<vmem>>, vector<1x24x128xf32>,
    %c0_39 = arith.constant 0 : index
    %c0_40 = arith.constant 0 : index
    %c0_41 = arith.constant 0 : index
    %73 = vector.load %arg14[%c0_39, %c0_40, %c0_41] : memref<1x24x128xf32, #tpu.memory_space<vmem>>, vector<1x24x128xf32>
    %74 = vector.shape_cast %73 : vector<1x24x128xf32> to vector<24x128xf32>
    %75 = vector.extract_strided_slice %65 {offsets = [0, 128], sizes = [24, 128], strides = [1, 1]} : vector<24x256xf32> to vector<24x128xf32>
    %76 = arith.addf %74, %75 : vector<24x128xf32>
    %c0_42 = arith.constant 0 : index
    %c0_43 = arith.constant 0 : index
    %c0_44 = arith.constant 0 : index
    %77 = vector.load %arg14[%c0_42, %c0_43, %c0_44] : memref<1x24x128xf32, #tpu.memory_space<vmem>>, vector<1x24x128xf32>
    %78 = vector.shape_cast %77 : vector<1x24x128xf32> to vector<24x128xf32>
    %79 = vector.shape_cast %76 : vector<24x128xf32> to vector<1x24x128xf32>
    tpu.vector_store %arg14[%c0_42, %c0_43, %c0_44], %79 {strides = array<i32>} : memref<1x24x128xf32, #tpu.memory_space<vmem>>, vector<1x24x128xf32>,
    return
  }
  func.func @transform_0(%arg0: i32, %arg1: i32) -> (i32, i32) {
    %c0_i32 = arith.constant 0 : i32
    %c0_i32_0 = arith.constant 0 : i32
    %c0_i32_1 = arith.constant 0 : i32
    return %c0_i32, %c0_i32_0 : i32, i32
  }
  func.func @transform_1(%arg0: i32, %arg1: i32) -> (i32, i32) {
    %c3_i32 = arith.constant 3 : i32
    %0 = arith.muli %arg0, %c3_i32 : i32
    %1 = arith.addi %0, %arg1 : i32
    %c0_i32 = arith.constant 0 : i32
    %c0_i32_0 = arith.constant 0 : i32
    return %1, %c0_i32 : i32, i32
  }
  func.func @transform_2(%arg0: i32, %arg1: i32) -> (i32, i32) {
    %c3_i32 = arith.constant 3 : i32
    %0 = arith.muli %arg0, %c3_i32 : i32
    %1 = arith.addi %0, %arg1 : i32
    %c0_i32 = arith.constant 0 : i32
    %c0_i32_0 = arith.constant 0 : i32
    return %1, %c0_i32 : i32, i32
  }
  func.func @transform_3(%arg0: i32, %arg1: i32) -> (i32, i32) {
    %c3_i32 = arith.constant 3 : i32
    %0 = arith.muli %arg0, %c3_i32 : i32
    %1 = arith.addi %0, %arg1 : i32
    %c0_i32 = arith.constant 0 : i32
    %c0_i32_0 = arith.constant 0 : i32
    return %1, %c0_i32 : i32, i32
  }
  func.func @transform_4(%arg0: i32, %arg1: i32) -> (i32, i32) {
    %c3_i32 = arith.constant 3 : i32
    %0 = arith.muli %arg0, %c3_i32 : i32
    %1 = arith.addi %0, %arg1 : i32
    %c0_i32 = arith.constant 0 : i32
    %c0_i32_0 = arith.constant 0 : i32
    return %c0_i32, %1 : i32, i32
  }
  func.func @transform_5(%arg0: i32, %arg1: i32) -> (i32, i32) {
    %c0_i32 = arith.constant 0 : i32
    %c0_i32_0 = arith.constant 0 : i32
    %c0_i32_1 = arith.constant 0 : i32
    return %c0_i32, %c0_i32_0 : i32, i32
  }
  func.func @transform_6(%arg0: i32, %arg1: i32) -> (i32, i32) {
    %c0_i32 = arith.constant 0 : i32
    %c0_i32_0 = arith.constant 0 : i32
    %c0_i32_1 = arith.constant 0 : i32
    return %c0_i32, %c0_i32_0 : i32, i32
  }
  func.func @transform_7(%arg0: i32, %arg1: i32) -> (i32, i32) {
    %c0_i32 = arith.constant 0 : i32
    %c0_i32_0 = arith.constant 0 : i32
    %c0_i32_1 = arith.constant 0 : i32
    return %c0_i32, %c0_i32_0 : i32, i32
  }
  func.func @transform_8(%arg0: i32, %arg1: i32) -> (i32, i32) {
    %c0_i32 = arith.constant 0 : i32
    %c0_i32_0 = arith.constant 0 : i32
    %c0_i32_1 = arith.constant 0 : i32
    return %c0_i32, %c0_i32_0 : i32, i32
  }
  func.func @transform_9(%arg0: i32, %arg1: i32) -> (i32, i32) {
    %c0_i32 = arith.constant 0 : i32
    %c0_i32_0 = arith.constant 0 : i32
    %c0_i32_1 = arith.constant 0 : i32
    return %c0_i32, %c0_i32_0 : i32, i32
  }
  func.func @transform_10(%arg0: i32, %arg1: i32) -> (i32, i32) {
    %c0_i32 = arith.constant 0 : i32
    %c0_i32_0 = arith.constant 0 : i32
    %c0_i32_1 = arith.constant 0 : i32
    return %c0_i32, %c0_i32_0 : i32, i32
  }
  func.func @transform_11(%arg0: i32, %arg1: i32) -> (i32, i32, i32) {
    %c0_i32 = arith.constant 0 : i32
    %c0_i32_0 = arith.constant 0 : i32
    %c0_i32_1 = arith.constant 0 : i32
    return %arg0, %c0_i32, %c0_i32_0 : i32, i32, i32
  }
  func.func @transform_12(%arg0: i32, %arg1: i32) -> (i32, i32, i32) {
    %c0_i32 = arith.constant 0 : i32
    %c0_i32_0 = arith.constant 0 : i32
    %c0_i32_1 = arith.constant 0 : i32
    return %arg0, %c0_i32, %c0_i32_0 : i32, i32, i32
  }
  func.func @transform_13(%arg0: i32, %arg1: i32) -> (i32, i32) {
    %c3_i32 = arith.constant 3 : i32
    %0 = arith.muli %arg0, %c3_i32 : i32
    %1 = arith.addi %0, %arg1 : i32
    %c0_i32 = arith.constant 0 : i32
    %c0_i32_0 = arith.constant 0 : i32
    return %1, %c0_i32 : i32, i32
  }
}

</mosaic_0001>

<llo_original>
// kernel: tpu_custom_call.1
$region0: #{tpu_custom_call.1}
  #allocation0 [shape = 'u32[]', space=smem, size = 0x4, offset = 0x4, fixed_abs, tag = 'smem constant byte address 0x4 - core index']
  #allocation1 [shape = 'u32[144,128]{1,0:T(1,128)}', space=vmem, size = 0x12000, scoped, tag = 'internal scratch']
  #allocation2 [shape = 'f32[24,256]{1,0:T(8,128)}', space=vmem, size = 0x6000, scoped, tag = 'scratch operand']
  #allocation3 [shape = 'bf16[24,128]{1,0:T(8,128)(2,1)}', space=vmem, size = 0x1800, scoped, tag = 'scratch operand']
  %s0 = inlined_call_operand.vmem [shape: f32[24,16], index: 0, kind: input, shape index: {}]
  %s1 = inlined_call_operand.vmem [shape: f32[768,16], index: 1, kind: input, shape index: {}]
  %s2 = inlined_call_operand.vmem [shape: s32[768,1], index: 2, kind: input, shape index: {}]
  %s3 = inlined_call_operand.vmem [shape: s32[768,1], index: 3, kind: input, shape index: {}]
  %s4 = inlined_call_operand.vmem [shape: s32[1,768], index: 4, kind: input, shape index: {}]
  %s5 = inlined_call_operand.vmem [shape: f32[16,384], index: 5, kind: input, shape index: {}]
  %s6 = inlined_call_operand.vmem [shape: f32[1,384], index: 6, kind: input, shape index: {}]
  %s7 = inlined_call_operand.vmem [shape: f32[16,128], index: 7, kind: input, shape index: {}]
  %s8 = inlined_call_operand.vmem [shape: f32[1,128], index: 8, kind: input, shape index: {}]
  %s9 = inlined_call_operand.vmem [shape: f32[128,128], index: 9, kind: input, shape index: {}]
  %s10 = inlined_call_operand.vmem [shape: f32[128,128], index: 10, kind: input, shape index: {}]
  %s11 = inlined_call_operand.hbm [shape: f32[2,24,128], index: 11, kind: output, shape index: {0}]
  %s12 = inlined_call_operand.hbm [shape: f32[2,24,128], index: 12, kind: output, shape index: {1}]
  %s13 = inlined_call_operand.hbm [shape: f32[768,128], index: 13, kind: output, shape index: {2}]
  %14 = xla_tuple %s11, %s12, %s13
  %s15 = sld [smem:[#allocation0]]
  $region97: #{tpu_custom_call.1} parent=0
    _
  %s17 = ssub.s32 1, %s15
  %s18 = scalar_select 0, %s17, %s15
  $region1: #{tpu_custom_call.1} parent=0
    #allocation4 [shape = 'u8[12288]{0}', space=vmem, size = 0x3000, scoped, tag = 'output window, operand 0, single buffered']
    #allocation5 [shape = 's32[2]{0}', space=sflag, size = 0x8, scoped, tag = 'scoped memory for tpu_custom_call.1']
    #allocation6 [shape = 'u8[12288]{0}', space=vmem, size = 0x3000, scoped, tag = 'output window, operand 1, single buffered']
    #allocation7 [shape = 's32[1]{0}', space=sflag, size = 0x4, scoped, tag = 'scoped memory for tpu_custom_call.1']
    #allocation8 [shape = 'u8[131072]{0}', space=vmem, size = 0x20000, scoped, tag = 'output window, operand 2']
    %19 = vsyncpa [#allocation5], 0
    %20 = vsyncpa [#allocation7], 0
    loop: start=0, step=1, limit=8
    $region2: #{tpu_custom_call.1} parent=1 // loop_pre_header
      _
    $region3: #{tpu_custom_call.1} parent=1 // loop_header
      %s22 = sphi 0, %s26
      %p23 = scmp.ge.s32.totalorder %s22, 8
      %s29 = sphi 0, %s41
      %s30 = sphi 0, %s37
      %s31 = sphi 0, %s29
      %s32 = sphi 0, %s30
      %s33 = sphi 0, %s31
      %s34 = sphi 0, %s32
      %s42 = sphi 0, %s42
      %s44 = sphi 0, %s42
      %s45 = sphi 0, %s44
      %s59 = sphi 0, %s45
      %s69 = sphi 0, %s71
      %s72 = sphi 0, %s69
      %s73 = sphi 0, %s72
      %s89 = sphi 0, %s73
      %s99 = sphi 0, %s101
      %s102 = sphi 0, %s99
      %s103 = sphi 0, %s102
      %s119 = sphi 0, %s103
      %s129 = sphi 0, %s131
      %s132 = sphi 0, %s129
      %s133 = sphi 0, %s132
      %s149 = sphi 0, %s133
      %s159 = sphi 0, %s161
      %s162 = sphi 0, %s159
      %s163 = sphi 0, %s162
      %s179 = sphi 0, %s163
      %s183 = sphi 0, %s183
      %s185 = sphi 0, %s183
      %s186 = sphi 0, %s185
      %s200 = sphi 0, %s186
      %s204 = sphi 0, %s204
      %s206 = sphi 0, %s204
      %s207 = sphi 0, %s206
      %s221 = sphi 0, %s207
      %s225 = sphi 0, %s225
      %s227 = sphi 0, %s225
      %s228 = sphi 0, %s227
      %s242 = sphi 0, %s228
      %s246 = sphi 0, %s246
      %s248 = sphi 0, %s246
      %s249 = sphi 0, %s248
      %s263 = sphi 0, %s249
      %s267 = sphi 0, %s267
      %s269 = sphi 0, %s267
      %s270 = sphi 0, %s269
      %s284 = sphi 0, %s270
      %s288 = sphi 0, %s288
      %s290 = sphi 0, %s288
      %s291 = sphi 0, %s290
      %s305 = sphi 0, %s291
      %s311 = sphi 0, %s313
      %s314 = sphi 0, %s311
      %s315 = sphi 0, %s314
      %s331 = sphi 0, %s315
      %s337 = sphi 0, %s339
      %s340 = sphi 0, %s337
      %s341 = sphi 0, %s340
      %s357 = sphi 0, %s341
      %s367 = sphi 0, %s369
      %s370 = sphi 0, %s367
      %s371 = sphi 0, %s370
      %s387 = sphi 0, %s371
    $region4: #{tpu_custom_call.1} parent=1 // loop_header_branch
      %25 = sbr.rel (%p23) target = $region8
    $region5: #{tpu_custom_call.1} parent=1 // loop_body
      %s27 = ssub.s32 %s22, 1
      %s28 = ssub.s32 %s22, 2
      %s35 = sadd.s32 1, %s30
      %p36 = scmp.ge.s32.totalorder %s35, 3
      %s37 = scalar_select %p36, 0, %s35
      %s38 = sadd.s32 1, %s29
      %s39 = scalar_select %p36, %s38, %s29
      %p40 = scmp.ge.s32.totalorder %s39, 2
      %s41 = scalar_select %p40, 0, %s39
      %s43 = sadd.s32 %s42, 1
      %p46 = scmp.eq.s32.totalorder %s22, 5
      %p47 = scmp.ne.s32.totalorder %s42, %s44
      %p48 = scmp.eq.s32.totalorder %s22, 0
      %p49 = por %p47, %p48
      %p50 = scmp.ne.s32.totalorder %s42, %s44
      %p51 = scmp.eq.s32.totalorder %s27, 5
      %p52 = por %p50, %p51
      %p53 = scmp.ne.s32.totalorder %s44, %s45
      %p54 = scmp.eq.s32.totalorder %s27, 0
      %p55 = por %p53, %p54
      %p56 = scmp.ne.s32.totalorder %s44, %s45
      %p57 = scmp.eq.s32.totalorder %s28, 5
      %p58 = por %p56, %p57
      %p60 = scmp.ne.s32.totalorder %s45, %s59
      %p61 = scmp.eq.s32.totalorder %s28, 0
      %p62 = por %p60, %p61
      %s63 = smul.u32 %s29, 3
      %s64 = sadd.s32 %s63, %s30
      %s65 = smul.u32 %s41, 3
      %s66 = sadd.s32 %s65, %s37
      %s67 = ssub.s32 %s64, %s66
      %p68 = scmp.eq.s32.totalorder %s67, 0
      %s70 = sadd.s32 %s69, 1
      %s71 = scalar_select %p68, %s69, %s70
      %p74 = pneg %p68
      %p75 = scmp.eq.s32.totalorder %s22, 5
      %p76 = por %p74, %p75
      %p77 = scmp.ne.s32.totalorder %s69, %s72
      %p78 = scmp.eq.s32.totalorder %s22, 0
      %p79 = por %p77, %p78
      %p80 = scmp.ne.s32.totalorder %s69, %s72
      %p81 = scmp.eq.s32.totalorder %s27, 5
      %p82 = por %p80, %p81
      %p83 = scmp.ne.s32.totalorder %s72, %s73
      %p84 = scmp.eq.s32.totalorder %s27, 0
      %p85 = por %p83, %p84
      %p86 = scmp.ne.s32.totalorder %s72, %s73
      %p87 = scmp.eq.s32.totalorder %s28, 5
      %p88 = por %p86, %p87
      %p90 = scmp.ne.s32.totalorder %s73, %s89
      %p91 = scmp.eq.s32.totalorder %s28, 0
      %p92 = por %p90, %p91
      %s93 = smul.u32 %s29, 3
      %s94 = sadd.s32 %s93, %s30
      %s95 = smul.u32 %s41, 3
      %s96 = sadd.s32 %s95, %s37
      %s97 = ssub.s32 %s94, %s96
      %p98 = scmp.eq.s32.totalorder %s97, 0
      %s100 = sadd.s32 %s99, 1
      %s101 = scalar_select %p98, %s99, %s100
      %p104 = pneg %p98
      %p105 = scmp.eq.s32.totalorder %s22, 5
      %p106 = por %p104, %p105
      %p107 = scmp.ne.s32.totalorder %s99, %s102
      %p108 = scmp.eq.s32.totalorder %s22, 0
      %p109 = por %p107, %p108
      %p110 = scmp.ne.s32.totalorder %s99, %s102
      %p111 = scmp.eq.s32.totalorder %s27, 5
      %p112 = por %p110, %p111
      %p113 = scmp.ne.s32.totalorder %s102, %s103
      %p114 = scmp.eq.s32.totalorder %s27, 0
      %p115 = por %p113, %p114
      %p116 = scmp.ne.s32.totalorder %s102, %s103
      %p117 = scmp.eq.s32.totalorder %s28, 5
      %p118 = por %p116, %p117
      %p120 = scmp.ne.s32.totalorder %s103, %s119
      %p121 = scmp.eq.s32.totalorder %s28, 0
      %p122 = por %p120, %p121
      %s123 = smul.u32 %s29, 3
      %s124 = sadd.s32 %s123, %s30
      %s125 = smul.u32 %s41, 3
      %s126 = sadd.s32 %s125, %s37
      %s127 = ssub.s32 %s124, %s126
      %p128 = scmp.eq.s32.totalorder %s127, 0
      %s130 = sadd.s32 %s129, 1
      %s131 = scalar_select %p128, %s129, %s130
      %p134 = pneg %p128
      %p135 = scmp.eq.s32.totalorder %s22, 5
      %p136 = por %p134, %p135
      %p137 = scmp.ne.s32.totalorder %s129, %s132
      %p138 = scmp.eq.s32.totalorder %s22, 0
      %p139 = por %p137, %p138
      %p140 = scmp.ne.s32.totalorder %s129, %s132
      %p141 = scmp.eq.s32.totalorder %s27, 5
      %p142 = por %p140, %p141
      %p143 = scmp.ne.s32.totalorder %s132, %s133
      %p144 = scmp.eq.s32.totalorder %s27, 0
      %p145 = por %p143, %p144
      %p146 = scmp.ne.s32.totalorder %s132, %s133
      %p147 = scmp.eq.s32.totalorder %s28, 5
      %p148 = por %p146, %p147
      %p150 = scmp.ne.s32.totalorder %s133, %s149
      %p151 = scmp.eq.s32.totalorder %s28, 0
      %p152 = por %p150, %p151
      %s153 = smul.u32 %s29, 3
      %s154 = sadd.s32 %s153, %s30
      %s155 = smul.u32 %s41, 3
      %s156 = sadd.s32 %s155, %s37
      %s157 = ssub.s32 %s154, %s156
      %p158 = scmp.eq.s32.totalorder %s157, 0
      %s160 = sadd.s32 %s159, 1
      %s161 = scalar_select %p158, %s159, %s160
      %p164 = pneg %p158
      %p165 = scmp.eq.s32.totalorder %s22, 5
      %p166 = por %p164, %p165
      %p167 = scmp.ne.s32.totalorder %s159, %s162
      %p168 = scmp.eq.s32.totalorder %s22, 0
      %p169 = por %p167, %p168
      %p170 = scmp.ne.s32.totalorder %s159, %s162
      %p171 = scmp.eq.s32.totalorder %s27, 5
      %p172 = por %p170, %p171
      %p173 = scmp.ne.s32.totalorder %s162, %s163
      %p174 = scmp.eq.s32.totalorder %s27, 0
      %p175 = por %p173, %p174
      %p176 = scmp.ne.s32.totalorder %s162, %s163
      %p177 = scmp.eq.s32.totalorder %s28, 5
      %p178 = por %p176, %p177
      %p180 = scmp.ne.s32.totalorder %s163, %s179
      %p181 = scmp.eq.s32.totalorder %s28, 0
      %p182 = por %p180, %p181
      %s184 = sadd.s32 %s183, 1
      %p187 = scmp.eq.s32.totalorder %s22, 5
      %p188 = scmp.ne.s32.totalorder %s183, %s185
      %p189 = scmp.eq.s32.totalorder %s22, 0
      %p190 = por %p188, %p189
      %p191 = scmp.ne.s32.totalorder %s183, %s185
      %p192 = scmp.eq.s32.totalorder %s27, 5
      %p193 = por %p191, %p192
      %p194 = scmp.ne.s32.totalorder %s185, %s186
      %p195 = scmp.eq.s32.totalorder %s27, 0
      %p196 = por %p194, %p195
      %p197 = scmp.ne.s32.totalorder %s185, %s186
      %p198 = scmp.eq.s32.totalorder %s28, 5
      %p199 = por %p197, %p198
      %p201 = scmp.ne.s32.totalorder %s186, %s200
      %p202 = scmp.eq.s32.totalorder %s28, 0
      %p203 = por %p201, %p202
      %s205 = sadd.s32 %s204, 1
      %p208 = scmp.eq.s32.totalorder %s22, 5
      %p209 = scmp.ne.s32.totalorder %s204, %s206
      %p210 = scmp.eq.s32.totalorder %s22, 0
      %p211 = por %p209, %p210
      %p212 = scmp.ne.s32.totalorder %s204, %s206
      %p213 = scmp.eq.s32.totalorder %s27, 5
      %p214 = por %p212, %p213
      %p215 = scmp.ne.s32.totalorder %s206, %s207
      %p216 = scmp.eq.s32.totalorder %s27, 0
      %p217 = por %p215, %p216
      %p218 = scmp.ne.s32.totalorder %s206, %s207
      %p219 = scmp.eq.s32.totalorder %s28, 5
      %p220 = por %p218, %p219
      %p222 = scmp.ne.s32.totalorder %s207, %s221
      %p223 = scmp.eq.s32.totalorder %s28, 0
      %p224 = por %p222, %p223
      %s226 = sadd.s32 %s225, 1
      %p229 = scmp.eq.s32.totalorder %s22, 5
      %p230 = scmp.ne.s32.totalorder %s225, %s227
      %p231 = scmp.eq.s32.totalorder %s22, 0
      %p232 = por %p230, %p231
      %p233 = scmp.ne.s32.totalorder %s225, %s227
      %p234 = scmp.eq.s32.totalorder %s27, 5
      %p235 = por %p233, %p234
      %p236 = scmp.ne.s32.totalorder %s227, %s228
      %p237 = scmp.eq.s32.totalorder %s27, 0
      %p238 = por %p236, %p237
      %p239 = scmp.ne.s32.totalorder %s227, %s228
      %p240 = scmp.eq.s32.totalorder %s28, 5
      %p241 = por %p239, %p240
      %p243 = scmp.ne.s32.totalorder %s228, %s242
      %p244 = scmp.eq.s32.totalorder %s28, 0
      %p245 = por %p243, %p244
      %s247 = sadd.s32 %s246, 1
      %p250 = scmp.eq.s32.totalorder %s22, 5
      %p251 = scmp.ne.s32.totalorder %s246, %s248
      %p252 = scmp.eq.s32.totalorder %s22, 0
      %p253 = por %p251, %p252
      %p254 = scmp.ne.s32.totalorder %s246, %s248
      %p255 = scmp.eq.s32.totalorder %s27, 5
      %p256 = por %p254, %p255
      %p257 = scmp.ne.s32.totalorder %s248, %s249
      %p258 = scmp.eq.s32.totalorder %s27, 0
      %p259 = por %p257, %p258
      %p260 = scmp.ne.s32.totalorder %s248, %s249
      %p261 = scmp.eq.s32.totalorder %s28, 5
      %p262 = por %p260, %p261
      %p264 = scmp.ne.s32.totalorder %s249, %s263
      %p265 = scmp.eq.s32.totalorder %s28, 0
      %p266 = por %p264, %p265
      %s268 = sadd.s32 %s267, 1
      %p271 = scmp.eq.s32.totalorder %s22, 5
      %p272 = scmp.ne.s32.totalorder %s267, %s269
      %p273 = scmp.eq.s32.totalorder %s22, 0
      %p274 = por %p272, %p273
      %p275 = scmp.ne.s32.totalorder %s267, %s269
      %p276 = scmp.eq.s32.totalorder %s27, 5
      %p277 = por %p275, %p276
      %p278 = scmp.ne.s32.totalorder %s269, %s270
      %p279 = scmp.eq.s32.totalorder %s27, 0
      %p280 = por %p278, %p279
      %p281 = scmp.ne.s32.totalorder %s269, %s270
      %p282 = scmp.eq.s32.totalorder %s28, 5
      %p283 = por %p281, %p282
      %p285 = scmp.ne.s32.totalorder %s270, %s284
      %p286 = scmp.eq.s32.totalorder %s28, 0
      %p287 = por %p285, %p286
      %s289 = sadd.s32 %s288, 1
      %p292 = scmp.eq.s32.totalorder %s22, 5
      %p293 = scmp.ne.s32.totalorder %s288, %s290
      %p294 = scmp.eq.s32.totalorder %s22, 0
      %p295 = por %p293, %p294
      %p296 = scmp.ne.s32.totalorder %s288, %s290
      %p297 = scmp.eq.s32.totalorder %s27, 5
      %p298 = por %p296, %p297
      %p299 = scmp.ne.s32.totalorder %s290, %s291
      %p300 = scmp.eq.s32.totalorder %s27, 0
      %p301 = por %p299, %p300
      %p302 = scmp.ne.s32.totalorder %s290, %s291
      %p303 = scmp.eq.s32.totalorder %s28, 5
      %p304 = por %p302, %p303
      %p306 = scmp.ne.s32.totalorder %s291, %s305
      %p307 = scmp.eq.s32.totalorder %s28, 0
      %p308 = por %p306, %p307
      %s309 = ssub.s32 %s29, %s41
      %p310 = scmp.eq.s32.totalorder %s309, 0
      %s312 = sadd.s32 %s311, 1
      %s313 = scalar_select %p310, %s311, %s312
      %p316 = pneg %p310
      %p317 = scmp.eq.s32.totalorder %s22, 5
      %p318 = por %p316, %p317
      %p319 = scmp.ne.s32.totalorder %s311, %s314
      %p320 = scmp.eq.s32.totalorder %s22, 0
      %p321 = por %p319, %p320
      %p322 = scmp.ne.s32.totalorder %s311, %s314
      %p323 = scmp.eq.s32.totalorder %s27, 5
      %p324 = por %p322, %p323
      %p325 = scmp.ne.s32.totalorder %s314, %s315
      %p326 = scmp.eq.s32.totalorder %s27, 0
      %p327 = por %p325, %p326
      %p328 = scmp.ne.s32.totalorder %s314, %s315
      %p329 = scmp.eq.s32.totalorder %s28, 5
      %p330 = por %p328, %p329
      %p332 = scmp.ne.s32.totalorder %s315, %s331
      %p333 = scmp.eq.s32.totalorder %s28, 0
      %p334 = por %p332, %p333
      %s335 = ssub.s32 %s29, %s41
      %p336 = scmp.eq.s32.totalorder %s335, 0
      %s338 = sadd.s32 %s337, 1
      %s339 = scalar_select %p336, %s337, %s338
      %p342 = pneg %p336
      %p343 = scmp.eq.s32.totalorder %s22, 5
      %p344 = por %p342, %p343
      %p345 = scmp.ne.s32.totalorder %s337, %s340
      %p346 = scmp.eq.s32.totalorder %s22, 0
      %p347 = por %p345, %p346
      %p348 = scmp.ne.s32.totalorder %s337, %s340
      %p349 = scmp.eq.s32.totalorder %s27, 5
      %p350 = por %p348, %p349
      %p351 = scmp.ne.s32.totalorder %s340, %s341
      %p352 = scmp.eq.s32.totalorder %s27, 0
      %p353 = por %p351, %p352
      %p354 = scmp.ne.s32.totalorder %s340, %s341
      %p355 = scmp.eq.s32.totalorder %s28, 5
      %p356 = por %p354, %p355
      %p358 = scmp.ne.s32.totalorder %s341, %s357
      %p359 = scmp.eq.s32.totalorder %s28, 0
      %p360 = por %p358, %p359
      %s361 = smul.u32 %s29, 3
      %s362 = sadd.s32 %s361, %s30
      %s363 = smul.u32 %s41, 3
      %s364 = sadd.s32 %s363, %s37
      %s365 = ssub.s32 %s362, %s364
      %p366 = scmp.eq.s32.totalorder %s365, 0
      %s368 = sadd.s32 %s367, 1
      %s369 = scalar_select %p366, %s367, %s368
      %p372 = pneg %p366
      %p373 = scmp.eq.s32.totalorder %s22, 5
      %p374 = por %p372, %p373
      %p375 = scmp.ne.s32.totalorder %s367, %s370
      %p376 = scmp.eq.s32.totalorder %s22, 0
      %p377 = por %p375, %p376
      %p378 = scmp.ne.s32.totalorder %s367, %s370
      %p379 = scmp.eq.s32.totalorder %s27, 5
      %p380 = por %p378, %p379
      %p381 = scmp.ne.s32.totalorder %s370, %s371
      %p382 = scmp.eq.s32.totalorder %s27, 0
      %p383 = por %p381, %p382
      %p384 = scmp.ne.s32.totalorder %s370, %s371
      %p385 = scmp.eq.s32.totalorder %s28, 5
      %p386 = por %p384, %p385
      %p388 = scmp.ne.s32.totalorder %s371, %s387
      %p389 = scmp.eq.s32.totalorder %s28, 0
      %p390 = por %p388, %p389
      %p391 = scmp.le.s32.totalorder 1, %s22
      %p392 = scmp.lt.s32.totalorder %s22, 7
      %p393 = pnand %p391, %p392
      %p394 = pneg %p393
      // Predicated region
      $region9: #{tpu_custom_call.1} parent=5 // pred_check
        _
      $region10: #{tpu_custom_call.1} parent=5 // pred_check_branch
        %396 = sbr.rel (%p393) target = $region12
      $region11: #{tpu_custom_call.1} parent=5 // pred_region
        %s397 = ssub.s32 %s22, 1
        // Predicated region
        $region13: #{tpu_custom_call.1} parent=11 // pred_check
          %p398 = pneg %p55
        $region14: #{tpu_custom_call.1} parent=11 // pred_check_branch
          %400 = sbr.rel (%p398) target = $region16
        $region15: #{tpu_custom_call.1} parent=11 // pred_region
          _
        $region16: #{tpu_custom_call.1} parent=11 // pred_fallthru
          _
        // Predicated region
        $region17: #{tpu_custom_call.1} parent=11 // pred_check
          %p401 = pneg %p196
        $region18: #{tpu_custom_call.1} parent=11 // pred_check_branch
          %403 = sbr.rel (%p401) target = $region20
        $region19: #{tpu_custom_call.1} parent=11 // pred_region
          _
        $region20: #{tpu_custom_call.1} parent=11 // pred_fallthru
          _
        // Predicated region
        $region21: #{tpu_custom_call.1} parent=11 // pred_check
          %p404 = pneg %p217
        $region22: #{tpu_custom_call.1} parent=11 // pred_check_branch
          %406 = sbr.rel (%p404) target = $region24
        $region23: #{tpu_custom_call.1} parent=11 // pred_region
          _
        $region24: #{tpu_custom_call.1} parent=11 // pred_fallthru
          _
        // Predicated region
        $region25: #{tpu_custom_call.1} parent=11 // pred_check
          %p407 = pneg %p238
        $region26: #{tpu_custom_call.1} parent=11 // pred_check_branch
          %409 = sbr.rel (%p407) target = $region28
        $region27: #{tpu_custom_call.1} parent=11 // pred_region
          _
        $region28: #{tpu_custom_call.1} parent=11 // pred_fallthru
          _
        // Predicated region
        $region29: #{tpu_custom_call.1} parent=11 // pred_check
          %p410 = pneg %p259
        $region30: #{tpu_custom_call.1} parent=11 // pred_check_branch
          %412 = sbr.rel (%p410) target = $region32
        $region31: #{tpu_custom_call.1} parent=11 // pred_region
          _
        $region32: #{tpu_custom_call.1} parent=11 // pred_fallthru
          _
        // Predicated region
        $region33: #{tpu_custom_call.1} parent=11 // pred_check
          %p413 = pneg %p280
        $region34: #{tpu_custom_call.1} parent=11 // pred_check_branch
          %415 = sbr.rel (%p413) target = $region36
        $region35: #{tpu_custom_call.1} parent=11 // pred_region
          _
        $region36: #{tpu_custom_call.1} parent=11 // pred_fallthru
          _
        // Predicated region
        $region37: #{tpu_custom_call.1} parent=11 // pred_check
          %p416 = pneg %p301
        $region38: #{tpu_custom_call.1} parent=11 // pred_check_branch
          %418 = sbr.rel (%p416) target = $region40
        $region39: #{tpu_custom_call.1} parent=11 // pred_region
          _
        $region40: #{tpu_custom_call.1} parent=11 // pred_fallthru
          _
      $region12: #{tpu_custom_call.1} parent=5 // pred_fallthru
        _
      %p419 = scmp.lt.s32.totalorder %s22, 6
      // Predicated region
      $region41: #{tpu_custom_call.1} parent=5 // pred_check
        %p420 = pneg %p419
      $region42: #{tpu_custom_call.1} parent=5 // pred_check_branch
        %422 = sbr.rel (%p420) target = $region44
      $region43: #{tpu_custom_call.1} parent=5 // pred_region
        // Predicated region
        $region45: #{tpu_custom_call.1} parent=43 // pred_check
          %p423 = pneg %p79
        $region46: #{tpu_custom_call.1} parent=43 // pred_check_branch
          %425 = sbr.rel (%p423) target = $region48
        $region47: #{tpu_custom_call.1} parent=43 // pred_region
          %s426 = smul.u32 %s29, 3
          %s427 = sadd.s32 %s426, %s30
          %s428 = smul.u32 16, %s427
          %p429 = scmp.lt.s32.totalorder %s428, 95
          %s430 = scalar_select %p429, %s428, 95
          %s431 = smul.addr %s430, 8
          %s432 = scalar_lea.vmem %s1, %s431
          %s433 = smul.u32 %s29, 3
          %s434 = sadd.s32 %s433, %s30
          %s435 = smul.u32 16, %s434
        $region48: #{tpu_custom_call.1} parent=43 // pred_fallthru
          _
        // Predicated region
        $region49: #{tpu_custom_call.1} parent=43 // pred_check
          %p436 = pneg %p109
        $region50: #{tpu_custom_call.1} parent=43 // pred_check_branch
          %438 = sbr.rel (%p436) target = $region52
        $region51: #{tpu_custom_call.1} parent=43 // pred_region
          %s439 = smul.u32 %s29, 3
          %s440 = sadd.s32 %s439, %s30
          %s441 = smul.u32 16, %s440
          %p442 = scmp.lt.s32.totalorder %s441, 95
          %s443 = scalar_select %p442, %s441, 95
          %s444 = smul.addr %s443, 8
          %s445 = scalar_lea.vmem %s2, %s444
          %s446 = smul.u32 %s29, 3
          %s447 = sadd.s32 %s446, %s30
          %s448 = smul.u32 16, %s447
        $region52: #{tpu_custom_call.1} parent=43 // pred_fallthru
          _
        // Predicated region
        $region53: #{tpu_custom_call.1} parent=43 // pred_check
          %p449 = pneg %p139
        $region54: #{tpu_custom_call.1} parent=43 // pred_check_branch
          %451 = sbr.rel (%p449) target = $region56
        $region55: #{tpu_custom_call.1} parent=43 // pred_region
          %s452 = smul.u32 %s29, 3
          %s453 = sadd.s32 %s452, %s30
          %s454 = smul.u32 16, %s453
          %p455 = scmp.lt.s32.totalorder %s454, 95
          %s456 = scalar_select %p455, %s454, 95
          %s457 = smul.addr %s456, 8
          %s458 = scalar_lea.vmem %s3, %s457
          %s459 = smul.u32 %s29, 3
          %s460 = sadd.s32 %s459, %s30
          %s461 = smul.u32 16, %s460
        $region56: #{tpu_custom_call.1} parent=43 // pred_fallthru
          _
        // Predicated region
        $region57: #{tpu_custom_call.1} parent=43 // pred_check
          %p462 = pneg %p169
        $region58: #{tpu_custom_call.1} parent=43 // pred_check_branch
          %464 = sbr.rel (%p462) target = $region60
        $region59: #{tpu_custom_call.1} parent=43 // pred_region
          %s465 = smul.u32 %s29, 3
          %s466 = sadd.s32 %s465, %s30
          %p467 = scmp.lt.s32.totalorder %s466, 5
          %s468 = scalar_select %p467, %s466, 5
          %s469 = scalar_lea.vmem %s4, %s468
          %s470 = smul.u32 %s29, 3
          %s471 = sadd.s32 %s470, %s30
        $region60: #{tpu_custom_call.1} parent=43 // pred_fallthru
          _
      $region44: #{tpu_custom_call.1} parent=5 // pred_fallthru
        _
      %p472 = scmp.le.s32.totalorder 1, %s22
      %p473 = scmp.lt.s32.totalorder %s22, 7
      %p474 = pnand %p472, %p473
      %p475 = pneg %p474
      // Predicated region
      $region61: #{tpu_custom_call.1} parent=5 // pred_check
        _
      $region62: #{tpu_custom_call.1} parent=5 // pred_check_branch
        %477 = sbr.rel (%p474) target = $region64
      $region63: #{tpu_custom_call.1} parent=5 // pred_region
        %s478 = ssub.s32 %s22, 1
        %p479 = pneg %p55
        %p480 = pneg %p52
        %s481 = smul.u32 %s31, 3
        %s482 = sadd.s32 %s481, %s32
        %s483 = smul.u32 16, %s482
        %p484 = scmp.lt.s32.totalorder %s483, 95
        %s485 = scalar_select %p484, %s483, 95
        %s486 = smul.addr %s485, 8
        %s487 = scalar_lea.vmem %s1, %s486
        %p488 = pneg %p85
        %p489 = pneg %p82
        %s490 = smul.u32 %s31, 3
        %s491 = sadd.s32 %s490, %s32
        %s492 = smul.u32 16, %s491
        %p493 = scmp.lt.s32.totalorder %s492, 95
        %s494 = scalar_select %p493, %s492, 95
        %s495 = smul.addr %s494, 8
        %s496 = scalar_lea.vmem %s2, %s495
        %p497 = pneg %p115
        %p498 = pneg %p112
        %s499 = smul.u32 %s31, 3
        %s500 = sadd.s32 %s499, %s32
        %s501 = smul.u32 16, %s500
        %p502 = scmp.lt.s32.totalorder %s501, 95
        %s503 = scalar_select %p502, %s501, 95
        %s504 = smul.addr %s503, 8
        %s505 = scalar_lea.vmem %s3, %s504
        %p506 = pneg %p145
        %p507 = pneg %p142
        %s508 = smul.u32 %s31, 3
        %s509 = sadd.s32 %s508, %s32
        %p510 = scmp.lt.s32.totalorder %s509, 5
        %s511 = scalar_select %p510, %s509, 5
        %s512 = scalar_lea.vmem %s4, %s511
        %p513 = pneg %p175
        %p514 = pneg %p172
        %p515 = pneg %p196
        %p516 = pneg %p193
        %p517 = pneg %p217
        %p518 = pneg %p214
        %p519 = pneg %p238
        %p520 = pneg %p235
        %p521 = pneg %p259
        %p522 = pneg %p256
        %p523 = pneg %p280
        %p524 = pneg %p277
        %p525 = pneg %p301
        %p526 = pneg %p298
        %p527 = pneg %p327
        %p528 = pneg %p324
        %p529 = pneg %p353
        %p530 = pneg %p350
        %p531 = pneg %p383
        %p532 = pneg %p380
        %s533 = sand.u32 %s27, 1
        %s534 = scalar_lea.sflag [#allocation5], %s533
        %s535 = sand.u32 %s370, 1
        %s536 = smul.addr %s535, 128
        %s537 = scalar_lea.vmem [#allocation8], %s536
        %s538 = smul.u32 %s31, 3
        %s539 = sadd.s32 %s538, %s32
        %s540 = smul.u32 16, %s539
        %p541 = scmp.lt.s32.totalorder %s540, 95
        %s542 = scalar_select %p541, %s540, 95
        %s543 = smul.addr %s542, 8
        %s544 = scalar_lea.vmem %s1, %s543
        %s545 = smul.u32 %s31, 3
        %s546 = sadd.s32 %s545, %s32
        %s547 = smul.u32 16, %s546
        %s548 = smul.u32 %s31, 3
        %s549 = sadd.s32 %s548, %s32
        %s550 = smul.u32 16, %s549
        %p551 = scmp.lt.s32.totalorder %s550, 95
        %s552 = scalar_select %p551, %s550, 95
        %s553 = smul.addr %s552, 8
        %s554 = scalar_lea.vmem %s2, %s553
        %s555 = smul.u32 %s31, 3
        %s556 = sadd.s32 %s555, %s32
        %s557 = smul.u32 16, %s556
        %s558 = smul.u32 %s31, 3
        %s559 = sadd.s32 %s558, %s32
        %s560 = smul.u32 16, %s559
        %p561 = scmp.lt.s32.totalorder %s560, 95
        %s562 = scalar_select %p561, %s560, 95
        %s563 = smul.addr %s562, 8
        %s564 = scalar_lea.vmem %s3, %s563
        %s565 = smul.u32 %s31, 3
        %s566 = sadd.s32 %s565, %s32
        %s567 = smul.u32 16, %s566
        %s568 = smul.u32 %s31, 3
        %s569 = sadd.s32 %s568, %s32
        %p570 = scmp.lt.s32.totalorder %s569, 5
        %s571 = scalar_select %p570, %s569, 5
        %s572 = scalar_lea.vmem %s4, %s571
        %s573 = smul.u32 %s31, 3
        %s574 = sadd.s32 %s573, %s32
        %s575 = smul.u32 %s31, 3
        %s576 = sadd.s32 %s575, %s32
        %s577 = smul.u32 16, %s576
        %p579 = scmp.eq.s32.totalorder %s32, 0
        // Predicated region
        $region65: #{tpu_custom_call.1} parent=63 // pred_check
          %p580 = pneg %p579
        $region66: #{tpu_custom_call.1} parent=63 // pred_check_branch
          %582 = sbr.rel (%p580) target = $region68
        $region67: #{tpu_custom_call.1} parent=63 // pred_region
          %v583 = vld [vmem:[%s0] sm:$0xff]
          %v584 = vld [vmem:[%s0 + $0x8] sm:$0xff]
          %v585 = vld [vmem:[%s0 + $0x10] sm:$0xff]
          %v586 = vld [vmem:[%s5] sm:$0xff]
          %v587 = vld [vmem:[%s5 + $0x8] sm:$0xff]
          %v588 = vld [vmem:[%s5 + $0x10] sm:$0xff]
          %v589 = vld [vmem:[%s5 + $0x18] sm:$0xff]
          %v590 = vld [vmem:[%s5 + $0x20] sm:$0xff]
          %v591 = vld [vmem:[%s5 + $0x28] sm:$0xff]
          %v592 = vld [vmem:[%s6] sm:$0x7]
          %v594 = vlaneseq
          %v595 = vshrl.u32 %v594, 7
          %v596 = vsub.s32 0, %v595
          %v597 = vrot.slane %v592, %v596
          %v598 = vlaneseq
          %v599 = vshrl.u32 %v598, 7
          %v600 = vsub.s32 1, %v599
          %v601 = vrot.slane %v592, %v600
          %v602 = vlaneseq
          %v603 = vshrl.u32 %v602, 7
          %v604 = vsub.s32 2, %v603
          %v605 = vrot.slane %v592, %v604
          %vm609 = vcmask 130048
          %v611 = vsel %vm609, %v583, 0
          %v614 = vsel %vm609, %v584, 0
          %v617 = vsel %vm609, %v585, 0
          %619 = vmatprep.subr.mxu0 0.0
          %620 = vmatpush1.msra.mxu0 0.0
          %621 = vmatprep.subr.mxu0 0.0
          %622 = vmatpush1.msra.mxu0 0.0
          %623 = vmatprep.subr.mxu0 0.0
          %624 = vmatpush1.msra.mxu0 0.0
          %625 = vmatprep.subr.mxu0 0.0
          %626 = vmatpush1.msra.mxu0 0.0
          %627 = vmatprep.subr.mxu0 0.0
          %628 = vmatpush1.msra.mxu0 0.0
          %629 = vmatprep.subr.mxu0 0.0
          %630 = vmatpush1.msra.mxu0 0.0
          %631 = vmatprep.subr.mxu0 0.0
          %632 = vmatpush1.msra.mxu0 0.0
          %633 = vmatprep.subr.mxu0 0.0
          %634 = vmatpush1.msra.mxu0 0.0
          %635 = vmatprep.subr.mxu0 0.0
          %636 = vmatpush1.msra.mxu0 0.0
          %637 = vmatprep.subr.mxu0 0.0
          %638 = vmatpush1.msra.mxu0 0.0
          %639 = vmatprep.subr.mxu0 0.0
          %640 = vmatpush1.msra.mxu0 0.0
          %641 = vmatprep.subr.mxu0 0.0
          %642 = vmatpush1.msra.mxu0 0.0
          %643 = vmatprep.subr.mxu0 0.0
          %644 = vmatpush1.msra.mxu0 0.0
          %645 = vmatprep.subr.mxu0 0.0
          %646 = vmatpush1.msra.mxu0 0.0
          %v647 = vand.u32 %v590, 4294901760
          %648 = vmatprep.subr.mxu0 %v647
          %v649 = vand.u32 %v589, 4294901760
          %650 = vmatpush1.msra.mxu0 %v649
          %v651 = vand.u32 %v587, 4294901760
          %652 = vmatprep.subr.mxu0 %v651
          %v653 = vand.u32 %v586, 4294901760
          %654 = vmatpush1.msra.mxu0 %v653
          %655 = vmatprep.subr.mxu0 0.0
          %656 = vmatpush2.msra.mxu0 0.0
          %657 = vmatprep.subr.mxu0 0.0
          %658 = vmatpush2.msra.mxu0 0.0
          %659 = vmatprep.subr.mxu0 0.0
          %660 = vmatpush2.msra.mxu0 0.0
          %661 = vmatprep.subr.mxu0 0.0
          %662 = vmatpush2.msra.mxu0 0.0
          %663 = vmatprep.subr.mxu0 0.0
          %664 = vmatpush2.msra.mxu0 0.0
          %665 = vmatprep.subr.mxu0 0.0
          %666 = vmatpush2.msra.mxu0 0.0
          %667 = vmatprep.subr.mxu0 0.0
          %668 = vmatpush2.msra.mxu0 0.0
          %669 = vmatprep.subr.mxu0 0.0
          %670 = vmatpush2.msra.mxu0 0.0
          %671 = vmatprep.subr.mxu0 0.0
          %672 = vmatpush2.msra.mxu0 0.0
          %673 = vmatprep.subr.mxu0 0.0
          %674 = vmatpush2.msra.mxu0 0.0
          %675 = vmatprep.subr.mxu0 0.0
          %676 = vmatpush2.msra.mxu0 0.0
          %677 = vmatprep.subr.mxu0 0.0
          %678 = vmatpush2.msra.mxu0 0.0
          %679 = vmatprep.subr.mxu0 0.0
          %680 = vmatpush2.msra.mxu0 0.0
          %681 = vmatprep.subr.mxu0 0.0
          %682 = vmatpush2.msra.mxu0 0.0
          %683 = vmatprep.subr.mxu0 0.0
          %684 = vmatpush2.msra.mxu0 0.0
          %685 = vmatprep.subr.mxu0 0.0
          %686 = vmatpush2.msra.mxu0 0.0
          %687 = vmatprep.mubr.f32.mxu0 0.0
          %v688 = vand.u32 %v611, 4294901760
          %v689 = vsub.f32 %v611, %v688
          %v690 = vand.u32 %v689, 4294901760
          %v691 = vsub.f32 %v689, %v690
          %v692 = vand.u32 %v691, 4294901760
          %693 = vmatmul.mubr.f32.gmra.mxu0 %v692
          %v694 = vpop.f32.mrf.mxu0
          %v695 = vadd.f32 %v597, %v694
          %v696 = vpop.f32.mrf.mxu0
          %v697 = vadd.f32 %v601, %v696
          %698 = vmatprep.mubr.f32.mxu0 0.0
          %v699 = vand.u32 %v614, 4294901760
          %v700 = vsub.f32 %v614, %v699
          %v701 = vand.u32 %v700, 4294901760
          %v702 = vsub.f32 %v700, %v701
          %v703 = vand.u32 %v702, 4294901760
          %704 = vmatmul.mubr.f32.gmra.mxu0 %v703
          %v705 = vpop.f32.mrf.mxu0
          %v706 = vadd.f32 %v597, %v705
          %v707 = vpop.f32.mrf.mxu0
          %v708 = vadd.f32 %v601, %v707
          %709 = vmatprep.mubr.f32.mxu0 0.0
          %v710 = vand.u32 %v617, 4294901760
          %v711 = vsub.f32 %v617, %v710
          %v712 = vand.u32 %v711, 4294901760
          %v713 = vsub.f32 %v711, %v712
          %v714 = vand.u32 %v713, 4294901760
          %715 = vmatmul.mubr.f32.gmra.mxu0 %v714
          %v716 = vpop.f32.mrf.mxu0
          %v717 = vadd.f32 %v597, %v716
          %v718 = vpop.f32.mrf.mxu0
          %v719 = vadd.f32 %v601, %v718
          %720 = vdwg.mxu0
          %721 = vmatprep.subr.mxu0 0.0
          %722 = vmatpush1.msra.mxu0 0.0
          %723 = vmatprep.subr.mxu0 0.0
          %724 = vmatpush1.msra.mxu0 0.0
          %725 = vmatprep.subr.mxu0 0.0
          %726 = vmatpush1.msra.mxu0 0.0
          %727 = vmatprep.subr.mxu0 0.0
          %728 = vmatpush1.msra.mxu0 0.0
          %729 = vmatprep.subr.mxu0 0.0
          %730 = vmatpush1.msra.mxu0 0.0
          %731 = vmatprep.subr.mxu0 0.0
          %732 = vmatpush1.msra.mxu0 0.0
          %733 = vmatprep.subr.mxu0 0.0
          %734 = vmatpush1.msra.mxu0 0.0
          %735 = vmatprep.subr.mxu0 0.0
          %736 = vmatpush1.msra.mxu0 0.0
          %737 = vmatprep.subr.mxu0 0.0
          %738 = vmatpush1.msra.mxu0 0.0
          %739 = vmatprep.subr.mxu0 0.0
          %740 = vmatpush1.msra.mxu0 0.0
          %741 = vmatprep.subr.mxu0 0.0
          %742 = vmatpush1.msra.mxu0 0.0
          %743 = vmatprep.subr.mxu0 0.0
          %744 = vmatpush1.msra.mxu0 0.0
          %745 = vmatprep.subr.mxu0 0.0
          %746 = vmatpush1.msra.mxu0 0.0
          %747 = vmatprep.subr.mxu0 0.0
          %748 = vmatpush1.msra.mxu0 0.0
          %v749 = vand.u32 %v590, 4294901760
          %v750 = vsub.f32 %v590, %v749
          %v751 = vand.u32 %v750, 4294901760
          %v752 = vsub.f32 %v750, %v751
          %v753 = vand.u32 %v752, 4294901760
          %754 = vmatprep.subr.mxu0 %v753
          %v755 = vand.u32 %v589, 4294901760
          %v756 = vsub.f32 %v589, %v755
          %v757 = vand.u32 %v756, 4294901760
          %v758 = vsub.f32 %v756, %v757
          %v759 = vand.u32 %v758, 4294901760
          %760 = vmatpush1.msra.mxu0 %v759
          %v761 = vand.u32 %v587, 4294901760
          %v762 = vsub.f32 %v587, %v761
          %v763 = vand.u32 %v762, 4294901760
          %v764 = vsub.f32 %v762, %v763
          %v765 = vand.u32 %v764, 4294901760
          %766 = vmatprep.subr.mxu0 %v765
          %v767 = vand.u32 %v586, 4294901760
          %v768 = vsub.f32 %v586, %v767
          %v769 = vand.u32 %v768, 4294901760
          %v770 = vsub.f32 %v768, %v769
          %v771 = vand.u32 %v770, 4294901760
          %772 = vmatpush1.msra.mxu0 %v771
          %773 = vmatprep.subr.mxu0 0.0
          %774 = vmatpush2.msra.mxu0 0.0
          %775 = vmatprep.subr.mxu0 0.0
          %776 = vmatpush2.msra.mxu0 0.0
          %777 = vmatprep.subr.mxu0 0.0
          %778 = vmatpush2.msra.mxu0 0.0
          %779 = vmatprep.subr.mxu0 0.0
          %780 = vmatpush2.msra.mxu0 0.0
          %781 = vmatprep.subr.mxu0 0.0
          %782 = vmatpush2.msra.mxu0 0.0
          %783 = vmatprep.subr.mxu0 0.0
          %784 = vmatpush2.msra.mxu0 0.0
          %785 = vmatprep.subr.mxu0 0.0
          %786 = vmatpush2.msra.mxu0 0.0
          %787 = vmatprep.subr.mxu0 0.0
          %788 = vmatpush2.msra.mxu0 0.0
          %789 = vmatprep.subr.mxu0 0.0
          %790 = vmatpush2.msra.mxu0 0.0
          %791 = vmatprep.subr.mxu0 0.0
          %792 = vmatpush2.msra.mxu0 0.0
          %793 = vmatprep.subr.mxu0 0.0
          %794 = vmatpush2.msra.mxu0 0.0
          %795 = vmatprep.subr.mxu0 0.0
          %796 = vmatpush2.msra.mxu0 0.0
          %797 = vmatprep.subr.mxu0 0.0
          %798 = vmatpush2.msra.mxu0 0.0
          %799 = vmatprep.subr.mxu0 0.0
          %800 = vmatpush2.msra.mxu0 0.0
          %801 = vmatprep.subr.mxu0 0.0
          %802 = vmatpush2.msra.mxu0 0.0
          %803 = vmatprep.subr.mxu0 0.0
          %804 = vmatpush2.msra.mxu0 0.0
          %805 = vmatprep.mubr.f32.mxu0 0.0
          %v806 = vand.u32 %v611, 4294901760
          %807 = vmatmul.mubr.f32.gmra.mxu0 %v806
          %v808 = vpop.f32.mrf.mxu0
          %v809 = vadd.f32 %v695, %v808
          %v810 = vpop.f32.mrf.mxu0
          %v811 = vadd.f32 %v697, %v810
          %812 = vmatprep.mubr.f32.mxu0 0.0
          %v813 = vand.u32 %v614, 4294901760
          %814 = vmatmul.mubr.f32.gmra.mxu0 %v813
          %v815 = vpop.f32.mrf.mxu0
          %v816 = vadd.f32 %v706, %v815
          %v817 = vpop.f32.mrf.mxu0
          %v818 = vadd.f32 %v708, %v817
          %819 = vmatprep.mubr.f32.mxu0 0.0
          %v820 = vand.u32 %v617, 4294901760
          %821 = vmatmul.mubr.f32.gmra.mxu0 %v820
          %v822 = vpop.f32.mrf.mxu0
          %v823 = vadd.f32 %v717, %v822
          %v824 = vpop.f32.mrf.mxu0
          %v825 = vadd.f32 %v719, %v824
          %826 = vdwg.mxu0
          %827 = vmatprep.subr.mxu0 0.0
          %828 = vmatpush1.msra.mxu0 0.0
          %829 = vmatprep.subr.mxu0 0.0
          %830 = vmatpush1.msra.mxu0 0.0
          %831 = vmatprep.subr.mxu0 0.0
          %832 = vmatpush1.msra.mxu0 0.0
          %833 = vmatprep.subr.mxu0 0.0
          %834 = vmatpush1.msra.mxu0 0.0
          %835 = vmatprep.subr.mxu0 0.0
          %836 = vmatpush1.msra.mxu0 0.0
          %837 = vmatprep.subr.mxu0 0.0
          %838 = vmatpush1.msra.mxu0 0.0
          %839 = vmatprep.subr.mxu0 0.0
          %840 = vmatpush1.msra.mxu0 0.0
          %841 = vmatprep.subr.mxu0 0.0
          %842 = vmatpush1.msra.mxu0 0.0
          %843 = vmatprep.subr.mxu0 0.0
          %844 = vmatpush1.msra.mxu0 0.0
          %845 = vmatprep.subr.mxu0 0.0
          %846 = vmatpush1.msra.mxu0 0.0
          %847 = vmatprep.subr.mxu0 0.0
          %848 = vmatpush1.msra.mxu0 0.0
          %849 = vmatprep.subr.mxu0 0.0
          %850 = vmatpush1.msra.mxu0 0.0
          %851 = vmatprep.subr.mxu0 0.0
          %852 = vmatpush1.msra.mxu0 0.0
          %853 = vmatprep.subr.mxu0 0.0
          %854 = vmatpush1.msra.mxu0 0.0
          %v855 = vand.u32 %v590, 4294901760
          %v856 = vsub.f32 %v590, %v855
          %857 = vmatprep.subr.mxu0 %v856
          %v858 = vand.u32 %v589, 4294901760
          %v859 = vsub.f32 %v589, %v858
          %860 = vmatpush1.msra.mxu0 %v859
          %v861 = vand.u32 %v587, 4294901760
          %v862 = vsub.f32 %v587, %v861
          %863 = vmatprep.subr.mxu0 %v862
          %v864 = vand.u32 %v586, 4294901760
          %v865 = vsub.f32 %v586, %v864
          %866 = vmatpush1.msra.mxu0 %v865
          %867 = vmatprep.subr.mxu0 0.0
          %868 = vmatpush2.msra.mxu0 0.0
          %869 = vmatprep.subr.mxu0 0.0
          %870 = vmatpush2.msra.mxu0 0.0
          %871 = vmatprep.subr.mxu0 0.0
          %872 = vmatpush2.msra.mxu0 0.0
          %873 = vmatprep.subr.mxu0 0.0
          %874 = vmatpush2.msra.mxu0 0.0
          %875 = vmatprep.subr.mxu0 0.0
          %876 = vmatpush2.msra.mxu0 0.0
          %877 = vmatprep.subr.mxu0 0.0
          %878 = vmatpush2.msra.mxu0 0.0
          %879 = vmatprep.subr.mxu0 0.0
          %880 = vmatpush2.msra.mxu0 0.0
          %881 = vmatprep.subr.mxu0 0.0
          %882 = vmatpush2.msra.mxu0 0.0
          %883 = vmatprep.subr.mxu0 0.0
          %884 = vmatpush2.msra.mxu0 0.0
          %885 = vmatprep.subr.mxu0 0.0
          %886 = vmatpush2.msra.mxu0 0.0
          %887 = vmatprep.subr.mxu0 0.0
          %888 = vmatpush2.msra.mxu0 0.0
          %889 = vmatprep.subr.mxu0 0.0
          %890 = vmatpush2.msra.mxu0 0.0
          %891 = vmatprep.subr.mxu0 0.0
          %892 = vmatpush2.msra.mxu0 0.0
          %893 = vmatprep.subr.mxu0 0.0
          %894 = vmatpush2.msra.mxu0 0.0
          %895 = vmatprep.subr.mxu0 0.0
          %896 = vmatpush2.msra.mxu0 0.0
          %897 = vmatprep.subr.mxu0 0.0
          %898 = vmatpush2.msra.mxu0 0.0
          %899 = vmatprep.mubr.f32.mxu0 0.0
          %v900 = vand.u32 %v611, 4294901760
          %v901 = vsub.f32 %v611, %v900
          %902 = vmatmul.mubr.f32.gmra.mxu0 %v901
          %v903 = vpop.f32.mrf.mxu0
          %v904 = vadd.f32 %v809, %v903
          %v905 = vpop.f32.mrf.mxu0
          %v906 = vadd.f32 %v811, %v905
          %907 = vmatprep.mubr.f32.mxu0 0.0
          %v908 = vand.u32 %v614, 4294901760
          %v909 = vsub.f32 %v614, %v908
          %910 = vmatmul.mubr.f32.gmra.mxu0 %v909
          %v911 = vpop.f32.mrf.mxu0
          %v912 = vadd.f32 %v816, %v911
          %v913 = vpop.f32.mrf.mxu0
          %v914 = vadd.f32 %v818, %v913
          %915 = vmatprep.mubr.f32.mxu0 0.0
          %v916 = vand.u32 %v617, 4294901760
          %v917 = vsub.f32 %v617, %v916
          %918 = vmatmul.mubr.f32.gmra.mxu0 %v917
          %v919 = vpop.f32.mrf.mxu0
          %v920 = vadd.f32 %v823, %v919
          %v921 = vpop.f32.mrf.mxu0
          %v922 = vadd.f32 %v825, %v921
          %923 = vdwg.mxu0
          %924 = vmatprep.subr.mxu0 0.0
          %925 = vmatpush1.msra.mxu0 0.0
          %926 = vmatprep.subr.mxu0 0.0
          %927 = vmatpush1.msra.mxu0 0.0
          %928 = vmatprep.subr.mxu0 0.0
          %929 = vmatpush1.msra.mxu0 0.0
          %930 = vmatprep.subr.mxu0 0.0
          %931 = vmatpush1.msra.mxu0 0.0
          %932 = vmatprep.subr.mxu0 0.0
          %933 = vmatpush1.msra.mxu0 0.0
          %934 = vmatprep.subr.mxu0 0.0
          %935 = vmatpush1.msra.mxu0 0.0
          %936 = vmatprep.subr.mxu0 0.0
          %937 = vmatpush1.msra.mxu0 0.0
          %938 = vmatprep.subr.mxu0 0.0
          %939 = vmatpush1.msra.mxu0 0.0
          %940 = vmatprep.subr.mxu0 0.0
          %941 = vmatpush1.msra.mxu0 0.0
          %942 = vmatprep.subr.mxu0 0.0
          %943 = vmatpush1.msra.mxu0 0.0
          %944 = vmatprep.subr.mxu0 0.0
          %945 = vmatpush1.msra.mxu0 0.0
          %946 = vmatprep.subr.mxu0 0.0
          %947 = vmatpush1.msra.mxu0 0.0
          %948 = vmatprep.subr.mxu0 0.0
          %949 = vmatpush1.msra.mxu0 0.0
          %950 = vmatprep.subr.mxu0 0.0
          %951 = vmatpush1.msra.mxu0 0.0
          %v952 = vand.u32 %v590, 4294901760
          %953 = vmatprep.subr.mxu0 %v952
          %v954 = vand.u32 %v589, 4294901760
          %955 = vmatpush1.msra.mxu0 %v954
          %v956 = vand.u32 %v587, 4294901760
          %957 = vmatprep.subr.mxu0 %v956
          %v958 = vand.u32 %v586, 4294901760
          %959 = vmatpush1.msra.mxu0 %v958
          %960 = vmatprep.subr.mxu0 0.0
          %961 = vmatpush2.msra.mxu0 0.0
          %962 = vmatprep.subr.mxu0 0.0
          %963 = vmatpush2.msra.mxu0 0.0
          %964 = vmatprep.subr.mxu0 0.0
          %965 = vmatpush2.msra.mxu0 0.0
          %966 = vmatprep.subr.mxu0 0.0
          %967 = vmatpush2.msra.mxu0 0.0
          %968 = vmatprep.subr.mxu0 0.0
          %969 = vmatpush2.msra.mxu0 0.0
          %970 = vmatprep.subr.mxu0 0.0
          %971 = vmatpush2.msra.mxu0 0.0
          %972 = vmatprep.subr.mxu0 0.0
          %973 = vmatpush2.msra.mxu0 0.0
          %974 = vmatprep.subr.mxu0 0.0
          %975 = vmatpush2.msra.mxu0 0.0
          %976 = vmatprep.subr.mxu0 0.0
          %977 = vmatpush2.msra.mxu0 0.0
          %978 = vmatprep.subr.mxu0 0.0
          %979 = vmatpush2.msra.mxu0 0.0
          %980 = vmatprep.subr.mxu0 0.0
          %981 = vmatpush2.msra.mxu0 0.0
          %982 = vmatprep.subr.mxu0 0.0
          %983 = vmatpush2.msra.mxu0 0.0
          %984 = vmatprep.subr.mxu0 0.0
          %985 = vmatpush2.msra.mxu0 0.0
          %986 = vmatprep.subr.mxu0 0.0
          %987 = vmatpush2.msra.mxu0 0.0
          %988 = vmatprep.subr.mxu0 0.0
          %989 = vmatpush2.msra.mxu0 0.0
          %990 = vmatprep.subr.mxu0 0.0
          %991 = vmatpush2.msra.mxu0 0.0
          %992 = vmatprep.mubr.f32.mxu0 0.0
          %v993 = vand.u32 %v611, 4294901760
          %v994 = vsub.f32 %v611, %v993
          %v995 = vand.u32 %v994, 4294901760
          %996 = vmatmul.mubr.f32.gmra.mxu0 %v995
          %v997 = vpop.f32.mrf.mxu0
          %v998 = vadd.f32 %v904, %v997
          %v999 = vpop.f32.mrf.mxu0
          %v1000 = vadd.f32 %v906, %v999
          %1001 = vmatprep.mubr.f32.mxu0 0.0
          %v1002 = vand.u32 %v614, 4294901760
          %v1003 = vsub.f32 %v614, %v1002
          %v1004 = vand.u32 %v1003, 4294901760
          %1005 = vmatmul.mubr.f32.gmra.mxu0 %v1004
          %v1006 = vpop.f32.mrf.mxu0
          %v1007 = vadd.f32 %v912, %v1006
          %v1008 = vpop.f32.mrf.mxu0
          %v1009 = vadd.f32 %v914, %v1008
          %1010 = vmatprep.mubr.f32.mxu0 0.0
          %v1011 = vand.u32 %v617, 4294901760
          %v1012 = vsub.f32 %v617, %v1011
          %v1013 = vand.u32 %v1012, 4294901760
          %1014 = vmatmul.mubr.f32.gmra.mxu0 %v1013
          %v1015 = vpop.f32.mrf.mxu0
          %v1016 = vadd.f32 %v920, %v1015
          %v1017 = vpop.f32.mrf.mxu0
          %v1018 = vadd.f32 %v922, %v1017
          %1019 = vdwg.mxu0
          %1020 = vmatprep.subr.mxu0 0.0
          %1021 = vmatpush1.msra.mxu0 0.0
          %1022 = vmatprep.subr.mxu0 0.0
          %1023 = vmatpush1.msra.mxu0 0.0
          %1024 = vmatprep.subr.mxu0 0.0
          %1025 = vmatpush1.msra.mxu0 0.0
          %1026 = vmatprep.subr.mxu0 0.0
          %1027 = vmatpush1.msra.mxu0 0.0
          %1028 = vmatprep.subr.mxu0 0.0
          %1029 = vmatpush1.msra.mxu0 0.0
          %1030 = vmatprep.subr.mxu0 0.0
          %1031 = vmatpush1.msra.mxu0 0.0
          %1032 = vmatprep.subr.mxu0 0.0
          %1033 = vmatpush1.msra.mxu0 0.0
          %1034 = vmatprep.subr.mxu0 0.0
          %1035 = vmatpush1.msra.mxu0 0.0
          %1036 = vmatprep.subr.mxu0 0.0
          %1037 = vmatpush1.msra.mxu0 0.0
          %1038 = vmatprep.subr.mxu0 0.0
          %1039 = vmatpush1.msra.mxu0 0.0
          %1040 = vmatprep.subr.mxu0 0.0
          %1041 = vmatpush1.msra.mxu0 0.0
          %1042 = vmatprep.subr.mxu0 0.0
          %1043 = vmatpush1.msra.mxu0 0.0
          %1044 = vmatprep.subr.mxu0 0.0
          %1045 = vmatpush1.msra.mxu0 0.0
          %1046 = vmatprep.subr.mxu0 0.0
          %1047 = vmatpush1.msra.mxu0 0.0
          %v1048 = vand.u32 %v590, 4294901760
          %v1049 = vsub.f32 %v590, %v1048
          %v1050 = vand.u32 %v1049, 4294901760
          %1051 = vmatprep.subr.mxu0 %v1050
          %v1052 = vand.u32 %v589, 4294901760
          %v1053 = vsub.f32 %v589, %v1052
          %v1054 = vand.u32 %v1053, 4294901760
          %1055 = vmatpush1.msra.mxu0 %v1054
          %v1056 = vand.u32 %v587, 4294901760
          %v1057 = vsub.f32 %v587, %v1056
          %v1058 = vand.u32 %v1057, 4294901760
          %1059 = vmatprep.subr.mxu0 %v1058
          %v1060 = vand.u32 %v586, 4294901760
          %v1061 = vsub.f32 %v586, %v1060
          %v1062 = vand.u32 %v1061, 4294901760
          %1063 = vmatpush1.msra.mxu0 %v1062
          %1064 = vmatprep.subr.mxu0 0.0
          %1065 = vmatpush2.msra.mxu0 0.0
          %1066 = vmatprep.subr.mxu0 0.0
          %1067 = vmatpush2.msra.mxu0 0.0
          %1068 = vmatprep.subr.mxu0 0.0
          %1069 = vmatpush2.msra.mxu0 0.0
          %1070 = vmatprep.subr.mxu0 0.0
          %1071 = vmatpush2.msra.mxu0 0.0
          %1072 = vmatprep.subr.mxu0 0.0
          %1073 = vmatpush2.msra.mxu0 0.0
          %1074 = vmatprep.subr.mxu0 0.0
          %1075 = vmatpush2.msra.mxu0 0.0
          %1076 = vmatprep.subr.mxu0 0.0
          %1077 = vmatpush2.msra.mxu0 0.0
          %1078 = vmatprep.subr.mxu0 0.0
          %1079 = vmatpush2.msra.mxu0 0.0
          %1080 = vmatprep.subr.mxu0 0.0
          %1081 = vmatpush2.msra.mxu0 0.0
          %1082 = vmatprep.subr.mxu0 0.0
          %1083 = vmatpush2.msra.mxu0 0.0
          %1084 = vmatprep.subr.mxu0 0.0
          %1085 = vmatpush2.msra.mxu0 0.0
          %1086 = vmatprep.subr.mxu0 0.0
          %1087 = vmatpush2.msra.mxu0 0.0
          %1088 = vmatprep.subr.mxu0 0.0
          %1089 = vmatpush2.msra.mxu0 0.0
          %1090 = vmatprep.subr.mxu0 0.0
          %1091 = vmatpush2.msra.mxu0 0.0
          %1092 = vmatprep.subr.mxu0 0.0
          %1093 = vmatpush2.msra.mxu0 0.0
          %1094 = vmatprep.subr.mxu0 0.0
          %1095 = vmatpush2.msra.mxu0 0.0
          %1096 = vmatprep.mubr.f32.mxu0 0.0
          %v1097 = vand.u32 %v611, 4294901760
          %1098 = vmatmul.mubr.f32.gmra.mxu0 %v1097
          %v1099 = vpop.f32.mrf.mxu0
          %v1100 = vadd.f32 %v998, %v1099
          %v1101 = vpop.f32.mrf.mxu0
          %v1102 = vadd.f32 %v1000, %v1101
          %1103 = vmatprep.mubr.f32.mxu0 0.0
          %v1104 = vand.u32 %v614, 4294901760
          %1105 = vmatmul.mubr.f32.gmra.mxu0 %v1104
          %v1106 = vpop.f32.mrf.mxu0
          %v1107 = vadd.f32 %v1007, %v1106
          %v1108 = vpop.f32.mrf.mxu0
          %v1109 = vadd.f32 %v1009, %v1108
          %1110 = vmatprep.mubr.f32.mxu0 0.0
          %v1111 = vand.u32 %v617, 4294901760
          %1112 = vmatmul.mubr.f32.gmra.mxu0 %v1111
          %v1113 = vpop.f32.mrf.mxu0
          %v1114 = vadd.f32 %v1016, %v1113
          %v1115 = vpop.f32.mrf.mxu0
          %v1116 = vadd.f32 %v1018, %v1115
          %1117 = vdwg.mxu0
          %1118 = vmatprep.subr.mxu0 0.0
          %1119 = vmatpush1.msra.mxu0 0.0
          %1120 = vmatprep.subr.mxu0 0.0
          %1121 = vmatpush1.msra.mxu0 0.0
          %1122 = vmatprep.subr.mxu0 0.0
          %1123 = vmatpush1.msra.mxu0 0.0
          %1124 = vmatprep.subr.mxu0 0.0
          %1125 = vmatpush1.msra.mxu0 0.0
          %1126 = vmatprep.subr.mxu0 0.0
          %1127 = vmatpush1.msra.mxu0 0.0
          %1128 = vmatprep.subr.mxu0 0.0
          %1129 = vmatpush1.msra.mxu0 0.0
          %1130 = vmatprep.subr.mxu0 0.0
          %1131 = vmatpush1.msra.mxu0 0.0
          %1132 = vmatprep.subr.mxu0 0.0
          %1133 = vmatpush1.msra.mxu0 0.0
          %1134 = vmatprep.subr.mxu0 0.0
          %1135 = vmatpush1.msra.mxu0 0.0
          %1136 = vmatprep.subr.mxu0 0.0
          %1137 = vmatpush1.msra.mxu0 0.0
          %1138 = vmatprep.subr.mxu0 0.0
          %1139 = vmatpush1.msra.mxu0 0.0
          %1140 = vmatprep.subr.mxu0 0.0
          %1141 = vmatpush1.msra.mxu0 0.0
          %1142 = vmatprep.subr.mxu0 0.0
          %1143 = vmatpush1.msra.mxu0 0.0
          %1144 = vmatprep.subr.mxu0 0.0
          %1145 = vmatpush1.msra.mxu0 0.0
          %v1146 = vand.u32 %v590, 4294901760
          %1147 = vmatprep.subr.mxu0 %v1146
          %v1148 = vand.u32 %v589, 4294901760
          %1149 = vmatpush1.msra.mxu0 %v1148
          %v1150 = vand.u32 %v587, 4294901760
          %1151 = vmatprep.subr.mxu0 %v1150
          %v1152 = vand.u32 %v586, 4294901760
          %1153 = vmatpush1.msra.mxu0 %v1152
          %1154 = vmatprep.subr.mxu0 0.0
          %1155 = vmatpush2.msra.mxu0 0.0
          %1156 = vmatprep.subr.mxu0 0.0
          %1157 = vmatpush2.msra.mxu0 0.0
          %1158 = vmatprep.subr.mxu0 0.0
          %1159 = vmatpush2.msra.mxu0 0.0
          %1160 = vmatprep.subr.mxu0 0.0
          %1161 = vmatpush2.msra.mxu0 0.0
          %1162 = vmatprep.subr.mxu0 0.0
          %1163 = vmatpush2.msra.mxu0 0.0
          %1164 = vmatprep.subr.mxu0 0.0
          %1165 = vmatpush2.msra.mxu0 0.0
          %1166 = vmatprep.subr.mxu0 0.0
          %1167 = vmatpush2.msra.mxu0 0.0
          %1168 = vmatprep.subr.mxu0 0.0
          %1169 = vmatpush2.msra.mxu0 0.0
          %1170 = vmatprep.subr.mxu0 0.0
          %1171 = vmatpush2.msra.mxu0 0.0
          %1172 = vmatprep.subr.mxu0 0.0
          %1173 = vmatpush2.msra.mxu0 0.0
          %1174 = vmatprep.subr.mxu0 0.0
          %1175 = vmatpush2.msra.mxu0 0.0
          %1176 = vmatprep.subr.mxu0 0.0
          %1177 = vmatpush2.msra.mxu0 0.0
          %1178 = vmatprep.subr.mxu0 0.0
          %1179 = vmatpush2.msra.mxu0 0.0
          %1180 = vmatprep.subr.mxu0 0.0
          %1181 = vmatpush2.msra.mxu0 0.0
          %1182 = vmatprep.subr.mxu0 0.0
          %1183 = vmatpush2.msra.mxu0 0.0
          %1184 = vmatprep.subr.mxu0 0.0
          %1185 = vmatpush2.msra.mxu0 0.0
          %1186 = vmatprep.mubr.f32.mxu0 0.0
          %v1187 = vand.u32 %v611, 4294901760
          %1188 = vmatmul.mubr.f32.gmra.mxu0 %v1187
          %v1189 = vpop.f32.mrf.mxu0
          %v1190 = vadd.f32 %v1100, %v1189
          %v1191 = vpop.f32.mrf.mxu0
          %v1192 = vadd.f32 %v1102, %v1191
          %1193 = vmatprep.mubr.f32.mxu0 0.0
          %v1194 = vand.u32 %v614, 4294901760
          %1195 = vmatmul.mubr.f32.gmra.mxu0 %v1194
          %v1196 = vpop.f32.mrf.mxu0
          %v1197 = vadd.f32 %v1107, %v1196
          %v1198 = vpop.f32.mrf.mxu0
          %v1199 = vadd.f32 %v1109, %v1198
          %1200 = vmatprep.mubr.f32.mxu0 0.0
          %v1201 = vand.u32 %v617, 4294901760
          %1202 = vmatmul.mubr.f32.gmra.mxu0 %v1201
          %v1203 = vpop.f32.mrf.mxu0
          %v1204 = vadd.f32 %v1114, %v1203
          %v1205 = vpop.f32.mrf.mxu0
          %v1206 = vadd.f32 %v1116, %v1205
          %1207 = vdwg.mxu0
          %1208 = vmatprep.subr.mxu0 0.0
          %1209 = vmatpush1.msra.mxu0 0.0
          %1210 = vmatprep.subr.mxu0 0.0
          %1211 = vmatpush1.msra.mxu0 0.0
          %1212 = vmatprep.subr.mxu0 0.0
          %1213 = vmatpush1.msra.mxu0 0.0
          %1214 = vmatprep.subr.mxu0 0.0
          %1215 = vmatpush1.msra.mxu0 0.0
          %1216 = vmatprep.subr.mxu0 0.0
          %1217 = vmatpush1.msra.mxu0 0.0
          %1218 = vmatprep.subr.mxu0 0.0
          %1219 = vmatpush1.msra.mxu0 0.0
          %1220 = vmatprep.subr.mxu0 0.0
          %1221 = vmatpush1.msra.mxu0 0.0
          %1222 = vmatprep.subr.mxu0 0.0
          %1223 = vmatpush1.msra.mxu0 0.0
          %1224 = vmatprep.subr.mxu0 0.0
          %1225 = vmatpush1.msra.mxu0 0.0
          %1226 = vmatprep.subr.mxu0 0.0
          %1227 = vmatpush1.msra.mxu0 0.0
          %1228 = vmatprep.subr.mxu0 0.0
          %1229 = vmatpush1.msra.mxu0 0.0
          %1230 = vmatprep.subr.mxu0 0.0
          %1231 = vmatpush1.msra.mxu0 0.0
          %1232 = vmatprep.subr.mxu0 0.0
          %1233 = vmatpush1.msra.mxu0 0.0
          %1234 = vmatprep.subr.mxu0 0.0
          %1235 = vmatpush1.msra.mxu0 0.0
          %1236 = vmatprep.subr.mxu0 0.0
          %v1237 = vand.u32 %v591, 4294901760
          %1238 = vmatpush1.msra.mxu0 %v1237
          %1239 = vmatprep.subr.mxu0 0.0
          %v1240 = vand.u32 %v588, 4294901760
          %1241 = vmatpush1.msra.mxu0 %v1240
          %1242 = vmatprep.subr.mxu0 0.0
          %1243 = vmatpush2.msra.mxu0 0.0
          %1244 = vmatprep.subr.mxu0 0.0
          %1245 = vmatpush2.msra.mxu0 0.0
          %1246 = vmatprep.subr.mxu0 0.0
          %1247 = vmatpush2.msra.mxu0 0.0
          %1248 = vmatprep.subr.mxu0 0.0
          %1249 = vmatpush2.msra.mxu0 0.0
          %1250 = vmatprep.subr.mxu0 0.0
          %1251 = vmatpush2.msra.mxu0 0.0
          %1252 = vmatprep.subr.mxu0 0.0
          %1253 = vmatpush2.msra.mxu0 0.0
          %1254 = vmatprep.subr.mxu0 0.0
          %1255 = vmatpush2.msra.mxu0 0.0
          %1256 = vmatprep.subr.mxu0 0.0
          %1257 = vmatpush2.msra.mxu0 0.0
          %1258 = vmatprep.subr.mxu0 0.0
          %1259 = vmatpush2.msra.mxu0 0.0
          %1260 = vmatprep.subr.mxu0 0.0
          %1261 = vmatpush2.msra.mxu0 0.0
          %1262 = vmatprep.subr.mxu0 0.0
          %1263 = vmatpush2.msra.mxu0 0.0
          %1264 = vmatprep.subr.mxu0 0.0
          %1265 = vmatpush2.msra.mxu0 0.0
          %1266 = vmatprep.subr.mxu0 0.0
          %1267 = vmatpush2.msra.mxu0 0.0
          %1268 = vmatprep.subr.mxu0 0.0
          %1269 = vmatpush2.msra.mxu0 0.0
          %1270 = vmatprep.subr.mxu0 0.0
          %1271 = vmatpush2.msra.mxu0 0.0
          %1272 = vmatprep.subr.mxu0 0.0
          %1273 = vmatpush2.msra.mxu0 0.0
          %1274 = vmatprep.mubr.f32.mxu0 0.0
          %v1275 = vand.u32 %v611, 4294901760
          %v1276 = vsub.f32 %v611, %v1275
          %v1277 = vand.u32 %v1276, 4294901760
          %v1278 = vsub.f32 %v1276, %v1277
          %v1279 = vand.u32 %v1278, 4294901760
          %1280 = vmatmul.mubr.f32.gmra.mxu0 %v1279
          %v1281 = vpop.f32.mrf.mxu0
          %v1282 = vadd.f32 %v605, %v1281
          %v1283 = vpop.f32.mrf.mxu0
          %1284 = vmatprep.mubr.f32.mxu0 0.0
          %v1285 = vand.u32 %v614, 4294901760
          %v1286 = vsub.f32 %v614, %v1285
          %v1287 = vand.u32 %v1286, 4294901760
          %v1288 = vsub.f32 %v1286, %v1287
          %v1289 = vand.u32 %v1288, 4294901760
          %1290 = vmatmul.mubr.f32.gmra.mxu0 %v1289
          %v1291 = vpop.f32.mrf.mxu0
          %v1292 = vadd.f32 %v605, %v1291
          %v1293 = vpop.f32.mrf.mxu0
          %1294 = vmatprep.mubr.f32.mxu0 0.0
          %v1295 = vand.u32 %v617, 4294901760
          %v1296 = vsub.f32 %v617, %v1295
          %v1297 = vand.u32 %v1296, 4294901760
          %v1298 = vsub.f32 %v1296, %v1297
          %v1299 = vand.u32 %v1298, 4294901760
          %1300 = vmatmul.mubr.f32.gmra.mxu0 %v1299
          %v1301 = vpop.f32.mrf.mxu0
          %v1302 = vadd.f32 %v605, %v1301
          %v1303 = vpop.f32.mrf.mxu0
          %1304 = vdwg.mxu0
          %1305 = vmatprep.subr.mxu0 0.0
          %1306 = vmatpush1.msra.mxu0 0.0
          %1307 = vmatprep.subr.mxu0 0.0
          %1308 = vmatpush1.msra.mxu0 0.0
          %1309 = vmatprep.subr.mxu0 0.0
          %1310 = vmatpush1.msra.mxu0 0.0
          %1311 = vmatprep.subr.mxu0 0.0
          %1312 = vmatpush1.msra.mxu0 0.0
          %1313 = vmatprep.subr.mxu0 0.0
          %1314 = vmatpush1.msra.mxu0 0.0
          %1315 = vmatprep.subr.mxu0 0.0
          %1316 = vmatpush1.msra.mxu0 0.0
          %1317 = vmatprep.subr.mxu0 0.0
          %1318 = vmatpush1.msra.mxu0 0.0
          %1319 = vmatprep.subr.mxu0 0.0
          %1320 = vmatpush1.msra.mxu0 0.0
          %1321 = vmatprep.subr.mxu0 0.0
          %1322 = vmatpush1.msra.mxu0 0.0
          %1323 = vmatprep.subr.mxu0 0.0
          %1324 = vmatpush1.msra.mxu0 0.0
          %1325 = vmatprep.subr.mxu0 0.0
          %1326 = vmatpush1.msra.mxu0 0.0
          %1327 = vmatprep.subr.mxu0 0.0
          %1328 = vmatpush1.msra.mxu0 0.0
          %1329 = vmatprep.subr.mxu0 0.0
          %1330 = vmatpush1.msra.mxu0 0.0
          %1331 = vmatprep.subr.mxu0 0.0
          %1332 = vmatpush1.msra.mxu0 0.0
          %1333 = vmatprep.subr.mxu0 0.0
          %v1334 = vand.u32 %v591, 4294901760
          %v1335 = vsub.f32 %v591, %v1334
          %v1336 = vand.u32 %v1335, 4294901760
          %v1337 = vsub.f32 %v1335, %v1336
          %v1338 = vand.u32 %v1337, 4294901760
          %1339 = vmatpush1.msra.mxu0 %v1338
          %1340 = vmatprep.subr.mxu0 0.0
          %v1341 = vand.u32 %v588, 4294901760
          %v1342 = vsub.f32 %v588, %v1341
          %v1343 = vand.u32 %v1342, 4294901760
          %v1344 = vsub.f32 %v1342, %v1343
          %v1345 = vand.u32 %v1344, 4294901760
          %1346 = vmatpush1.msra.mxu0 %v1345
          %1347 = vmatprep.subr.mxu0 0.0
          %1348 = vmatpush2.msra.mxu0 0.0
          %1349 = vmatprep.subr.mxu0 0.0
          %1350 = vmatpush2.msra.mxu0 0.0
          %1351 = vmatprep.subr.mxu0 0.0
          %1352 = vmatpush2.msra.mxu0 0.0
          %1353 = vmatprep.subr.mxu0 0.0
          %1354 = vmatpush2.msra.mxu0 0.0
          %1355 = vmatprep.subr.mxu0 0.0
          %1356 = vmatpush2.msra.mxu0 0.0
          %1357 = vmatprep.subr.mxu0 0.0
          %1358 = vmatpush2.msra.mxu0 0.0
          %1359 = vmatprep.subr.mxu0 0.0
          %1360 = vmatpush2.msra.mxu0 0.0
          %1361 = vmatprep.subr.mxu0 0.0
          %1362 = vmatpush2.msra.mxu0 0.0
          %1363 = vmatprep.subr.mxu0 0.0
          %1364 = vmatpush2.msra.mxu0 0.0
          %1365 = vmatprep.subr.mxu0 0.0
          %1366 = vmatpush2.msra.mxu0 0.0
          %1367 = vmatprep.subr.mxu0 0.0
          %1368 = vmatpush2.msra.mxu0 0.0
          %1369 = vmatprep.subr.mxu0 0.0
          %1370 = vmatpush2.msra.mxu0 0.0
          %1371 = vmatprep.subr.mxu0 0.0
          %1372 = vmatpush2.msra.mxu0 0.0
          %1373 = vmatprep.subr.mxu0 0.0
          %1374 = vmatpush2.msra.mxu0 0.0
          %1375 = vmatprep.subr.mxu0 0.0
          %1376 = vmatpush2.msra.mxu0 0.0
          %1377 = vmatprep.subr.mxu0 0.0
          %1378 = vmatpush2.msra.mxu0 0.0
          %1379 = vmatprep.mubr.f32.mxu0 0.0
          %v1380 = vand.u32 %v611, 4294901760
          %1381 = vmatmul.mubr.f32.gmra.mxu0 %v1380
          %v1382 = vpop.f32.mrf.mxu0
          %v1383 = vadd.f32 %v1282, %v1382
          %v1384 = vpop.f32.mrf.mxu0
          %1385 = vmatprep.mubr.f32.mxu0 0.0
          %v1386 = vand.u32 %v614, 4294901760
          %1387 = vmatmul.mubr.f32.gmra.mxu0 %v1386
          %v1388 = vpop.f32.mrf.mxu0
          %v1389 = vadd.f32 %v1292, %v1388
          %v1390 = vpop.f32.mrf.mxu0
          %1391 = vmatprep.mubr.f32.mxu0 0.0
          %v1392 = vand.u32 %v617, 4294901760
          %1393 = vmatmul.mubr.f32.gmra.mxu0 %v1392
          %v1394 = vpop.f32.mrf.mxu0
          %v1395 = vadd.f32 %v1302, %v1394
          %v1396 = vpop.f32.mrf.mxu0
          %1397 = vdwg.mxu0
          %1398 = vmatprep.subr.mxu0 0.0
          %1399 = vmatpush1.msra.mxu0 0.0
          %1400 = vmatprep.subr.mxu0 0.0
          %1401 = vmatpush1.msra.mxu0 0.0
          %1402 = vmatprep.subr.mxu0 0.0
          %1403 = vmatpush1.msra.mxu0 0.0
          %1404 = vmatprep.subr.mxu0 0.0
          %1405 = vmatpush1.msra.mxu0 0.0
          %1406 = vmatprep.subr.mxu0 0.0
          %1407 = vmatpush1.msra.mxu0 0.0
          %1408 = vmatprep.subr.mxu0 0.0
          %1409 = vmatpush1.msra.mxu0 0.0
          %1410 = vmatprep.subr.mxu0 0.0
          %1411 = vmatpush1.msra.mxu0 0.0
          %1412 = vmatprep.subr.mxu0 0.0
          %1413 = vmatpush1.msra.mxu0 0.0
          %1414 = vmatprep.subr.mxu0 0.0
          %1415 = vmatpush1.msra.mxu0 0.0
          %1416 = vmatprep.subr.mxu0 0.0
          %1417 = vmatpush1.msra.mxu0 0.0
          %1418 = vmatprep.subr.mxu0 0.0
          %1419 = vmatpush1.msra.mxu0 0.0
          %1420 = vmatprep.subr.mxu0 0.0
          %1421 = vmatpush1.msra.mxu0 0.0
          %1422 = vmatprep.subr.mxu0 0.0
          %1423 = vmatpush1.msra.mxu0 0.0
          %1424 = vmatprep.subr.mxu0 0.0
          %1425 = vmatpush1.msra.mxu0 0.0
          %1426 = vmatprep.subr.mxu0 0.0
          %v1427 = vand.u32 %v591, 4294901760
          %v1428 = vsub.f32 %v591, %v1427
          %1429 = vmatpush1.msra.mxu0 %v1428
          %1430 = vmatprep.subr.mxu0 0.0
          %v1431 = vand.u32 %v588, 4294901760
          %v1432 = vsub.f32 %v588, %v1431
          %1433 = vmatpush1.msra.mxu0 %v1432
          %1434 = vmatprep.subr.mxu0 0.0
          %1435 = vmatpush2.msra.mxu0 0.0
          %1436 = vmatprep.subr.mxu0 0.0
          %1437 = vmatpush2.msra.mxu0 0.0
          %1438 = vmatprep.subr.mxu0 0.0
          %1439 = vmatpush2.msra.mxu0 0.0
          %1440 = vmatprep.subr.mxu0 0.0
          %1441 = vmatpush2.msra.mxu0 0.0
          %1442 = vmatprep.subr.mxu0 0.0
          %1443 = vmatpush2.msra.mxu0 0.0
          %1444 = vmatprep.subr.mxu0 0.0
          %1445 = vmatpush2.msra.mxu0 0.0
          %1446 = vmatprep.subr.mxu0 0.0
          %1447 = vmatpush2.msra.mxu0 0.0
          %1448 = vmatprep.subr.mxu0 0.0
          %1449 = vmatpush2.msra.mxu0 0.0
          %1450 = vmatprep.subr.mxu0 0.0
          %1451 = vmatpush2.msra.mxu0 0.0
          %1452 = vmatprep.subr.mxu0 0.0
          %1453 = vmatpush2.msra.mxu0 0.0
          %1454 = vmatprep.subr.mxu0 0.0
          %1455 = vmatpush2.msra.mxu0 0.0
          %1456 = vmatprep.subr.mxu0 0.0
          %1457 = vmatpush2.msra.mxu0 0.0
          %1458 = vmatprep.subr.mxu0 0.0
          %1459 = vmatpush2.msra.mxu0 0.0
          %1460 = vmatprep.subr.mxu0 0.0
          %1461 = vmatpush2.msra.mxu0 0.0
          %1462 = vmatprep.subr.mxu0 0.0
          %1463 = vmatpush2.msra.mxu0 0.0
          %1464 = vmatprep.subr.mxu0 0.0
          %1465 = vmatpush2.msra.mxu0 0.0
          %1466 = vmatprep.mubr.f32.mxu0 0.0
          %v1467 = vand.u32 %v611, 4294901760
          %v1468 = vsub.f32 %v611, %v1467
          %1469 = vmatmul.mubr.f32.gmra.mxu0 %v1468
          %v1470 = vpop.f32.mrf.mxu0
          %v1471 = vadd.f32 %v1383, %v1470
          %v1472 = vpop.f32.mrf.mxu0
          %1473 = vmatprep.mubr.f32.mxu0 0.0
          %v1474 = vand.u32 %v614, 4294901760
          %v1475 = vsub.f32 %v614, %v1474
          %1476 = vmatmul.mubr.f32.gmra.mxu0 %v1475
          %v1477 = vpop.f32.mrf.mxu0
          %v1478 = vadd.f32 %v1389, %v1477
          %v1479 = vpop.f32.mrf.mxu0
          %1480 = vmatprep.mubr.f32.mxu0 0.0
          %v1481 = vand.u32 %v617, 4294901760
          %v1482 = vsub.f32 %v617, %v1481
          %1483 = vmatmul.mubr.f32.gmra.mxu0 %v1482
          %v1484 = vpop.f32.mrf.mxu0
          %v1485 = vadd.f32 %v1395, %v1484
          %v1486 = vpop.f32.mrf.mxu0
          %1487 = vdwg.mxu0
          %1488 = vmatprep.subr.mxu0 0.0
          %1489 = vmatpush1.msra.mxu0 0.0
          %1490 = vmatprep.subr.mxu0 0.0
          %1491 = vmatpush1.msra.mxu0 0.0
          %1492 = vmatprep.subr.mxu0 0.0
          %1493 = vmatpush1.msra.mxu0 0.0
          %1494 = vmatprep.subr.mxu0 0.0
          %1495 = vmatpush1.msra.mxu0 0.0
          %1496 = vmatprep.subr.mxu0 0.0
          %1497 = vmatpush1.msra.mxu0 0.0
          %1498 = vmatprep.subr.mxu0 0.0
          %1499 = vmatpush1.msra.mxu0 0.0
          %1500 = vmatprep.subr.mxu0 0.0
          %1501 = vmatpush1.msra.mxu0 0.0
          %1502 = vmatprep.subr.mxu0 0.0
          %1503 = vmatpush1.msra.mxu0 0.0
          %1504 = vmatprep.subr.mxu0 0.0
          %1505 = vmatpush1.msra.mxu0 0.0
          %1506 = vmatprep.subr.mxu0 0.0
          %1507 = vmatpush1.msra.mxu0 0.0
          %1508 = vmatprep.subr.mxu0 0.0
          %1509 = vmatpush1.msra.mxu0 0.0
          %1510 = vmatprep.subr.mxu0 0.0
          %1511 = vmatpush1.msra.mxu0 0.0
          %1512 = vmatprep.subr.mxu0 0.0
          %1513 = vmatpush1.msra.mxu0 0.0
          %1514 = vmatprep.subr.mxu0 0.0
          %1515 = vmatpush1.msra.mxu0 0.0
          %1516 = vmatprep.subr.mxu0 0.0
          %v1517 = vand.u32 %v591, 4294901760
          %1518 = vmatpush1.msra.mxu0 %v1517
          %1519 = vmatprep.subr.mxu0 0.0
          %v1520 = vand.u32 %v588, 4294901760
          %1521 = vmatpush1.msra.mxu0 %v1520
          %1522 = vmatprep.subr.mxu0 0.0
          %1523 = vmatpush2.msra.mxu0 0.0
          %1524 = vmatprep.subr.mxu0 0.0
          %1525 = vmatpush2.msra.mxu0 0.0
          %1526 = vmatprep.subr.mxu0 0.0
          %1527 = vmatpush2.msra.mxu0 0.0
          %1528 = vmatprep.subr.mxu0 0.0
          %1529 = vmatpush2.msra.mxu0 0.0
          %1530 = vmatprep.subr.mxu0 0.0
          %1531 = vmatpush2.msra.mxu0 0.0
          %1532 = vmatprep.subr.mxu0 0.0
          %1533 = vmatpush2.msra.mxu0 0.0
          %1534 = vmatprep.subr.mxu0 0.0
          %1535 = vmatpush2.msra.mxu0 0.0
          %1536 = vmatprep.subr.mxu0 0.0
          %1537 = vmatpush2.msra.mxu0 0.0
          %1538 = vmatprep.subr.mxu0 0.0
          %1539 = vmatpush2.msra.mxu0 0.0
          %1540 = vmatprep.subr.mxu0 0.0
          %1541 = vmatpush2.msra.mxu0 0.0
          %1542 = vmatprep.subr.mxu0 0.0
          %1543 = vmatpush2.msra.mxu0 0.0
          %1544 = vmatprep.subr.mxu0 0.0
          %1545 = vmatpush2.msra.mxu0 0.0
          %1546 = vmatprep.subr.mxu0 0.0
          %1547 = vmatpush2.msra.mxu0 0.0
          %1548 = vmatprep.subr.mxu0 0.0
          %1549 = vmatpush2.msra.mxu0 0.0
          %1550 = vmatprep.subr.mxu0 0.0
          %1551 = vmatpush2.msra.mxu0 0.0
          %1552 = vmatprep.subr.mxu0 0.0
          %1553 = vmatpush2.msra.mxu0 0.0
          %1554 = vmatprep.mubr.f32.mxu0 0.0
          %v1555 = vand.u32 %v611, 4294901760
          %v1556 = vsub.f32 %v611, %v1555
          %v1557 = vand.u32 %v1556, 4294901760
          %1558 = vmatmul.mubr.f32.gmra.mxu0 %v1557
          %v1559 = vpop.f32.mrf.mxu0
          %v1560 = vadd.f32 %v1471, %v1559
          %v1561 = vpop.f32.mrf.mxu0
          %1562 = vmatprep.mubr.f32.mxu0 0.0
          %v1563 = vand.u32 %v614, 4294901760
          %v1564 = vsub.f32 %v614, %v1563
          %v1565 = vand.u32 %v1564, 4294901760
          %1566 = vmatmul.mubr.f32.gmra.mxu0 %v1565
          %v1567 = vpop.f32.mrf.mxu0
          %v1568 = vadd.f32 %v1478, %v1567
          %v1569 = vpop.f32.mrf.mxu0
          %1570 = vmatprep.mubr.f32.mxu0 0.0
          %v1571 = vand.u32 %v617, 4294901760
          %v1572 = vsub.f32 %v617, %v1571
          %v1573 = vand.u32 %v1572, 4294901760
          %1574 = vmatmul.mubr.f32.gmra.mxu0 %v1573
          %v1575 = vpop.f32.mrf.mxu0
          %v1576 = vadd.f32 %v1485, %v1575
          %v1577 = vpop.f32.mrf.mxu0
          %1578 = vdwg.mxu0
          %1579 = vmatprep.subr.mxu0 0.0
          %1580 = vmatpush1.msra.mxu0 0.0
          %1581 = vmatprep.subr.mxu0 0.0
          %1582 = vmatpush1.msra.mxu0 0.0
          %1583 = vmatprep.subr.mxu0 0.0
          %1584 = vmatpush1.msra.mxu0 0.0
          %1585 = vmatprep.subr.mxu0 0.0
          %1586 = vmatpush1.msra.mxu0 0.0
          %1587 = vmatprep.subr.mxu0 0.0
          %1588 = vmatpush1.msra.mxu0 0.0
          %1589 = vmatprep.subr.mxu0 0.0
          %1590 = vmatpush1.msra.mxu0 0.0
          %1591 = vmatprep.subr.mxu0 0.0
          %1592 = vmatpush1.msra.mxu0 0.0
          %1593 = vmatprep.subr.mxu0 0.0
          %1594 = vmatpush1.msra.mxu0 0.0
          %1595 = vmatprep.subr.mxu0 0.0
          %1596 = vmatpush1.msra.mxu0 0.0
          %1597 = vmatprep.subr.mxu0 0.0
          %1598 = vmatpush1.msra.mxu0 0.0
          %1599 = vmatprep.subr.mxu0 0.0
          %1600 = vmatpush1.msra.mxu0 0.0
          %1601 = vmatprep.subr.mxu0 0.0
          %1602 = vmatpush1.msra.mxu0 0.0
          %1603 = vmatprep.subr.mxu0 0.0
          %1604 = vmatpush1.msra.mxu0 0.0
          %1605 = vmatprep.subr.mxu0 0.0
          %1606 = vmatpush1.msra.mxu0 0.0
          %1607 = vmatprep.subr.mxu0 0.0
          %v1608 = vand.u32 %v591, 4294901760
          %v1609 = vsub.f32 %v591, %v1608
          %v1610 = vand.u32 %v1609, 4294901760
          %1611 = vmatpush1.msra.mxu0 %v1610
          %1612 = vmatprep.subr.mxu0 0.0
          %v1613 = vand.u32 %v588, 4294901760
          %v1614 = vsub.f32 %v588, %v1613
          %v1615 = vand.u32 %v1614, 4294901760
          %1616 = vmatpush1.msra.mxu0 %v1615
          %1617 = vmatprep.subr.mxu0 0.0
          %1618 = vmatpush2.msra.mxu0 0.0
          %1619 = vmatprep.subr.mxu0 0.0
          %1620 = vmatpush2.msra.mxu0 0.0
          %1621 = vmatprep.subr.mxu0 0.0
          %1622 = vmatpush2.msra.mxu0 0.0
          %1623 = vmatprep.subr.mxu0 0.0
          %1624 = vmatpush2.msra.mxu0 0.0
          %1625 = vmatprep.subr.mxu0 0.0
          %1626 = vmatpush2.msra.mxu0 0.0
          %1627 = vmatprep.subr.mxu0 0.0
          %1628 = vmatpush2.msra.mxu0 0.0
          %1629 = vmatprep.subr.mxu0 0.0
          %1630 = vmatpush2.msra.mxu0 0.0
          %1631 = vmatprep.subr.mxu0 0.0
          %1632 = vmatpush2.msra.mxu0 0.0
          %1633 = vmatprep.subr.mxu0 0.0
          %1634 = vmatpush2.msra.mxu0 0.0
          %1635 = vmatprep.subr.mxu0 0.0
          %1636 = vmatpush2.msra.mxu0 0.0
          %1637 = vmatprep.subr.mxu0 0.0
          %1638 = vmatpush2.msra.mxu0 0.0
          %1639 = vmatprep.subr.mxu0 0.0
          %1640 = vmatpush2.msra.mxu0 0.0
          %1641 = vmatprep.subr.mxu0 0.0
          %1642 = vmatpush2.msra.mxu0 0.0
          %1643 = vmatprep.subr.mxu0 0.0
          %1644 = vmatpush2.msra.mxu0 0.0
          %1645 = vmatprep.subr.mxu0 0.0
          %1646 = vmatpush2.msra.mxu0 0.0
          %1647 = vmatprep.subr.mxu0 0.0
          %1648 = vmatpush2.msra.mxu0 0.0
          %1649 = vmatprep.mubr.f32.mxu0 0.0
          %v1650 = vand.u32 %v611, 4294901760
          %1651 = vmatmul.mubr.f32.gmra.mxu0 %v1650
          %v1652 = vpop.f32.mrf.mxu0
          %v1653 = vadd.f32 %v1560, %v1652
          %v1654 = vpop.f32.mrf.mxu0
          %1655 = vmatprep.mubr.f32.mxu0 0.0
          %v1656 = vand.u32 %v614, 4294901760
          %1657 = vmatmul.mubr.f32.gmra.mxu0 %v1656
          %v1658 = vpop.f32.mrf.mxu0
          %v1659 = vadd.f32 %v1568, %v1658
          %v1660 = vpop.f32.mrf.mxu0
          %1661 = vmatprep.mubr.f32.mxu0 0.0
          %v1662 = vand.u32 %v617, 4294901760
          %1663 = vmatmul.mubr.f32.gmra.mxu0 %v1662
          %v1664 = vpop.f32.mrf.mxu0
          %v1665 = vadd.f32 %v1576, %v1664
          %v1666 = vpop.f32.mrf.mxu0
          %1667 = vdwg.mxu0
          %1668 = vmatprep.subr.mxu0 0.0
          %1669 = vmatpush1.msra.mxu0 0.0
          %1670 = vmatprep.subr.mxu0 0.0
          %1671 = vmatpush1.msra.mxu0 0.0
          %1672 = vmatprep.subr.mxu0 0.0
          %1673 = vmatpush1.msra.mxu0 0.0
          %1674 = vmatprep.subr.mxu0 0.0
          %1675 = vmatpush1.msra.mxu0 0.0
          %1676 = vmatprep.subr.mxu0 0.0
          %1677 = vmatpush1.msra.mxu0 0.0
          %1678 = vmatprep.subr.mxu0 0.0
          %1679 = vmatpush1.msra.mxu0 0.0
          %1680 = vmatprep.subr.mxu0 0.0
          %1681 = vmatpush1.msra.mxu0 0.0
          %1682 = vmatprep.subr.mxu0 0.0
          %1683 = vmatpush1.msra.mxu0 0.0
          %1684 = vmatprep.subr.mxu0 0.0
          %1685 = vmatpush1.msra.mxu0 0.0
          %1686 = vmatprep.subr.mxu0 0.0
          %1687 = vmatpush1.msra.mxu0 0.0
          %1688 = vmatprep.subr.mxu0 0.0
          %1689 = vmatpush1.msra.mxu0 0.0
          %1690 = vmatprep.subr.mxu0 0.0
          %1691 = vmatpush1.msra.mxu0 0.0
          %1692 = vmatprep.subr.mxu0 0.0
          %1693 = vmatpush1.msra.mxu0 0.0
          %1694 = vmatprep.subr.mxu0 0.0
          %1695 = vmatpush1.msra.mxu0 0.0
          %1696 = vmatprep.subr.mxu0 0.0
          %v1697 = vand.u32 %v591, 4294901760
          %1698 = vmatpush1.msra.mxu0 %v1697
          %1699 = vmatprep.subr.mxu0 0.0
          %v1700 = vand.u32 %v588, 4294901760
          %1701 = vmatpush1.msra.mxu0 %v1700
          %1702 = vmatprep.subr.mxu0 0.0
          %1703 = vmatpush2.msra.mxu0 0.0
          %1704 = vmatprep.subr.mxu0 0.0
          %1705 = vmatpush2.msra.mxu0 0.0
          %1706 = vmatprep.subr.mxu0 0.0
          %1707 = vmatpush2.msra.mxu0 0.0
          %1708 = vmatprep.subr.mxu0 0.0
          %1709 = vmatpush2.msra.mxu0 0.0
          %1710 = vmatprep.subr.mxu0 0.0
          %1711 = vmatpush2.msra.mxu0 0.0
          %1712 = vmatprep.subr.mxu0 0.0
          %1713 = vmatpush2.msra.mxu0 0.0
          %1714 = vmatprep.subr.mxu0 0.0
          %1715 = vmatpush2.msra.mxu0 0.0
          %1716 = vmatprep.subr.mxu0 0.0
          %1717 = vmatpush2.msra.mxu0 0.0
          %1718 = vmatprep.subr.mxu0 0.0
          %1719 = vmatpush2.msra.mxu0 0.0
          %1720 = vmatprep.subr.mxu0 0.0
          %1721 = vmatpush2.msra.mxu0 0.0
          %1722 = vmatprep.subr.mxu0 0.0
          %1723 = vmatpush2.msra.mxu0 0.0
          %1724 = vmatprep.subr.mxu0 0.0
          %1725 = vmatpush2.msra.mxu0 0.0
          %1726 = vmatprep.subr.mxu0 0.0
          %1727 = vmatpush2.msra.mxu0 0.0
          %1728 = vmatprep.subr.mxu0 0.0
          %1729 = vmatpush2.msra.mxu0 0.0
          %1730 = vmatprep.subr.mxu0 0.0
          %1731 = vmatpush2.msra.mxu0 0.0
          %1732 = vmatprep.subr.mxu0 0.0
          %1733 = vmatpush2.msra.mxu0 0.0
          %1734 = vmatprep.mubr.f32.mxu0 0.0
          %v1735 = vand.u32 %v611, 4294901760
          %1736 = vmatmul.mubr.f32.gmra.mxu0 %v1735
          %v1737 = vpop.f32.mrf.mxu0
          %v1738 = vadd.f32 %v1653, %v1737
          %v1739 = vpop.f32.mrf.mxu0
          %1740 = vmatprep.mubr.f32.mxu0 0.0
          %v1741 = vand.u32 %v614, 4294901760
          %1742 = vmatmul.mubr.f32.gmra.mxu0 %v1741
          %v1743 = vpop.f32.mrf.mxu0
          %v1744 = vadd.f32 %v1659, %v1743
          %v1745 = vpop.f32.mrf.mxu0
          %1746 = vmatprep.mubr.f32.mxu0 0.0
          %v1747 = vand.u32 %v617, 4294901760
          %1748 = vmatmul.mubr.f32.gmra.mxu0 %v1747
          %v1749 = vpop.f32.mrf.mxu0
          %v1750 = vadd.f32 %v1665, %v1749
          %v1751 = vpop.f32.mrf.mxu0
          %1752 = vdwg.mxu0
          %1753 = vst [vmem:[#allocation2] sm:$0xff] %v1190
          %1754 = vst [vmem:[#allocation2 + $0x8] sm:$0xff] %v1192
          %1755 = vst [vmem:[#allocation2 + $0x10] sm:$0xff] %v1197
          %1756 = vst [vmem:[#allocation2 + $0x18] sm:$0xff] %v1199
          %1757 = vst [vmem:[#allocation2 + $0x20] sm:$0xff] %v1204
          %1758 = vst [vmem:[#allocation2 + $0x28] sm:$0xff] %v1206
          %v1759 = vpack.c.bf16 %v1744, %v1738
          %v1760 = vpack.c.bf16 %v1750, %v1750
          %v1763 = vunpack.c.l.b16 %v1759
          %v1764 = vunpack.c.h.b16 %v1759
          %v1765 = vunpack.c.l.b16 %v1760
          %v1766 = vpack.c.b16 %v1763, %v1763
          %v1767 = vpack.c.b16 %v1764, %v1764
          %v1768 = vpack.c.b16 %v1765, %v1765
          %1772 = vst [vmem:[#allocation3] sm:$0xf] %v1766
          %1773 = vst [vmem:[#allocation3 + $0x4] sm:$0xf] %v1767
          %1774 = vst [vmem:[#allocation3 + $0x8] sm:$0xf] %v1768
          %1775 = vst [vmem:[#allocation4] sm:$0xff] 0.0
          %1776 = vst [vmem:[#allocation4 + $0x8] sm:$0xff] 0.0
          %1777 = vst [vmem:[#allocation4 + $0x10] sm:$0xff] 0.0
          %1778 = vst [vmem:[#allocation6] sm:$0xff] 0.0
          %1779 = vst [vmem:[#allocation6 + $0x8] sm:$0xff] 0.0
          %1780 = vst [vmem:[#allocation6 + $0x10] sm:$0xff] 0.0
        $region68: #{tpu_custom_call.1} parent=63 // pred_fallthru
          _
        %v1781 = vld [vmem:[%s544] sm:$0xff]
        %v1782 = vld [vmem:[%s544 + $0x8] sm:$0xff]
        %v1783 = vld [vmem:[%s544 + $0x10] sm:$0xff]
        %v1784 = vld [vmem:[%s544 + $0x18] sm:$0xff]
        %v1785 = vld [vmem:[%s544 + $0x20] sm:$0xff]
        %v1786 = vld [vmem:[%s544 + $0x28] sm:$0xff]
        %v1787 = vld [vmem:[%s544 + $0x30] sm:$0xff]
        %v1788 = vld [vmem:[%s544 + $0x38] sm:$0xff]
        %v1789 = vld [vmem:[%s544 + $0x40] sm:$0xff]
        %v1790 = vld [vmem:[%s544 + $0x48] sm:$0xff]
        %v1791 = vld [vmem:[%s544 + $0x50] sm:$0xff]
        %v1792 = vld [vmem:[%s544 + $0x58] sm:$0xff]
        %v1793 = vld [vmem:[%s544 + $0x60] sm:$0xff]
        %v1794 = vld [vmem:[%s544 + $0x68] sm:$0xff]
        %v1795 = vld [vmem:[%s544 + $0x70] sm:$0xff]
        %v1796 = vld [vmem:[%s544 + $0x78] sm:$0xff]
        %v1797 = vld [vmem:[%s7] sm:$0xff]
        %v1798 = vld [vmem:[%s7 + $0x8] sm:$0xff]
        %v1799 = vld [vmem:[%s8] sm:$0x1]
        %v1801 = vlaneseq
        %v1802 = vshrl.u32 %v1801, 7
        %v1803 = vsub.s32 0, %v1802
        %v1804 = vrot.slane %v1799, %v1803
        %vm1806 = vcmask 130048
        %v1808 = vsel %vm1806, %v1781, 0
        %v1811 = vsel %vm1806, %v1782, 0
        %v1814 = vsel %vm1806, %v1783, 0
        %v1817 = vsel %vm1806, %v1784, 0
        %v1820 = vsel %vm1806, %v1785, 0
        %v1823 = vsel %vm1806, %v1786, 0
        %v1826 = vsel %vm1806, %v1787, 0
        %v1829 = vsel %vm1806, %v1788, 0
        %v1832 = vsel %vm1806, %v1789, 0
        %v1835 = vsel %vm1806, %v1790, 0
        %v1838 = vsel %vm1806, %v1791, 0
        %v1841 = vsel %vm1806, %v1792, 0
        %v1844 = vsel %vm1806, %v1793, 0
        %v1847 = vsel %vm1806, %v1794, 0
        %v1850 = vsel %vm1806, %v1795, 0
        %v1853 = vsel %vm1806, %v1796, 0
        %1855 = vmatprep.subr.mxu0 0.0
        %1856 = vmatpush1.msra.mxu0 0.0
        %1857 = vmatprep.subr.mxu0 0.0
        %1858 = vmatpush1.msra.mxu0 0.0
        %1859 = vmatprep.subr.mxu0 0.0
        %1860 = vmatpush1.msra.mxu0 0.0
        %1861 = vmatprep.subr.mxu0 0.0
        %1862 = vmatpush1.msra.mxu0 0.0
        %1863 = vmatprep.subr.mxu0 0.0
        %1864 = vmatpush1.msra.mxu0 0.0
        %1865 = vmatprep.subr.mxu0 0.0
        %1866 = vmatpush1.msra.mxu0 0.0
        %1867 = vmatprep.subr.mxu0 0.0
        %1868 = vmatpush1.msra.mxu0 0.0
        %1869 = vmatprep.subr.mxu0 0.0
        %1870 = vmatpush1.msra.mxu0 0.0
        %1871 = vmatprep.subr.mxu0 0.0
        %1872 = vmatpush1.msra.mxu0 0.0
        %1873 = vmatprep.subr.mxu0 0.0
        %1874 = vmatpush1.msra.mxu0 0.0
        %1875 = vmatprep.subr.mxu0 0.0
        %1876 = vmatpush1.msra.mxu0 0.0
        %1877 = vmatprep.subr.mxu0 0.0
        %1878 = vmatpush1.msra.mxu0 0.0
        %1879 = vmatprep.subr.mxu0 0.0
        %1880 = vmatpush1.msra.mxu0 0.0
        %1881 = vmatprep.subr.mxu0 0.0
        %1882 = vmatpush1.msra.mxu0 0.0
        %1883 = vmatprep.subr.mxu0 0.0
        %v1884 = vand.u32 %v1798, 4294901760
        %1885 = vmatpush1.msra.mxu0 %v1884
        %1886 = vmatprep.subr.mxu0 0.0
        %v1887 = vand.u32 %v1797, 4294901760
        %1888 = vmatpush1.msra.mxu0 %v1887
        %1889 = vmatprep.subr.mxu0 0.0
        %1890 = vmatpush2.msra.mxu0 0.0
        %1891 = vmatprep.subr.mxu0 0.0
        %1892 = vmatpush2.msra.mxu0 0.0
        %1893 = vmatprep.subr.mxu0 0.0
        %1894 = vmatpush2.msra.mxu0 0.0
        %1895 = vmatprep.subr.mxu0 0.0
        %1896 = vmatpush2.msra.mxu0 0.0
        %1897 = vmatprep.subr.mxu0 0.0
        %1898 = vmatpush2.msra.mxu0 0.0
        %1899 = vmatprep.subr.mxu0 0.0
        %1900 = vmatpush2.msra.mxu0 0.0
        %1901 = vmatprep.subr.mxu0 0.0
        %1902 = vmatpush2.msra.mxu0 0.0
        %1903 = vmatprep.subr.mxu0 0.0
        %1904 = vmatpush2.msra.mxu0 0.0
        %1905 = vmatprep.subr.mxu0 0.0
        %1906 = vmatpush2.msra.mxu0 0.0
        %1907 = vmatprep.subr.mxu0 0.0
        %1908 = vmatpush2.msra.mxu0 0.0
        %1909 = vmatprep.subr.mxu0 0.0
        %1910 = vmatpush2.msra.mxu0 0.0
        %1911 = vmatprep.subr.mxu0 0.0
        %1912 = vmatpush2.msra.mxu0 0.0
        %1913 = vmatprep.subr.mxu0 0.0
        %1914 = vmatpush2.msra.mxu0 0.0
        %1915 = vmatprep.subr.mxu0 0.0
        %1916 = vmatpush2.msra.mxu0 0.0
        %1917 = vmatprep.subr.mxu0 0.0
        %1918 = vmatpush2.msra.mxu0 0.0
        %1919 = vmatprep.subr.mxu0 0.0
        %1920 = vmatpush2.msra.mxu0 0.0
        %1921 = vmatprep.mubr.f32.mxu0 0.0
        %v1922 = vand.u32 %v1808, 4294901760
        %v1923 = vsub.f32 %v1808, %v1922
        %v1924 = vand.u32 %v1923, 4294901760
        %v1925 = vsub.f32 %v1923, %v1924
        %v1926 = vand.u32 %v1925, 4294901760
        %1927 = vmatmul.mubr.f32.gmra.mxu0 %v1926
        %v1928 = vpop.f32.mrf.mxu0
        %v1929 = vadd.f32 %v1804, %v1928
        %v1930 = vpop.f32.mrf.mxu0
        %1931 = vmatprep.mubr.f32.mxu0 0.0
        %v1932 = vand.u32 %v1811, 4294901760
        %v1933 = vsub.f32 %v1811, %v1932
        %v1934 = vand.u32 %v1933, 4294901760
        %v1935 = vsub.f32 %v1933, %v1934
        %v1936 = vand.u32 %v1935, 4294901760
        %1937 = vmatmul.mubr.f32.gmra.mxu0 %v1936
        %v1938 = vpop.f32.mrf.mxu0
        %v1939 = vadd.f32 %v1804, %v1938
        %v1940 = vpop.f32.mrf.mxu0
        %1941 = vmatprep.mubr.f32.mxu0 0.0
        %v1942 = vand.u32 %v1814, 4294901760
        %v1943 = vsub.f32 %v1814, %v1942
        %v1944 = vand.u32 %v1943, 4294901760
        %v1945 = vsub.f32 %v1943, %v1944
        %v1946 = vand.u32 %v1945, 4294901760
        %1947 = vmatmul.mubr.f32.gmra.mxu0 %v1946
        %v1948 = vpop.f32.mrf.mxu0
        %v1949 = vadd.f32 %v1804, %v1948
        %v1950 = vpop.f32.mrf.mxu0
        %1951 = vmatprep.mubr.f32.mxu0 0.0
        %v1952 = vand.u32 %v1817, 4294901760
        %v1953 = vsub.f32 %v1817, %v1952
        %v1954 = vand.u32 %v1953, 4294901760
        %v1955 = vsub.f32 %v1953, %v1954
        %v1956 = vand.u32 %v1955, 4294901760
        %1957 = vmatmul.mubr.f32.gmra.mxu0 %v1956
        %v1958 = vpop.f32.mrf.mxu0
        %v1959 = vadd.f32 %v1804, %v1958
        %v1960 = vpop.f32.mrf.mxu0
        %1961 = vmatprep.mubr.f32.mxu0 0.0
        %v1962 = vand.u32 %v1820, 4294901760
        %v1963 = vsub.f32 %v1820, %v1962
        %v1964 = vand.u32 %v1963, 4294901760
        %v1965 = vsub.f32 %v1963, %v1964
        %v1966 = vand.u32 %v1965, 4294901760
        %1967 = vmatmul.mubr.f32.gmra.mxu0 %v1966
        %v1968 = vpop.f32.mrf.mxu0
        %v1969 = vadd.f32 %v1804, %v1968
        %v1970 = vpop.f32.mrf.mxu0
        %1971 = vmatprep.mubr.f32.mxu0 0.0
        %v1972 = vand.u32 %v1823, 4294901760
        %v1973 = vsub.f32 %v1823, %v1972
        %v1974 = vand.u32 %v1973, 4294901760
        %v1975 = vsub.f32 %v1973, %v1974
        %v1976 = vand.u32 %v1975, 4294901760
        %1977 = vmatmul.mubr.f32.gmra.mxu0 %v1976
        %v1978 = vpop.f32.mrf.mxu0
        %v1979 = vadd.f32 %v1804, %v1978
        %v1980 = vpop.f32.mrf.mxu0
        %1981 = vmatprep.mubr.f32.mxu0 0.0
        %v1982 = vand.u32 %v1826, 4294901760
        %v1983 = vsub.f32 %v1826, %v1982
        %v1984 = vand.u32 %v1983, 4294901760
        %v1985 = vsub.f32 %v1983, %v1984
        %v1986 = vand.u32 %v1985, 4294901760
        %1987 = vmatmul.mubr.f32.gmra.mxu0 %v1986
        %v1988 = vpop.f32.mrf.mxu0
        %v1989 = vadd.f32 %v1804, %v1988
        %v1990 = vpop.f32.mrf.mxu0
        %1991 = vmatprep.mubr.f32.mxu0 0.0
        %v1992 = vand.u32 %v1829, 4294901760
        %v1993 = vsub.f32 %v1829, %v1992
        %v1994 = vand.u32 %v1993, 4294901760
        %v1995 = vsub.f32 %v1993, %v1994
        %v1996 = vand.u32 %v1995, 4294901760
        %1997 = vmatmul.mubr.f32.gmra.mxu0 %v1996
        %v1998 = vpop.f32.mrf.mxu0
        %v1999 = vadd.f32 %v1804, %v1998
        %v2000 = vpop.f32.mrf.mxu0
        %2001 = vmatprep.mubr.f32.mxu0 0.0
        %v2002 = vand.u32 %v1832, 4294901760
        %v2003 = vsub.f32 %v1832, %v2002
        %v2004 = vand.u32 %v2003, 4294901760
        %v2005 = vsub.f32 %v2003, %v2004
        %v2006 = vand.u32 %v2005, 4294901760
        %2007 = vmatmul.mubr.f32.gmra.mxu0 %v2006
        %v2008 = vpop.f32.mrf.mxu0
        %v2009 = vadd.f32 %v1804, %v2008
        %v2010 = vpop.f32.mrf.mxu0
        %2011 = vmatprep.mubr.f32.mxu0 0.0
        %v2012 = vand.u32 %v1835, 4294901760
        %v2013 = vsub.f32 %v1835, %v2012
        %v2014 = vand.u32 %v2013, 4294901760
        %v2015 = vsub.f32 %v2013, %v2014
        %v2016 = vand.u32 %v2015, 4294901760
        %2017 = vmatmul.mubr.f32.gmra.mxu0 %v2016
        %v2018 = vpop.f32.mrf.mxu0
        %v2019 = vadd.f32 %v1804, %v2018
        %v2020 = vpop.f32.mrf.mxu0
        %2021 = vmatprep.mubr.f32.mxu0 0.0
        %v2022 = vand.u32 %v1838, 4294901760
        %v2023 = vsub.f32 %v1838, %v2022
        %v2024 = vand.u32 %v2023, 4294901760
        %v2025 = vsub.f32 %v2023, %v2024
        %v2026 = vand.u32 %v2025, 4294901760
        %2027 = vmatmul.mubr.f32.gmra.mxu0 %v2026
        %v2028 = vpop.f32.mrf.mxu0
        %v2029 = vadd.f32 %v1804, %v2028
        %v2030 = vpop.f32.mrf.mxu0
        %2031 = vmatprep.mubr.f32.mxu0 0.0
        %v2032 = vand.u32 %v1841, 4294901760
        %v2033 = vsub.f32 %v1841, %v2032
        %v2034 = vand.u32 %v2033, 4294901760
        %v2035 = vsub.f32 %v2033, %v2034
        %v2036 = vand.u32 %v2035, 4294901760
        %2037 = vmatmul.mubr.f32.gmra.mxu0 %v2036
        %v2038 = vpop.f32.mrf.mxu0
        %v2039 = vadd.f32 %v1804, %v2038
        %v2040 = vpop.f32.mrf.mxu0
        %2041 = vmatprep.mubr.f32.mxu0 0.0
        %v2042 = vand.u32 %v1844, 4294901760
        %v2043 = vsub.f32 %v1844, %v2042
        %v2044 = vand.u32 %v2043, 4294901760
        %v2045 = vsub.f32 %v2043, %v2044
        %v2046 = vand.u32 %v2045, 4294901760
        %2047 = vmatmul.mubr.f32.gmra.mxu0 %v2046
        %v2048 = vpop.f32.mrf.mxu0
        %v2049 = vadd.f32 %v1804, %v2048
        %v2050 = vpop.f32.mrf.mxu0
        %2051 = vmatprep.mubr.f32.mxu0 0.0
        %v2052 = vand.u32 %v1847, 4294901760
        %v2053 = vsub.f32 %v1847, %v2052
        %v2054 = vand.u32 %v2053, 4294901760
        %v2055 = vsub.f32 %v2053, %v2054
        %v2056 = vand.u32 %v2055, 4294901760
        %2057 = vmatmul.mubr.f32.gmra.mxu0 %v2056
        %v2058 = vpop.f32.mrf.mxu0
        %v2059 = vadd.f32 %v1804, %v2058
        %v2060 = vpop.f32.mrf.mxu0
        %2061 = vmatprep.mubr.f32.mxu0 0.0
        %v2062 = vand.u32 %v1850, 4294901760
        %v2063 = vsub.f32 %v1850, %v2062
        %v2064 = vand.u32 %v2063, 4294901760
        %v2065 = vsub.f32 %v2063, %v2064
        %v2066 = vand.u32 %v2065, 4294901760
        %2067 = vmatmul.mubr.f32.gmra.mxu0 %v2066
        %v2068 = vpop.f32.mrf.mxu0
        %v2069 = vadd.f32 %v1804, %v2068
        %v2070 = vpop.f32.mrf.mxu0
        %2071 = vmatprep.mubr.f32.mxu0 0.0
        %v2072 = vand.u32 %v1853, 4294901760
        %v2073 = vsub.f32 %v1853, %v2072
        %v2074 = vand.u32 %v2073, 4294901760
        %v2075 = vsub.f32 %v2073, %v2074
        %v2076 = vand.u32 %v2075, 4294901760
        %2077 = vmatmul.mubr.f32.gmra.mxu0 %v2076
        %v2078 = vpop.f32.mrf.mxu0
        %v2079 = vadd.f32 %v1804, %v2078
        %v2080 = vpop.f32.mrf.mxu0
        %2081 = vdwg.mxu0
        %2082 = vmatprep.subr.mxu0 0.0
        %2083 = vmatpush1.msra.mxu0 0.0
        %2084 = vmatprep.subr.mxu0 0.0
        %2085 = vmatpush1.msra.mxu0 0.0
        %2086 = vmatprep.subr.mxu0 0.0
        %2087 = vmatpush1.msra.mxu0 0.0
        %2088 = vmatprep.subr.mxu0 0.0
        %2089 = vmatpush1.msra.mxu0 0.0
        %2090 = vmatprep.subr.mxu0 0.0
        %2091 = vmatpush1.msra.mxu0 0.0
        %2092 = vmatprep.subr.mxu0 0.0
        %2093 = vmatpush1.msra.mxu0 0.0
        %2094 = vmatprep.subr.mxu0 0.0
        %2095 = vmatpush1.msra.mxu0 0.0
        %2096 = vmatprep.subr.mxu0 0.0
        %2097 = vmatpush1.msra.mxu0 0.0
        %2098 = vmatprep.subr.mxu0 0.0
        %2099 = vmatpush1.msra.mxu0 0.0
        %2100 = vmatprep.subr.mxu0 0.0
        %2101 = vmatpush1.msra.mxu0 0.0
        %2102 = vmatprep.subr.mxu0 0.0
        %2103 = vmatpush1.msra.mxu0 0.0
        %2104 = vmatprep.subr.mxu0 0.0
        %2105 = vmatpush1.msra.mxu0 0.0
        %2106 = vmatprep.subr.mxu0 0.0
        %2107 = vmatpush1.msra.mxu0 0.0
        %2108 = vmatprep.subr.mxu0 0.0
        %2109 = vmatpush1.msra.mxu0 0.0
        %2110 = vmatprep.subr.mxu0 0.0
        %v2111 = vand.u32 %v1798, 4294901760
        %v2112 = vsub.f32 %v1798, %v2111
        %v2113 = vand.u32 %v2112, 4294901760
        %v2114 = vsub.f32 %v2112, %v2113
        %v2115 = vand.u32 %v2114, 4294901760
        %2116 = vmatpush1.msra.mxu0 %v2115
        %2117 = vmatprep.subr.mxu0 0.0
        %v2118 = vand.u32 %v1797, 4294901760
        %v2119 = vsub.f32 %v1797, %v2118
        %v2120 = vand.u32 %v2119, 4294901760
        %v2121 = vsub.f32 %v2119, %v2120
        %v2122 = vand.u32 %v2121, 4294901760
        %2123 = vmatpush1.msra.mxu0 %v2122
        %2124 = vmatprep.subr.mxu0 0.0
        %2125 = vmatpush2.msra.mxu0 0.0
        %2126 = vmatprep.subr.mxu0 0.0
        %2127 = vmatpush2.msra.mxu0 0.0
        %2128 = vmatprep.subr.mxu0 0.0
        %2129 = vmatpush2.msra.mxu0 0.0
        %2130 = vmatprep.subr.mxu0 0.0
        %2131 = vmatpush2.msra.mxu0 0.0
        %2132 = vmatprep.subr.mxu0 0.0
        %2133 = vmatpush2.msra.mxu0 0.0
        %2134 = vmatprep.subr.mxu0 0.0
        %2135 = vmatpush2.msra.mxu0 0.0
        %2136 = vmatprep.subr.mxu0 0.0
        %2137 = vmatpush2.msra.mxu0 0.0
        %2138 = vmatprep.subr.mxu0 0.0
        %2139 = vmatpush2.msra.mxu0 0.0
        %2140 = vmatprep.subr.mxu0 0.0
        %2141 = vmatpush2.msra.mxu0 0.0
        %2142 = vmatprep.subr.mxu0 0.0
        %2143 = vmatpush2.msra.mxu0 0.0
        %2144 = vmatprep.subr.mxu0 0.0
        %2145 = vmatpush2.msra.mxu0 0.0
        %2146 = vmatprep.subr.mxu0 0.0
        %2147 = vmatpush2.msra.mxu0 0.0
        %2148 = vmatprep.subr.mxu0 0.0
        %2149 = vmatpush2.msra.mxu0 0.0
        %2150 = vmatprep.subr.mxu0 0.0
        %2151 = vmatpush2.msra.mxu0 0.0
        %2152 = vmatprep.subr.mxu0 0.0
        %2153 = vmatpush2.msra.mxu0 0.0
        %2154 = vmatprep.subr.mxu0 0.0
        %2155 = vmatpush2.msra.mxu0 0.0
        %2156 = vmatprep.mubr.f32.mxu0 0.0
        %v2157 = vand.u32 %v1808, 4294901760
        %2158 = vmatmul.mubr.f32.gmra.mxu0 %v2157
        %v2159 = vpop.f32.mrf.mxu0
        %v2160 = vadd.f32 %v1929, %v2159
        %v2161 = vpop.f32.mrf.mxu0
        %2162 = vmatprep.mubr.f32.mxu0 0.0
        %v2163 = vand.u32 %v1811, 4294901760
        %2164 = vmatmul.mubr.f32.gmra.mxu0 %v2163
        %v2165 = vpop.f32.mrf.mxu0
        %v2166 = vadd.f32 %v1939, %v2165
        %v2167 = vpop.f32.mrf.mxu0
        %2168 = vmatprep.mubr.f32.mxu0 0.0
        %v2169 = vand.u32 %v1814, 4294901760
        %2170 = vmatmul.mubr.f32.gmra.mxu0 %v2169
        %v2171 = vpop.f32.mrf.mxu0
        %v2172 = vadd.f32 %v1949, %v2171
        %v2173 = vpop.f32.mrf.mxu0
        %2174 = vmatprep.mubr.f32.mxu0 0.0
        %v2175 = vand.u32 %v1817, 4294901760
        %2176 = vmatmul.mubr.f32.gmra.mxu0 %v2175
        %v2177 = vpop.f32.mrf.mxu0
        %v2178 = vadd.f32 %v1959, %v2177
        %v2179 = vpop.f32.mrf.mxu0
        %2180 = vmatprep.mubr.f32.mxu0 0.0
        %v2181 = vand.u32 %v1820, 4294901760
        %2182 = vmatmul.mubr.f32.gmra.mxu0 %v2181
        %v2183 = vpop.f32.mrf.mxu0
        %v2184 = vadd.f32 %v1969, %v2183
        %v2185 = vpop.f32.mrf.mxu0
        %2186 = vmatprep.mubr.f32.mxu0 0.0
        %v2187 = vand.u32 %v1823, 4294901760
        %2188 = vmatmul.mubr.f32.gmra.mxu0 %v2187
        %v2189 = vpop.f32.mrf.mxu0
        %v2190 = vadd.f32 %v1979, %v2189
        %v2191 = vpop.f32.mrf.mxu0
        %2192 = vmatprep.mubr.f32.mxu0 0.0
        %v2193 = vand.u32 %v1826, 4294901760
        %2194 = vmatmul.mubr.f32.gmra.mxu0 %v2193
        %v2195 = vpop.f32.mrf.mxu0
        %v2196 = vadd.f32 %v1989, %v2195
        %v2197 = vpop.f32.mrf.mxu0
        %2198 = vmatprep.mubr.f32.mxu0 0.0
        %v2199 = vand.u32 %v1829, 4294901760
        %2200 = vmatmul.mubr.f32.gmra.mxu0 %v2199
        %v2201 = vpop.f32.mrf.mxu0
        %v2202 = vadd.f32 %v1999, %v2201
        %v2203 = vpop.f32.mrf.mxu0
        %2204 = vmatprep.mubr.f32.mxu0 0.0
        %v2205 = vand.u32 %v1832, 4294901760
        %2206 = vmatmul.mubr.f32.gmra.mxu0 %v2205
        %v2207 = vpop.f32.mrf.mxu0
        %v2208 = vadd.f32 %v2009, %v2207
        %v2209 = vpop.f32.mrf.mxu0
        %2210 = vmatprep.mubr.f32.mxu0 0.0
        %v2211 = vand.u32 %v1835, 4294901760
        %2212 = vmatmul.mubr.f32.gmra.mxu0 %v2211
        %v2213 = vpop.f32.mrf.mxu0
        %v2214 = vadd.f32 %v2019, %v2213
        %v2215 = vpop.f32.mrf.mxu0
        %2216 = vmatprep.mubr.f32.mxu0 0.0
        %v2217 = vand.u32 %v1838, 4294901760
        %2218 = vmatmul.mubr.f32.gmra.mxu0 %v2217
        %v2219 = vpop.f32.mrf.mxu0
        %v2220 = vadd.f32 %v2029, %v2219
        %v2221 = vpop.f32.mrf.mxu0
        %2222 = vmatprep.mubr.f32.mxu0 0.0
        %v2223 = vand.u32 %v1841, 4294901760
        %2224 = vmatmul.mubr.f32.gmra.mxu0 %v2223
        %v2225 = vpop.f32.mrf.mxu0
        %v2226 = vadd.f32 %v2039, %v2225
        %v2227 = vpop.f32.mrf.mxu0
        %2228 = vmatprep.mubr.f32.mxu0 0.0
        %v2229 = vand.u32 %v1844, 4294901760
        %2230 = vmatmul.mubr.f32.gmra.mxu0 %v2229
        %v2231 = vpop.f32.mrf.mxu0
        %v2232 = vadd.f32 %v2049, %v2231
        %v2233 = vpop.f32.mrf.mxu0
        %2234 = vmatprep.mubr.f32.mxu0 0.0
        %v2235 = vand.u32 %v1847, 4294901760
        %2236 = vmatmul.mubr.f32.gmra.mxu0 %v2235
        %v2237 = vpop.f32.mrf.mxu0
        %v2238 = vadd.f32 %v2059, %v2237
        %v2239 = vpop.f32.mrf.mxu0
        %2240 = vmatprep.mubr.f32.mxu0 0.0
        %v2241 = vand.u32 %v1850, 4294901760
        %2242 = vmatmul.mubr.f32.gmra.mxu0 %v2241
        %v2243 = vpop.f32.mrf.mxu0
        %v2244 = vadd.f32 %v2069, %v2243
        %v2245 = vpop.f32.mrf.mxu0
        %2246 = vmatprep.mubr.f32.mxu0 0.0
        %v2247 = vand.u32 %v1853, 4294901760
        %2248 = vmatmul.mubr.f32.gmra.mxu0 %v2247
        %v2249 = vpop.f32.mrf.mxu0
        %v2250 = vadd.f32 %v2079, %v2249
        %v2251 = vpop.f32.mrf.mxu0
        %2252 = vdwg.mxu0
        %2253 = vmatprep.subr.mxu0 0.0
        %2254 = vmatpush1.msra.mxu0 0.0
        %2255 = vmatprep.subr.mxu0 0.0
        %2256 = vmatpush1.msra.mxu0 0.0
        %2257 = vmatprep.subr.mxu0 0.0
        %2258 = vmatpush1.msra.mxu0 0.0
        %2259 = vmatprep.subr.mxu0 0.0
        %2260 = vmatpush1.msra.mxu0 0.0
        %2261 = vmatprep.subr.mxu0 0.0
        %2262 = vmatpush1.msra.mxu0 0.0
        %2263 = vmatprep.subr.mxu0 0.0
        %2264 = vmatpush1.msra.mxu0 0.0
        %2265 = vmatprep.subr.mxu0 0.0
        %2266 = vmatpush1.msra.mxu0 0.0
        %2267 = vmatprep.subr.mxu0 0.0
        %2268 = vmatpush1.msra.mxu0 0.0
        %2269 = vmatprep.subr.mxu0 0.0
        %2270 = vmatpush1.msra.mxu0 0.0
        %2271 = vmatprep.subr.mxu0 0.0
        %2272 = vmatpush1.msra.mxu0 0.0
        %2273 = vmatprep.subr.mxu0 0.0
        %2274 = vmatpush1.msra.mxu0 0.0
        %2275 = vmatprep.subr.mxu0 0.0
        %2276 = vmatpush1.msra.mxu0 0.0
        %2277 = vmatprep.subr.mxu0 0.0
        %2278 = vmatpush1.msra.mxu0 0.0
        %2279 = vmatprep.subr.mxu0 0.0
        %2280 = vmatpush1.msra.mxu0 0.0
        %2281 = vmatprep.subr.mxu0 0.0
        %v2282 = vand.u32 %v1798, 4294901760
        %v2283 = vsub.f32 %v1798, %v2282
        %2284 = vmatpush1.msra.mxu0 %v2283
        %2285 = vmatprep.subr.mxu0 0.0
        %v2286 = vand.u32 %v1797, 4294901760
        %v2287 = vsub.f32 %v1797, %v2286
        %2288 = vmatpush1.msra.mxu0 %v2287
        %2289 = vmatprep.subr.mxu0 0.0
        %2290 = vmatpush2.msra.mxu0 0.0
        %2291 = vmatprep.subr.mxu0 0.0
        %2292 = vmatpush2.msra.mxu0 0.0
        %2293 = vmatprep.subr.mxu0 0.0
        %2294 = vmatpush2.msra.mxu0 0.0
        %2295 = vmatprep.subr.mxu0 0.0
        %2296 = vmatpush2.msra.mxu0 0.0
        %2297 = vmatprep.subr.mxu0 0.0
        %2298 = vmatpush2.msra.mxu0 0.0
        %2299 = vmatprep.subr.mxu0 0.0
        %2300 = vmatpush2.msra.mxu0 0.0
        %2301 = vmatprep.subr.mxu0 0.0
        %2302 = vmatpush2.msra.mxu0 0.0
        %2303 = vmatprep.subr.mxu0 0.0
        %2304 = vmatpush2.msra.mxu0 0.0
        %2305 = vmatprep.subr.mxu0 0.0
        %2306 = vmatpush2.msra.mxu0 0.0
        %2307 = vmatprep.subr.mxu0 0.0
        %2308 = vmatpush2.msra.mxu0 0.0
        %2309 = vmatprep.subr.mxu0 0.0
        %2310 = vmatpush2.msra.mxu0 0.0
        %2311 = vmatprep.subr.mxu0 0.0
        %2312 = vmatpush2.msra.mxu0 0.0
        %2313 = vmatprep.subr.mxu0 0.0
        %2314 = vmatpush2.msra.mxu0 0.0
        %2315 = vmatprep.subr.mxu0 0.0
        %2316 = vmatpush2.msra.mxu0 0.0
        %2317 = vmatprep.subr.mxu0 0.0
        %2318 = vmatpush2.msra.mxu0 0.0
        %2319 = vmatprep.subr.mxu0 0.0
        %2320 = vmatpush2.msra.mxu0 0.0
        %2321 = vmatprep.mubr.f32.mxu0 0.0
        %v2322 = vand.u32 %v1808, 4294901760
        %v2323 = vsub.f32 %v1808, %v2322
        %2324 = vmatmul.mubr.f32.gmra.mxu0 %v2323
        %v2325 = vpop.f32.mrf.mxu0
        %v2326 = vadd.f32 %v2160, %v2325
        %v2327 = vpop.f32.mrf.mxu0
        %2328 = vmatprep.mubr.f32.mxu0 0.0
        %v2329 = vand.u32 %v1811, 4294901760
        %v2330 = vsub.f32 %v1811, %v2329
        %2331 = vmatmul.mubr.f32.gmra.mxu0 %v2330
        %v2332 = vpop.f32.mrf.mxu0
        %v2333 = vadd.f32 %v2166, %v2332
        %v2334 = vpop.f32.mrf.mxu0
        %2335 = vmatprep.mubr.f32.mxu0 0.0
        %v2336 = vand.u32 %v1814, 4294901760
        %v2337 = vsub.f32 %v1814, %v2336
        %2338 = vmatmul.mubr.f32.gmra.mxu0 %v2337
        %v2339 = vpop.f32.mrf.mxu0
        %v2340 = vadd.f32 %v2172, %v2339
        %v2341 = vpop.f32.mrf.mxu0
        %2342 = vmatprep.mubr.f32.mxu0 0.0
        %v2343 = vand.u32 %v1817, 4294901760
        %v2344 = vsub.f32 %v1817, %v2343
        %2345 = vmatmul.mubr.f32.gmra.mxu0 %v2344
        %v2346 = vpop.f32.mrf.mxu0
        %v2347 = vadd.f32 %v2178, %v2346
        %v2348 = vpop.f32.mrf.mxu0
        %2349 = vmatprep.mubr.f32.mxu0 0.0
        %v2350 = vand.u32 %v1820, 4294901760
        %v2351 = vsub.f32 %v1820, %v2350
        %2352 = vmatmul.mubr.f32.gmra.mxu0 %v2351
        %v2353 = vpop.f32.mrf.mxu0
        %v2354 = vadd.f32 %v2184, %v2353
        %v2355 = vpop.f32.mrf.mxu0
        %2356 = vmatprep.mubr.f32.mxu0 0.0
        %v2357 = vand.u32 %v1823, 4294901760
        %v2358 = vsub.f32 %v1823, %v2357
        %2359 = vmatmul.mubr.f32.gmra.mxu0 %v2358
        %v2360 = vpop.f32.mrf.mxu0
        %v2361 = vadd.f32 %v2190, %v2360
        %v2362 = vpop.f32.mrf.mxu0
        %2363 = vmatprep.mubr.f32.mxu0 0.0
        %v2364 = vand.u32 %v1826, 4294901760
        %v2365 = vsub.f32 %v1826, %v2364
        %2366 = vmatmul.mubr.f32.gmra.mxu0 %v2365
        %v2367 = vpop.f32.mrf.mxu0
        %v2368 = vadd.f32 %v2196, %v2367
        %v2369 = vpop.f32.mrf.mxu0
        %2370 = vmatprep.mubr.f32.mxu0 0.0
        %v2371 = vand.u32 %v1829, 4294901760
        %v2372 = vsub.f32 %v1829, %v2371
        %2373 = vmatmul.mubr.f32.gmra.mxu0 %v2372
        %v2374 = vpop.f32.mrf.mxu0
        %v2375 = vadd.f32 %v2202, %v2374
        %v2376 = vpop.f32.mrf.mxu0
        %2377 = vmatprep.mubr.f32.mxu0 0.0
        %v2378 = vand.u32 %v1832, 4294901760
        %v2379 = vsub.f32 %v1832, %v2378
        %2380 = vmatmul.mubr.f32.gmra.mxu0 %v2379
        %v2381 = vpop.f32.mrf.mxu0
        %v2382 = vadd.f32 %v2208, %v2381
        %v2383 = vpop.f32.mrf.mxu0
        %2384 = vmatprep.mubr.f32.mxu0 0.0
        %v2385 = vand.u32 %v1835, 4294901760
        %v2386 = vsub.f32 %v1835, %v2385
        %2387 = vmatmul.mubr.f32.gmra.mxu0 %v2386
        %v2388 = vpop.f32.mrf.mxu0
        %v2389 = vadd.f32 %v2214, %v2388
        %v2390 = vpop.f32.mrf.mxu0
        %2391 = vmatprep.mubr.f32.mxu0 0.0
        %v2392 = vand.u32 %v1838, 4294901760
        %v2393 = vsub.f32 %v1838, %v2392
        %2394 = vmatmul.mubr.f32.gmra.mxu0 %v2393
        %v2395 = vpop.f32.mrf.mxu0
        %v2396 = vadd.f32 %v2220, %v2395
        %v2397 = vpop.f32.mrf.mxu0
        %2398 = vmatprep.mubr.f32.mxu0 0.0
        %v2399 = vand.u32 %v1841, 4294901760
        %v2400 = vsub.f32 %v1841, %v2399
        %2401 = vmatmul.mubr.f32.gmra.mxu0 %v2400
        %v2402 = vpop.f32.mrf.mxu0
        %v2403 = vadd.f32 %v2226, %v2402
        %v2404 = vpop.f32.mrf.mxu0
        %2405 = vmatprep.mubr.f32.mxu0 0.0
        %v2406 = vand.u32 %v1844, 4294901760
        %v2407 = vsub.f32 %v1844, %v2406
        %2408 = vmatmul.mubr.f32.gmra.mxu0 %v2407
        %v2409 = vpop.f32.mrf.mxu0
        %v2410 = vadd.f32 %v2232, %v2409
        %v2411 = vpop.f32.mrf.mxu0
        %2412 = vmatprep.mubr.f32.mxu0 0.0
        %v2413 = vand.u32 %v1847, 4294901760
        %v2414 = vsub.f32 %v1847, %v2413
        %2415 = vmatmul.mubr.f32.gmra.mxu0 %v2414
        %v2416 = vpop.f32.mrf.mxu0
        %v2417 = vadd.f32 %v2238, %v2416
        %v2418 = vpop.f32.mrf.mxu0
        %2419 = vmatprep.mubr.f32.mxu0 0.0
        %v2420 = vand.u32 %v1850, 4294901760
        %v2421 = vsub.f32 %v1850, %v2420
        %2422 = vmatmul.mubr.f32.gmra.mxu0 %v2421
        %v2423 = vpop.f32.mrf.mxu0
        %v2424 = vadd.f32 %v2244, %v2423
        %v2425 = vpop.f32.mrf.mxu0
        %2426 = vmatprep.mubr.f32.mxu0 0.0
        %v2427 = vand.u32 %v1853, 4294901760
        %v2428 = vsub.f32 %v1853, %v2427
        %2429 = vmatmul.mubr.f32.gmra.mxu0 %v2428
        %v2430 = vpop.f32.mrf.mxu0
        %v2431 = vadd.f32 %v2250, %v2430
        %v2432 = vpop.f32.mrf.mxu0
        %2433 = vdwg.mxu0
        %2434 = vmatprep.subr.mxu0 0.0
        %2435 = vmatpush1.msra.mxu0 0.0
        %2436 = vmatprep.subr.mxu0 0.0
        %2437 = vmatpush1.msra.mxu0 0.0
        %2438 = vmatprep.subr.mxu0 0.0
        %2439 = vmatpush1.msra.mxu0 0.0
        %2440 = vmatprep.subr.mxu0 0.0
        %2441 = vmatpush1.msra.mxu0 0.0
        %2442 = vmatprep.subr.mxu0 0.0
        %2443 = vmatpush1.msra.mxu0 0.0
        %2444 = vmatprep.subr.mxu0 0.0
        %2445 = vmatpush1.msra.mxu0 0.0
        %2446 = vmatprep.subr.mxu0 0.0
        %2447 = vmatpush1.msra.mxu0 0.0
        %2448 = vmatprep.subr.mxu0 0.0
        %2449 = vmatpush1.msra.mxu0 0.0
        %2450 = vmatprep.subr.mxu0 0.0
        %2451 = vmatpush1.msra.mxu0 0.0
        %2452 = vmatprep.subr.mxu0 0.0
        %2453 = vmatpush1.msra.mxu0 0.0
        %2454 = vmatprep.subr.mxu0 0.0
        %2455 = vmatpush1.msra.mxu0 0.0
        %2456 = vmatprep.subr.mxu0 0.0
        %2457 = vmatpush1.msra.mxu0 0.0
        %2458 = vmatprep.subr.mxu0 0.0
        %2459 = vmatpush1.msra.mxu0 0.0
        %2460 = vmatprep.subr.mxu0 0.0
        %2461 = vmatpush1.msra.mxu0 0.0
        %2462 = vmatprep.subr.mxu0 0.0
        %v2463 = vand.u32 %v1798, 4294901760
        %2464 = vmatpush1.msra.mxu0 %v2463
        %2465 = vmatprep.subr.mxu0 0.0
        %v2466 = vand.u32 %v1797, 4294901760
        %2467 = vmatpush1.msra.mxu0 %v2466
        %2468 = vmatprep.subr.mxu0 0.0
        %2469 = vmatpush2.msra.mxu0 0.0
        %2470 = vmatprep.subr.mxu0 0.0
        %2471 = vmatpush2.msra.mxu0 0.0
        %2472 = vmatprep.subr.mxu0 0.0
        %2473 = vmatpush2.msra.mxu0 0.0
        %2474 = vmatprep.subr.mxu0 0.0
        %2475 = vmatpush2.msra.mxu0 0.0
        %2476 = vmatprep.subr.mxu0 0.0
        %2477 = vmatpush2.msra.mxu0 0.0
        %2478 = vmatprep.subr.mxu0 0.0
        %2479 = vmatpush2.msra.mxu0 0.0
        %2480 = vmatprep.subr.mxu0 0.0
        %2481 = vmatpush2.msra.mxu0 0.0
        %2482 = vmatprep.subr.mxu0 0.0
        %2483 = vmatpush2.msra.mxu0 0.0
        %2484 = vmatprep.subr.mxu0 0.0
        %2485 = vmatpush2.msra.mxu0 0.0
        %2486 = vmatprep.subr.mxu0 0.0
        %2487 = vmatpush2.msra.mxu0 0.0
        %2488 = vmatprep.subr.mxu0 0.0
        %2489 = vmatpush2.msra.mxu0 0.0
        %2490 = vmatprep.subr.mxu0 0.0
        %2491 = vmatpush2.msra.mxu0 0.0
        %2492 = vmatprep.subr.mxu0 0.0
        %2493 = vmatpush2.msra.mxu0 0.0
        %2494 = vmatprep.subr.mxu0 0.0
        %2495 = vmatpush2.msra.mxu0 0.0
        %2496 = vmatprep.subr.mxu0 0.0
        %2497 = vmatpush2.msra.mxu0 0.0
        %2498 = vmatprep.subr.mxu0 0.0
        %2499 = vmatpush2.msra.mxu0 0.0
        %2500 = vmatprep.mubr.f32.mxu0 0.0
        %v2501 = vand.u32 %v1808, 4294901760
        %v2502 = vsub.f32 %v1808, %v2501
        %v2503 = vand.u32 %v2502, 4294901760
        %2504 = vmatmul.mubr.f32.gmra.mxu0 %v2503
        %v2505 = vpop.f32.mrf.mxu0
        %v2506 = vadd.f32 %v2326, %v2505
        %v2507 = vpop.f32.mrf.mxu0
        %2508 = vmatprep.mubr.f32.mxu0 0.0
        %v2509 = vand.u32 %v1811, 4294901760
        %v2510 = vsub.f32 %v1811, %v2509
        %v2511 = vand.u32 %v2510, 4294901760
        %2512 = vmatmul.mubr.f32.gmra.mxu0 %v2511
        %v2513 = vpop.f32.mrf.mxu0
        %v2514 = vadd.f32 %v2333, %v2513
        %v2515 = vpop.f32.mrf.mxu0
        %2516 = vmatprep.mubr.f32.mxu0 0.0
        %v2517 = vand.u32 %v1814, 4294901760
        %v2518 = vsub.f32 %v1814, %v2517
        %v2519 = vand.u32 %v2518, 4294901760
        %2520 = vmatmul.mubr.f32.gmra.mxu0 %v2519
        %v2521 = vpop.f32.mrf.mxu0
        %v2522 = vadd.f32 %v2340, %v2521
        %v2523 = vpop.f32.mrf.mxu0
        %2524 = vmatprep.mubr.f32.mxu0 0.0
        %v2525 = vand.u32 %v1817, 4294901760
        %v2526 = vsub.f32 %v1817, %v2525
        %v2527 = vand.u32 %v2526, 4294901760
        %2528 = vmatmul.mubr.f32.gmra.mxu0 %v2527
        %v2529 = vpop.f32.mrf.mxu0
        %v2530 = vadd.f32 %v2347, %v2529
        %v2531 = vpop.f32.mrf.mxu0
        %2532 = vmatprep.mubr.f32.mxu0 0.0
        %v2533 = vand.u32 %v1820, 4294901760
        %v2534 = vsub.f32 %v1820, %v2533
        %v2535 = vand.u32 %v2534, 4294901760
        %2536 = vmatmul.mubr.f32.gmra.mxu0 %v2535
        %v2537 = vpop.f32.mrf.mxu0
        %v2538 = vadd.f32 %v2354, %v2537
        %v2539 = vpop.f32.mrf.mxu0
        %2540 = vmatprep.mubr.f32.mxu0 0.0
        %v2541 = vand.u32 %v1823, 4294901760
        %v2542 = vsub.f32 %v1823, %v2541
        %v2543 = vand.u32 %v2542, 4294901760
        %2544 = vmatmul.mubr.f32.gmra.mxu0 %v2543
        %v2545 = vpop.f32.mrf.mxu0
        %v2546 = vadd.f32 %v2361, %v2545
        %v2547 = vpop.f32.mrf.mxu0
        %2548 = vmatprep.mubr.f32.mxu0 0.0
        %v2549 = vand.u32 %v1826, 4294901760
        %v2550 = vsub.f32 %v1826, %v2549
        %v2551 = vand.u32 %v2550, 4294901760
        %2552 = vmatmul.mubr.f32.gmra.mxu0 %v2551
        %v2553 = vpop.f32.mrf.mxu0
        %v2554 = vadd.f32 %v2368, %v2553
        %v2555 = vpop.f32.mrf.mxu0
        %2556 = vmatprep.mubr.f32.mxu0 0.0
        %v2557 = vand.u32 %v1829, 4294901760
        %v2558 = vsub.f32 %v1829, %v2557
        %v2559 = vand.u32 %v2558, 4294901760
        %2560 = vmatmul.mubr.f32.gmra.mxu0 %v2559
        %v2561 = vpop.f32.mrf.mxu0
        %v2562 = vadd.f32 %v2375, %v2561
        %v2563 = vpop.f32.mrf.mxu0
        %2564 = vmatprep.mubr.f32.mxu0 0.0
        %v2565 = vand.u32 %v1832, 4294901760
        %v2566 = vsub.f32 %v1832, %v2565
        %v2567 = vand.u32 %v2566, 4294901760
        %2568 = vmatmul.mubr.f32.gmra.mxu0 %v2567
        %v2569 = vpop.f32.mrf.mxu0
        %v2570 = vadd.f32 %v2382, %v2569
        %v2571 = vpop.f32.mrf.mxu0
        %2572 = vmatprep.mubr.f32.mxu0 0.0
        %v2573 = vand.u32 %v1835, 4294901760
        %v2574 = vsub.f32 %v1835, %v2573
        %v2575 = vand.u32 %v2574, 4294901760
        %2576 = vmatmul.mubr.f32.gmra.mxu0 %v2575
        %v2577 = vpop.f32.mrf.mxu0
        %v2578 = vadd.f32 %v2389, %v2577
        %v2579 = vpop.f32.mrf.mxu0
        %2580 = vmatprep.mubr.f32.mxu0 0.0
        %v2581 = vand.u32 %v1838, 4294901760
        %v2582 = vsub.f32 %v1838, %v2581
        %v2583 = vand.u32 %v2582, 4294901760
        %2584 = vmatmul.mubr.f32.gmra.mxu0 %v2583
        %v2585 = vpop.f32.mrf.mxu0
        %v2586 = vadd.f32 %v2396, %v2585
        %v2587 = vpop.f32.mrf.mxu0
        %2588 = vmatprep.mubr.f32.mxu0 0.0
        %v2589 = vand.u32 %v1841, 4294901760
        %v2590 = vsub.f32 %v1841, %v2589
        %v2591 = vand.u32 %v2590, 4294901760
        %2592 = vmatmul.mubr.f32.gmra.mxu0 %v2591
        %v2593 = vpop.f32.mrf.mxu0
        %v2594 = vadd.f32 %v2403, %v2593
        %v2595 = vpop.f32.mrf.mxu0
        %2596 = vmatprep.mubr.f32.mxu0 0.0
        %v2597 = vand.u32 %v1844, 4294901760
        %v2598 = vsub.f32 %v1844, %v2597
        %v2599 = vand.u32 %v2598, 4294901760
        %2600 = vmatmul.mubr.f32.gmra.mxu0 %v2599
        %v2601 = vpop.f32.mrf.mxu0
        %v2602 = vadd.f32 %v2410, %v2601
        %v2603 = vpop.f32.mrf.mxu0
        %2604 = vmatprep.mubr.f32.mxu0 0.0
        %v2605 = vand.u32 %v1847, 4294901760
        %v2606 = vsub.f32 %v1847, %v2605
        %v2607 = vand.u32 %v2606, 4294901760
        %2608 = vmatmul.mubr.f32.gmra.mxu0 %v2607
        %v2609 = vpop.f32.mrf.mxu0
        %v2610 = vadd.f32 %v2417, %v2609
        %v2611 = vpop.f32.mrf.mxu0
        %2612 = vmatprep.mubr.f32.mxu0 0.0
        %v2613 = vand.u32 %v1850, 4294901760
        %v2614 = vsub.f32 %v1850, %v2613
        %v2615 = vand.u32 %v2614, 4294901760
        %2616 = vmatmul.mubr.f32.gmra.mxu0 %v2615
        %v2617 = vpop.f32.mrf.mxu0
        %v2618 = vadd.f32 %v2424, %v2617
        %v2619 = vpop.f32.mrf.mxu0
        %2620 = vmatprep.mubr.f32.mxu0 0.0
        %v2621 = vand.u32 %v1853, 4294901760
        %v2622 = vsub.f32 %v1853, %v2621
        %v2623 = vand.u32 %v2622, 4294901760
        %2624 = vmatmul.mubr.f32.gmra.mxu0 %v2623
        %v2625 = vpop.f32.mrf.mxu0
        %v2626 = vadd.f32 %v2431, %v2625
        %v2627 = vpop.f32.mrf.mxu0
        %2628 = vdwg.mxu0
        %2629 = vmatprep.subr.mxu0 0.0
        %2630 = vmatpush1.msra.mxu0 0.0
        %2631 = vmatprep.subr.mxu0 0.0
        %2632 = vmatpush1.msra.mxu0 0.0
        %2633 = vmatprep.subr.mxu0 0.0
        %2634 = vmatpush1.msra.mxu0 0.0
        %2635 = vmatprep.subr.mxu0 0.0
        %2636 = vmatpush1.msra.mxu0 0.0
        %2637 = vmatprep.subr.mxu0 0.0
        %2638 = vmatpush1.msra.mxu0 0.0
        %2639 = vmatprep.subr.mxu0 0.0
        %2640 = vmatpush1.msra.mxu0 0.0
        %2641 = vmatprep.subr.mxu0 0.0
        %2642 = vmatpush1.msra.mxu0 0.0
        %2643 = vmatprep.subr.mxu0 0.0
        %2644 = vmatpush1.msra.mxu0 0.0
        %2645 = vmatprep.subr.mxu0 0.0
        %2646 = vmatpush1.msra.mxu0 0.0
        %2647 = vmatprep.subr.mxu0 0.0
        %2648 = vmatpush1.msra.mxu0 0.0
        %2649 = vmatprep.subr.mxu0 0.0
        %2650 = vmatpush1.msra.mxu0 0.0
        %2651 = vmatprep.subr.mxu0 0.0
        %2652 = vmatpush1.msra.mxu0 0.0
        %2653 = vmatprep.subr.mxu0 0.0
        %2654 = vmatpush1.msra.mxu0 0.0
        %2655 = vmatprep.subr.mxu0 0.0
        %2656 = vmatpush1.msra.mxu0 0.0
        %2657 = vmatprep.subr.mxu0 0.0
        %v2658 = vand.u32 %v1798, 4294901760
        %v2659 = vsub.f32 %v1798, %v2658
        %v2660 = vand.u32 %v2659, 4294901760
        %2661 = vmatpush1.msra.mxu0 %v2660
        %2662 = vmatprep.subr.mxu0 0.0
        %v2663 = vand.u32 %v1797, 4294901760
        %v2664 = vsub.f32 %v1797, %v2663
        %v2665 = vand.u32 %v2664, 4294901760
        %2666 = vmatpush1.msra.mxu0 %v2665
        %2667 = vmatprep.subr.mxu0 0.0
        %2668 = vmatpush2.msra.mxu0 0.0
        %2669 = vmatprep.subr.mxu0 0.0
        %2670 = vmatpush2.msra.mxu0 0.0
        %2671 = vmatprep.subr.mxu0 0.0
        %2672 = vmatpush2.msra.mxu0 0.0
        %2673 = vmatprep.subr.mxu0 0.0
        %2674 = vmatpush2.msra.mxu0 0.0
        %2675 = vmatprep.subr.mxu0 0.0
        %2676 = vmatpush2.msra.mxu0 0.0
        %2677 = vmatprep.subr.mxu0 0.0
        %2678 = vmatpush2.msra.mxu0 0.0
        %2679 = vmatprep.subr.mxu0 0.0
        %2680 = vmatpush2.msra.mxu0 0.0
        %2681 = vmatprep.subr.mxu0 0.0
        %2682 = vmatpush2.msra.mxu0 0.0
        %2683 = vmatprep.subr.mxu0 0.0
        %2684 = vmatpush2.msra.mxu0 0.0
        %2685 = vmatprep.subr.mxu0 0.0
        %2686 = vmatpush2.msra.mxu0 0.0
        %2687 = vmatprep.subr.mxu0 0.0
        %2688 = vmatpush2.msra.mxu0 0.0
        %2689 = vmatprep.subr.mxu0 0.0
        %2690 = vmatpush2.msra.mxu0 0.0
        %2691 = vmatprep.subr.mxu0 0.0
        %2692 = vmatpush2.msra.mxu0 0.0
        %2693 = vmatprep.subr.mxu0 0.0
        %2694 = vmatpush2.msra.mxu0 0.0
        %2695 = vmatprep.subr.mxu0 0.0
        %2696 = vmatpush2.msra.mxu0 0.0
        %2697 = vmatprep.subr.mxu0 0.0
        %2698 = vmatpush2.msra.mxu0 0.0
        %2699 = vmatprep.mubr.f32.mxu0 0.0
        %v2700 = vand.u32 %v1808, 4294901760
        %2701 = vmatmul.mubr.f32.gmra.mxu0 %v2700
        %v2702 = vpop.f32.mrf.mxu0
        %v2703 = vadd.f32 %v2506, %v2702
        %v2704 = vpop.f32.mrf.mxu0
        %2705 = vmatprep.mubr.f32.mxu0 0.0
        %v2706 = vand.u32 %v1811, 4294901760
        %2707 = vmatmul.mubr.f32.gmra.mxu0 %v2706
        %v2708 = vpop.f32.mrf.mxu0
        %v2709 = vadd.f32 %v2514, %v2708
        %v2710 = vpop.f32.mrf.mxu0
        %2711 = vmatprep.mubr.f32.mxu0 0.0
        %v2712 = vand.u32 %v1814, 4294901760
        %2713 = vmatmul.mubr.f32.gmra.mxu0 %v2712
        %v2714 = vpop.f32.mrf.mxu0
        %v2715 = vadd.f32 %v2522, %v2714
        %v2716 = vpop.f32.mrf.mxu0
        %2717 = vmatprep.mubr.f32.mxu0 0.0
        %v2718 = vand.u32 %v1817, 4294901760
        %2719 = vmatmul.mubr.f32.gmra.mxu0 %v2718
        %v2720 = vpop.f32.mrf.mxu0
        %v2721 = vadd.f32 %v2530, %v2720
        %v2722 = vpop.f32.mrf.mxu0
        %2723 = vmatprep.mubr.f32.mxu0 0.0
        %v2724 = vand.u32 %v1820, 4294901760
        %2725 = vmatmul.mubr.f32.gmra.mxu0 %v2724
        %v2726 = vpop.f32.mrf.mxu0
        %v2727 = vadd.f32 %v2538, %v2726
        %v2728 = vpop.f32.mrf.mxu0
        %2729 = vmatprep.mubr.f32.mxu0 0.0
        %v2730 = vand.u32 %v1823, 4294901760
        %2731 = vmatmul.mubr.f32.gmra.mxu0 %v2730
        %v2732 = vpop.f32.mrf.mxu0
        %v2733 = vadd.f32 %v2546, %v2732
        %v2734 = vpop.f32.mrf.mxu0
        %2735 = vmatprep.mubr.f32.mxu0 0.0
        %v2736 = vand.u32 %v1826, 4294901760
        %2737 = vmatmul.mubr.f32.gmra.mxu0 %v2736
        %v2738 = vpop.f32.mrf.mxu0
        %v2739 = vadd.f32 %v2554, %v2738
        %v2740 = vpop.f32.mrf.mxu0
        %2741 = vmatprep.mubr.f32.mxu0 0.0
        %v2742 = vand.u32 %v1829, 4294901760
        %2743 = vmatmul.mubr.f32.gmra.mxu0 %v2742
        %v2744 = vpop.f32.mrf.mxu0
        %v2745 = vadd.f32 %v2562, %v2744
        %v2746 = vpop.f32.mrf.mxu0
        %2747 = vmatprep.mubr.f32.mxu0 0.0
        %v2748 = vand.u32 %v1832, 4294901760
        %2749 = vmatmul.mubr.f32.gmra.mxu0 %v2748
        %v2750 = vpop.f32.mrf.mxu0
        %v2751 = vadd.f32 %v2570, %v2750
        %v2752 = vpop.f32.mrf.mxu0
        %2753 = vmatprep.mubr.f32.mxu0 0.0
        %v2754 = vand.u32 %v1835, 4294901760
        %2755 = vmatmul.mubr.f32.gmra.mxu0 %v2754
        %v2756 = vpop.f32.mrf.mxu0
        %v2757 = vadd.f32 %v2578, %v2756
        %v2758 = vpop.f32.mrf.mxu0
        %2759 = vmatprep.mubr.f32.mxu0 0.0
        %v2760 = vand.u32 %v1838, 4294901760
        %2761 = vmatmul.mubr.f32.gmra.mxu0 %v2760
        %v2762 = vpop.f32.mrf.mxu0
        %v2763 = vadd.f32 %v2586, %v2762
        %v2764 = vpop.f32.mrf.mxu0
        %2765 = vmatprep.mubr.f32.mxu0 0.0
        %v2766 = vand.u32 %v1841, 4294901760
        %2767 = vmatmul.mubr.f32.gmra.mxu0 %v2766
        %v2768 = vpop.f32.mrf.mxu0
        %v2769 = vadd.f32 %v2594, %v2768
        %v2770 = vpop.f32.mrf.mxu0
        %2771 = vmatprep.mubr.f32.mxu0 0.0
        %v2772 = vand.u32 %v1844, 4294901760
        %2773 = vmatmul.mubr.f32.gmra.mxu0 %v2772
        %v2774 = vpop.f32.mrf.mxu0
        %v2775 = vadd.f32 %v2602, %v2774
        %v2776 = vpop.f32.mrf.mxu0
        %2777 = vmatprep.mubr.f32.mxu0 0.0
        %v2778 = vand.u32 %v1847, 4294901760
        %2779 = vmatmul.mubr.f32.gmra.mxu0 %v2778
        %v2780 = vpop.f32.mrf.mxu0
        %v2781 = vadd.f32 %v2610, %v2780
        %v2782 = vpop.f32.mrf.mxu0
        %2783 = vmatprep.mubr.f32.mxu0 0.0
        %v2784 = vand.u32 %v1850, 4294901760
        %2785 = vmatmul.mubr.f32.gmra.mxu0 %v2784
        %v2786 = vpop.f32.mrf.mxu0
        %v2787 = vadd.f32 %v2618, %v2786
        %v2788 = vpop.f32.mrf.mxu0
        %2789 = vmatprep.mubr.f32.mxu0 0.0
        %v2790 = vand.u32 %v1853, 4294901760
        %2791 = vmatmul.mubr.f32.gmra.mxu0 %v2790
        %v2792 = vpop.f32.mrf.mxu0
        %v2793 = vadd.f32 %v2626, %v2792
        %v2794 = vpop.f32.mrf.mxu0
        %2795 = vdwg.mxu0
        %2796 = vmatprep.subr.mxu0 0.0
        %2797 = vmatpush1.msra.mxu0 0.0
        %2798 = vmatprep.subr.mxu0 0.0
        %2799 = vmatpush1.msra.mxu0 0.0
        %2800 = vmatprep.subr.mxu0 0.0
        %2801 = vmatpush1.msra.mxu0 0.0
        %2802 = vmatprep.subr.mxu0 0.0
        %2803 = vmatpush1.msra.mxu0 0.0
        %2804 = vmatprep.subr.mxu0 0.0
        %2805 = vmatpush1.msra.mxu0 0.0
        %2806 = vmatprep.subr.mxu0 0.0
        %2807 = vmatpush1.msra.mxu0 0.0
        %2808 = vmatprep.subr.mxu0 0.0
        %2809 = vmatpush1.msra.mxu0 0.0
        %2810 = vmatprep.subr.mxu0 0.0
        %2811 = vmatpush1.msra.mxu0 0.0
        %2812 = vmatprep.subr.mxu0 0.0
        %2813 = vmatpush1.msra.mxu0 0.0
        %2814 = vmatprep.subr.mxu0 0.0
        %2815 = vmatpush1.msra.mxu0 0.0
        %2816 = vmatprep.subr.mxu0 0.0
        %2817 = vmatpush1.msra.mxu0 0.0
        %2818 = vmatprep.subr.mxu0 0.0
        %2819 = vmatpush1.msra.mxu0 0.0
        %2820 = vmatprep.subr.mxu0 0.0
        %2821 = vmatpush1.msra.mxu0 0.0
        %2822 = vmatprep.subr.mxu0 0.0
        %2823 = vmatpush1.msra.mxu0 0.0
        %2824 = vmatprep.subr.mxu0 0.0
        %v2825 = vand.u32 %v1798, 4294901760
        %2826 = vmatpush1.msra.mxu0 %v2825
        %2827 = vmatprep.subr.mxu0 0.0
        %v2828 = vand.u32 %v1797, 4294901760
        %2829 = vmatpush1.msra.mxu0 %v2828
        %2830 = vmatprep.subr.mxu0 0.0
        %2831 = vmatpush2.msra.mxu0 0.0
        %2832 = vmatprep.subr.mxu0 0.0
        %2833 = vmatpush2.msra.mxu0 0.0
        %2834 = vmatprep.subr.mxu0 0.0
        %2835 = vmatpush2.msra.mxu0 0.0
        %2836 = vmatprep.subr.mxu0 0.0
        %2837 = vmatpush2.msra.mxu0 0.0
        %2838 = vmatprep.subr.mxu0 0.0
        %2839 = vmatpush2.msra.mxu0 0.0
        %2840 = vmatprep.subr.mxu0 0.0
        %2841 = vmatpush2.msra.mxu0 0.0
        %2842 = vmatprep.subr.mxu0 0.0
        %2843 = vmatpush2.msra.mxu0 0.0
        %2844 = vmatprep.subr.mxu0 0.0
        %2845 = vmatpush2.msra.mxu0 0.0
        %2846 = vmatprep.subr.mxu0 0.0
        %2847 = vmatpush2.msra.mxu0 0.0
        %2848 = vmatprep.subr.mxu0 0.0
        %2849 = vmatpush2.msra.mxu0 0.0
        %2850 = vmatprep.subr.mxu0 0.0
        %2851 = vmatpush2.msra.mxu0 0.0
        %2852 = vmatprep.subr.mxu0 0.0
        %2853 = vmatpush2.msra.mxu0 0.0
        %2854 = vmatprep.subr.mxu0 0.0
        %2855 = vmatpush2.msra.mxu0 0.0
        %2856 = vmatprep.subr.mxu0 0.0
        %2857 = vmatpush2.msra.mxu0 0.0
        %2858 = vmatprep.subr.mxu0 0.0
        %2859 = vmatpush2.msra.mxu0 0.0
        %2860 = vmatprep.subr.mxu0 0.0
        %2861 = vmatpush2.msra.mxu0 0.0
        %2862 = vmatprep.mubr.f32.mxu0 0.0
        %v2863 = vand.u32 %v1808, 4294901760
        %2864 = vmatmul.mubr.f32.gmra.mxu0 %v2863
        %v2865 = vpop.f32.mrf.mxu0
        %v2866 = vadd.f32 %v2703, %v2865
        %v2867 = vpop.f32.mrf.mxu0
        %2868 = vmatprep.mubr.f32.mxu0 0.0
        %v2869 = vand.u32 %v1811, 4294901760
        %2870 = vmatmul.mubr.f32.gmra.mxu0 %v2869
        %v2871 = vpop.f32.mrf.mxu0
        %v2872 = vadd.f32 %v2709, %v2871
        %v2873 = vpop.f32.mrf.mxu0
        %2874 = vmatprep.mubr.f32.mxu0 0.0
        %v2875 = vand.u32 %v1814, 4294901760
        %2876 = vmatmul.mubr.f32.gmra.mxu0 %v2875
        %v2877 = vpop.f32.mrf.mxu0
        %v2878 = vadd.f32 %v2715, %v2877
        %v2879 = vpop.f32.mrf.mxu0
        %2880 = vmatprep.mubr.f32.mxu0 0.0
        %v2881 = vand.u32 %v1817, 4294901760
        %2882 = vmatmul.mubr.f32.gmra.mxu0 %v2881
        %v2883 = vpop.f32.mrf.mxu0
        %v2884 = vadd.f32 %v2721, %v2883
        %v2885 = vpop.f32.mrf.mxu0
        %2886 = vmatprep.mubr.f32.mxu0 0.0
        %v2887 = vand.u32 %v1820, 4294901760
        %2888 = vmatmul.mubr.f32.gmra.mxu0 %v2887
        %v2889 = vpop.f32.mrf.mxu0
        %v2890 = vadd.f32 %v2727, %v2889
        %v2891 = vpop.f32.mrf.mxu0
        %2892 = vmatprep.mubr.f32.mxu0 0.0
        %v2893 = vand.u32 %v1823, 4294901760
        %2894 = vmatmul.mubr.f32.gmra.mxu0 %v2893
        %v2895 = vpop.f32.mrf.mxu0
        %v2896 = vadd.f32 %v2733, %v2895
        %v2897 = vpop.f32.mrf.mxu0
        %2898 = vmatprep.mubr.f32.mxu0 0.0
        %v2899 = vand.u32 %v1826, 4294901760
        %2900 = vmatmul.mubr.f32.gmra.mxu0 %v2899
        %v2901 = vpop.f32.mrf.mxu0
        %v2902 = vadd.f32 %v2739, %v2901
        %v2903 = vpop.f32.mrf.mxu0
        %2904 = vmatprep.mubr.f32.mxu0 0.0
        %v2905 = vand.u32 %v1829, 4294901760
        %2906 = vmatmul.mubr.f32.gmra.mxu0 %v2905
        %v2907 = vpop.f32.mrf.mxu0
        %v2908 = vadd.f32 %v2745, %v2907
        %v2909 = vpop.f32.mrf.mxu0
        %2910 = vmatprep.mubr.f32.mxu0 0.0
        %v2911 = vand.u32 %v1832, 4294901760
        %2912 = vmatmul.mubr.f32.gmra.mxu0 %v2911
        %v2913 = vpop.f32.mrf.mxu0
        %v2914 = vadd.f32 %v2751, %v2913
        %v2915 = vpop.f32.mrf.mxu0
        %2916 = vmatprep.mubr.f32.mxu0 0.0
        %v2917 = vand.u32 %v1835, 4294901760
        %2918 = vmatmul.mubr.f32.gmra.mxu0 %v2917
        %v2919 = vpop.f32.mrf.mxu0
        %v2920 = vadd.f32 %v2757, %v2919
        %v2921 = vpop.f32.mrf.mxu0
        %2922 = vmatprep.mubr.f32.mxu0 0.0
        %v2923 = vand.u32 %v1838, 4294901760
        %2924 = vmatmul.mubr.f32.gmra.mxu0 %v2923
        %v2925 = vpop.f32.mrf.mxu0
        %v2926 = vadd.f32 %v2763, %v2925
        %v2927 = vpop.f32.mrf.mxu0
        %2928 = vmatprep.mubr.f32.mxu0 0.0
        %v2929 = vand.u32 %v1841, 4294901760
        %2930 = vmatmul.mubr.f32.gmra.mxu0 %v2929
        %v2931 = vpop.f32.mrf.mxu0
        %v2932 = vadd.f32 %v2769, %v2931
        %v2933 = vpop.f32.mrf.mxu0
        %2934 = vmatprep.mubr.f32.mxu0 0.0
        %v2935 = vand.u32 %v1844, 4294901760
        %2936 = vmatmul.mubr.f32.gmra.mxu0 %v2935
        %v2937 = vpop.f32.mrf.mxu0
        %v2938 = vadd.f32 %v2775, %v2937
        %v2939 = vpop.f32.mrf.mxu0
        %2940 = vmatprep.mubr.f32.mxu0 0.0
        %v2941 = vand.u32 %v1847, 4294901760
        %2942 = vmatmul.mubr.f32.gmra.mxu0 %v2941
        %v2943 = vpop.f32.mrf.mxu0
        %v2944 = vadd.f32 %v2781, %v2943
        %v2945 = vpop.f32.mrf.mxu0
        %2946 = vmatprep.mubr.f32.mxu0 0.0
        %v2947 = vand.u32 %v1850, 4294901760
        %2948 = vmatmul.mubr.f32.gmra.mxu0 %v2947
        %v2949 = vpop.f32.mrf.mxu0
        %v2950 = vadd.f32 %v2787, %v2949
        %v2951 = vpop.f32.mrf.mxu0
        %2952 = vmatprep.mubr.f32.mxu0 0.0
        %v2953 = vand.u32 %v1853, 4294901760
        %2954 = vmatmul.mubr.f32.gmra.mxu0 %v2953
        %v2955 = vpop.f32.mrf.mxu0
        %v2956 = vadd.f32 %v2793, %v2955
        %v2957 = vpop.f32.mrf.mxu0
        %2958 = vdwg.mxu0
        %v2959 = vlaneseq
        %v2960 = vand.u32 %v2959, 127
        %v2961 = vld [vmem:[%s564] sm:$0xff]
        %v2962 = vld [vmem:[%s564 + $0x8] sm:$0xff]
        %v2963 = vld [vmem:[%s564 + $0x10] sm:$0xff]
        %v2964 = vld [vmem:[%s564 + $0x18] sm:$0xff]
        %v2965 = vld [vmem:[%s564 + $0x20] sm:$0xff]
        %v2966 = vld [vmem:[%s564 + $0x28] sm:$0xff]
        %v2967 = vld [vmem:[%s564 + $0x30] sm:$0xff]
        %v2968 = vld [vmem:[%s564 + $0x38] sm:$0xff]
        %v2969 = vld [vmem:[%s564 + $0x40] sm:$0xff]
        %v2970 = vld [vmem:[%s564 + $0x48] sm:$0xff]
        %v2971 = vld [vmem:[%s564 + $0x50] sm:$0xff]
        %v2972 = vld [vmem:[%s564 + $0x58] sm:$0xff]
        %v2973 = vld [vmem:[%s564 + $0x60] sm:$0xff]
        %v2974 = vld [vmem:[%s564 + $0x68] sm:$0xff]
        %v2975 = vld [vmem:[%s564 + $0x70] sm:$0xff]
        %v2976 = vld [vmem:[%s564 + $0x78] sm:$0xff]
        %2977 = vset.pattern.permute.xlu0 0
        %2978 = vperm.xlu0 %2977, %v2961
        %v2979 = vpop.permute.xlu0 %2978
        %2980 = vset.pattern.permute.xlu0 0
        %2981 = vperm.xlu0 %2980, %v2962
        %v2982 = vpop.permute.xlu0 %2981
        %2983 = vset.pattern.permute.xlu0 0
        %2984 = vperm.xlu0 %2983, %v2963
        %v2985 = vpop.permute.xlu0 %2984
        %2986 = vset.pattern.permute.xlu0 0
        %2987 = vperm.xlu0 %2986, %v2964
        %v2988 = vpop.permute.xlu0 %2987
        %2989 = vset.pattern.permute.xlu0 0
        %2990 = vperm.xlu0 %2989, %v2965
        %v2991 = vpop.permute.xlu0 %2990
        %2992 = vset.pattern.permute.xlu0 0
        %2993 = vperm.xlu0 %2992, %v2966
        %v2994 = vpop.permute.xlu0 %2993
        %2995 = vset.pattern.permute.xlu0 0
        %2996 = vperm.xlu0 %2995, %v2967
        %v2997 = vpop.permute.xlu0 %2996
        %2998 = vset.pattern.permute.xlu0 0
        %2999 = vperm.xlu0 %2998, %v2968
        %v3000 = vpop.permute.xlu0 %2999
        %3001 = vset.pattern.permute.xlu0 0
        %3002 = vperm.xlu0 %3001, %v2969
        %v3003 = vpop.permute.xlu0 %3002
        %3004 = vset.pattern.permute.xlu0 0
        %3005 = vperm.xlu0 %3004, %v2970
        %v3006 = vpop.permute.xlu0 %3005
        %3007 = vset.pattern.permute.xlu0 0
        %3008 = vperm.xlu0 %3007, %v2971
        %v3009 = vpop.permute.xlu0 %3008
        %3010 = vset.pattern.permute.xlu0 0
        %3011 = vperm.xlu0 %3010, %v2972
        %v3012 = vpop.permute.xlu0 %3011
        %3013 = vset.pattern.permute.xlu0 0
        %3014 = vperm.xlu0 %3013, %v2973
        %v3015 = vpop.permute.xlu0 %3014
        %3016 = vset.pattern.permute.xlu0 0
        %3017 = vperm.xlu0 %3016, %v2974
        %v3018 = vpop.permute.xlu0 %3017
        %3019 = vset.pattern.permute.xlu0 0
        %3020 = vperm.xlu0 %3019, %v2975
        %v3021 = vpop.permute.xlu0 %3020
        %3022 = vset.pattern.permute.xlu0 0
        %3023 = vperm.xlu0 %3022, %v2976
        %v3024 = vpop.permute.xlu0 %3023
        %vm3025 = vcmp.eq.s32.totalorder %v2960, %v2979
        %vm3026 = vcmp.eq.s32.totalorder %v2960, %v2982
        %vm3027 = vcmp.eq.s32.totalorder %v2960, %v2985
        %vm3028 = vcmp.eq.s32.totalorder %v2960, %v2988
        %vm3029 = vcmp.eq.s32.totalorder %v2960, %v2991
        %vm3030 = vcmp.eq.s32.totalorder %v2960, %v2994
        %vm3031 = vcmp.eq.s32.totalorder %v2960, %v2997
        %vm3032 = vcmp.eq.s32.totalorder %v2960, %v3000
        %vm3033 = vcmp.eq.s32.totalorder %v2960, %v3003
        %vm3034 = vcmp.eq.s32.totalorder %v2960, %v3006
        %vm3035 = vcmp.eq.s32.totalorder %v2960, %v3009
        %vm3036 = vcmp.eq.s32.totalorder %v2960, %v3012
        %vm3037 = vcmp.eq.s32.totalorder %v2960, %v3015
        %vm3038 = vcmp.eq.s32.totalorder %v2960, %v3018
        %vm3039 = vcmp.eq.s32.totalorder %v2960, %v3021
        %vm3040 = vcmp.eq.s32.totalorder %v2960, %v3024
        %v3041 = vsel %vm3025, 1, 0
        %v3042 = vsel %vm3026, 1, 0
        %v3043 = vsel %vm3027, 1, 0
        %v3044 = vsel %vm3028, 1, 0
        %v3045 = vsel %vm3029, 1, 0
        %v3046 = vsel %vm3030, 1, 0
        %v3047 = vsel %vm3031, 1, 0
        %v3048 = vsel %vm3032, 1, 0
        %v3049 = vsel %vm3033, 1, 0
        %v3050 = vsel %vm3034, 1, 0
        %v3051 = vsel %vm3035, 1, 0
        %v3052 = vsel %vm3036, 1, 0
        %v3053 = vsel %vm3037, 1, 0
        %v3054 = vsel %vm3038, 1, 0
        %v3055 = vsel %vm3039, 1, 0
        %v3056 = vsel %vm3040, 1, 0
        %v3057 = vcvt.s32.f32 %v3041
        %v3058 = vcvt.s32.f32 %v3042
        %v3059 = vcvt.s32.f32 %v3043
        %v3060 = vcvt.s32.f32 %v3044
        %v3061 = vcvt.s32.f32 %v3045
        %v3062 = vcvt.s32.f32 %v3046
        %v3063 = vcvt.s32.f32 %v3047
        %v3064 = vcvt.s32.f32 %v3048
        %v3065 = vcvt.s32.f32 %v3049
        %v3066 = vcvt.s32.f32 %v3050
        %v3067 = vcvt.s32.f32 %v3051
        %v3068 = vcvt.s32.f32 %v3052
        %v3069 = vcvt.s32.f32 %v3053
        %v3070 = vcvt.s32.f32 %v3054
        %v3071 = vcvt.s32.f32 %v3055
        %v3072 = vcvt.s32.f32 %v3056
        %v3073 = vld [vmem:[#allocation2] sm:$0xff]
        %v3074 = vld [vmem:[#allocation2 + $0x10] sm:$0xff]
        %v3075 = vld [vmem:[#allocation2 + $0x20] sm:$0xff]
        %vm3076 = vcmask 195584
        %v3078 = vsel %vm3076, %v3057, 0
        %v3081 = vsel %vm3076, %v3058, 0
        %v3084 = vsel %vm3076, %v3059, 0
        %v3087 = vsel %vm3076, %v3060, 0
        %v3090 = vsel %vm3076, %v3061, 0
        %v3093 = vsel %vm3076, %v3062, 0
        %v3096 = vsel %vm3076, %v3063, 0
        %v3099 = vsel %vm3076, %v3064, 0
        %v3102 = vsel %vm3076, %v3065, 0
        %v3105 = vsel %vm3076, %v3066, 0
        %v3108 = vsel %vm3076, %v3067, 0
        %v3111 = vsel %vm3076, %v3068, 0
        %v3114 = vsel %vm3076, %v3069, 0
        %v3117 = vsel %vm3076, %v3070, 0
        %v3120 = vsel %vm3076, %v3071, 0
        %v3123 = vsel %vm3076, %v3072, 0
        %3125 = vmatprep.subr.mxu0 0.0
        %3126 = vmatpush1.msra.mxu0 0.0
        %3127 = vmatprep.subr.mxu0 0.0
        %3128 = vmatpush1.msra.mxu0 0.0
        %3129 = vmatprep.subr.mxu0 0.0
        %3130 = vmatpush1.msra.mxu0 0.0
        %3131 = vmatprep.subr.mxu0 0.0
        %3132 = vmatpush1.msra.mxu0 0.0
        %3133 = vmatprep.subr.mxu0 0.0
        %3134 = vmatpush1.msra.mxu0 0.0
        %3135 = vmatprep.subr.mxu0 0.0
        %3136 = vmatpush1.msra.mxu0 0.0
        %3137 = vmatprep.subr.mxu0 0.0
        %3138 = vmatpush1.msra.mxu0 0.0
        %3139 = vmatprep.subr.mxu0 0.0
        %3140 = vmatpush1.msra.mxu0 0.0
        %3141 = vmatprep.subr.mxu0 0.0
        %3142 = vmatpush1.msra.mxu0 0.0
        %3143 = vmatprep.subr.mxu0 0.0
        %3144 = vmatpush1.msra.mxu0 0.0
        %3145 = vmatprep.subr.mxu0 0.0
        %3146 = vmatpush1.msra.mxu0 0.0
        %3147 = vmatprep.subr.mxu0 0.0
        %3148 = vmatpush1.msra.mxu0 0.0
        %3149 = vmatprep.subr.mxu0 0.0
        %3150 = vmatpush1.msra.mxu0 0.0
        %3151 = vmatprep.subr.mxu0 0.0
        %v3152 = vand.u32 %v3075, 4294901760
        %3153 = vmatpush1.msra.mxu0 %v3152
        %3154 = vmatprep.subr.mxu0 0.0
        %v3155 = vand.u32 %v3074, 4294901760
        %3156 = vmatpush1.msra.mxu0 %v3155
        %3157 = vmatprep.subr.mxu0 0.0
        %v3158 = vand.u32 %v3073, 4294901760
        %3159 = vmatpush1.msra.mxu0 %v3158
        %3160 = vmatprep.subr.mxu0 0.0
        %3161 = vmatpush2.msra.mxu0 0.0
        %3162 = vmatprep.subr.mxu0 0.0
        %3163 = vmatpush2.msra.mxu0 0.0
        %3164 = vmatprep.subr.mxu0 0.0
        %3165 = vmatpush2.msra.mxu0 0.0
        %3166 = vmatprep.subr.mxu0 0.0
        %3167 = vmatpush2.msra.mxu0 0.0
        %3168 = vmatprep.subr.mxu0 0.0
        %3169 = vmatpush2.msra.mxu0 0.0
        %3170 = vmatprep.subr.mxu0 0.0
        %3171 = vmatpush2.msra.mxu0 0.0
        %3172 = vmatprep.subr.mxu0 0.0
        %3173 = vmatpush2.msra.mxu0 0.0
        %3174 = vmatprep.subr.mxu0 0.0
        %3175 = vmatpush2.msra.mxu0 0.0
        %3176 = vmatprep.subr.mxu0 0.0
        %3177 = vmatpush2.msra.mxu0 0.0
        %3178 = vmatprep.subr.mxu0 0.0
        %3179 = vmatpush2.msra.mxu0 0.0
        %3180 = vmatprep.subr.mxu0 0.0
        %3181 = vmatpush2.msra.mxu0 0.0
        %3182 = vmatprep.subr.mxu0 0.0
        %3183 = vmatpush2.msra.mxu0 0.0
        %3184 = vmatprep.subr.mxu0 0.0
        %3185 = vmatpush2.msra.mxu0 0.0
        %3186 = vmatprep.subr.mxu0 0.0
        %3187 = vmatpush2.msra.mxu0 0.0
        %3188 = vmatprep.subr.mxu0 0.0
        %3189 = vmatpush2.msra.mxu0 0.0
        %3190 = vmatprep.subr.mxu0 0.0
        %3191 = vmatpush2.msra.mxu0 0.0
        %3192 = vmatprep.mubr.f32.mxu0 0.0
        %v3193 = vand.u32 %v3078, 4294901760
        %v3194 = vsub.f32 %v3078, %v3193
        %v3195 = vand.u32 %v3194, 4294901760
        %v3196 = vsub.f32 %v3194, %v3195
        %v3197 = vand.u32 %v3196, 4294901760
        %3198 = vmatmul.mubr.f32.gmra.mxu0 %v3197
        %v3199 = vpop.f32.mrf.mxu0
        %v3200 = vadd.f32 0.0, %v3199
        %v3201 = vpop.f32.mrf.mxu0
        %3202 = vmatprep.mubr.f32.mxu0 0.0
        %v3203 = vand.u32 %v3081, 4294901760
        %v3204 = vsub.f32 %v3081, %v3203
        %v3205 = vand.u32 %v3204, 4294901760
        %v3206 = vsub.f32 %v3204, %v3205
        %v3207 = vand.u32 %v3206, 4294901760
        %3208 = vmatmul.mubr.f32.gmra.mxu0 %v3207
        %v3209 = vpop.f32.mrf.mxu0
        %v3210 = vadd.f32 0.0, %v3209
        %v3211 = vpop.f32.mrf.mxu0
        %3212 = vmatprep.mubr.f32.mxu0 0.0
        %v3213 = vand.u32 %v3084, 4294901760
        %v3214 = vsub.f32 %v3084, %v3213
        %v3215 = vand.u32 %v3214, 4294901760
        %v3216 = vsub.f32 %v3214, %v3215
        %v3217 = vand.u32 %v3216, 4294901760
        %3218 = vmatmul.mubr.f32.gmra.mxu0 %v3217
        %v3219 = vpop.f32.mrf.mxu0
        %v3220 = vadd.f32 0.0, %v3219
        %v3221 = vpop.f32.mrf.mxu0
        %3222 = vmatprep.mubr.f32.mxu0 0.0
        %v3223 = vand.u32 %v3087, 4294901760
        %v3224 = vsub.f32 %v3087, %v3223
        %v3225 = vand.u32 %v3224, 4294901760
        %v3226 = vsub.f32 %v3224, %v3225
        %v3227 = vand.u32 %v3226, 4294901760
        %3228 = vmatmul.mubr.f32.gmra.mxu0 %v3227
        %v3229 = vpop.f32.mrf.mxu0
        %v3230 = vadd.f32 0.0, %v3229
        %v3231 = vpop.f32.mrf.mxu0
        %3232 = vmatprep.mubr.f32.mxu0 0.0
        %v3233 = vand.u32 %v3090, 4294901760
        %v3234 = vsub.f32 %v3090, %v3233
        %v3235 = vand.u32 %v3234, 4294901760
        %v3236 = vsub.f32 %v3234, %v3235
        %v3237 = vand.u32 %v3236, 4294901760
        %3238 = vmatmul.mubr.f32.gmra.mxu0 %v3237
        %v3239 = vpop.f32.mrf.mxu0
        %v3240 = vadd.f32 0.0, %v3239
        %v3241 = vpop.f32.mrf.mxu0
        %3242 = vmatprep.mubr.f32.mxu0 0.0
        %v3243 = vand.u32 %v3093, 4294901760
        %v3244 = vsub.f32 %v3093, %v3243
        %v3245 = vand.u32 %v3244, 4294901760
        %v3246 = vsub.f32 %v3244, %v3245
        %v3247 = vand.u32 %v3246, 4294901760
        %3248 = vmatmul.mubr.f32.gmra.mxu0 %v3247
        %v3249 = vpop.f32.mrf.mxu0
        %v3250 = vadd.f32 0.0, %v3249
        %v3251 = vpop.f32.mrf.mxu0
        %3252 = vmatprep.mubr.f32.mxu0 0.0
        %v3253 = vand.u32 %v3096, 4294901760
        %v3254 = vsub.f32 %v3096, %v3253
        %v3255 = vand.u32 %v3254, 4294901760
        %v3256 = vsub.f32 %v3254, %v3255
        %v3257 = vand.u32 %v3256, 4294901760
        %3258 = vmatmul.mubr.f32.gmra.mxu0 %v3257
        %v3259 = vpop.f32.mrf.mxu0
        %v3260 = vadd.f32 0.0, %v3259
        %v3261 = vpop.f32.mrf.mxu0
        %3262 = vmatprep.mubr.f32.mxu0 0.0
        %v3263 = vand.u32 %v3099, 4294901760
        %v3264 = vsub.f32 %v3099, %v3263
        %v3265 = vand.u32 %v3264, 4294901760
        %v3266 = vsub.f32 %v3264, %v3265
        %v3267 = vand.u32 %v3266, 4294901760
        %3268 = vmatmul.mubr.f32.gmra.mxu0 %v3267
        %v3269 = vpop.f32.mrf.mxu0
        %v3270 = vadd.f32 0.0, %v3269
        %v3271 = vpop.f32.mrf.mxu0
        %3272 = vmatprep.mubr.f32.mxu0 0.0
        %v3273 = vand.u32 %v3102, 4294901760
        %v3274 = vsub.f32 %v3102, %v3273
        %v3275 = vand.u32 %v3274, 4294901760
        %v3276 = vsub.f32 %v3274, %v3275
        %v3277 = vand.u32 %v3276, 4294901760
        %3278 = vmatmul.mubr.f32.gmra.mxu0 %v3277
        %v3279 = vpop.f32.mrf.mxu0
        %v3280 = vadd.f32 0.0, %v3279
        %v3281 = vpop.f32.mrf.mxu0
        %3282 = vmatprep.mubr.f32.mxu0 0.0
        %v3283 = vand.u32 %v3105, 4294901760
        %v3284 = vsub.f32 %v3105, %v3283
        %v3285 = vand.u32 %v3284, 4294901760
        %v3286 = vsub.f32 %v3284, %v3285
        %v3287 = vand.u32 %v3286, 4294901760
        %3288 = vmatmul.mubr.f32.gmra.mxu0 %v3287
        %v3289 = vpop.f32.mrf.mxu0
        %v3290 = vadd.f32 0.0, %v3289
        %v3291 = vpop.f32.mrf.mxu0
        %3292 = vmatprep.mubr.f32.mxu0 0.0
        %v3293 = vand.u32 %v3108, 4294901760
        %v3294 = vsub.f32 %v3108, %v3293
        %v3295 = vand.u32 %v3294, 4294901760
        %v3296 = vsub.f32 %v3294, %v3295
        %v3297 = vand.u32 %v3296, 4294901760
        %3298 = vmatmul.mubr.f32.gmra.mxu0 %v3297
        %v3299 = vpop.f32.mrf.mxu0
        %v3300 = vadd.f32 0.0, %v3299
        %v3301 = vpop.f32.mrf.mxu0
        %3302 = vmatprep.mubr.f32.mxu0 0.0
        %v3303 = vand.u32 %v3111, 4294901760
        %v3304 = vsub.f32 %v3111, %v3303
        %v3305 = vand.u32 %v3304, 4294901760
        %v3306 = vsub.f32 %v3304, %v3305
        %v3307 = vand.u32 %v3306, 4294901760
        %3308 = vmatmul.mubr.f32.gmra.mxu0 %v3307
        %v3309 = vpop.f32.mrf.mxu0
        %v3310 = vadd.f32 0.0, %v3309
        %v3311 = vpop.f32.mrf.mxu0
        %3312 = vmatprep.mubr.f32.mxu0 0.0
        %v3313 = vand.u32 %v3114, 4294901760
        %v3314 = vsub.f32 %v3114, %v3313
        %v3315 = vand.u32 %v3314, 4294901760
        %v3316 = vsub.f32 %v3314, %v3315
        %v3317 = vand.u32 %v3316, 4294901760
        %3318 = vmatmul.mubr.f32.gmra.mxu0 %v3317
        %v3319 = vpop.f32.mrf.mxu0
        %v3320 = vadd.f32 0.0, %v3319
        %v3321 = vpop.f32.mrf.mxu0
        %3322 = vmatprep.mubr.f32.mxu0 0.0
        %v3323 = vand.u32 %v3117, 4294901760
        %v3324 = vsub.f32 %v3117, %v3323
        %v3325 = vand.u32 %v3324, 4294901760
        %v3326 = vsub.f32 %v3324, %v3325
        %v3327 = vand.u32 %v3326, 4294901760
        %3328 = vmatmul.mubr.f32.gmra.mxu0 %v3327
        %v3329 = vpop.f32.mrf.mxu0
        %v3330 = vadd.f32 0.0, %v3329
        %v3331 = vpop.f32.mrf.mxu0
        %3332 = vmatprep.mubr.f32.mxu0 0.0
        %v3333 = vand.u32 %v3120, 4294901760
        %v3334 = vsub.f32 %v3120, %v3333
        %v3335 = vand.u32 %v3334, 4294901760
        %v3336 = vsub.f32 %v3334, %v3335
        %v3337 = vand.u32 %v3336, 4294901760
        %3338 = vmatmul.mubr.f32.gmra.mxu0 %v3337
        %v3339 = vpop.f32.mrf.mxu0
        %v3340 = vadd.f32 0.0, %v3339
        %v3341 = vpop.f32.mrf.mxu0
        %3342 = vmatprep.mubr.f32.mxu0 0.0
        %v3343 = vand.u32 %v3123, 4294901760
        %v3344 = vsub.f32 %v3123, %v3343
        %v3345 = vand.u32 %v3344, 4294901760
        %v3346 = vsub.f32 %v3344, %v3345
        %v3347 = vand.u32 %v3346, 4294901760
        %3348 = vmatmul.mubr.f32.gmra.mxu0 %v3347
        %v3349 = vpop.f32.mrf.mxu0
        %v3350 = vadd.f32 0.0, %v3349
        %v3351 = vpop.f32.mrf.mxu0
        %3352 = vdwg.mxu0
        %3353 = vmatprep.subr.mxu0 0.0
        %3354 = vmatpush1.msra.mxu0 0.0
        %3355 = vmatprep.subr.mxu0 0.0
        %3356 = vmatpush1.msra.mxu0 0.0
        %3357 = vmatprep.subr.mxu0 0.0
        %3358 = vmatpush1.msra.mxu0 0.0
        %3359 = vmatprep.subr.mxu0 0.0
        %3360 = vmatpush1.msra.mxu0 0.0
        %3361 = vmatprep.subr.mxu0 0.0
        %3362 = vmatpush1.msra.mxu0 0.0
        %3363 = vmatprep.subr.mxu0 0.0
        %3364 = vmatpush1.msra.mxu0 0.0
        %3365 = vmatprep.subr.mxu0 0.0
        %3366 = vmatpush1.msra.mxu0 0.0
        %3367 = vmatprep.subr.mxu0 0.0
        %3368 = vmatpush1.msra.mxu0 0.0
        %3369 = vmatprep.subr.mxu0 0.0
        %3370 = vmatpush1.msra.mxu0 0.0
        %3371 = vmatprep.subr.mxu0 0.0
        %3372 = vmatpush1.msra.mxu0 0.0
        %3373 = vmatprep.subr.mxu0 0.0
        %3374 = vmatpush1.msra.mxu0 0.0
        %3375 = vmatprep.subr.mxu0 0.0
        %3376 = vmatpush1.msra.mxu0 0.0
        %3377 = vmatprep.subr.mxu0 0.0
        %3378 = vmatpush1.msra.mxu0 0.0
        %3379 = vmatprep.subr.mxu0 0.0
        %v3380 = vand.u32 %v3075, 4294901760
        %v3381 = vsub.f32 %v3075, %v3380
        %v3382 = vand.u32 %v3381, 4294901760
        %v3383 = vsub.f32 %v3381, %v3382
        %v3384 = vand.u32 %v3383, 4294901760
        %3385 = vmatpush1.msra.mxu0 %v3384
        %3386 = vmatprep.subr.mxu0 0.0
        %v3387 = vand.u32 %v3074, 4294901760
        %v3388 = vsub.f32 %v3074, %v3387
        %v3389 = vand.u32 %v3388, 4294901760
        %v3390 = vsub.f32 %v3388, %v3389
        %v3391 = vand.u32 %v3390, 4294901760
        %3392 = vmatpush1.msra.mxu0 %v3391
        %3393 = vmatprep.subr.mxu0 0.0
        %v3394 = vand.u32 %v3073, 4294901760
        %v3395 = vsub.f32 %v3073, %v3394
        %v3396 = vand.u32 %v3395, 4294901760
        %v3397 = vsub.f32 %v3395, %v3396
        %v3398 = vand.u32 %v3397, 4294901760
        %3399 = vmatpush1.msra.mxu0 %v3398
        %3400 = vmatprep.subr.mxu0 0.0
        %3401 = vmatpush2.msra.mxu0 0.0
        %3402 = vmatprep.subr.mxu0 0.0
        %3403 = vmatpush2.msra.mxu0 0.0
        %3404 = vmatprep.subr.mxu0 0.0
        %3405 = vmatpush2.msra.mxu0 0.0
        %3406 = vmatprep.subr.mxu0 0.0
        %3407 = vmatpush2.msra.mxu0 0.0
        %3408 = vmatprep.subr.mxu0 0.0
        %3409 = vmatpush2.msra.mxu0 0.0
        %3410 = vmatprep.subr.mxu0 0.0
        %3411 = vmatpush2.msra.mxu0 0.0
        %3412 = vmatprep.subr.mxu0 0.0
        %3413 = vmatpush2.msra.mxu0 0.0
        %3414 = vmatprep.subr.mxu0 0.0
        %3415 = vmatpush2.msra.mxu0 0.0
        %3416 = vmatprep.subr.mxu0 0.0
        %3417 = vmatpush2.msra.mxu0 0.0
        %3418 = vmatprep.subr.mxu0 0.0
        %3419 = vmatpush2.msra.mxu0 0.0
        %3420 = vmatprep.subr.mxu0 0.0
        %3421 = vmatpush2.msra.mxu0 0.0
        %3422 = vmatprep.subr.mxu0 0.0
        %3423 = vmatpush2.msra.mxu0 0.0
        %3424 = vmatprep.subr.mxu0 0.0
        %3425 = vmatpush2.msra.mxu0 0.0
        %3426 = vmatprep.subr.mxu0 0.0
        %3427 = vmatpush2.msra.mxu0 0.0
        %3428 = vmatprep.subr.mxu0 0.0
        %3429 = vmatpush2.msra.mxu0 0.0
        %3430 = vmatprep.subr.mxu0 0.0
        %3431 = vmatpush2.msra.mxu0 0.0
        %3432 = vmatprep.mubr.f32.mxu0 0.0
        %v3433 = vand.u32 %v3078, 4294901760
        %3434 = vmatmul.mubr.f32.gmra.mxu0 %v3433
        %v3435 = vpop.f32.mrf.mxu0
        %v3436 = vadd.f32 %v3200, %v3435
        %v3437 = vpop.f32.mrf.mxu0
        %3438 = vmatprep.mubr.f32.mxu0 0.0
        %v3439 = vand.u32 %v3081, 4294901760
        %3440 = vmatmul.mubr.f32.gmra.mxu0 %v3439
        %v3441 = vpop.f32.mrf.mxu0
        %v3442 = vadd.f32 %v3210, %v3441
        %v3443 = vpop.f32.mrf.mxu0
        %3444 = vmatprep.mubr.f32.mxu0 0.0
        %v3445 = vand.u32 %v3084, 4294901760
        %3446 = vmatmul.mubr.f32.gmra.mxu0 %v3445
        %v3447 = vpop.f32.mrf.mxu0
        %v3448 = vadd.f32 %v3220, %v3447
        %v3449 = vpop.f32.mrf.mxu0
        %3450 = vmatprep.mubr.f32.mxu0 0.0
        %v3451 = vand.u32 %v3087, 4294901760
        %3452 = vmatmul.mubr.f32.gmra.mxu0 %v3451
        %v3453 = vpop.f32.mrf.mxu0
        %v3454 = vadd.f32 %v3230, %v3453
        %v3455 = vpop.f32.mrf.mxu0
        %3456 = vmatprep.mubr.f32.mxu0 0.0
        %v3457 = vand.u32 %v3090, 4294901760
        %3458 = vmatmul.mubr.f32.gmra.mxu0 %v3457
        %v3459 = vpop.f32.mrf.mxu0
        %v3460 = vadd.f32 %v3240, %v3459
        %v3461 = vpop.f32.mrf.mxu0
        %3462 = vmatprep.mubr.f32.mxu0 0.0
        %v3463 = vand.u32 %v3093, 4294901760
        %3464 = vmatmul.mubr.f32.gmra.mxu0 %v3463
        %v3465 = vpop.f32.mrf.mxu0
        %v3466 = vadd.f32 %v3250, %v3465
        %v3467 = vpop.f32.mrf.mxu0
        %3468 = vmatprep.mubr.f32.mxu0 0.0
        %v3469 = vand.u32 %v3096, 4294901760
        %3470 = vmatmul.mubr.f32.gmra.mxu0 %v3469
        %v3471 = vpop.f32.mrf.mxu0
        %v3472 = vadd.f32 %v3260, %v3471
        %v3473 = vpop.f32.mrf.mxu0
        %3474 = vmatprep.mubr.f32.mxu0 0.0
        %v3475 = vand.u32 %v3099, 4294901760
        %3476 = vmatmul.mubr.f32.gmra.mxu0 %v3475
        %v3477 = vpop.f32.mrf.mxu0
        %v3478 = vadd.f32 %v3270, %v3477
        %v3479 = vpop.f32.mrf.mxu0
        %3480 = vmatprep.mubr.f32.mxu0 0.0
        %v3481 = vand.u32 %v3102, 4294901760
        %3482 = vmatmul.mubr.f32.gmra.mxu0 %v3481
        %v3483 = vpop.f32.mrf.mxu0
        %v3484 = vadd.f32 %v3280, %v3483
        %v3485 = vpop.f32.mrf.mxu0
        %3486 = vmatprep.mubr.f32.mxu0 0.0
        %v3487 = vand.u32 %v3105, 4294901760
        %3488 = vmatmul.mubr.f32.gmra.mxu0 %v3487
        %v3489 = vpop.f32.mrf.mxu0
        %v3490 = vadd.f32 %v3290, %v3489
        %v3491 = vpop.f32.mrf.mxu0
        %3492 = vmatprep.mubr.f32.mxu0 0.0
        %v3493 = vand.u32 %v3108, 4294901760
        %3494 = vmatmul.mubr.f32.gmra.mxu0 %v3493
        %v3495 = vpop.f32.mrf.mxu0
        %v3496 = vadd.f32 %v3300, %v3495
        %v3497 = vpop.f32.mrf.mxu0
        %3498 = vmatprep.mubr.f32.mxu0 0.0
        %v3499 = vand.u32 %v3111, 4294901760
        %3500 = vmatmul.mubr.f32.gmra.mxu0 %v3499
        %v3501 = vpop.f32.mrf.mxu0
        %v3502 = vadd.f32 %v3310, %v3501
        %v3503 = vpop.f32.mrf.mxu0
        %3504 = vmatprep.mubr.f32.mxu0 0.0
        %v3505 = vand.u32 %v3114, 4294901760
        %3506 = vmatmul.mubr.f32.gmra.mxu0 %v3505
        %v3507 = vpop.f32.mrf.mxu0
        %v3508 = vadd.f32 %v3320, %v3507
        %v3509 = vpop.f32.mrf.mxu0
        %3510 = vmatprep.mubr.f32.mxu0 0.0
        %v3511 = vand.u32 %v3117, 4294901760
        %3512 = vmatmul.mubr.f32.gmra.mxu0 %v3511
        %v3513 = vpop.f32.mrf.mxu0
        %v3514 = vadd.f32 %v3330, %v3513
        %v3515 = vpop.f32.mrf.mxu0
        %3516 = vmatprep.mubr.f32.mxu0 0.0
        %v3517 = vand.u32 %v3120, 4294901760
        %3518 = vmatmul.mubr.f32.gmra.mxu0 %v3517
        %v3519 = vpop.f32.mrf.mxu0
        %v3520 = vadd.f32 %v3340, %v3519
        %v3521 = vpop.f32.mrf.mxu0
        %3522 = vmatprep.mubr.f32.mxu0 0.0
        %v3523 = vand.u32 %v3123, 4294901760
        %3524 = vmatmul.mubr.f32.gmra.mxu0 %v3523
        %v3525 = vpop.f32.mrf.mxu0
        %v3526 = vadd.f32 %v3350, %v3525
        %v3527 = vpop.f32.mrf.mxu0
        %3528 = vdwg.mxu0
        %3529 = vmatprep.subr.mxu0 0.0
        %3530 = vmatpush1.msra.mxu0 0.0
        %3531 = vmatprep.subr.mxu0 0.0
        %3532 = vmatpush1.msra.mxu0 0.0
        %3533 = vmatprep.subr.mxu0 0.0
        %3534 = vmatpush1.msra.mxu0 0.0
        %3535 = vmatprep.subr.mxu0 0.0
        %3536 = vmatpush1.msra.mxu0 0.0
        %3537 = vmatprep.subr.mxu0 0.0
        %3538 = vmatpush1.msra.mxu0 0.0
        %3539 = vmatprep.subr.mxu0 0.0
        %3540 = vmatpush1.msra.mxu0 0.0
        %3541 = vmatprep.subr.mxu0 0.0
        %3542 = vmatpush1.msra.mxu0 0.0
        %3543 = vmatprep.subr.mxu0 0.0
        %3544 = vmatpush1.msra.mxu0 0.0
        %3545 = vmatprep.subr.mxu0 0.0
        %3546 = vmatpush1.msra.mxu0 0.0
        %3547 = vmatprep.subr.mxu0 0.0
        %3548 = vmatpush1.msra.mxu0 0.0
        %3549 = vmatprep.subr.mxu0 0.0
        %3550 = vmatpush1.msra.mxu0 0.0
        %3551 = vmatprep.subr.mxu0 0.0
        %3552 = vmatpush1.msra.mxu0 0.0
        %3553 = vmatprep.subr.mxu0 0.0
        %3554 = vmatpush1.msra.mxu0 0.0
        %3555 = vmatprep.subr.mxu0 0.0
        %v3556 = vand.u32 %v3075, 4294901760
        %v3557 = vsub.f32 %v3075, %v3556
        %3558 = vmatpush1.msra.mxu0 %v3557
        %3559 = vmatprep.subr.mxu0 0.0
        %v3560 = vand.u32 %v3074, 4294901760
        %v3561 = vsub.f32 %v3074, %v3560
        %3562 = vmatpush1.msra.mxu0 %v3561
        %3563 = vmatprep.subr.mxu0 0.0
        %v3564 = vand.u32 %v3073, 4294901760
        %v3565 = vsub.f32 %v3073, %v3564
        %3566 = vmatpush1.msra.mxu0 %v3565
        %3567 = vmatprep.subr.mxu0 0.0
        %3568 = vmatpush2.msra.mxu0 0.0
        %3569 = vmatprep.subr.mxu0 0.0
        %3570 = vmatpush2.msra.mxu0 0.0
        %3571 = vmatprep.subr.mxu0 0.0
        %3572 = vmatpush2.msra.mxu0 0.0
        %3573 = vmatprep.subr.mxu0 0.0
        %3574 = vmatpush2.msra.mxu0 0.0
        %3575 = vmatprep.subr.mxu0 0.0
        %3576 = vmatpush2.msra.mxu0 0.0
        %3577 = vmatprep.subr.mxu0 0.0
        %3578 = vmatpush2.msra.mxu0 0.0
        %3579 = vmatprep.subr.mxu0 0.0
        %3580 = vmatpush2.msra.mxu0 0.0
        %3581 = vmatprep.subr.mxu0 0.0
        %3582 = vmatpush2.msra.mxu0 0.0
        %3583 = vmatprep.subr.mxu0 0.0
        %3584 = vmatpush2.msra.mxu0 0.0
        %3585 = vmatprep.subr.mxu0 0.0
        %3586 = vmatpush2.msra.mxu0 0.0
        %3587 = vmatprep.subr.mxu0 0.0
        %3588 = vmatpush2.msra.mxu0 0.0
        %3589 = vmatprep.subr.mxu0 0.0
        %3590 = vmatpush2.msra.mxu0 0.0
        %3591 = vmatprep.subr.mxu0 0.0
        %3592 = vmatpush2.msra.mxu0 0.0
        %3593 = vmatprep.subr.mxu0 0.0
        %3594 = vmatpush2.msra.mxu0 0.0
        %3595 = vmatprep.subr.mxu0 0.0
        %3596 = vmatpush2.msra.mxu0 0.0
        %3597 = vmatprep.subr.mxu0 0.0
        %3598 = vmatpush2.msra.mxu0 0.0
        %3599 = vmatprep.mubr.f32.mxu0 0.0
        %v3600 = vand.u32 %v3078, 4294901760
        %v3601 = vsub.f32 %v3078, %v3600
        %3602 = vmatmul.mubr.f32.gmra.mxu0 %v3601
        %v3603 = vpop.f32.mrf.mxu0
        %v3604 = vadd.f32 %v3436, %v3603
        %v3605 = vpop.f32.mrf.mxu0
        %3606 = vmatprep.mubr.f32.mxu0 0.0
        %v3607 = vand.u32 %v3081, 4294901760
        %v3608 = vsub.f32 %v3081, %v3607
        %3609 = vmatmul.mubr.f32.gmra.mxu0 %v3608
        %v3610 = vpop.f32.mrf.mxu0
        %v3611 = vadd.f32 %v3442, %v3610
        %v3612 = vpop.f32.mrf.mxu0
        %3613 = vmatprep.mubr.f32.mxu0 0.0
        %v3614 = vand.u32 %v3084, 4294901760
        %v3615 = vsub.f32 %v3084, %v3614
        %3616 = vmatmul.mubr.f32.gmra.mxu0 %v3615
        %v3617 = vpop.f32.mrf.mxu0
        %v3618 = vadd.f32 %v3448, %v3617
        %v3619 = vpop.f32.mrf.mxu0
        %3620 = vmatprep.mubr.f32.mxu0 0.0
        %v3621 = vand.u32 %v3087, 4294901760
        %v3622 = vsub.f32 %v3087, %v3621
        %3623 = vmatmul.mubr.f32.gmra.mxu0 %v3622
        %v3624 = vpop.f32.mrf.mxu0
        %v3625 = vadd.f32 %v3454, %v3624
        %v3626 = vpop.f32.mrf.mxu0
        %3627 = vmatprep.mubr.f32.mxu0 0.0
        %v3628 = vand.u32 %v3090, 4294901760
        %v3629 = vsub.f32 %v3090, %v3628
        %3630 = vmatmul.mubr.f32.gmra.mxu0 %v3629
        %v3631 = vpop.f32.mrf.mxu0
        %v3632 = vadd.f32 %v3460, %v3631
        %v3633 = vpop.f32.mrf.mxu0
        %3634 = vmatprep.mubr.f32.mxu0 0.0
        %v3635 = vand.u32 %v3093, 4294901760
        %v3636 = vsub.f32 %v3093, %v3635
        %3637 = vmatmul.mubr.f32.gmra.mxu0 %v3636
        %v3638 = vpop.f32.mrf.mxu0
        %v3639 = vadd.f32 %v3466, %v3638
        %v3640 = vpop.f32.mrf.mxu0
        %3641 = vmatprep.mubr.f32.mxu0 0.0
        %v3642 = vand.u32 %v3096, 4294901760
        %v3643 = vsub.f32 %v3096, %v3642
        %3644 = vmatmul.mubr.f32.gmra.mxu0 %v3643
        %v3645 = vpop.f32.mrf.mxu0
        %v3646 = vadd.f32 %v3472, %v3645
        %v3647 = vpop.f32.mrf.mxu0
        %3648 = vmatprep.mubr.f32.mxu0 0.0
        %v3649 = vand.u32 %v3099, 4294901760
        %v3650 = vsub.f32 %v3099, %v3649
        %3651 = vmatmul.mubr.f32.gmra.mxu0 %v3650
        %v3652 = vpop.f32.mrf.mxu0
        %v3653 = vadd.f32 %v3478, %v3652
        %v3654 = vpop.f32.mrf.mxu0
        %3655 = vmatprep.mubr.f32.mxu0 0.0
        %v3656 = vand.u32 %v3102, 4294901760
        %v3657 = vsub.f32 %v3102, %v3656
        %3658 = vmatmul.mubr.f32.gmra.mxu0 %v3657
        %v3659 = vpop.f32.mrf.mxu0
        %v3660 = vadd.f32 %v3484, %v3659
        %v3661 = vpop.f32.mrf.mxu0
        %3662 = vmatprep.mubr.f32.mxu0 0.0
        %v3663 = vand.u32 %v3105, 4294901760
        %v3664 = vsub.f32 %v3105, %v3663
        %3665 = vmatmul.mubr.f32.gmra.mxu0 %v3664
        %v3666 = vpop.f32.mrf.mxu0
        %v3667 = vadd.f32 %v3490, %v3666
        %v3668 = vpop.f32.mrf.mxu0
        %3669 = vmatprep.mubr.f32.mxu0 0.0
        %v3670 = vand.u32 %v3108, 4294901760
        %v3671 = vsub.f32 %v3108, %v3670
        %3672 = vmatmul.mubr.f32.gmra.mxu0 %v3671
        %v3673 = vpop.f32.mrf.mxu0
        %v3674 = vadd.f32 %v3496, %v3673
        %v3675 = vpop.f32.mrf.mxu0
        %3676 = vmatprep.mubr.f32.mxu0 0.0
        %v3677 = vand.u32 %v3111, 4294901760
        %v3678 = vsub.f32 %v3111, %v3677
        %3679 = vmatmul.mubr.f32.gmra.mxu0 %v3678
        %v3680 = vpop.f32.mrf.mxu0
        %v3681 = vadd.f32 %v3502, %v3680
        %v3682 = vpop.f32.mrf.mxu0
        %3683 = vmatprep.mubr.f32.mxu0 0.0
        %v3684 = vand.u32 %v3114, 4294901760
        %v3685 = vsub.f32 %v3114, %v3684
        %3686 = vmatmul.mubr.f32.gmra.mxu0 %v3685
        %v3687 = vpop.f32.mrf.mxu0
        %v3688 = vadd.f32 %v3508, %v3687
        %v3689 = vpop.f32.mrf.mxu0
        %3690 = vmatprep.mubr.f32.mxu0 0.0
        %v3691 = vand.u32 %v3117, 4294901760
        %v3692 = vsub.f32 %v3117, %v3691
        %3693 = vmatmul.mubr.f32.gmra.mxu0 %v3692
        %v3694 = vpop.f32.mrf.mxu0
        %v3695 = vadd.f32 %v3514, %v3694
        %v3696 = vpop.f32.mrf.mxu0
        %3697 = vmatprep.mubr.f32.mxu0 0.0
        %v3698 = vand.u32 %v3120, 4294901760
        %v3699 = vsub.f32 %v3120, %v3698
        %3700 = vmatmul.mubr.f32.gmra.mxu0 %v3699
        %v3701 = vpop.f32.mrf.mxu0
        %v3702 = vadd.f32 %v3520, %v3701
        %v3703 = vpop.f32.mrf.mxu0
        %3704 = vmatprep.mubr.f32.mxu0 0.0
        %v3705 = vand.u32 %v3123, 4294901760
        %v3706 = vsub.f32 %v3123, %v3705
        %3707 = vmatmul.mubr.f32.gmra.mxu0 %v3706
        %v3708 = vpop.f32.mrf.mxu0
        %v3709 = vadd.f32 %v3526, %v3708
        %v3710 = vpop.f32.mrf.mxu0
        %3711 = vdwg.mxu0
        %3712 = vmatprep.subr.mxu0 0.0
        %3713 = vmatpush1.msra.mxu0 0.0
        %3714 = vmatprep.subr.mxu0 0.0
        %3715 = vmatpush1.msra.mxu0 0.0
        %3716 = vmatprep.subr.mxu0 0.0
        %3717 = vmatpush1.msra.mxu0 0.0
        %3718 = vmatprep.subr.mxu0 0.0
        %3719 = vmatpush1.msra.mxu0 0.0
        %3720 = vmatprep.subr.mxu0 0.0
        %3721 = vmatpush1.msra.mxu0 0.0
        %3722 = vmatprep.subr.mxu0 0.0
        %3723 = vmatpush1.msra.mxu0 0.0
        %3724 = vmatprep.subr.mxu0 0.0
        %3725 = vmatpush1.msra.mxu0 0.0
        %3726 = vmatprep.subr.mxu0 0.0
        %3727 = vmatpush1.msra.mxu0 0.0
        %3728 = vmatprep.subr.mxu0 0.0
        %3729 = vmatpush1.msra.mxu0 0.0
        %3730 = vmatprep.subr.mxu0 0.0
        %3731 = vmatpush1.msra.mxu0 0.0
        %3732 = vmatprep.subr.mxu0 0.0
        %3733 = vmatpush1.msra.mxu0 0.0
        %3734 = vmatprep.subr.mxu0 0.0
        %3735 = vmatpush1.msra.mxu0 0.0
        %3736 = vmatprep.subr.mxu0 0.0
        %3737 = vmatpush1.msra.mxu0 0.0
        %3738 = vmatprep.subr.mxu0 0.0
        %v3739 = vand.u32 %v3075, 4294901760
        %3740 = vmatpush1.msra.mxu0 %v3739
        %3741 = vmatprep.subr.mxu0 0.0
        %v3742 = vand.u32 %v3074, 4294901760
        %3743 = vmatpush1.msra.mxu0 %v3742
        %3744 = vmatprep.subr.mxu0 0.0
        %v3745 = vand.u32 %v3073, 4294901760
        %3746 = vmatpush1.msra.mxu0 %v3745
        %3747 = vmatprep.subr.mxu0 0.0
        %3748 = vmatpush2.msra.mxu0 0.0
        %3749 = vmatprep.subr.mxu0 0.0
        %3750 = vmatpush2.msra.mxu0 0.0
        %3751 = vmatprep.subr.mxu0 0.0
        %3752 = vmatpush2.msra.mxu0 0.0
        %3753 = vmatprep.subr.mxu0 0.0
        %3754 = vmatpush2.msra.mxu0 0.0
        %3755 = vmatprep.subr.mxu0 0.0
        %3756 = vmatpush2.msra.mxu0 0.0
        %3757 = vmatprep.subr.mxu0 0.0
        %3758 = vmatpush2.msra.mxu0 0.0
        %3759 = vmatprep.subr.mxu0 0.0
        %3760 = vmatpush2.msra.mxu0 0.0
        %3761 = vmatprep.subr.mxu0 0.0
        %3762 = vmatpush2.msra.mxu0 0.0
        %3763 = vmatprep.subr.mxu0 0.0
        %3764 = vmatpush2.msra.mxu0 0.0
        %3765 = vmatprep.subr.mxu0 0.0
        %3766 = vmatpush2.msra.mxu0 0.0
        %3767 = vmatprep.subr.mxu0 0.0
        %3768 = vmatpush2.msra.mxu0 0.0
        %3769 = vmatprep.subr.mxu0 0.0
        %3770 = vmatpush2.msra.mxu0 0.0
        %3771 = vmatprep.subr.mxu0 0.0
        %3772 = vmatpush2.msra.mxu0 0.0
        %3773 = vmatprep.subr.mxu0 0.0
        %3774 = vmatpush2.msra.mxu0 0.0
        %3775 = vmatprep.subr.mxu0 0.0
        %3776 = vmatpush2.msra.mxu0 0.0
        %3777 = vmatprep.subr.mxu0 0.0
        %3778 = vmatpush2.msra.mxu0 0.0
        %3779 = vmatprep.mubr.f32.mxu0 0.0
        %v3780 = vand.u32 %v3078, 4294901760
        %v3781 = vsub.f32 %v3078, %v3780
        %v3782 = vand.u32 %v3781, 4294901760
        %3783 = vmatmul.mubr.f32.gmra.mxu0 %v3782
        %v3784 = vpop.f32.mrf.mxu0
        %v3785 = vadd.f32 %v3604, %v3784
        %v3786 = vpop.f32.mrf.mxu0
        %3787 = vmatprep.mubr.f32.mxu0 0.0
        %v3788 = vand.u32 %v3081, 4294901760
        %v3789 = vsub.f32 %v3081, %v3788
        %v3790 = vand.u32 %v3789, 4294901760
        %3791 = vmatmul.mubr.f32.gmra.mxu0 %v3790
        %v3792 = vpop.f32.mrf.mxu0
        %v3793 = vadd.f32 %v3611, %v3792
        %v3794 = vpop.f32.mrf.mxu0
        %3795 = vmatprep.mubr.f32.mxu0 0.0
        %v3796 = vand.u32 %v3084, 4294901760
        %v3797 = vsub.f32 %v3084, %v3796
        %v3798 = vand.u32 %v3797, 4294901760
        %3799 = vmatmul.mubr.f32.gmra.mxu0 %v3798
        %v3800 = vpop.f32.mrf.mxu0
        %v3801 = vadd.f32 %v3618, %v3800
        %v3802 = vpop.f32.mrf.mxu0
        %3803 = vmatprep.mubr.f32.mxu0 0.0
        %v3804 = vand.u32 %v3087, 4294901760
        %v3805 = vsub.f32 %v3087, %v3804
        %v3806 = vand.u32 %v3805, 4294901760
        %3807 = vmatmul.mubr.f32.gmra.mxu0 %v3806
        %v3808 = vpop.f32.mrf.mxu0
        %v3809 = vadd.f32 %v3625, %v3808
        %v3810 = vpop.f32.mrf.mxu0
        %3811 = vmatprep.mubr.f32.mxu0 0.0
        %v3812 = vand.u32 %v3090, 4294901760
        %v3813 = vsub.f32 %v3090, %v3812
        %v3814 = vand.u32 %v3813, 4294901760
        %3815 = vmatmul.mubr.f32.gmra.mxu0 %v3814
        %v3816 = vpop.f32.mrf.mxu0
        %v3817 = vadd.f32 %v3632, %v3816
        %v3818 = vpop.f32.mrf.mxu0
        %3819 = vmatprep.mubr.f32.mxu0 0.0
        %v3820 = vand.u32 %v3093, 4294901760
        %v3821 = vsub.f32 %v3093, %v3820
        %v3822 = vand.u32 %v3821, 4294901760
        %3823 = vmatmul.mubr.f32.gmra.mxu0 %v3822
        %v3824 = vpop.f32.mrf.mxu0
        %v3825 = vadd.f32 %v3639, %v3824
        %v3826 = vpop.f32.mrf.mxu0
        %3827 = vmatprep.mubr.f32.mxu0 0.0
        %v3828 = vand.u32 %v3096, 4294901760
        %v3829 = vsub.f32 %v3096, %v3828
        %v3830 = vand.u32 %v3829, 4294901760
        %3831 = vmatmul.mubr.f32.gmra.mxu0 %v3830
        %v3832 = vpop.f32.mrf.mxu0
        %v3833 = vadd.f32 %v3646, %v3832
        %v3834 = vpop.f32.mrf.mxu0
        %3835 = vmatprep.mubr.f32.mxu0 0.0
        %v3836 = vand.u32 %v3099, 4294901760
        %v3837 = vsub.f32 %v3099, %v3836
        %v3838 = vand.u32 %v3837, 4294901760
        %3839 = vmatmul.mubr.f32.gmra.mxu0 %v3838
        %v3840 = vpop.f32.mrf.mxu0
        %v3841 = vadd.f32 %v3653, %v3840
        %v3842 = vpop.f32.mrf.mxu0
        %3843 = vmatprep.mubr.f32.mxu0 0.0
        %v3844 = vand.u32 %v3102, 4294901760
        %v3845 = vsub.f32 %v3102, %v3844
        %v3846 = vand.u32 %v3845, 4294901760
        %3847 = vmatmul.mubr.f32.gmra.mxu0 %v3846
        %v3848 = vpop.f32.mrf.mxu0
        %v3849 = vadd.f32 %v3660, %v3848
        %v3850 = vpop.f32.mrf.mxu0
        %3851 = vmatprep.mubr.f32.mxu0 0.0
        %v3852 = vand.u32 %v3105, 4294901760
        %v3853 = vsub.f32 %v3105, %v3852
        %v3854 = vand.u32 %v3853, 4294901760
        %3855 = vmatmul.mubr.f32.gmra.mxu0 %v3854
        %v3856 = vpop.f32.mrf.mxu0
        %v3857 = vadd.f32 %v3667, %v3856
        %v3858 = vpop.f32.mrf.mxu0
        %3859 = vmatprep.mubr.f32.mxu0 0.0
        %v3860 = vand.u32 %v3108, 4294901760
        %v3861 = vsub.f32 %v3108, %v3860
        %v3862 = vand.u32 %v3861, 4294901760
        %3863 = vmatmul.mubr.f32.gmra.mxu0 %v3862
        %v3864 = vpop.f32.mrf.mxu0
        %v3865 = vadd.f32 %v3674, %v3864
        %v3866 = vpop.f32.mrf.mxu0
        %3867 = vmatprep.mubr.f32.mxu0 0.0
        %v3868 = vand.u32 %v3111, 4294901760
        %v3869 = vsub.f32 %v3111, %v3868
        %v3870 = vand.u32 %v3869, 4294901760
        %3871 = vmatmul.mubr.f32.gmra.mxu0 %v3870
        %v3872 = vpop.f32.mrf.mxu0
        %v3873 = vadd.f32 %v3681, %v3872
        %v3874 = vpop.f32.mrf.mxu0
        %3875 = vmatprep.mubr.f32.mxu0 0.0
        %v3876 = vand.u32 %v3114, 4294901760
        %v3877 = vsub.f32 %v3114, %v3876
        %v3878 = vand.u32 %v3877, 4294901760
        %3879 = vmatmul.mubr.f32.gmra.mxu0 %v3878
        %v3880 = vpop.f32.mrf.mxu0
        %v3881 = vadd.f32 %v3688, %v3880
        %v3882 = vpop.f32.mrf.mxu0
        %3883 = vmatprep.mubr.f32.mxu0 0.0
        %v3884 = vand.u32 %v3117, 4294901760
        %v3885 = vsub.f32 %v3117, %v3884
        %v3886 = vand.u32 %v3885, 4294901760
        %3887 = vmatmul.mubr.f32.gmra.mxu0 %v3886
        %v3888 = vpop.f32.mrf.mxu0
        %v3889 = vadd.f32 %v3695, %v3888
        %v3890 = vpop.f32.mrf.mxu0
        %3891 = vmatprep.mubr.f32.mxu0 0.0
        %v3892 = vand.u32 %v3120, 4294901760
        %v3893 = vsub.f32 %v3120, %v3892
        %v3894 = vand.u32 %v3893, 4294901760
        %3895 = vmatmul.mubr.f32.gmra.mxu0 %v3894
        %v3896 = vpop.f32.mrf.mxu0
        %v3897 = vadd.f32 %v3702, %v3896
        %v3898 = vpop.f32.mrf.mxu0
        %3899 = vmatprep.mubr.f32.mxu0 0.0
        %v3900 = vand.u32 %v3123, 4294901760
        %v3901 = vsub.f32 %v3123, %v3900
        %v3902 = vand.u32 %v3901, 4294901760
        %3903 = vmatmul.mubr.f32.gmra.mxu0 %v3902
        %v3904 = vpop.f32.mrf.mxu0
        %v3905 = vadd.f32 %v3709, %v3904
        %v3906 = vpop.f32.mrf.mxu0
        %3907 = vdwg.mxu0
        %3908 = vmatprep.subr.mxu0 0.0
        %3909 = vmatpush1.msra.mxu0 0.0
        %3910 = vmatprep.subr.mxu0 0.0
        %3911 = vmatpush1.msra.mxu0 0.0
        %3912 = vmatprep.subr.mxu0 0.0
        %3913 = vmatpush1.msra.mxu0 0.0
        %3914 = vmatprep.subr.mxu0 0.0
        %3915 = vmatpush1.msra.mxu0 0.0
        %3916 = vmatprep.subr.mxu0 0.0
        %3917 = vmatpush1.msra.mxu0 0.0
        %3918 = vmatprep.subr.mxu0 0.0
        %3919 = vmatpush1.msra.mxu0 0.0
        %3920 = vmatprep.subr.mxu0 0.0
        %3921 = vmatpush1.msra.mxu0 0.0
        %3922 = vmatprep.subr.mxu0 0.0
        %3923 = vmatpush1.msra.mxu0 0.0
        %3924 = vmatprep.subr.mxu0 0.0
        %3925 = vmatpush1.msra.mxu0 0.0
        %3926 = vmatprep.subr.mxu0 0.0
        %3927 = vmatpush1.msra.mxu0 0.0
        %3928 = vmatprep.subr.mxu0 0.0
        %3929 = vmatpush1.msra.mxu0 0.0
        %3930 = vmatprep.subr.mxu0 0.0
        %3931 = vmatpush1.msra.mxu0 0.0
        %3932 = vmatprep.subr.mxu0 0.0
        %3933 = vmatpush1.msra.mxu0 0.0
        %3934 = vmatprep.subr.mxu0 0.0
        %v3935 = vand.u32 %v3075, 4294901760
        %v3936 = vsub.f32 %v3075, %v3935
        %v3937 = vand.u32 %v3936, 4294901760
        %3938 = vmatpush1.msra.mxu0 %v3937
        %3939 = vmatprep.subr.mxu0 0.0
        %v3940 = vand.u32 %v3074, 4294901760
        %v3941 = vsub.f32 %v3074, %v3940
        %v3942 = vand.u32 %v3941, 4294901760
        %3943 = vmatpush1.msra.mxu0 %v3942
        %3944 = vmatprep.subr.mxu0 0.0
        %v3945 = vand.u32 %v3073, 4294901760
        %v3946 = vsub.f32 %v3073, %v3945
        %v3947 = vand.u32 %v3946, 4294901760
        %3948 = vmatpush1.msra.mxu0 %v3947
        %3949 = vmatprep.subr.mxu0 0.0
        %3950 = vmatpush2.msra.mxu0 0.0
        %3951 = vmatprep.subr.mxu0 0.0
        %3952 = vmatpush2.msra.mxu0 0.0
        %3953 = vmatprep.subr.mxu0 0.0
        %3954 = vmatpush2.msra.mxu0 0.0
        %3955 = vmatprep.subr.mxu0 0.0
        %3956 = vmatpush2.msra.mxu0 0.0
        %3957 = vmatprep.subr.mxu0 0.0
        %3958 = vmatpush2.msra.mxu0 0.0
        %3959 = vmatprep.subr.mxu0 0.0
        %3960 = vmatpush2.msra.mxu0 0.0
        %3961 = vmatprep.subr.mxu0 0.0
        %3962 = vmatpush2.msra.mxu0 0.0
        %3963 = vmatprep.subr.mxu0 0.0
        %3964 = vmatpush2.msra.mxu0 0.0
        %3965 = vmatprep.subr.mxu0 0.0
        %3966 = vmatpush2.msra.mxu0 0.0
        %3967 = vmatprep.subr.mxu0 0.0
        %3968 = vmatpush2.msra.mxu0 0.0
        %3969 = vmatprep.subr.mxu0 0.0
        %3970 = vmatpush2.msra.mxu0 0.0
        %3971 = vmatprep.subr.mxu0 0.0
        %3972 = vmatpush2.msra.mxu0 0.0
        %3973 = vmatprep.subr.mxu0 0.0
        %3974 = vmatpush2.msra.mxu0 0.0
        %3975 = vmatprep.subr.mxu0 0.0
        %3976 = vmatpush2.msra.mxu0 0.0
        %3977 = vmatprep.subr.mxu0 0.0
        %3978 = vmatpush2.msra.mxu0 0.0
        %3979 = vmatprep.subr.mxu0 0.0
        %3980 = vmatpush2.msra.mxu0 0.0
        %3981 = vmatprep.mubr.f32.mxu0 0.0
        %v3982 = vand.u32 %v3078, 4294901760
        %3983 = vmatmul.mubr.f32.gmra.mxu0 %v3982
        %v3984 = vpop.f32.mrf.mxu0
        %v3985 = vadd.f32 %v3785, %v3984
        %v3986 = vpop.f32.mrf.mxu0
        %3987 = vmatprep.mubr.f32.mxu0 0.0
        %v3988 = vand.u32 %v3081, 4294901760
        %3989 = vmatmul.mubr.f32.gmra.mxu0 %v3988
        %v3990 = vpop.f32.mrf.mxu0
        %v3991 = vadd.f32 %v3793, %v3990
        %v3992 = vpop.f32.mrf.mxu0
        %3993 = vmatprep.mubr.f32.mxu0 0.0
        %v3994 = vand.u32 %v3084, 4294901760
        %3995 = vmatmul.mubr.f32.gmra.mxu0 %v3994
        %v3996 = vpop.f32.mrf.mxu0
        %v3997 = vadd.f32 %v3801, %v3996
        %v3998 = vpop.f32.mrf.mxu0
        %3999 = vmatprep.mubr.f32.mxu0 0.0
        %v4000 = vand.u32 %v3087, 4294901760
        %4001 = vmatmul.mubr.f32.gmra.mxu0 %v4000
        %v4002 = vpop.f32.mrf.mxu0
        %v4003 = vadd.f32 %v3809, %v4002
        %v4004 = vpop.f32.mrf.mxu0
        %4005 = vmatprep.mubr.f32.mxu0 0.0
        %v4006 = vand.u32 %v3090, 4294901760
        %4007 = vmatmul.mubr.f32.gmra.mxu0 %v4006
        %v4008 = vpop.f32.mrf.mxu0
        %v4009 = vadd.f32 %v3817, %v4008
        %v4010 = vpop.f32.mrf.mxu0
        %4011 = vmatprep.mubr.f32.mxu0 0.0
        %v4012 = vand.u32 %v3093, 4294901760
        %4013 = vmatmul.mubr.f32.gmra.mxu0 %v4012
        %v4014 = vpop.f32.mrf.mxu0
        %v4015 = vadd.f32 %v3825, %v4014
        %v4016 = vpop.f32.mrf.mxu0
        %4017 = vmatprep.mubr.f32.mxu0 0.0
        %v4018 = vand.u32 %v3096, 4294901760
        %4019 = vmatmul.mubr.f32.gmra.mxu0 %v4018
        %v4020 = vpop.f32.mrf.mxu0
        %v4021 = vadd.f32 %v3833, %v4020
        %v4022 = vpop.f32.mrf.mxu0
        %4023 = vmatprep.mubr.f32.mxu0 0.0
        %v4024 = vand.u32 %v3099, 4294901760
        %4025 = vmatmul.mubr.f32.gmra.mxu0 %v4024
        %v4026 = vpop.f32.mrf.mxu0
        %v4027 = vadd.f32 %v3841, %v4026
        %v4028 = vpop.f32.mrf.mxu0
        %4029 = vmatprep.mubr.f32.mxu0 0.0
        %v4030 = vand.u32 %v3102, 4294901760
        %4031 = vmatmul.mubr.f32.gmra.mxu0 %v4030
        %v4032 = vpop.f32.mrf.mxu0
        %v4033 = vadd.f32 %v3849, %v4032
        %v4034 = vpop.f32.mrf.mxu0
        %4035 = vmatprep.mubr.f32.mxu0 0.0
        %v4036 = vand.u32 %v3105, 4294901760
        %4037 = vmatmul.mubr.f32.gmra.mxu0 %v4036
        %v4038 = vpop.f32.mrf.mxu0
        %v4039 = vadd.f32 %v3857, %v4038
        %v4040 = vpop.f32.mrf.mxu0
        %4041 = vmatprep.mubr.f32.mxu0 0.0
        %v4042 = vand.u32 %v3108, 4294901760
        %4043 = vmatmul.mubr.f32.gmra.mxu0 %v4042
        %v4044 = vpop.f32.mrf.mxu0
        %v4045 = vadd.f32 %v3865, %v4044
        %v4046 = vpop.f32.mrf.mxu0
        %4047 = vmatprep.mubr.f32.mxu0 0.0
        %v4048 = vand.u32 %v3111, 4294901760
        %4049 = vmatmul.mubr.f32.gmra.mxu0 %v4048
        %v4050 = vpop.f32.mrf.mxu0
        %v4051 = vadd.f32 %v3873, %v4050
        %v4052 = vpop.f32.mrf.mxu0
        %4053 = vmatprep.mubr.f32.mxu0 0.0
        %v4054 = vand.u32 %v3114, 4294901760
        %4055 = vmatmul.mubr.f32.gmra.mxu0 %v4054
        %v4056 = vpop.f32.mrf.mxu0
        %v4057 = vadd.f32 %v3881, %v4056
        %v4058 = vpop.f32.mrf.mxu0
        %4059 = vmatprep.mubr.f32.mxu0 0.0
        %v4060 = vand.u32 %v3117, 4294901760
        %4061 = vmatmul.mubr.f32.gmra.mxu0 %v4060
        %v4062 = vpop.f32.mrf.mxu0
        %v4063 = vadd.f32 %v3889, %v4062
        %v4064 = vpop.f32.mrf.mxu0
        %4065 = vmatprep.mubr.f32.mxu0 0.0
        %v4066 = vand.u32 %v3120, 4294901760
        %4067 = vmatmul.mubr.f32.gmra.mxu0 %v4066
        %v4068 = vpop.f32.mrf.mxu0
        %v4069 = vadd.f32 %v3897, %v4068
        %v4070 = vpop.f32.mrf.mxu0
        %4071 = vmatprep.mubr.f32.mxu0 0.0
        %v4072 = vand.u32 %v3123, 4294901760
        %4073 = vmatmul.mubr.f32.gmra.mxu0 %v4072
        %v4074 = vpop.f32.mrf.mxu0
        %v4075 = vadd.f32 %v3905, %v4074
        %v4076 = vpop.f32.mrf.mxu0
        %4077 = vdwg.mxu0
        %4078 = vmatprep.subr.mxu0 0.0
        %4079 = vmatpush1.msra.mxu0 0.0
        %4080 = vmatprep.subr.mxu0 0.0
        %4081 = vmatpush1.msra.mxu0 0.0
        %4082 = vmatprep.subr.mxu0 0.0
        %4083 = vmatpush1.msra.mxu0 0.0
        %4084 = vmatprep.subr.mxu0 0.0
        %4085 = vmatpush1.msra.mxu0 0.0
        %4086 = vmatprep.subr.mxu0 0.0
        %4087 = vmatpush1.msra.mxu0 0.0
        %4088 = vmatprep.subr.mxu0 0.0
        %4089 = vmatpush1.msra.mxu0 0.0
        %4090 = vmatprep.subr.mxu0 0.0
        %4091 = vmatpush1.msra.mxu0 0.0
        %4092 = vmatprep.subr.mxu0 0.0
        %4093 = vmatpush1.msra.mxu0 0.0
        %4094 = vmatprep.subr.mxu0 0.0
        %4095 = vmatpush1.msra.mxu0 0.0
        %4096 = vmatprep.subr.mxu0 0.0
        %4097 = vmatpush1.msra.mxu0 0.0
        %4098 = vmatprep.subr.mxu0 0.0
        %4099 = vmatpush1.msra.mxu0 0.0
        %4100 = vmatprep.subr.mxu0 0.0
        %4101 = vmatpush1.msra.mxu0 0.0
        %4102 = vmatprep.subr.mxu0 0.0
        %4103 = vmatpush1.msra.mxu0 0.0
        %4104 = vmatprep.subr.mxu0 0.0
        %v4105 = vand.u32 %v3075, 4294901760
        %4106 = vmatpush1.msra.mxu0 %v4105
        %4107 = vmatprep.subr.mxu0 0.0
        %v4108 = vand.u32 %v3074, 4294901760
        %4109 = vmatpush1.msra.mxu0 %v4108
        %4110 = vmatprep.subr.mxu0 0.0
        %v4111 = vand.u32 %v3073, 4294901760
        %4112 = vmatpush1.msra.mxu0 %v4111
        %4113 = vmatprep.subr.mxu0 0.0
        %4114 = vmatpush2.msra.mxu0 0.0
        %4115 = vmatprep.subr.mxu0 0.0
        %4116 = vmatpush2.msra.mxu0 0.0
        %4117 = vmatprep.subr.mxu0 0.0
        %4118 = vmatpush2.msra.mxu0 0.0
        %4119 = vmatprep.subr.mxu0 0.0
        %4120 = vmatpush2.msra.mxu0 0.0
        %4121 = vmatprep.subr.mxu0 0.0
        %4122 = vmatpush2.msra.mxu0 0.0
        %4123 = vmatprep.subr.mxu0 0.0
        %4124 = vmatpush2.msra.mxu0 0.0
        %4125 = vmatprep.subr.mxu0 0.0
        %4126 = vmatpush2.msra.mxu0 0.0
        %4127 = vmatprep.subr.mxu0 0.0
        %4128 = vmatpush2.msra.mxu0 0.0
        %4129 = vmatprep.subr.mxu0 0.0
        %4130 = vmatpush2.msra.mxu0 0.0
        %4131 = vmatprep.subr.mxu0 0.0
        %4132 = vmatpush2.msra.mxu0 0.0
        %4133 = vmatprep.subr.mxu0 0.0
        %4134 = vmatpush2.msra.mxu0 0.0
        %4135 = vmatprep.subr.mxu0 0.0
        %4136 = vmatpush2.msra.mxu0 0.0
        %4137 = vmatprep.subr.mxu0 0.0
        %4138 = vmatpush2.msra.mxu0 0.0
        %4139 = vmatprep.subr.mxu0 0.0
        %4140 = vmatpush2.msra.mxu0 0.0
        %4141 = vmatprep.subr.mxu0 0.0
        %4142 = vmatpush2.msra.mxu0 0.0
        %4143 = vmatprep.subr.mxu0 0.0
        %4144 = vmatpush2.msra.mxu0 0.0
        %4145 = vmatprep.mubr.f32.mxu0 0.0
        %v4146 = vand.u32 %v3078, 4294901760
        %4147 = vmatmul.mubr.f32.gmra.mxu0 %v4146
        %v4148 = vpop.f32.mrf.mxu0
        %v4149 = vadd.f32 %v3985, %v4148
        %v4150 = vpop.f32.mrf.mxu0
        %4151 = vmatprep.mubr.f32.mxu0 0.0
        %v4152 = vand.u32 %v3081, 4294901760
        %4153 = vmatmul.mubr.f32.gmra.mxu0 %v4152
        %v4154 = vpop.f32.mrf.mxu0
        %v4155 = vadd.f32 %v3991, %v4154
        %v4156 = vpop.f32.mrf.mxu0
        %4157 = vmatprep.mubr.f32.mxu0 0.0
        %v4158 = vand.u32 %v3084, 4294901760
        %4159 = vmatmul.mubr.f32.gmra.mxu0 %v4158
        %v4160 = vpop.f32.mrf.mxu0
        %v4161 = vadd.f32 %v3997, %v4160
        %v4162 = vpop.f32.mrf.mxu0
        %4163 = vmatprep.mubr.f32.mxu0 0.0
        %v4164 = vand.u32 %v3087, 4294901760
        %4165 = vmatmul.mubr.f32.gmra.mxu0 %v4164
        %v4166 = vpop.f32.mrf.mxu0
        %v4167 = vadd.f32 %v4003, %v4166
        %v4168 = vpop.f32.mrf.mxu0
        %4169 = vmatprep.mubr.f32.mxu0 0.0
        %v4170 = vand.u32 %v3090, 4294901760
        %4171 = vmatmul.mubr.f32.gmra.mxu0 %v4170
        %v4172 = vpop.f32.mrf.mxu0
        %v4173 = vadd.f32 %v4009, %v4172
        %v4174 = vpop.f32.mrf.mxu0
        %4175 = vmatprep.mubr.f32.mxu0 0.0
        %v4176 = vand.u32 %v3093, 4294901760
        %4177 = vmatmul.mubr.f32.gmra.mxu0 %v4176
        %v4178 = vpop.f32.mrf.mxu0
        %v4179 = vadd.f32 %v4015, %v4178
        %v4180 = vpop.f32.mrf.mxu0
        %4181 = vmatprep.mubr.f32.mxu0 0.0
        %v4182 = vand.u32 %v3096, 4294901760
        %4183 = vmatmul.mubr.f32.gmra.mxu0 %v4182
        %v4184 = vpop.f32.mrf.mxu0
        %v4185 = vadd.f32 %v4021, %v4184
        %v4186 = vpop.f32.mrf.mxu0
        %4187 = vmatprep.mubr.f32.mxu0 0.0
        %v4188 = vand.u32 %v3099, 4294901760
        %4189 = vmatmul.mubr.f32.gmra.mxu0 %v4188
        %v4190 = vpop.f32.mrf.mxu0
        %v4191 = vadd.f32 %v4027, %v4190
        %v4192 = vpop.f32.mrf.mxu0
        %4193 = vmatprep.mubr.f32.mxu0 0.0
        %v4194 = vand.u32 %v3102, 4294901760
        %4195 = vmatmul.mubr.f32.gmra.mxu0 %v4194
        %v4196 = vpop.f32.mrf.mxu0
        %v4197 = vadd.f32 %v4033, %v4196
        %v4198 = vpop.f32.mrf.mxu0
        %4199 = vmatprep.mubr.f32.mxu0 0.0
        %v4200 = vand.u32 %v3105, 4294901760
        %4201 = vmatmul.mubr.f32.gmra.mxu0 %v4200
        %v4202 = vpop.f32.mrf.mxu0
        %v4203 = vadd.f32 %v4039, %v4202
        %v4204 = vpop.f32.mrf.mxu0
        %4205 = vmatprep.mubr.f32.mxu0 0.0
        %v4206 = vand.u32 %v3108, 4294901760
        %4207 = vmatmul.mubr.f32.gmra.mxu0 %v4206
        %v4208 = vpop.f32.mrf.mxu0
        %v4209 = vadd.f32 %v4045, %v4208
        %v4210 = vpop.f32.mrf.mxu0
        %4211 = vmatprep.mubr.f32.mxu0 0.0
        %v4212 = vand.u32 %v3111, 4294901760
        %4213 = vmatmul.mubr.f32.gmra.mxu0 %v4212
        %v4214 = vpop.f32.mrf.mxu0
        %v4215 = vadd.f32 %v4051, %v4214
        %v4216 = vpop.f32.mrf.mxu0
        %4217 = vmatprep.mubr.f32.mxu0 0.0
        %v4218 = vand.u32 %v3114, 4294901760
        %4219 = vmatmul.mubr.f32.gmra.mxu0 %v4218
        %v4220 = vpop.f32.mrf.mxu0
        %v4221 = vadd.f32 %v4057, %v4220
        %v4222 = vpop.f32.mrf.mxu0
        %4223 = vmatprep.mubr.f32.mxu0 0.0
        %v4224 = vand.u32 %v3117, 4294901760
        %4225 = vmatmul.mubr.f32.gmra.mxu0 %v4224
        %v4226 = vpop.f32.mrf.mxu0
        %v4227 = vadd.f32 %v4063, %v4226
        %v4228 = vpop.f32.mrf.mxu0
        %4229 = vmatprep.mubr.f32.mxu0 0.0
        %v4230 = vand.u32 %v3120, 4294901760
        %4231 = vmatmul.mubr.f32.gmra.mxu0 %v4230
        %v4232 = vpop.f32.mrf.mxu0
        %v4233 = vadd.f32 %v4069, %v4232
        %v4234 = vpop.f32.mrf.mxu0
        %4235 = vmatprep.mubr.f32.mxu0 0.0
        %v4236 = vand.u32 %v3123, 4294901760
        %4237 = vmatmul.mubr.f32.gmra.mxu0 %v4236
        %v4238 = vpop.f32.mrf.mxu0
        %v4239 = vadd.f32 %v4075, %v4238
        %v4240 = vpop.f32.mrf.mxu0
        %4241 = vdwg.mxu0
        %v4242 = vld [vmem:[%s554] sm:$0xff]
        %v4243 = vld [vmem:[%s554 + $0x8] sm:$0xff]
        %v4244 = vld [vmem:[%s554 + $0x10] sm:$0xff]
        %v4245 = vld [vmem:[%s554 + $0x18] sm:$0xff]
        %v4246 = vld [vmem:[%s554 + $0x20] sm:$0xff]
        %v4247 = vld [vmem:[%s554 + $0x28] sm:$0xff]
        %v4248 = vld [vmem:[%s554 + $0x30] sm:$0xff]
        %v4249 = vld [vmem:[%s554 + $0x38] sm:$0xff]
        %v4250 = vld [vmem:[%s554 + $0x40] sm:$0xff]
        %v4251 = vld [vmem:[%s554 + $0x48] sm:$0xff]
        %v4252 = vld [vmem:[%s554 + $0x50] sm:$0xff]
        %v4253 = vld [vmem:[%s554 + $0x58] sm:$0xff]
        %v4254 = vld [vmem:[%s554 + $0x60] sm:$0xff]
        %v4255 = vld [vmem:[%s554 + $0x68] sm:$0xff]
        %v4256 = vld [vmem:[%s554 + $0x70] sm:$0xff]
        %v4257 = vld [vmem:[%s554 + $0x78] sm:$0xff]
        %4258 = vset.pattern.permute.xlu0 0
        %4259 = vperm.xlu0 %4258, %v4242
        %v4260 = vpop.permute.xlu0 %4259
        %4261 = vset.pattern.permute.xlu0 0
        %4262 = vperm.xlu0 %4261, %v4243
        %v4263 = vpop.permute.xlu0 %4262
        %4264 = vset.pattern.permute.xlu0 0
        %4265 = vperm.xlu0 %4264, %v4244
        %v4266 = vpop.permute.xlu0 %4265
        %4267 = vset.pattern.permute.xlu0 0
        %4268 = vperm.xlu0 %4267, %v4245
        %v4269 = vpop.permute.xlu0 %4268
        %4270 = vset.pattern.permute.xlu0 0
        %4271 = vperm.xlu0 %4270, %v4246
        %v4272 = vpop.permute.xlu0 %4271
        %4273 = vset.pattern.permute.xlu0 0
        %4274 = vperm.xlu0 %4273, %v4247
        %v4275 = vpop.permute.xlu0 %4274
        %4276 = vset.pattern.permute.xlu0 0
        %4277 = vperm.xlu0 %4276, %v4248
        %v4278 = vpop.permute.xlu0 %4277
        %4279 = vset.pattern.permute.xlu0 0
        %4280 = vperm.xlu0 %4279, %v4249
        %v4281 = vpop.permute.xlu0 %4280
        %4282 = vset.pattern.permute.xlu0 0
        %4283 = vperm.xlu0 %4282, %v4250
        %v4284 = vpop.permute.xlu0 %4283
        %4285 = vset.pattern.permute.xlu0 0
        %4286 = vperm.xlu0 %4285, %v4251
        %v4287 = vpop.permute.xlu0 %4286
        %4288 = vset.pattern.permute.xlu0 0
        %4289 = vperm.xlu0 %4288, %v4252
        %v4290 = vpop.permute.xlu0 %4289
        %4291 = vset.pattern.permute.xlu0 0
        %4292 = vperm.xlu0 %4291, %v4253
        %v4293 = vpop.permute.xlu0 %4292
        %4294 = vset.pattern.permute.xlu0 0
        %4295 = vperm.xlu0 %4294, %v4254
        %v4296 = vpop.permute.xlu0 %4295
        %4297 = vset.pattern.permute.xlu0 0
        %4298 = vperm.xlu0 %4297, %v4255
        %v4299 = vpop.permute.xlu0 %4298
        %4300 = vset.pattern.permute.xlu0 0
        %4301 = vperm.xlu0 %4300, %v4256
        %v4302 = vpop.permute.xlu0 %4301
        %4303 = vset.pattern.permute.xlu0 0
        %4304 = vperm.xlu0 %4303, %v4257
        %v4305 = vpop.permute.xlu0 %4304
        %vm4306 = vcmp.eq.s32.totalorder %v2960, %v4260
        %vm4307 = vcmp.eq.s32.totalorder %v2960, %v4263
        %vm4308 = vcmp.eq.s32.totalorder %v2960, %v4266
        %vm4309 = vcmp.eq.s32.totalorder %v2960, %v4269
        %vm4310 = vcmp.eq.s32.totalorder %v2960, %v4272
        %vm4311 = vcmp.eq.s32.totalorder %v2960, %v4275
        %vm4312 = vcmp.eq.s32.totalorder %v2960, %v4278
        %vm4313 = vcmp.eq.s32.totalorder %v2960, %v4281
        %vm4314 = vcmp.eq.s32.totalorder %v2960, %v4284
        %vm4315 = vcmp.eq.s32.totalorder %v2960, %v4287
        %vm4316 = vcmp.eq.s32.totalorder %v2960, %v4290
        %vm4317 = vcmp.eq.s32.totalorder %v2960, %v4293
        %vm4318 = vcmp.eq.s32.totalorder %v2960, %v4296
        %vm4319 = vcmp.eq.s32.totalorder %v2960, %v4299
        %vm4320 = vcmp.eq.s32.totalorder %v2960, %v4302
        %vm4321 = vcmp.eq.s32.totalorder %v2960, %v4305
        %v4322 = vsel %vm4306, 1, 0
        %v4323 = vsel %vm4307, 1, 0
        %v4324 = vsel %vm4308, 1, 0
        %v4325 = vsel %vm4309, 1, 0
        %v4326 = vsel %vm4310, 1, 0
        %v4327 = vsel %vm4311, 1, 0
        %v4328 = vsel %vm4312, 1, 0
        %v4329 = vsel %vm4313, 1, 0
        %v4330 = vsel %vm4314, 1, 0
        %v4331 = vsel %vm4315, 1, 0
        %v4332 = vsel %vm4316, 1, 0
        %v4333 = vsel %vm4317, 1, 0
        %v4334 = vsel %vm4318, 1, 0
        %v4335 = vsel %vm4319, 1, 0
        %v4336 = vsel %vm4320, 1, 0
        %v4337 = vsel %vm4321, 1, 0
        %v4338 = vcvt.s32.f32 %v4322
        %v4339 = vcvt.s32.f32 %v4323
        %v4340 = vcvt.s32.f32 %v4324
        %v4341 = vcvt.s32.f32 %v4325
        %v4342 = vcvt.s32.f32 %v4326
        %v4343 = vcvt.s32.f32 %v4327
        %v4344 = vcvt.s32.f32 %v4328
        %v4345 = vcvt.s32.f32 %v4329
        %v4346 = vcvt.s32.f32 %v4330
        %v4347 = vcvt.s32.f32 %v4331
        %v4348 = vcvt.s32.f32 %v4332
        %v4349 = vcvt.s32.f32 %v4333
        %v4350 = vcvt.s32.f32 %v4334
        %v4351 = vcvt.s32.f32 %v4335
        %v4352 = vcvt.s32.f32 %v4336
        %v4353 = vcvt.s32.f32 %v4337
        %v4354 = vld [vmem:[#allocation2 + $0x8] sm:$0xff]
        %v4355 = vld [vmem:[#allocation2 + $0x18] sm:$0xff]
        %v4356 = vld [vmem:[#allocation2 + $0x28] sm:$0xff]
        %v4358 = vsel %vm3076, %v4338, 0
        %v4361 = vsel %vm3076, %v4339, 0
        %v4364 = vsel %vm3076, %v4340, 0
        %v4367 = vsel %vm3076, %v4341, 0
        %v4370 = vsel %vm3076, %v4342, 0
        %v4373 = vsel %vm3076, %v4343, 0
        %v4376 = vsel %vm3076, %v4344, 0
        %v4379 = vsel %vm3076, %v4345, 0
        %v4382 = vsel %vm3076, %v4346, 0
        %v4385 = vsel %vm3076, %v4347, 0
        %v4388 = vsel %vm3076, %v4348, 0
        %v4391 = vsel %vm3076, %v4349, 0
        %v4394 = vsel %vm3076, %v4350, 0
        %v4397 = vsel %vm3076, %v4351, 0
        %v4400 = vsel %vm3076, %v4352, 0
        %v4403 = vsel %vm3076, %v4353, 0
        %4405 = vmatprep.subr.mxu0 0.0
        %4406 = vmatpush1.msra.mxu0 0.0
        %4407 = vmatprep.subr.mxu0 0.0
        %4408 = vmatpush1.msra.mxu0 0.0
        %4409 = vmatprep.subr.mxu0 0.0
        %4410 = vmatpush1.msra.mxu0 0.0
        %4411 = vmatprep.subr.mxu0 0.0
        %4412 = vmatpush1.msra.mxu0 0.0
        %4413 = vmatprep.subr.mxu0 0.0
        %4414 = vmatpush1.msra.mxu0 0.0
        %4415 = vmatprep.subr.mxu0 0.0
        %4416 = vmatpush1.msra.mxu0 0.0
        %4417 = vmatprep.subr.mxu0 0.0
        %4418 = vmatpush1.msra.mxu0 0.0
        %4419 = vmatprep.subr.mxu0 0.0
        %4420 = vmatpush1.msra.mxu0 0.0
        %4421 = vmatprep.subr.mxu0 0.0
        %4422 = vmatpush1.msra.mxu0 0.0
        %4423 = vmatprep.subr.mxu0 0.0
        %4424 = vmatpush1.msra.mxu0 0.0
        %4425 = vmatprep.subr.mxu0 0.0
        %4426 = vmatpush1.msra.mxu0 0.0
        %4427 = vmatprep.subr.mxu0 0.0
        %4428 = vmatpush1.msra.mxu0 0.0
        %4429 = vmatprep.subr.mxu0 0.0
        %4430 = vmatpush1.msra.mxu0 0.0
        %4431 = vmatprep.subr.mxu0 0.0
        %v4432 = vand.u32 %v4356, 4294901760
        %4433 = vmatpush1.msra.mxu0 %v4432
        %4434 = vmatprep.subr.mxu0 0.0
        %v4435 = vand.u32 %v4355, 4294901760
        %4436 = vmatpush1.msra.mxu0 %v4435
        %4437 = vmatprep.subr.mxu0 0.0
        %v4438 = vand.u32 %v4354, 4294901760
        %4439 = vmatpush1.msra.mxu0 %v4438
        %4440 = vmatprep.subr.mxu0 0.0
        %4441 = vmatpush2.msra.mxu0 0.0
        %4442 = vmatprep.subr.mxu0 0.0
        %4443 = vmatpush2.msra.mxu0 0.0
        %4444 = vmatprep.subr.mxu0 0.0
        %4445 = vmatpush2.msra.mxu0 0.0
        %4446 = vmatprep.subr.mxu0 0.0
        %4447 = vmatpush2.msra.mxu0 0.0
        %4448 = vmatprep.subr.mxu0 0.0
        %4449 = vmatpush2.msra.mxu0 0.0
        %4450 = vmatprep.subr.mxu0 0.0
        %4451 = vmatpush2.msra.mxu0 0.0
        %4452 = vmatprep.subr.mxu0 0.0
        %4453 = vmatpush2.msra.mxu0 0.0
        %4454 = vmatprep.subr.mxu0 0.0
        %4455 = vmatpush2.msra.mxu0 0.0
        %4456 = vmatprep.subr.mxu0 0.0
        %4457 = vmatpush2.msra.mxu0 0.0
        %4458 = vmatprep.subr.mxu0 0.0
        %4459 = vmatpush2.msra.mxu0 0.0
        %4460 = vmatprep.subr.mxu0 0.0
        %4461 = vmatpush2.msra.mxu0 0.0
        %4462 = vmatprep.subr.mxu0 0.0
        %4463 = vmatpush2.msra.mxu0 0.0
        %4464 = vmatprep.subr.mxu0 0.0
        %4465 = vmatpush2.msra.mxu0 0.0
        %4466 = vmatprep.subr.mxu0 0.0
        %4467 = vmatpush2.msra.mxu0 0.0
        %4468 = vmatprep.subr.mxu0 0.0
        %4469 = vmatpush2.msra.mxu0 0.0
        %4470 = vmatprep.subr.mxu0 0.0
        %4471 = vmatpush2.msra.mxu0 0.0
        %4472 = vmatprep.mubr.f32.mxu0 0.0
        %v4473 = vand.u32 %v4358, 4294901760
        %v4474 = vsub.f32 %v4358, %v4473
        %v4475 = vand.u32 %v4474, 4294901760
        %v4476 = vsub.f32 %v4474, %v4475
        %v4477 = vand.u32 %v4476, 4294901760
        %4478 = vmatmul.mubr.f32.gmra.mxu0 %v4477
        %v4479 = vpop.f32.mrf.mxu0
        %v4480 = vadd.f32 0.0, %v4479
        %v4481 = vpop.f32.mrf.mxu0
        %4482 = vmatprep.mubr.f32.mxu0 0.0
        %v4483 = vand.u32 %v4361, 4294901760
        %v4484 = vsub.f32 %v4361, %v4483
        %v4485 = vand.u32 %v4484, 4294901760
        %v4486 = vsub.f32 %v4484, %v4485
        %v4487 = vand.u32 %v4486, 4294901760
        %4488 = vmatmul.mubr.f32.gmra.mxu0 %v4487
        %v4489 = vpop.f32.mrf.mxu0
        %v4490 = vadd.f32 0.0, %v4489
        %v4491 = vpop.f32.mrf.mxu0
        %4492 = vmatprep.mubr.f32.mxu0 0.0
        %v4493 = vand.u32 %v4364, 4294901760
        %v4494 = vsub.f32 %v4364, %v4493
        %v4495 = vand.u32 %v4494, 4294901760
        %v4496 = vsub.f32 %v4494, %v4495
        %v4497 = vand.u32 %v4496, 4294901760
        %4498 = vmatmul.mubr.f32.gmra.mxu0 %v4497
        %v4499 = vpop.f32.mrf.mxu0
        %v4500 = vadd.f32 0.0, %v4499
        %v4501 = vpop.f32.mrf.mxu0
        %4502 = vmatprep.mubr.f32.mxu0 0.0
        %v4503 = vand.u32 %v4367, 4294901760
        %v4504 = vsub.f32 %v4367, %v4503
        %v4505 = vand.u32 %v4504, 4294901760
        %v4506 = vsub.f32 %v4504, %v4505
        %v4507 = vand.u32 %v4506, 4294901760
        %4508 = vmatmul.mubr.f32.gmra.mxu0 %v4507
        %v4509 = vpop.f32.mrf.mxu0
        %v4510 = vadd.f32 0.0, %v4509
        %v4511 = vpop.f32.mrf.mxu0
        %4512 = vmatprep.mubr.f32.mxu0 0.0
        %v4513 = vand.u32 %v4370, 4294901760
        %v4514 = vsub.f32 %v4370, %v4513
        %v4515 = vand.u32 %v4514, 4294901760
        %v4516 = vsub.f32 %v4514, %v4515
        %v4517 = vand.u32 %v4516, 4294901760
        %4518 = vmatmul.mubr.f32.gmra.mxu0 %v4517
        %v4519 = vpop.f32.mrf.mxu0
        %v4520 = vadd.f32 0.0, %v4519
        %v4521 = vpop.f32.mrf.mxu0
        %4522 = vmatprep.mubr.f32.mxu0 0.0
        %v4523 = vand.u32 %v4373, 4294901760
        %v4524 = vsub.f32 %v4373, %v4523
        %v4525 = vand.u32 %v4524, 4294901760
        %v4526 = vsub.f32 %v4524, %v4525
        %v4527 = vand.u32 %v4526, 4294901760
        %4528 = vmatmul.mubr.f32.gmra.mxu0 %v4527
        %v4529 = vpop.f32.mrf.mxu0
        %v4530 = vadd.f32 0.0, %v4529
        %v4531 = vpop.f32.mrf.mxu0
        %4532 = vmatprep.mubr.f32.mxu0 0.0
        %v4533 = vand.u32 %v4376, 4294901760
        %v4534 = vsub.f32 %v4376, %v4533
        %v4535 = vand.u32 %v4534, 4294901760
        %v4536 = vsub.f32 %v4534, %v4535
        %v4537 = vand.u32 %v4536, 4294901760
        %4538 = vmatmul.mubr.f32.gmra.mxu0 %v4537
        %v4539 = vpop.f32.mrf.mxu0
        %v4540 = vadd.f32 0.0, %v4539
        %v4541 = vpop.f32.mrf.mxu0
        %4542 = vmatprep.mubr.f32.mxu0 0.0
        %v4543 = vand.u32 %v4379, 4294901760
        %v4544 = vsub.f32 %v4379, %v4543
        %v4545 = vand.u32 %v4544, 4294901760
        %v4546 = vsub.f32 %v4544, %v4545
        %v4547 = vand.u32 %v4546, 4294901760
        %4548 = vmatmul.mubr.f32.gmra.mxu0 %v4547
        %v4549 = vpop.f32.mrf.mxu0
        %v4550 = vadd.f32 0.0, %v4549
        %v4551 = vpop.f32.mrf.mxu0
        %4552 = vmatprep.mubr.f32.mxu0 0.0
        %v4553 = vand.u32 %v4382, 4294901760
        %v4554 = vsub.f32 %v4382, %v4553
        %v4555 = vand.u32 %v4554, 4294901760
        %v4556 = vsub.f32 %v4554, %v4555
        %v4557 = vand.u32 %v4556, 4294901760
        %4558 = vmatmul.mubr.f32.gmra.mxu0 %v4557
        %v4559 = vpop.f32.mrf.mxu0
        %v4560 = vadd.f32 0.0, %v4559
        %v4561 = vpop.f32.mrf.mxu0
        %4562 = vmatprep.mubr.f32.mxu0 0.0
        %v4563 = vand.u32 %v4385, 4294901760
        %v4564 = vsub.f32 %v4385, %v4563
        %v4565 = vand.u32 %v4564, 4294901760
        %v4566 = vsub.f32 %v4564, %v4565
        %v4567 = vand.u32 %v4566, 4294901760
        %4568 = vmatmul.mubr.f32.gmra.mxu0 %v4567
        %v4569 = vpop.f32.mrf.mxu0
        %v4570 = vadd.f32 0.0, %v4569
        %v4571 = vpop.f32.mrf.mxu0
        %4572 = vmatprep.mubr.f32.mxu0 0.0
        %v4573 = vand.u32 %v4388, 4294901760
        %v4574 = vsub.f32 %v4388, %v4573
        %v4575 = vand.u32 %v4574, 4294901760
        %v4576 = vsub.f32 %v4574, %v4575
        %v4577 = vand.u32 %v4576, 4294901760
        %4578 = vmatmul.mubr.f32.gmra.mxu0 %v4577
        %v4579 = vpop.f32.mrf.mxu0
        %v4580 = vadd.f32 0.0, %v4579
        %v4581 = vpop.f32.mrf.mxu0
        %4582 = vmatprep.mubr.f32.mxu0 0.0
        %v4583 = vand.u32 %v4391, 4294901760
        %v4584 = vsub.f32 %v4391, %v4583
        %v4585 = vand.u32 %v4584, 4294901760
        %v4586 = vsub.f32 %v4584, %v4585
        %v4587 = vand.u32 %v4586, 4294901760
        %4588 = vmatmul.mubr.f32.gmra.mxu0 %v4587
        %v4589 = vpop.f32.mrf.mxu0
        %v4590 = vadd.f32 0.0, %v4589
        %v4591 = vpop.f32.mrf.mxu0
        %4592 = vmatprep.mubr.f32.mxu0 0.0
        %v4593 = vand.u32 %v4394, 4294901760
        %v4594 = vsub.f32 %v4394, %v4593
        %v4595 = vand.u32 %v4594, 4294901760
        %v4596 = vsub.f32 %v4594, %v4595
        %v4597 = vand.u32 %v4596, 4294901760
        %4598 = vmatmul.mubr.f32.gmra.mxu0 %v4597
        %v4599 = vpop.f32.mrf.mxu0
        %v4600 = vadd.f32 0.0, %v4599
        %v4601 = vpop.f32.mrf.mxu0
        %4602 = vmatprep.mubr.f32.mxu0 0.0
        %v4603 = vand.u32 %v4397, 4294901760
        %v4604 = vsub.f32 %v4397, %v4603
        %v4605 = vand.u32 %v4604, 4294901760
        %v4606 = vsub.f32 %v4604, %v4605
        %v4607 = vand.u32 %v4606, 4294901760
        %4608 = vmatmul.mubr.f32.gmra.mxu0 %v4607
        %v4609 = vpop.f32.mrf.mxu0
        %v4610 = vadd.f32 0.0, %v4609
        %v4611 = vpop.f32.mrf.mxu0
        %4612 = vmatprep.mubr.f32.mxu0 0.0
        %v4613 = vand.u32 %v4400, 4294901760
        %v4614 = vsub.f32 %v4400, %v4613
        %v4615 = vand.u32 %v4614, 4294901760
        %v4616 = vsub.f32 %v4614, %v4615
        %v4617 = vand.u32 %v4616, 4294901760
        %4618 = vmatmul.mubr.f32.gmra.mxu0 %v4617
        %v4619 = vpop.f32.mrf.mxu0
        %v4620 = vadd.f32 0.0, %v4619
        %v4621 = vpop.f32.mrf.mxu0
        %4622 = vmatprep.mubr.f32.mxu0 0.0
        %v4623 = vand.u32 %v4403, 4294901760
        %v4624 = vsub.f32 %v4403, %v4623
        %v4625 = vand.u32 %v4624, 4294901760
        %v4626 = vsub.f32 %v4624, %v4625
        %v4627 = vand.u32 %v4626, 4294901760
        %4628 = vmatmul.mubr.f32.gmra.mxu0 %v4627
        %v4629 = vpop.f32.mrf.mxu0
        %v4630 = vadd.f32 0.0, %v4629
        %v4631 = vpop.f32.mrf.mxu0
        %4632 = vdwg.mxu0
        %4633 = vmatprep.subr.mxu0 0.0
        %4634 = vmatpush1.msra.mxu0 0.0
        %4635 = vmatprep.subr.mxu0 0.0
        %4636 = vmatpush1.msra.mxu0 0.0
        %4637 = vmatprep.subr.mxu0 0.0
        %4638 = vmatpush1.msra.mxu0 0.0
        %4639 = vmatprep.subr.mxu0 0.0
        %4640 = vmatpush1.msra.mxu0 0.0
        %4641 = vmatprep.subr.mxu0 0.0
        %4642 = vmatpush1.msra.mxu0 0.0
        %4643 = vmatprep.subr.mxu0 0.0
        %4644 = vmatpush1.msra.mxu0 0.0
        %4645 = vmatprep.subr.mxu0 0.0
        %4646 = vmatpush1.msra.mxu0 0.0
        %4647 = vmatprep.subr.mxu0 0.0
        %4648 = vmatpush1.msra.mxu0 0.0
        %4649 = vmatprep.subr.mxu0 0.0
        %4650 = vmatpush1.msra.mxu0 0.0
        %4651 = vmatprep.subr.mxu0 0.0
        %4652 = vmatpush1.msra.mxu0 0.0
        %4653 = vmatprep.subr.mxu0 0.0
        %4654 = vmatpush1.msra.mxu0 0.0
        %4655 = vmatprep.subr.mxu0 0.0
        %4656 = vmatpush1.msra.mxu0 0.0
        %4657 = vmatprep.subr.mxu0 0.0
        %4658 = vmatpush1.msra.mxu0 0.0
        %4659 = vmatprep.subr.mxu0 0.0
        %v4660 = vand.u32 %v4356, 4294901760
        %v4661 = vsub.f32 %v4356, %v4660
        %v4662 = vand.u32 %v4661, 4294901760
        %v4663 = vsub.f32 %v4661, %v4662
        %v4664 = vand.u32 %v4663, 4294901760
        %4665 = vmatpush1.msra.mxu0 %v4664
        %4666 = vmatprep.subr.mxu0 0.0
        %v4667 = vand.u32 %v4355, 4294901760
        %v4668 = vsub.f32 %v4355, %v4667
        %v4669 = vand.u32 %v4668, 4294901760
        %v4670 = vsub.f32 %v4668, %v4669
        %v4671 = vand.u32 %v4670, 4294901760
        %4672 = vmatpush1.msra.mxu0 %v4671
        %4673 = vmatprep.subr.mxu0 0.0
        %v4674 = vand.u32 %v4354, 4294901760
        %v4675 = vsub.f32 %v4354, %v4674
        %v4676 = vand.u32 %v4675, 4294901760
        %v4677 = vsub.f32 %v4675, %v4676
        %v4678 = vand.u32 %v4677, 4294901760
        %4679 = vmatpush1.msra.mxu0 %v4678
        %4680 = vmatprep.subr.mxu0 0.0
        %4681 = vmatpush2.msra.mxu0 0.0
        %4682 = vmatprep.subr.mxu0 0.0
        %4683 = vmatpush2.msra.mxu0 0.0
        %4684 = vmatprep.subr.mxu0 0.0
        %4685 = vmatpush2.msra.mxu0 0.0
        %4686 = vmatprep.subr.mxu0 0.0
        %4687 = vmatpush2.msra.mxu0 0.0
        %4688 = vmatprep.subr.mxu0 0.0
        %4689 = vmatpush2.msra.mxu0 0.0
        %4690 = vmatprep.subr.mxu0 0.0
        %4691 = vmatpush2.msra.mxu0 0.0
        %4692 = vmatprep.subr.mxu0 0.0
        %4693 = vmatpush2.msra.mxu0 0.0
        %4694 = vmatprep.subr.mxu0 0.0
        %4695 = vmatpush2.msra.mxu0 0.0
        %4696 = vmatprep.subr.mxu0 0.0
        %4697 = vmatpush2.msra.mxu0 0.0
        %4698 = vmatprep.subr.mxu0 0.0
        %4699 = vmatpush2.msra.mxu0 0.0
        %4700 = vmatprep.subr.mxu0 0.0
        %4701 = vmatpush2.msra.mxu0 0.0
        %4702 = vmatprep.subr.mxu0 0.0
        %4703 = vmatpush2.msra.mxu0 0.0
        %4704 = vmatprep.subr.mxu0 0.0
        %4705 = vmatpush2.msra.mxu0 0.0
        %4706 = vmatprep.subr.mxu0 0.0
        %4707 = vmatpush2.msra.mxu0 0.0
        %4708 = vmatprep.subr.mxu0 0.0
        %4709 = vmatpush2.msra.mxu0 0.0
        %4710 = vmatprep.subr.mxu0 0.0
        %4711 = vmatpush2.msra.mxu0 0.0
        %4712 = vmatprep.mubr.f32.mxu0 0.0
        %v4713 = vand.u32 %v4358, 4294901760
        %4714 = vmatmul.mubr.f32.gmra.mxu0 %v4713
        %v4715 = vpop.f32.mrf.mxu0
        %v4716 = vadd.f32 %v4480, %v4715
        %v4717 = vpop.f32.mrf.mxu0
        %4718 = vmatprep.mubr.f32.mxu0 0.0
        %v4719 = vand.u32 %v4361, 4294901760
        %4720 = vmatmul.mubr.f32.gmra.mxu0 %v4719
        %v4721 = vpop.f32.mrf.mxu0
        %v4722 = vadd.f32 %v4490, %v4721
        %v4723 = vpop.f32.mrf.mxu0
        %4724 = vmatprep.mubr.f32.mxu0 0.0
        %v4725 = vand.u32 %v4364, 4294901760
        %4726 = vmatmul.mubr.f32.gmra.mxu0 %v4725
        %v4727 = vpop.f32.mrf.mxu0
        %v4728 = vadd.f32 %v4500, %v4727
        %v4729 = vpop.f32.mrf.mxu0
        %4730 = vmatprep.mubr.f32.mxu0 0.0
        %v4731 = vand.u32 %v4367, 4294901760
        %4732 = vmatmul.mubr.f32.gmra.mxu0 %v4731
        %v4733 = vpop.f32.mrf.mxu0
        %v4734 = vadd.f32 %v4510, %v4733
        %v4735 = vpop.f32.mrf.mxu0
        %4736 = vmatprep.mubr.f32.mxu0 0.0
        %v4737 = vand.u32 %v4370, 4294901760
        %4738 = vmatmul.mubr.f32.gmra.mxu0 %v4737
        %v4739 = vpop.f32.mrf.mxu0
        %v4740 = vadd.f32 %v4520, %v4739
        %v4741 = vpop.f32.mrf.mxu0
        %4742 = vmatprep.mubr.f32.mxu0 0.0
        %v4743 = vand.u32 %v4373, 4294901760
        %4744 = vmatmul.mubr.f32.gmra.mxu0 %v4743
        %v4745 = vpop.f32.mrf.mxu0
        %v4746 = vadd.f32 %v4530, %v4745
        %v4747 = vpop.f32.mrf.mxu0
        %4748 = vmatprep.mubr.f32.mxu0 0.0
        %v4749 = vand.u32 %v4376, 4294901760
        %4750 = vmatmul.mubr.f32.gmra.mxu0 %v4749
        %v4751 = vpop.f32.mrf.mxu0
        %v4752 = vadd.f32 %v4540, %v4751
        %v4753 = vpop.f32.mrf.mxu0
        %4754 = vmatprep.mubr.f32.mxu0 0.0
        %v4755 = vand.u32 %v4379, 4294901760
        %4756 = vmatmul.mubr.f32.gmra.mxu0 %v4755
        %v4757 = vpop.f32.mrf.mxu0
        %v4758 = vadd.f32 %v4550, %v4757
        %v4759 = vpop.f32.mrf.mxu0
        %4760 = vmatprep.mubr.f32.mxu0 0.0
        %v4761 = vand.u32 %v4382, 4294901760
        %4762 = vmatmul.mubr.f32.gmra.mxu0 %v4761
        %v4763 = vpop.f32.mrf.mxu0
        %v4764 = vadd.f32 %v4560, %v4763
        %v4765 = vpop.f32.mrf.mxu0
        %4766 = vmatprep.mubr.f32.mxu0 0.0
        %v4767 = vand.u32 %v4385, 4294901760
        %4768 = vmatmul.mubr.f32.gmra.mxu0 %v4767
        %v4769 = vpop.f32.mrf.mxu0
        %v4770 = vadd.f32 %v4570, %v4769
        %v4771 = vpop.f32.mrf.mxu0
        %4772 = vmatprep.mubr.f32.mxu0 0.0
        %v4773 = vand.u32 %v4388, 4294901760
        %4774 = vmatmul.mubr.f32.gmra.mxu0 %v4773
        %v4775 = vpop.f32.mrf.mxu0
        %v4776 = vadd.f32 %v4580, %v4775
        %v4777 = vpop.f32.mrf.mxu0
        %4778 = vmatprep.mubr.f32.mxu0 0.0
        %v4779 = vand.u32 %v4391, 4294901760
        %4780 = vmatmul.mubr.f32.gmra.mxu0 %v4779
        %v4781 = vpop.f32.mrf.mxu0
        %v4782 = vadd.f32 %v4590, %v4781
        %v4783 = vpop.f32.mrf.mxu0
        %4784 = vmatprep.mubr.f32.mxu0 0.0
        %v4785 = vand.u32 %v4394, 4294901760
        %4786 = vmatmul.mubr.f32.gmra.mxu0 %v4785
        %v4787 = vpop.f32.mrf.mxu0
        %v4788 = vadd.f32 %v4600, %v4787
        %v4789 = vpop.f32.mrf.mxu0
        %4790 = vmatprep.mubr.f32.mxu0 0.0
        %v4791 = vand.u32 %v4397, 4294901760
        %4792 = vmatmul.mubr.f32.gmra.mxu0 %v4791
        %v4793 = vpop.f32.mrf.mxu0
        %v4794 = vadd.f32 %v4610, %v4793
        %v4795 = vpop.f32.mrf.mxu0
        %4796 = vmatprep.mubr.f32.mxu0 0.0
        %v4797 = vand.u32 %v4400, 4294901760
        %4798 = vmatmul.mubr.f32.gmra.mxu0 %v4797
        %v4799 = vpop.f32.mrf.mxu0
        %v4800 = vadd.f32 %v4620, %v4799
        %v4801 = vpop.f32.mrf.mxu0
        %4802 = vmatprep.mubr.f32.mxu0 0.0
        %v4803 = vand.u32 %v4403, 4294901760
        %4804 = vmatmul.mubr.f32.gmra.mxu0 %v4803
        %v4805 = vpop.f32.mrf.mxu0
        %v4806 = vadd.f32 %v4630, %v4805
        %v4807 = vpop.f32.mrf.mxu0
        %4808 = vdwg.mxu0
        %4809 = vmatprep.subr.mxu0 0.0
        %4810 = vmatpush1.msra.mxu0 0.0
        %4811 = vmatprep.subr.mxu0 0.0
        %4812 = vmatpush1.msra.mxu0 0.0
        %4813 = vmatprep.subr.mxu0 0.0
        %4814 = vmatpush1.msra.mxu0 0.0
        %4815 = vmatprep.subr.mxu0 0.0
        %4816 = vmatpush1.msra.mxu0 0.0
        %4817 = vmatprep.subr.mxu0 0.0
        %4818 = vmatpush1.msra.mxu0 0.0
        %4819 = vmatprep.subr.mxu0 0.0
        %4820 = vmatpush1.msra.mxu0 0.0
        %4821 = vmatprep.subr.mxu0 0.0
        %4822 = vmatpush1.msra.mxu0 0.0
        %4823 = vmatprep.subr.mxu0 0.0
        %4824 = vmatpush1.msra.mxu0 0.0
        %4825 = vmatprep.subr.mxu0 0.0
        %4826 = vmatpush1.msra.mxu0 0.0
        %4827 = vmatprep.subr.mxu0 0.0
        %4828 = vmatpush1.msra.mxu0 0.0
        %4829 = vmatprep.subr.mxu0 0.0
        %4830 = vmatpush1.msra.mxu0 0.0
        %4831 = vmatprep.subr.mxu0 0.0
        %4832 = vmatpush1.msra.mxu0 0.0
        %4833 = vmatprep.subr.mxu0 0.0
        %4834 = vmatpush1.msra.mxu0 0.0
        %4835 = vmatprep.subr.mxu0 0.0
        %v4836 = vand.u32 %v4356, 4294901760
        %v4837 = vsub.f32 %v4356, %v4836
        %4838 = vmatpush1.msra.mxu0 %v4837
        %4839 = vmatprep.subr.mxu0 0.0
        %v4840 = vand.u32 %v4355, 4294901760
        %v4841 = vsub.f32 %v4355, %v4840
        %4842 = vmatpush1.msra.mxu0 %v4841
        %4843 = vmatprep.subr.mxu0 0.0
        %v4844 = vand.u32 %v4354, 4294901760
        %v4845 = vsub.f32 %v4354, %v4844
        %4846 = vmatpush1.msra.mxu0 %v4845
        %4847 = vmatprep.subr.mxu0 0.0
        %4848 = vmatpush2.msra.mxu0 0.0
        %4849 = vmatprep.subr.mxu0 0.0
        %4850 = vmatpush2.msra.mxu0 0.0
        %4851 = vmatprep.subr.mxu0 0.0
        %4852 = vmatpush2.msra.mxu0 0.0
        %4853 = vmatprep.subr.mxu0 0.0
        %4854 = vmatpush2.msra.mxu0 0.0
        %4855 = vmatprep.subr.mxu0 0.0
        %4856 = vmatpush2.msra.mxu0 0.0
        %4857 = vmatprep.subr.mxu0 0.0
        %4858 = vmatpush2.msra.mxu0 0.0
        %4859 = vmatprep.subr.mxu0 0.0
        %4860 = vmatpush2.msra.mxu0 0.0
        %4861 = vmatprep.subr.mxu0 0.0
        %4862 = vmatpush2.msra.mxu0 0.0
        %4863 = vmatprep.subr.mxu0 0.0
        %4864 = vmatpush2.msra.mxu0 0.0
        %4865 = vmatprep.subr.mxu0 0.0
        %4866 = vmatpush2.msra.mxu0 0.0
        %4867 = vmatprep.subr.mxu0 0.0
        %4868 = vmatpush2.msra.mxu0 0.0
        %4869 = vmatprep.subr.mxu0 0.0
        %4870 = vmatpush2.msra.mxu0 0.0
        %4871 = vmatprep.subr.mxu0 0.0
        %4872 = vmatpush2.msra.mxu0 0.0
        %4873 = vmatprep.subr.mxu0 0.0
        %4874 = vmatpush2.msra.mxu0 0.0
        %4875 = vmatprep.subr.mxu0 0.0
        %4876 = vmatpush2.msra.mxu0 0.0
        %4877 = vmatprep.subr.mxu0 0.0
        %4878 = vmatpush2.msra.mxu0 0.0
        %4879 = vmatprep.mubr.f32.mxu0 0.0
        %v4880 = vand.u32 %v4358, 4294901760
        %v4881 = vsub.f32 %v4358, %v4880
        %4882 = vmatmul.mubr.f32.gmra.mxu0 %v4881
        %v4883 = vpop.f32.mrf.mxu0
        %v4884 = vadd.f32 %v4716, %v4883
        %v4885 = vpop.f32.mrf.mxu0
        %4886 = vmatprep.mubr.f32.mxu0 0.0
        %v4887 = vand.u32 %v4361, 4294901760
        %v4888 = vsub.f32 %v4361, %v4887
        %4889 = vmatmul.mubr.f32.gmra.mxu0 %v4888
        %v4890 = vpop.f32.mrf.mxu0
        %v4891 = vadd.f32 %v4722, %v4890
        %v4892 = vpop.f32.mrf.mxu0
        %4893 = vmatprep.mubr.f32.mxu0 0.0
        %v4894 = vand.u32 %v4364, 4294901760
        %v4895 = vsub.f32 %v4364, %v4894
        %4896 = vmatmul.mubr.f32.gmra.mxu0 %v4895
        %v4897 = vpop.f32.mrf.mxu0
        %v4898 = vadd.f32 %v4728, %v4897
        %v4899 = vpop.f32.mrf.mxu0
        %4900 = vmatprep.mubr.f32.mxu0 0.0
        %v4901 = vand.u32 %v4367, 4294901760
        %v4902 = vsub.f32 %v4367, %v4901
        %4903 = vmatmul.mubr.f32.gmra.mxu0 %v4902
        %v4904 = vpop.f32.mrf.mxu0
        %v4905 = vadd.f32 %v4734, %v4904
        %v4906 = vpop.f32.mrf.mxu0
        %4907 = vmatprep.mubr.f32.mxu0 0.0
        %v4908 = vand.u32 %v4370, 4294901760
        %v4909 = vsub.f32 %v4370, %v4908
        %4910 = vmatmul.mubr.f32.gmra.mxu0 %v4909
        %v4911 = vpop.f32.mrf.mxu0
        %v4912 = vadd.f32 %v4740, %v4911
        %v4913 = vpop.f32.mrf.mxu0
        %4914 = vmatprep.mubr.f32.mxu0 0.0
        %v4915 = vand.u32 %v4373, 4294901760
        %v4916 = vsub.f32 %v4373, %v4915
        %4917 = vmatmul.mubr.f32.gmra.mxu0 %v4916
        %v4918 = vpop.f32.mrf.mxu0
        %v4919 = vadd.f32 %v4746, %v4918
        %v4920 = vpop.f32.mrf.mxu0
        %4921 = vmatprep.mubr.f32.mxu0 0.0
        %v4922 = vand.u32 %v4376, 4294901760
        %v4923 = vsub.f32 %v4376, %v4922
        %4924 = vmatmul.mubr.f32.gmra.mxu0 %v4923
        %v4925 = vpop.f32.mrf.mxu0
        %v4926 = vadd.f32 %v4752, %v4925
        %v4927 = vpop.f32.mrf.mxu0
        %4928 = vmatprep.mubr.f32.mxu0 0.0
        %v4929 = vand.u32 %v4379, 4294901760
        %v4930 = vsub.f32 %v4379, %v4929
        %4931 = vmatmul.mubr.f32.gmra.mxu0 %v4930
        %v4932 = vpop.f32.mrf.mxu0
        %v4933 = vadd.f32 %v4758, %v4932
        %v4934 = vpop.f32.mrf.mxu0
        %4935 = vmatprep.mubr.f32.mxu0 0.0
        %v4936 = vand.u32 %v4382, 4294901760
        %v4937 = vsub.f32 %v4382, %v4936
        %4938 = vmatmul.mubr.f32.gmra.mxu0 %v4937
        %v4939 = vpop.f32.mrf.mxu0
        %v4940 = vadd.f32 %v4764, %v4939
        %v4941 = vpop.f32.mrf.mxu0
        %4942 = vmatprep.mubr.f32.mxu0 0.0
        %v4943 = vand.u32 %v4385, 4294901760
        %v4944 = vsub.f32 %v4385, %v4943
        %4945 = vmatmul.mubr.f32.gmra.mxu0 %v4944
        %v4946 = vpop.f32.mrf.mxu0
        %v4947 = vadd.f32 %v4770, %v4946
        %v4948 = vpop.f32.mrf.mxu0
        %4949 = vmatprep.mubr.f32.mxu0 0.0
        %v4950 = vand.u32 %v4388, 4294901760
        %v4951 = vsub.f32 %v4388, %v4950
        %4952 = vmatmul.mubr.f32.gmra.mxu0 %v4951
        %v4953 = vpop.f32.mrf.mxu0
        %v4954 = vadd.f32 %v4776, %v4953
        %v4955 = vpop.f32.mrf.mxu0
        %4956 = vmatprep.mubr.f32.mxu0 0.0
        %v4957 = vand.u32 %v4391, 4294901760
        %v4958 = vsub.f32 %v4391, %v4957
        %4959 = vmatmul.mubr.f32.gmra.mxu0 %v4958
        %v4960 = vpop.f32.mrf.mxu0
        %v4961 = vadd.f32 %v4782, %v4960
        %v4962 = vpop.f32.mrf.mxu0
        %4963 = vmatprep.mubr.f32.mxu0 0.0
        %v4964 = vand.u32 %v4394, 4294901760
        %v4965 = vsub.f32 %v4394, %v4964
        %4966 = vmatmul.mubr.f32.gmra.mxu0 %v4965
        %v4967 = vpop.f32.mrf.mxu0
        %v4968 = vadd.f32 %v4788, %v4967
        %v4969 = vpop.f32.mrf.mxu0
        %4970 = vmatprep.mubr.f32.mxu0 0.0
        %v4971 = vand.u32 %v4397, 4294901760
        %v4972 = vsub.f32 %v4397, %v4971
        %4973 = vmatmul.mubr.f32.gmra.mxu0 %v4972
        %v4974 = vpop.f32.mrf.mxu0
        %v4975 = vadd.f32 %v4794, %v4974
        %v4976 = vpop.f32.mrf.mxu0
        %4977 = vmatprep.mubr.f32.mxu0 0.0
        %v4978 = vand.u32 %v4400, 4294901760
        %v4979 = vsub.f32 %v4400, %v4978
        %4980 = vmatmul.mubr.f32.gmra.mxu0 %v4979
        %v4981 = vpop.f32.mrf.mxu0
        %v4982 = vadd.f32 %v4800, %v4981
        %v4983 = vpop.f32.mrf.mxu0
        %4984 = vmatprep.mubr.f32.mxu0 0.0
        %v4985 = vand.u32 %v4403, 4294901760
        %v4986 = vsub.f32 %v4403, %v4985
        %4987 = vmatmul.mubr.f32.gmra.mxu0 %v4986
        %v4988 = vpop.f32.mrf.mxu0
        %v4989 = vadd.f32 %v4806, %v4988
        %v4990 = vpop.f32.mrf.mxu0
        %4991 = vdwg.mxu0
        %4992 = vmatprep.subr.mxu0 0.0
        %4993 = vmatpush1.msra.mxu0 0.0
        %4994 = vmatprep.subr.mxu0 0.0
        %4995 = vmatpush1.msra.mxu0 0.0
        %4996 = vmatprep.subr.mxu0 0.0
        %4997 = vmatpush1.msra.mxu0 0.0
        %4998 = vmatprep.subr.mxu0 0.0
        %4999 = vmatpush1.msra.mxu0 0.0
        %5000 = vmatprep.subr.mxu0 0.0
        %5001 = vmatpush1.msra.mxu0 0.0
        %5002 = vmatprep.subr.mxu0 0.0
        %5003 = vmatpush1.msra.mxu0 0.0
        %5004 = vmatprep.subr.mxu0 0.0
        %5005 = vmatpush1.msra.mxu0 0.0
        %5006 = vmatprep.subr.mxu0 0.0
        %5007 = vmatpush1.msra.mxu0 0.0
        %5008 = vmatprep.subr.mxu0 0.0
        %5009 = vmatpush1.msra.mxu0 0.0
        %5010 = vmatprep.subr.mxu0 0.0
        %5011 = vmatpush1.msra.mxu0 0.0
        %5012 = vmatprep.subr.mxu0 0.0
        %5013 = vmatpush1.msra.mxu0 0.0
        %5014 = vmatprep.subr.mxu0 0.0
        %5015 = vmatpush1.msra.mxu0 0.0
        %5016 = vmatprep.subr.mxu0 0.0
        %5017 = vmatpush1.msra.mxu0 0.0
        %5018 = vmatprep.subr.mxu0 0.0
        %v5019 = vand.u32 %v4356, 4294901760
        %5020 = vmatpush1.msra.mxu0 %v5019
        %5021 = vmatprep.subr.mxu0 0.0
        %v5022 = vand.u32 %v4355, 4294901760
        %5023 = vmatpush1.msra.mxu0 %v5022
        %5024 = vmatprep.subr.mxu0 0.0
        %v5025 = vand.u32 %v4354, 4294901760
        %5026 = vmatpush1.msra.mxu0 %v5025
        %5027 = vmatprep.subr.mxu0 0.0
        %5028 = vmatpush2.msra.mxu0 0.0
        %5029 = vmatprep.subr.mxu0 0.0
        %5030 = vmatpush2.msra.mxu0 0.0
        %5031 = vmatprep.subr.mxu0 0.0
        %5032 = vmatpush2.msra.mxu0 0.0
        %5033 = vmatprep.subr.mxu0 0.0
        %5034 = vmatpush2.msra.mxu0 0.0
        %5035 = vmatprep.subr.mxu0 0.0
        %5036 = vmatpush2.msra.mxu0 0.0
        %5037 = vmatprep.subr.mxu0 0.0
        %5038 = vmatpush2.msra.mxu0 0.0
        %5039 = vmatprep.subr.mxu0 0.0
        %5040 = vmatpush2.msra.mxu0 0.0
        %5041 = vmatprep.subr.mxu0 0.0
        %5042 = vmatpush2.msra.mxu0 0.0
        %5043 = vmatprep.subr.mxu0 0.0
        %5044 = vmatpush2.msra.mxu0 0.0
        %5045 = vmatprep.subr.mxu0 0.0
        %5046 = vmatpush2.msra.mxu0 0.0
        %5047 = vmatprep.subr.mxu0 0.0
        %5048 = vmatpush2.msra.mxu0 0.0
        %5049 = vmatprep.subr.mxu0 0.0
        %5050 = vmatpush2.msra.mxu0 0.0
        %5051 = vmatprep.subr.mxu0 0.0
        %5052 = vmatpush2.msra.mxu0 0.0
        %5053 = vmatprep.subr.mxu0 0.0
        %5054 = vmatpush2.msra.mxu0 0.0
        %5055 = vmatprep.subr.mxu0 0.0
        %5056 = vmatpush2.msra.mxu0 0.0
        %5057 = vmatprep.subr.mxu0 0.0
        %5058 = vmatpush2.msra.mxu0 0.0
        %5059 = vmatprep.mubr.f32.mxu0 0.0
        %v5060 = vand.u32 %v4358, 4294901760
        %v5061 = vsub.f32 %v4358, %v5060
        %v5062 = vand.u32 %v5061, 4294901760
        %5063 = vmatmul.mubr.f32.gmra.mxu0 %v5062
        %v5064 = vpop.f32.mrf.mxu0
        %v5065 = vadd.f32 %v4884, %v5064
        %v5066 = vpop.f32.mrf.mxu0
        %5067 = vmatprep.mubr.f32.mxu0 0.0
        %v5068 = vand.u32 %v4361, 4294901760
        %v5069 = vsub.f32 %v4361, %v5068
        %v5070 = vand.u32 %v5069, 4294901760
        %5071 = vmatmul.mubr.f32.gmra.mxu0 %v5070
        %v5072 = vpop.f32.mrf.mxu0
        %v5073 = vadd.f32 %v4891, %v5072
        %v5074 = vpop.f32.mrf.mxu0
        %5075 = vmatprep.mubr.f32.mxu0 0.0
        %v5076 = vand.u32 %v4364, 4294901760
        %v5077 = vsub.f32 %v4364, %v5076
        %v5078 = vand.u32 %v5077, 4294901760
        %5079 = vmatmul.mubr.f32.gmra.mxu0 %v5078
        %v5080 = vpop.f32.mrf.mxu0
        %v5081 = vadd.f32 %v4898, %v5080
        %v5082 = vpop.f32.mrf.mxu0
        %5083 = vmatprep.mubr.f32.mxu0 0.0
        %v5084 = vand.u32 %v4367, 4294901760
        %v5085 = vsub.f32 %v4367, %v5084
        %v5086 = vand.u32 %v5085, 4294901760
        %5087 = vmatmul.mubr.f32.gmra.mxu0 %v5086
        %v5088 = vpop.f32.mrf.mxu0
        %v5089 = vadd.f32 %v4905, %v5088
        %v5090 = vpop.f32.mrf.mxu0
        %5091 = vmatprep.mubr.f32.mxu0 0.0
        %v5092 = vand.u32 %v4370, 4294901760
        %v5093 = vsub.f32 %v4370, %v5092
        %v5094 = vand.u32 %v5093, 4294901760
        %5095 = vmatmul.mubr.f32.gmra.mxu0 %v5094
        %v5096 = vpop.f32.mrf.mxu0
        %v5097 = vadd.f32 %v4912, %v5096
        %v5098 = vpop.f32.mrf.mxu0
        %5099 = vmatprep.mubr.f32.mxu0 0.0
        %v5100 = vand.u32 %v4373, 4294901760
        %v5101 = vsub.f32 %v4373, %v5100
        %v5102 = vand.u32 %v5101, 4294901760
        %5103 = vmatmul.mubr.f32.gmra.mxu0 %v5102
        %v5104 = vpop.f32.mrf.mxu0
        %v5105 = vadd.f32 %v4919, %v5104
        %v5106 = vpop.f32.mrf.mxu0
        %5107 = vmatprep.mubr.f32.mxu0 0.0
        %v5108 = vand.u32 %v4376, 4294901760
        %v5109 = vsub.f32 %v4376, %v5108
        %v5110 = vand.u32 %v5109, 4294901760
        %5111 = vmatmul.mubr.f32.gmra.mxu0 %v5110
        %v5112 = vpop.f32.mrf.mxu0
        %v5113 = vadd.f32 %v4926, %v5112
        %v5114 = vpop.f32.mrf.mxu0
        %5115 = vmatprep.mubr.f32.mxu0 0.0
        %v5116 = vand.u32 %v4379, 4294901760
        %v5117 = vsub.f32 %v4379, %v5116
        %v5118 = vand.u32 %v5117, 4294901760
        %5119 = vmatmul.mubr.f32.gmra.mxu0 %v5118
        %v5120 = vpop.f32.mrf.mxu0
        %v5121 = vadd.f32 %v4933, %v5120
        %v5122 = vpop.f32.mrf.mxu0
        %5123 = vmatprep.mubr.f32.mxu0 0.0
        %v5124 = vand.u32 %v4382, 4294901760
        %v5125 = vsub.f32 %v4382, %v5124
        %v5126 = vand.u32 %v5125, 4294901760
        %5127 = vmatmul.mubr.f32.gmra.mxu0 %v5126
        %v5128 = vpop.f32.mrf.mxu0
        %v5129 = vadd.f32 %v4940, %v5128
        %v5130 = vpop.f32.mrf.mxu0
        %5131 = vmatprep.mubr.f32.mxu0 0.0
        %v5132 = vand.u32 %v4385, 4294901760
        %v5133 = vsub.f32 %v4385, %v5132
        %v5134 = vand.u32 %v5133, 4294901760
        %5135 = vmatmul.mubr.f32.gmra.mxu0 %v5134
        %v5136 = vpop.f32.mrf.mxu0
        %v5137 = vadd.f32 %v4947, %v5136
        %v5138 = vpop.f32.mrf.mxu0
        %5139 = vmatprep.mubr.f32.mxu0 0.0
        %v5140 = vand.u32 %v4388, 4294901760
        %v5141 = vsub.f32 %v4388, %v5140
        %v5142 = vand.u32 %v5141, 4294901760
        %5143 = vmatmul.mubr.f32.gmra.mxu0 %v5142
        %v5144 = vpop.f32.mrf.mxu0
        %v5145 = vadd.f32 %v4954, %v5144
        %v5146 = vpop.f32.mrf.mxu0
        %5147 = vmatprep.mubr.f32.mxu0 0.0
        %v5148 = vand.u32 %v4391, 4294901760
        %v5149 = vsub.f32 %v4391, %v5148
        %v5150 = vand.u32 %v5149, 4294901760
        %5151 = vmatmul.mubr.f32.gmra.mxu0 %v5150
        %v5152 = vpop.f32.mrf.mxu0
        %v5153 = vadd.f32 %v4961, %v5152
        %v5154 = vpop.f32.mrf.mxu0
        %5155 = vmatprep.mubr.f32.mxu0 0.0
        %v5156 = vand.u32 %v4394, 4294901760
        %v5157 = vsub.f32 %v4394, %v5156
        %v5158 = vand.u32 %v5157, 4294901760
        %5159 = vmatmul.mubr.f32.gmra.mxu0 %v5158
        %v5160 = vpop.f32.mrf.mxu0
        %v5161 = vadd.f32 %v4968, %v5160
        %v5162 = vpop.f32.mrf.mxu0
        %5163 = vmatprep.mubr.f32.mxu0 0.0
        %v5164 = vand.u32 %v4397, 4294901760
        %v5165 = vsub.f32 %v4397, %v5164
        %v5166 = vand.u32 %v5165, 4294901760
        %5167 = vmatmul.mubr.f32.gmra.mxu0 %v5166
        %v5168 = vpop.f32.mrf.mxu0
        %v5169 = vadd.f32 %v4975, %v5168
        %v5170 = vpop.f32.mrf.mxu0
        %5171 = vmatprep.mubr.f32.mxu0 0.0
        %v5172 = vand.u32 %v4400, 4294901760
        %v5173 = vsub.f32 %v4400, %v5172
        %v5174 = vand.u32 %v5173, 4294901760
        %5175 = vmatmul.mubr.f32.gmra.mxu0 %v5174
        %v5176 = vpop.f32.mrf.mxu0
        %v5177 = vadd.f32 %v4982, %v5176
        %v5178 = vpop.f32.mrf.mxu0
        %5179 = vmatprep.mubr.f32.mxu0 0.0
        %v5180 = vand.u32 %v4403, 4294901760
        %v5181 = vsub.f32 %v4403, %v5180
        %v5182 = vand.u32 %v5181, 4294901760
        %5183 = vmatmul.mubr.f32.gmra.mxu0 %v5182
        %v5184 = vpop.f32.mrf.mxu0
        %v5185 = vadd.f32 %v4989, %v5184
        %v5186 = vpop.f32.mrf.mxu0
        %5187 = vdwg.mxu0
        %5188 = vmatprep.subr.mxu0 0.0
        %5189 = vmatpush1.msra.mxu0 0.0
        %5190 = vmatprep.subr.mxu0 0.0
        %5191 = vmatpush1.msra.mxu0 0.0
        %5192 = vmatprep.subr.mxu0 0.0
        %5193 = vmatpush1.msra.mxu0 0.0
        %5194 = vmatprep.subr.mxu0 0.0
        %5195 = vmatpush1.msra.mxu0 0.0
        %5196 = vmatprep.subr.mxu0 0.0
        %5197 = vmatpush1.msra.mxu0 0.0
        %5198 = vmatprep.subr.mxu0 0.0
        %5199 = vmatpush1.msra.mxu0 0.0
        %5200 = vmatprep.subr.mxu0 0.0
        %5201 = vmatpush1.msra.mxu0 0.0
        %5202 = vmatprep.subr.mxu0 0.0
        %5203 = vmatpush1.msra.mxu0 0.0
        %5204 = vmatprep.subr.mxu0 0.0
        %5205 = vmatpush1.msra.mxu0 0.0
        %5206 = vmatprep.subr.mxu0 0.0
        %5207 = vmatpush1.msra.mxu0 0.0
        %5208 = vmatprep.subr.mxu0 0.0
        %5209 = vmatpush1.msra.mxu0 0.0
        %5210 = vmatprep.subr.mxu0 0.0
        %5211 = vmatpush1.msra.mxu0 0.0
        %5212 = vmatprep.subr.mxu0 0.0
        %5213 = vmatpush1.msra.mxu0 0.0
        %5214 = vmatprep.subr.mxu0 0.0
        %v5215 = vand.u32 %v4356, 4294901760
        %v5216 = vsub.f32 %v4356, %v5215
        %v5217 = vand.u32 %v5216, 4294901760
        %5218 = vmatpush1.msra.mxu0 %v5217
        %5219 = vmatprep.subr.mxu0 0.0
        %v5220 = vand.u32 %v4355, 4294901760
        %v5221 = vsub.f32 %v4355, %v5220
        %v5222 = vand.u32 %v5221, 4294901760
        %5223 = vmatpush1.msra.mxu0 %v5222
        %5224 = vmatprep.subr.mxu0 0.0
        %v5225 = vand.u32 %v4354, 4294901760
        %v5226 = vsub.f32 %v4354, %v5225
        %v5227 = vand.u32 %v5226, 4294901760
        %5228 = vmatpush1.msra.mxu0 %v5227
        %5229 = vmatprep.subr.mxu0 0.0
        %5230 = vmatpush2.msra.mxu0 0.0
        %5231 = vmatprep.subr.mxu0 0.0
        %5232 = vmatpush2.msra.mxu0 0.0
        %5233 = vmatprep.subr.mxu0 0.0
        %5234 = vmatpush2.msra.mxu0 0.0
        %5235 = vmatprep.subr.mxu0 0.0
        %5236 = vmatpush2.msra.mxu0 0.0
        %5237 = vmatprep.subr.mxu0 0.0
        %5238 = vmatpush2.msra.mxu0 0.0
        %5239 = vmatprep.subr.mxu0 0.0
        %5240 = vmatpush2.msra.mxu0 0.0
        %5241 = vmatprep.subr.mxu0 0.0
        %5242 = vmatpush2.msra.mxu0 0.0
        %5243 = vmatprep.subr.mxu0 0.0
        %5244 = vmatpush2.msra.mxu0 0.0
        %5245 = vmatprep.subr.mxu0 0.0
        %5246 = vmatpush2.msra.mxu0 0.0
        %5247 = vmatprep.subr.mxu0 0.0
        %5248 = vmatpush2.msra.mxu0 0.0
        %5249 = vmatprep.subr.mxu0 0.0
        %5250 = vmatpush2.msra.mxu0 0.0
        %5251 = vmatprep.subr.mxu0 0.0
        %5252 = vmatpush2.msra.mxu0 0.0
        %5253 = vmatprep.subr.mxu0 0.0
        %5254 = vmatpush2.msra.mxu0 0.0
        %5255 = vmatprep.subr.mxu0 0.0
        %5256 = vmatpush2.msra.mxu0 0.0
        %5257 = vmatprep.subr.mxu0 0.0
        %5258 = vmatpush2.msra.mxu0 0.0
        %5259 = vmatprep.subr.mxu0 0.0
        %5260 = vmatpush2.msra.mxu0 0.0
        %5261 = vmatprep.mubr.f32.mxu0 0.0
        %v5262 = vand.u32 %v4358, 4294901760
        %5263 = vmatmul.mubr.f32.gmra.mxu0 %v5262
        %v5264 = vpop.f32.mrf.mxu0
        %v5265 = vadd.f32 %v5065, %v5264
        %v5266 = vpop.f32.mrf.mxu0
        %5267 = vmatprep.mubr.f32.mxu0 0.0
        %v5268 = vand.u32 %v4361, 4294901760
        %5269 = vmatmul.mubr.f32.gmra.mxu0 %v5268
        %v5270 = vpop.f32.mrf.mxu0
        %v5271 = vadd.f32 %v5073, %v5270
        %v5272 = vpop.f32.mrf.mxu0
        %5273 = vmatprep.mubr.f32.mxu0 0.0
        %v5274 = vand.u32 %v4364, 4294901760
        %5275 = vmatmul.mubr.f32.gmra.mxu0 %v5274
        %v5276 = vpop.f32.mrf.mxu0
        %v5277 = vadd.f32 %v5081, %v5276
        %v5278 = vpop.f32.mrf.mxu0
        %5279 = vmatprep.mubr.f32.mxu0 0.0
        %v5280 = vand.u32 %v4367, 4294901760
        %5281 = vmatmul.mubr.f32.gmra.mxu0 %v5280
        %v5282 = vpop.f32.mrf.mxu0
        %v5283 = vadd.f32 %v5089, %v5282
        %v5284 = vpop.f32.mrf.mxu0
        %5285 = vmatprep.mubr.f32.mxu0 0.0
        %v5286 = vand.u32 %v4370, 4294901760
        %5287 = vmatmul.mubr.f32.gmra.mxu0 %v5286
        %v5288 = vpop.f32.mrf.mxu0
        %v5289 = vadd.f32 %v5097, %v5288
        %v5290 = vpop.f32.mrf.mxu0
        %5291 = vmatprep.mubr.f32.mxu0 0.0
        %v5292 = vand.u32 %v4373, 4294901760
        %5293 = vmatmul.mubr.f32.gmra.mxu0 %v5292
        %v5294 = vpop.f32.mrf.mxu0
        %v5295 = vadd.f32 %v5105, %v5294
        %v5296 = vpop.f32.mrf.mxu0
        %5297 = vmatprep.mubr.f32.mxu0 0.0
        %v5298 = vand.u32 %v4376, 4294901760
        %5299 = vmatmul.mubr.f32.gmra.mxu0 %v5298
        %v5300 = vpop.f32.mrf.mxu0
        %v5301 = vadd.f32 %v5113, %v5300
        %v5302 = vpop.f32.mrf.mxu0
        %5303 = vmatprep.mubr.f32.mxu0 0.0
        %v5304 = vand.u32 %v4379, 4294901760
        %5305 = vmatmul.mubr.f32.gmra.mxu0 %v5304
        %v5306 = vpop.f32.mrf.mxu0
        %v5307 = vadd.f32 %v5121, %v5306
        %v5308 = vpop.f32.mrf.mxu0
        %5309 = vmatprep.mubr.f32.mxu0 0.0
        %v5310 = vand.u32 %v4382, 4294901760
        %5311 = vmatmul.mubr.f32.gmra.mxu0 %v5310
        %v5312 = vpop.f32.mrf.mxu0
        %v5313 = vadd.f32 %v5129, %v5312
        %v5314 = vpop.f32.mrf.mxu0
        %5315 = vmatprep.mubr.f32.mxu0 0.0
        %v5316 = vand.u32 %v4385, 4294901760
        %5317 = vmatmul.mubr.f32.gmra.mxu0 %v5316
        %v5318 = vpop.f32.mrf.mxu0
        %v5319 = vadd.f32 %v5137, %v5318
        %v5320 = vpop.f32.mrf.mxu0
        %5321 = vmatprep.mubr.f32.mxu0 0.0
        %v5322 = vand.u32 %v4388, 4294901760
        %5323 = vmatmul.mubr.f32.gmra.mxu0 %v5322
        %v5324 = vpop.f32.mrf.mxu0
        %v5325 = vadd.f32 %v5145, %v5324
        %v5326 = vpop.f32.mrf.mxu0
        %5327 = vmatprep.mubr.f32.mxu0 0.0
        %v5328 = vand.u32 %v4391, 4294901760
        %5329 = vmatmul.mubr.f32.gmra.mxu0 %v5328
        %v5330 = vpop.f32.mrf.mxu0
        %v5331 = vadd.f32 %v5153, %v5330
        %v5332 = vpop.f32.mrf.mxu0
        %5333 = vmatprep.mubr.f32.mxu0 0.0
        %v5334 = vand.u32 %v4394, 4294901760
        %5335 = vmatmul.mubr.f32.gmra.mxu0 %v5334
        %v5336 = vpop.f32.mrf.mxu0
        %v5337 = vadd.f32 %v5161, %v5336
        %v5338 = vpop.f32.mrf.mxu0
        %5339 = vmatprep.mubr.f32.mxu0 0.0
        %v5340 = vand.u32 %v4397, 4294901760
        %5341 = vmatmul.mubr.f32.gmra.mxu0 %v5340
        %v5342 = vpop.f32.mrf.mxu0
        %v5343 = vadd.f32 %v5169, %v5342
        %v5344 = vpop.f32.mrf.mxu0
        %5345 = vmatprep.mubr.f32.mxu0 0.0
        %v5346 = vand.u32 %v4400, 4294901760
        %5347 = vmatmul.mubr.f32.gmra.mxu0 %v5346
        %v5348 = vpop.f32.mrf.mxu0
        %v5349 = vadd.f32 %v5177, %v5348
        %v5350 = vpop.f32.mrf.mxu0
        %5351 = vmatprep.mubr.f32.mxu0 0.0
        %v5352 = vand.u32 %v4403, 4294901760
        %5353 = vmatmul.mubr.f32.gmra.mxu0 %v5352
        %v5354 = vpop.f32.mrf.mxu0
        %v5355 = vadd.f32 %v5185, %v5354
        %v5356 = vpop.f32.mrf.mxu0
        %5357 = vdwg.mxu0
        %5358 = vmatprep.subr.mxu0 0.0
        %5359 = vmatpush1.msra.mxu0 0.0
        %5360 = vmatprep.subr.mxu0 0.0
        %5361 = vmatpush1.msra.mxu0 0.0
        %5362 = vmatprep.subr.mxu0 0.0
        %5363 = vmatpush1.msra.mxu0 0.0
        %5364 = vmatprep.subr.mxu0 0.0
        %5365 = vmatpush1.msra.mxu0 0.0
        %5366 = vmatprep.subr.mxu0 0.0
        %5367 = vmatpush1.msra.mxu0 0.0
        %5368 = vmatprep.subr.mxu0 0.0
        %5369 = vmatpush1.msra.mxu0 0.0
        %5370 = vmatprep.subr.mxu0 0.0
        %5371 = vmatpush1.msra.mxu0 0.0
        %5372 = vmatprep.subr.mxu0 0.0
        %5373 = vmatpush1.msra.mxu0 0.0
        %5374 = vmatprep.subr.mxu0 0.0
        %5375 = vmatpush1.msra.mxu0 0.0
        %5376 = vmatprep.subr.mxu0 0.0
        %5377 = vmatpush1.msra.mxu0 0.0
        %5378 = vmatprep.subr.mxu0 0.0
        %5379 = vmatpush1.msra.mxu0 0.0
        %5380 = vmatprep.subr.mxu0 0.0
        %5381 = vmatpush1.msra.mxu0 0.0
        %5382 = vmatprep.subr.mxu0 0.0
        %5383 = vmatpush1.msra.mxu0 0.0
        %5384 = vmatprep.subr.mxu0 0.0
        %v5385 = vand.u32 %v4356, 4294901760
        %5386 = vmatpush1.msra.mxu0 %v5385
        %5387 = vmatprep.subr.mxu0 0.0
        %v5388 = vand.u32 %v4355, 4294901760
        %5389 = vmatpush1.msra.mxu0 %v5388
        %5390 = vmatprep.subr.mxu0 0.0
        %v5391 = vand.u32 %v4354, 4294901760
        %5392 = vmatpush1.msra.mxu0 %v5391
        %5393 = vmatprep.subr.mxu0 0.0
        %5394 = vmatpush2.msra.mxu0 0.0
        %5395 = vmatprep.subr.mxu0 0.0
        %5396 = vmatpush2.msra.mxu0 0.0
        %5397 = vmatprep.subr.mxu0 0.0
        %5398 = vmatpush2.msra.mxu0 0.0
        %5399 = vmatprep.subr.mxu0 0.0
        %5400 = vmatpush2.msra.mxu0 0.0
        %5401 = vmatprep.subr.mxu0 0.0
        %5402 = vmatpush2.msra.mxu0 0.0
        %5403 = vmatprep.subr.mxu0 0.0
        %5404 = vmatpush2.msra.mxu0 0.0
        %5405 = vmatprep.subr.mxu0 0.0
        %5406 = vmatpush2.msra.mxu0 0.0
        %5407 = vmatprep.subr.mxu0 0.0
        %5408 = vmatpush2.msra.mxu0 0.0
        %5409 = vmatprep.subr.mxu0 0.0
        %5410 = vmatpush2.msra.mxu0 0.0
        %5411 = vmatprep.subr.mxu0 0.0
        %5412 = vmatpush2.msra.mxu0 0.0
        %5413 = vmatprep.subr.mxu0 0.0
        %5414 = vmatpush2.msra.mxu0 0.0
        %5415 = vmatprep.subr.mxu0 0.0
        %5416 = vmatpush2.msra.mxu0 0.0
        %5417 = vmatprep.subr.mxu0 0.0
        %5418 = vmatpush2.msra.mxu0 0.0
        %5419 = vmatprep.subr.mxu0 0.0
        %5420 = vmatpush2.msra.mxu0 0.0
        %5421 = vmatprep.subr.mxu0 0.0
        %5422 = vmatpush2.msra.mxu0 0.0
        %5423 = vmatprep.subr.mxu0 0.0
        %5424 = vmatpush2.msra.mxu0 0.0
        %5425 = vmatprep.mubr.f32.mxu0 0.0
        %v5426 = vand.u32 %v4358, 4294901760
        %5427 = vmatmul.mubr.f32.gmra.mxu0 %v5426
        %v5428 = vpop.f32.mrf.mxu0
        %v5429 = vadd.f32 %v5265, %v5428
        %v5430 = vpop.f32.mrf.mxu0
        %5431 = vmatprep.mubr.f32.mxu0 0.0
        %v5432 = vand.u32 %v4361, 4294901760
        %5433 = vmatmul.mubr.f32.gmra.mxu0 %v5432
        %v5434 = vpop.f32.mrf.mxu0
        %v5435 = vadd.f32 %v5271, %v5434
        %v5436 = vpop.f32.mrf.mxu0
        %5437 = vmatprep.mubr.f32.mxu0 0.0
        %v5438 = vand.u32 %v4364, 4294901760
        %5439 = vmatmul.mubr.f32.gmra.mxu0 %v5438
        %v5440 = vpop.f32.mrf.mxu0
        %v5441 = vadd.f32 %v5277, %v5440
        %v5442 = vpop.f32.mrf.mxu0
        %5443 = vmatprep.mubr.f32.mxu0 0.0
        %v5444 = vand.u32 %v4367, 4294901760
        %5445 = vmatmul.mubr.f32.gmra.mxu0 %v5444
        %v5446 = vpop.f32.mrf.mxu0
        %v5447 = vadd.f32 %v5283, %v5446
        %v5448 = vpop.f32.mrf.mxu0
        %5449 = vmatprep.mubr.f32.mxu0 0.0
        %v5450 = vand.u32 %v4370, 4294901760
        %5451 = vmatmul.mubr.f32.gmra.mxu0 %v5450
        %v5452 = vpop.f32.mrf.mxu0
        %v5453 = vadd.f32 %v5289, %v5452
        %v5454 = vpop.f32.mrf.mxu0
        %5455 = vmatprep.mubr.f32.mxu0 0.0
        %v5456 = vand.u32 %v4373, 4294901760
        %5457 = vmatmul.mubr.f32.gmra.mxu0 %v5456
        %v5458 = vpop.f32.mrf.mxu0
        %v5459 = vadd.f32 %v5295, %v5458
        %v5460 = vpop.f32.mrf.mxu0
        %5461 = vmatprep.mubr.f32.mxu0 0.0
        %v5462 = vand.u32 %v4376, 4294901760
        %5463 = vmatmul.mubr.f32.gmra.mxu0 %v5462
        %v5464 = vpop.f32.mrf.mxu0
        %v5465 = vadd.f32 %v5301, %v5464
        %v5466 = vpop.f32.mrf.mxu0
        %5467 = vmatprep.mubr.f32.mxu0 0.0
        %v5468 = vand.u32 %v4379, 4294901760
        %5469 = vmatmul.mubr.f32.gmra.mxu0 %v5468
        %v5470 = vpop.f32.mrf.mxu0
        %v5471 = vadd.f32 %v5307, %v5470
        %v5472 = vpop.f32.mrf.mxu0
        %5473 = vmatprep.mubr.f32.mxu0 0.0
        %v5474 = vand.u32 %v4382, 4294901760
        %5475 = vmatmul.mubr.f32.gmra.mxu0 %v5474
        %v5476 = vpop.f32.mrf.mxu0
        %v5477 = vadd.f32 %v5313, %v5476
        %v5478 = vpop.f32.mrf.mxu0
        %5479 = vmatprep.mubr.f32.mxu0 0.0
        %v5480 = vand.u32 %v4385, 4294901760
        %5481 = vmatmul.mubr.f32.gmra.mxu0 %v5480
        %v5482 = vpop.f32.mrf.mxu0
        %v5483 = vadd.f32 %v5319, %v5482
        %v5484 = vpop.f32.mrf.mxu0
        %5485 = vmatprep.mubr.f32.mxu0 0.0
        %v5486 = vand.u32 %v4388, 4294901760
        %5487 = vmatmul.mubr.f32.gmra.mxu0 %v5486
        %v5488 = vpop.f32.mrf.mxu0
        %v5489 = vadd.f32 %v5325, %v5488
        %v5490 = vpop.f32.mrf.mxu0
        %5491 = vmatprep.mubr.f32.mxu0 0.0
        %v5492 = vand.u32 %v4391, 4294901760
        %5493 = vmatmul.mubr.f32.gmra.mxu0 %v5492
        %v5494 = vpop.f32.mrf.mxu0
        %v5495 = vadd.f32 %v5331, %v5494
        %v5496 = vpop.f32.mrf.mxu0
        %5497 = vmatprep.mubr.f32.mxu0 0.0
        %v5498 = vand.u32 %v4394, 4294901760
        %5499 = vmatmul.mubr.f32.gmra.mxu0 %v5498
        %v5500 = vpop.f32.mrf.mxu0
        %v5501 = vadd.f32 %v5337, %v5500
        %v5502 = vpop.f32.mrf.mxu0
        %5503 = vmatprep.mubr.f32.mxu0 0.0
        %v5504 = vand.u32 %v4397, 4294901760
        %5505 = vmatmul.mubr.f32.gmra.mxu0 %v5504
        %v5506 = vpop.f32.mrf.mxu0
        %v5507 = vadd.f32 %v5343, %v5506
        %v5508 = vpop.f32.mrf.mxu0
        %5509 = vmatprep.mubr.f32.mxu0 0.0
        %v5510 = vand.u32 %v4400, 4294901760
        %5511 = vmatmul.mubr.f32.gmra.mxu0 %v5510
        %v5512 = vpop.f32.mrf.mxu0
        %v5513 = vadd.f32 %v5349, %v5512
        %v5514 = vpop.f32.mrf.mxu0
        %5515 = vmatprep.mubr.f32.mxu0 0.0
        %v5516 = vand.u32 %v4403, 4294901760
        %5517 = vmatmul.mubr.f32.gmra.mxu0 %v5516
        %v5518 = vpop.f32.mrf.mxu0
        %v5519 = vadd.f32 %v5355, %v5518
        %v5520 = vpop.f32.mrf.mxu0
        %5521 = vdwg.mxu0
        %v5522 = vpack.c.bf16 %v4339, %v4338
        %v5523 = vpack.c.bf16 %v4341, %v4340
        %v5524 = vpack.c.bf16 %v4343, %v4342
        %v5525 = vpack.c.bf16 %v4345, %v4344
        %v5526 = vpack.c.bf16 %v4347, %v4346
        %v5527 = vpack.c.bf16 %v4349, %v4348
        %v5528 = vpack.c.bf16 %v4351, %v4350
        %v5529 = vpack.c.bf16 %v4353, %v4352
        %v5530 = vld [vmem:[#allocation3] sm:$0xf]
        %v5531 = vld [vmem:[#allocation3 + $0x4] sm:$0xf]
        %v5532 = vld [vmem:[#allocation3 + $0x8] sm:$0xf]
        %v5536 = vunpack.c.l.b16 %v5530
        %v5537 = vunpack.c.l.b16 %v5531
        %v5538 = vunpack.c.l.b16 %v5532
        %v5539 = vpack.c.b16 %v5537, %v5536
        %v5540 = vpack.c.b16 %v5538, %v5538
        %v5543 = vsel %vm3076, %v5522, 0
        %v5546 = vsel %vm3076, %v5523, 0
        %v5549 = vsel %vm3076, %v5524, 0
        %v5552 = vsel %vm3076, %v5525, 0
        %v5555 = vsel %vm3076, %v5526, 0
        %v5558 = vsel %vm3076, %v5527, 0
        %v5561 = vsel %vm3076, %v5528, 0
        %v5564 = vsel %vm3076, %v5529, 0
        %vm5566 = vcmask 1043456
        %v5568 = vsel %vm5566, %v5540, 0
        %5570 = vmatprep.subr.bf16.mxu0 0
        %5571 = vmatpush1.bf16.msra.mxu0 0
        %5572 = vmatprep.subr.bf16.mxu0 0
        %5573 = vmatpush1.bf16.msra.mxu0 0
        %5574 = vmatprep.subr.bf16.mxu0 0
        %5575 = vmatpush1.bf16.msra.mxu0 0
        %5576 = vmatprep.subr.bf16.mxu0 0
        %5577 = vmatpush1.bf16.msra.mxu0 0
        %5578 = vmatprep.subr.bf16.mxu0 0
        %5579 = vmatpush1.bf16.msra.mxu0 0
        %5580 = vmatprep.subr.bf16.mxu0 0
        %5581 = vmatpush1.bf16.msra.mxu0 0
        %5582 = vmatprep.subr.bf16.mxu0 0
        %5583 = vmatpush1.bf16.msra.mxu0 %v5568
        %5584 = vmatprep.subr.bf16.mxu0 0
        %5585 = vmatpush1.bf16.msra.mxu0 %v5539
        %5586 = vmatprep.subr.bf16.mxu0 0
        %5587 = vmatpush2.bf16.msra.mxu0 0
        %5588 = vmatprep.subr.bf16.mxu0 0
        %5589 = vmatpush2.bf16.msra.mxu0 0
        %5590 = vmatprep.subr.bf16.mxu0 0
        %5591 = vmatpush2.bf16.msra.mxu0 0
        %5592 = vmatprep.subr.bf16.mxu0 0
        %5593 = vmatpush2.bf16.msra.mxu0 0
        %5594 = vmatprep.subr.bf16.mxu0 0
        %5595 = vmatpush2.bf16.msra.mxu0 0
        %5596 = vmatprep.subr.bf16.mxu0 0
        %5597 = vmatpush2.bf16.msra.mxu0 0
        %5598 = vmatprep.subr.bf16.mxu0 0
        %5599 = vmatpush2.bf16.msra.mxu0 0
        %5600 = vmatprep.subr.bf16.mxu0 0
        %5601 = vmatpush2.bf16.msra.mxu0 0
        %5602 = vmatprep.mubr.bf16.mxu0 0
        %5603 = vmatmul.mubr.bf16.gmra.mxu0 %v5543
        %v5604 = vpop.f32.mrf.mxu0
        %v5605 = vadd.f32 0.0, %v5604
        %v5606 = vpop.f32.mrf.mxu0
        %v5607 = vpop.f32.mrf.mxu0
        %v5608 = vadd.f32 0.0, %v5607
        %v5609 = vpop.f32.mrf.mxu0
        %5610 = vmatprep.mubr.bf16.mxu0 0
        %5611 = vmatmul.mubr.bf16.gmra.mxu0 %v5546
        %v5612 = vpop.f32.mrf.mxu0
        %v5613 = vadd.f32 0.0, %v5612
        %v5614 = vpop.f32.mrf.mxu0
        %v5615 = vpop.f32.mrf.mxu0
        %v5616 = vadd.f32 0.0, %v5615
        %v5617 = vpop.f32.mrf.mxu0
        %5618 = vmatprep.mubr.bf16.mxu0 0
        %5619 = vmatmul.mubr.bf16.gmra.mxu0 %v5549
        %v5620 = vpop.f32.mrf.mxu0
        %v5621 = vadd.f32 0.0, %v5620
        %v5622 = vpop.f32.mrf.mxu0
        %v5623 = vpop.f32.mrf.mxu0
        %v5624 = vadd.f32 0.0, %v5623
        %v5625 = vpop.f32.mrf.mxu0
        %5626 = vmatprep.mubr.bf16.mxu0 0
        %5627 = vmatmul.mubr.bf16.gmra.mxu0 %v5552
        %v5628 = vpop.f32.mrf.mxu0
        %v5629 = vadd.f32 0.0, %v5628
        %v5630 = vpop.f32.mrf.mxu0
        %v5631 = vpop.f32.mrf.mxu0
        %v5632 = vadd.f32 0.0, %v5631
        %v5633 = vpop.f32.mrf.mxu0
        %5634 = vmatprep.mubr.bf16.mxu0 0
        %5635 = vmatmul.mubr.bf16.gmra.mxu0 %v5555
        %v5636 = vpop.f32.mrf.mxu0
        %v5637 = vadd.f32 0.0, %v5636
        %v5638 = vpop.f32.mrf.mxu0
        %v5639 = vpop.f32.mrf.mxu0
        %v5640 = vadd.f32 0.0, %v5639
        %v5641 = vpop.f32.mrf.mxu0
        %5642 = vmatprep.mubr.bf16.mxu0 0
        %5643 = vmatmul.mubr.bf16.gmra.mxu0 %v5558
        %v5644 = vpop.f32.mrf.mxu0
        %v5645 = vadd.f32 0.0, %v5644
        %v5646 = vpop.f32.mrf.mxu0
        %v5647 = vpop.f32.mrf.mxu0
        %v5648 = vadd.f32 0.0, %v5647
        %v5649 = vpop.f32.mrf.mxu0
        %5650 = vmatprep.mubr.bf16.mxu0 0
        %5651 = vmatmul.mubr.bf16.gmra.mxu0 %v5561
        %v5652 = vpop.f32.mrf.mxu0
        %v5653 = vadd.f32 0.0, %v5652
        %v5654 = vpop.f32.mrf.mxu0
        %v5655 = vpop.f32.mrf.mxu0
        %v5656 = vadd.f32 0.0, %v5655
        %v5657 = vpop.f32.mrf.mxu0
        %5658 = vmatprep.mubr.bf16.mxu0 0
        %5659 = vmatmul.mubr.bf16.gmra.mxu0 %v5564
        %v5660 = vpop.f32.mrf.mxu0
        %v5661 = vadd.f32 0.0, %v5660
        %v5662 = vpop.f32.mrf.mxu0
        %v5663 = vpop.f32.mrf.mxu0
        %v5664 = vadd.f32 0.0, %v5663
        %v5665 = vpop.f32.mrf.mxu0
        %5666 = vdwg.mxu0
        %v5667 = vmul.f32 %v5429, %v4149
        %v5668 = vmul.f32 %v5435, %v4155
        %v5669 = vmul.f32 %v5441, %v4161
        %v5670 = vmul.f32 %v5447, %v4167
        %v5671 = vmul.f32 %v5453, %v4173
        %v5672 = vmul.f32 %v5459, %v4179
        %v5673 = vmul.f32 %v5465, %v4185
        %v5674 = vmul.f32 %v5471, %v4191
        %v5675 = vmul.f32 %v5477, %v4197
        %v5676 = vmul.f32 %v5483, %v4203
        %v5677 = vmul.f32 %v5489, %v4209
        %v5678 = vmul.f32 %v5495, %v4215
        %v5679 = vmul.f32 %v5501, %v4221
        %v5680 = vmul.f32 %v5507, %v4227
        %v5681 = vmul.f32 %v5513, %v4233
        %v5682 = vmul.f32 %v5519, %v4239
        %v5683 = vmul.f32 %v5667, 0.35355338
        %v5684 = vmul.f32 %v5668, 0.35355338
        %v5685 = vmul.f32 %v5669, 0.35355338
        %v5686 = vmul.f32 %v5670, 0.35355338
        %v5687 = vmul.f32 %v5671, 0.35355338
        %v5688 = vmul.f32 %v5672, 0.35355338
        %v5689 = vmul.f32 %v5673, 0.35355338
        %v5690 = vmul.f32 %v5674, 0.35355338
        %v5691 = vmul.f32 %v5675, 0.35355338
        %v5692 = vmul.f32 %v5676, 0.35355338
        %v5693 = vmul.f32 %v5677, 0.35355338
        %v5694 = vmul.f32 %v5678, 0.35355338
        %v5695 = vmul.f32 %v5679, 0.35355338
        %v5696 = vmul.f32 %v5680, 0.35355338
        %v5697 = vmul.f32 %v5681, 0.35355338
        %v5698 = vmul.f32 %v5682, 0.35355338
        %v5699 = vmul.f32 %v5683, %v2866
        %v5700 = vmul.f32 %v5684, %v2872
        %v5701 = vmul.f32 %v5685, %v2878
        %v5702 = vmul.f32 %v5686, %v2884
        %v5703 = vmul.f32 %v5687, %v2890
        %v5704 = vmul.f32 %v5688, %v2896
        %v5705 = vmul.f32 %v5689, %v2902
        %v5706 = vmul.f32 %v5690, %v2908
        %v5707 = vmul.f32 %v5691, %v2914
        %v5708 = vmul.f32 %v5692, %v2920
        %v5709 = vmul.f32 %v5693, %v2926
        %v5710 = vmul.f32 %v5694, %v2932
        %v5711 = vmul.f32 %v5695, %v2938
        %v5712 = vmul.f32 %v5696, %v2944
        %v5713 = vmul.f32 %v5697, %v2950
        %v5714 = vmul.f32 %v5698, %v2956
        %5715 = vst [vmem:[%s537] sm:$0xff] %v5699
        %5716 = vst [vmem:[%s537 + $0x8] sm:$0xff] %v5700
        %5717 = vst [vmem:[%s537 + $0x10] sm:$0xff] %v5701
        %5718 = vst [vmem:[%s537 + $0x18] sm:$0xff] %v5702
        %5719 = vst [vmem:[%s537 + $0x20] sm:$0xff] %v5703
        %5720 = vst [vmem:[%s537 + $0x28] sm:$0xff] %v5704
        %5721 = vst [vmem:[%s537 + $0x30] sm:$0xff] %v5705
        %5722 = vst [vmem:[%s537 + $0x38] sm:$0xff] %v5706
        %5723 = vst [vmem:[%s537 + $0x40] sm:$0xff] %v5707
        %5724 = vst [vmem:[%s537 + $0x48] sm:$0xff] %v5708
        %5725 = vst [vmem:[%s537 + $0x50] sm:$0xff] %v5709
        %5726 = vst [vmem:[%s537 + $0x58] sm:$0xff] %v5710
        %5727 = vst [vmem:[%s537 + $0x60] sm:$0xff] %v5711
        %5728 = vst [vmem:[%s537 + $0x68] sm:$0xff] %v5712
        %5729 = vst [vmem:[%s537 + $0x70] sm:$0xff] %v5713
        %5730 = vst [vmem:[%s537 + $0x78] sm:$0xff] %v5714
        %v5731 = vld [vmem:[%s9] sm:$0xff]
        %v5732 = vld [vmem:[%s9 + $0x8] sm:$0xff]
        %v5733 = vld [vmem:[%s9 + $0x10] sm:$0xff]
        %v5734 = vld [vmem:[%s9 + $0x18] sm:$0xff]
        %v5735 = vld [vmem:[%s9 + $0x20] sm:$0xff]
        %v5736 = vld [vmem:[%s9 + $0x28] sm:$0xff]
        %v5737 = vld [vmem:[%s9 + $0x30] sm:$0xff]
        %v5738 = vld [vmem:[%s9 + $0x38] sm:$0xff]
        %v5739 = vld [vmem:[%s9 + $0x40] sm:$0xff]
        %v5740 = vld [vmem:[%s9 + $0x48] sm:$0xff]
        %v5741 = vld [vmem:[%s9 + $0x50] sm:$0xff]
        %v5742 = vld [vmem:[%s9 + $0x58] sm:$0xff]
        %v5743 = vld [vmem:[%s9 + $0x60] sm:$0xff]
        %v5744 = vld [vmem:[%s9 + $0x68] sm:$0xff]
        %v5745 = vld [vmem:[%s9 + $0x70] sm:$0xff]
        %v5746 = vld [vmem:[%s9 + $0x78] sm:$0xff]
        %5747 = vmatprep.subr.mxu0 0.0
        %5748 = vmatpush1.msra.mxu0 %v5746
        %5749 = vmatprep.subr.mxu0 0.0
        %5750 = vmatpush1.msra.mxu0 %v5745
        %5751 = vmatprep.subr.mxu0 0.0
        %5752 = vmatpush1.msra.mxu0 %v5744
        %5753 = vmatprep.subr.mxu0 0.0
        %5754 = vmatpush1.msra.mxu0 %v5743
        %5755 = vmatprep.subr.mxu0 0.0
        %5756 = vmatpush1.msra.mxu0 %v5742
        %5757 = vmatprep.subr.mxu0 0.0
        %5758 = vmatpush1.msra.mxu0 %v5741
        %5759 = vmatprep.subr.mxu0 0.0
        %5760 = vmatpush1.msra.mxu0 %v5740
        %5761 = vmatprep.subr.mxu0 0.0
        %5762 = vmatpush1.msra.mxu0 %v5739
        %5763 = vmatprep.subr.mxu0 0.0
        %5764 = vmatpush1.msra.mxu0 %v5738
        %5765 = vmatprep.subr.mxu0 0.0
        %5766 = vmatpush1.msra.mxu0 %v5737
        %5767 = vmatprep.subr.mxu0 0.0
        %5768 = vmatpush1.msra.mxu0 %v5736
        %5769 = vmatprep.subr.mxu0 0.0
        %5770 = vmatpush1.msra.mxu0 %v5735
        %5771 = vmatprep.subr.mxu0 0.0
        %5772 = vmatpush1.msra.mxu0 %v5734
        %5773 = vmatprep.subr.mxu0 0.0
        %5774 = vmatpush1.msra.mxu0 %v5733
        %5775 = vmatprep.subr.mxu0 0.0
        %5776 = vmatpush1.msra.mxu0 %v5732
        %5777 = vmatprep.subr.mxu0 0.0
        %5778 = vmatpush1.msra.mxu0 %v5731
        %5779 = vmatprep.subr.mxu0 0.0
        %5780 = vmatpush2.msra.mxu0 0.0
        %5781 = vmatprep.subr.mxu0 0.0
        %5782 = vmatpush2.msra.mxu0 0.0
        %5783 = vmatprep.subr.mxu0 0.0
        %5784 = vmatpush2.msra.mxu0 0.0
        %5785 = vmatprep.subr.mxu0 0.0
        %5786 = vmatpush2.msra.mxu0 0.0
        %5787 = vmatprep.subr.mxu0 0.0
        %5788 = vmatpush2.msra.mxu0 0.0
        %5789 = vmatprep.subr.mxu0 0.0
        %5790 = vmatpush2.msra.mxu0 0.0
        %5791 = vmatprep.subr.mxu0 0.0
        %5792 = vmatpush2.msra.mxu0 0.0
        %5793 = vmatprep.subr.mxu0 0.0
        %5794 = vmatpush2.msra.mxu0 0.0
        %5795 = vmatprep.subr.mxu0 0.0
        %5796 = vmatpush2.msra.mxu0 0.0
        %5797 = vmatprep.subr.mxu0 0.0
        %5798 = vmatpush2.msra.mxu0 0.0
        %5799 = vmatprep.subr.mxu0 0.0
        %5800 = vmatpush2.msra.mxu0 0.0
        %5801 = vmatprep.subr.mxu0 0.0
        %5802 = vmatpush2.msra.mxu0 0.0
        %5803 = vmatprep.subr.mxu0 0.0
        %5804 = vmatpush2.msra.mxu0 0.0
        %5805 = vmatprep.subr.mxu0 0.0
        %5806 = vmatpush2.msra.mxu0 0.0
        %5807 = vmatprep.subr.mxu0 0.0
        %5808 = vmatpush2.msra.mxu0 0.0
        %5809 = vmatprep.subr.mxu0 0.0
        %5810 = vmatpush2.msra.mxu0 0.0
        %5811 = vmatprep.mubr.f32.mxu0 0.0
        %5812 = vmatmul.mubr.f32.gmra.mxu0 %v5699
        %v5813 = vpop.f32.mrf.mxu0
        %v5814 = vadd.f32 0.0, %v5813
        %v5815 = vpop.f32.mrf.mxu0
        %5816 = vmatprep.mubr.f32.mxu0 0.0
        %5817 = vmatmul.mubr.f32.gmra.mxu0 %v5700
        %v5818 = vpop.f32.mrf.mxu0
        %v5819 = vadd.f32 0.0, %v5818
        %v5820 = vpop.f32.mrf.mxu0
        %5821 = vmatprep.mubr.f32.mxu0 0.0
        %5822 = vmatmul.mubr.f32.gmra.mxu0 %v5701
        %v5823 = vpop.f32.mrf.mxu0
        %v5824 = vadd.f32 0.0, %v5823
        %v5825 = vpop.f32.mrf.mxu0
        %5826 = vmatprep.mubr.f32.mxu0 0.0
        %5827 = vmatmul.mubr.f32.gmra.mxu0 %v5702
        %v5828 = vpop.f32.mrf.mxu0
        %v5829 = vadd.f32 0.0, %v5828
        %v5830 = vpop.f32.mrf.mxu0
        %5831 = vmatprep.mubr.f32.mxu0 0.0
        %5832 = vmatmul.mubr.f32.gmra.mxu0 %v5703
        %v5833 = vpop.f32.mrf.mxu0
        %v5834 = vadd.f32 0.0, %v5833
        %v5835 = vpop.f32.mrf.mxu0
        %5836 = vmatprep.mubr.f32.mxu0 0.0
        %5837 = vmatmul.mubr.f32.gmra.mxu0 %v5704
        %v5838 = vpop.f32.mrf.mxu0
        %v5839 = vadd.f32 0.0, %v5838
        %v5840 = vpop.f32.mrf.mxu0
        %5841 = vmatprep.mubr.f32.mxu0 0.0
        %5842 = vmatmul.mubr.f32.gmra.mxu0 %v5705
        %v5843 = vpop.f32.mrf.mxu0
        %v5844 = vadd.f32 0.0, %v5843
        %v5845 = vpop.f32.mrf.mxu0
        %5846 = vmatprep.mubr.f32.mxu0 0.0
        %5847 = vmatmul.mubr.f32.gmra.mxu0 %v5706
        %v5848 = vpop.f32.mrf.mxu0
        %v5849 = vadd.f32 0.0, %v5848
        %v5850 = vpop.f32.mrf.mxu0
        %5851 = vmatprep.mubr.f32.mxu0 0.0
        %5852 = vmatmul.mubr.f32.gmra.mxu0 %v5707
        %v5853 = vpop.f32.mrf.mxu0
        %v5854 = vadd.f32 0.0, %v5853
        %v5855 = vpop.f32.mrf.mxu0
        %5856 = vmatprep.mubr.f32.mxu0 0.0
        %5857 = vmatmul.mubr.f32.gmra.mxu0 %v5708
        %v5858 = vpop.f32.mrf.mxu0
        %v5859 = vadd.f32 0.0, %v5858
        %v5860 = vpop.f32.mrf.mxu0
        %5861 = vmatprep.mubr.f32.mxu0 0.0
        %5862 = vmatmul.mubr.f32.gmra.mxu0 %v5709
        %v5863 = vpop.f32.mrf.mxu0
        %v5864 = vadd.f32 0.0, %v5863
        %v5865 = vpop.f32.mrf.mxu0
        %5866 = vmatprep.mubr.f32.mxu0 0.0
        %5867 = vmatmul.mubr.f32.gmra.mxu0 %v5710
        %v5868 = vpop.f32.mrf.mxu0
        %v5869 = vadd.f32 0.0, %v5868
        %v5870 = vpop.f32.mrf.mxu0
        %5871 = vmatprep.mubr.f32.mxu0 0.0
        %5872 = vmatmul.mubr.f32.gmra.mxu0 %v5711
        %v5873 = vpop.f32.mrf.mxu0
        %v5874 = vadd.f32 0.0, %v5873
        %v5875 = vpop.f32.mrf.mxu0
        %5876 = vmatprep.mubr.f32.mxu0 0.0
        %5877 = vmatmul.mubr.f32.gmra.mxu0 %v5712
        %v5878 = vpop.f32.mrf.mxu0
        %v5879 = vadd.f32 0.0, %v5878
        %v5880 = vpop.f32.mrf.mxu0
        %5881 = vmatprep.mubr.f32.mxu0 0.0
        %5882 = vmatmul.mubr.f32.gmra.mxu0 %v5713
        %v5883 = vpop.f32.mrf.mxu0
        %v5884 = vadd.f32 0.0, %v5883
        %v5885 = vpop.f32.mrf.mxu0
        %5886 = vmatprep.mubr.f32.mxu0 0.0
        %5887 = vmatmul.mubr.f32.gmra.mxu0 %v5714
        %v5888 = vpop.f32.mrf.mxu0
        %v5889 = vadd.f32 0.0, %v5888
        %v5890 = vpop.f32.mrf.mxu0
        %5891 = vdwg.mxu0
        %v5892 = vmax.f32 %v5814, -5.0
        %v5893 = vmax.f32 %v5819, -5.0
        %v5894 = vmax.f32 %v5824, -5.0
        %v5895 = vmax.f32 %v5829, -5.0
        %v5896 = vmax.f32 %v5834, -5.0
        %v5897 = vmax.f32 %v5839, -5.0
        %v5898 = vmax.f32 %v5844, -5.0
        %v5899 = vmax.f32 %v5849, -5.0
        %v5900 = vmax.f32 %v5854, -5.0
        %v5901 = vmax.f32 %v5859, -5.0
        %v5902 = vmax.f32 %v5864, -5.0
        %v5903 = vmax.f32 %v5869, -5.0
        %v5904 = vmax.f32 %v5874, -5.0
        %v5905 = vmax.f32 %v5879, -5.0
        %v5906 = vmax.f32 %v5884, -5.0
        %v5907 = vmax.f32 %v5889, -5.0
        %v5908 = vmin.f32 %v5892, 5.0
        %v5909 = vmin.f32 %v5893, 5.0
        %v5910 = vmin.f32 %v5894, 5.0
        %v5911 = vmin.f32 %v5895, 5.0
        %v5912 = vmin.f32 %v5896, 5.0
        %v5913 = vmin.f32 %v5897, 5.0
        %v5914 = vmin.f32 %v5898, 5.0
        %v5915 = vmin.f32 %v5899, 5.0
        %v5916 = vmin.f32 %v5900, 5.0
        %v5917 = vmin.f32 %v5901, 5.0
        %v5918 = vmin.f32 %v5902, 5.0
        %v5919 = vmin.f32 %v5903, 5.0
        %v5920 = vmin.f32 %v5904, 5.0
        %v5921 = vmin.f32 %v5905, 5.0
        %v5922 = vmin.f32 %v5906, 5.0
        %v5923 = vmin.f32 %v5907, 5.0
        %v5924 = vmul.f32 %v5908, 1.442695
        %v5925 = vpow.pop %v5924
        %v5926 = vmul.f32 %v5909, 1.442695
        %v5927 = vpow.pop %v5926
        %v5928 = vmul.f32 %v5910, 1.442695
        %v5929 = vpow.pop %v5928
        %v5930 = vmul.f32 %v5911, 1.442695
        %v5931 = vpow.pop %v5930
        %v5932 = vmul.f32 %v5912, 1.442695
        %v5933 = vpow.pop %v5932
        %v5934 = vmul.f32 %v5913, 1.442695
        %v5935 = vpow.pop %v5934
        %v5936 = vmul.f32 %v5914, 1.442695
        %v5937 = vpow.pop %v5936
        %v5938 = vmul.f32 %v5915, 1.442695
        %v5939 = vpow.pop %v5938
        %v5940 = vmul.f32 %v5916, 1.442695
        %v5941 = vpow.pop %v5940
        %v5942 = vmul.f32 %v5917, 1.442695
        %v5943 = vpow.pop %v5942
        %v5944 = vmul.f32 %v5918, 1.442695
        %v5945 = vpow.pop %v5944
        %v5946 = vmul.f32 %v5919, 1.442695
        %v5947 = vpow.pop %v5946
        %v5948 = vmul.f32 %v5920, 1.442695
        %v5949 = vpow.pop %v5948
        %v5950 = vmul.f32 %v5921, 1.442695
        %v5951 = vpow.pop %v5950
        %v5952 = vmul.f32 %v5922, 1.442695
        %v5953 = vpow.pop %v5952
        %v5954 = vmul.f32 %v5923, 1.442695
        %v5955 = vpow.pop %v5954
        %s5956 = smul.u32 %s31, 3
        %s5957 = sadd.s32 %s5956, %s32
        %s5958 = smul.u32 %s5957, 128
        %v5959 = vlaneseq
        %v5960 = vshrl.u32 %v5959, 7
        %v5961 = vadd.s32 %v5960, 8
        %v5962 = vadd.s32 %v5960, 16
        %v5963 = vadd.s32 %v5960, 24
        %v5964 = vadd.s32 %v5960, 32
        %v5965 = vadd.s32 %v5960, 40
        %v5966 = vadd.s32 %v5960, 48
        %v5967 = vadd.s32 %v5960, 56
        %v5968 = vadd.s32 %v5960, 64
        %v5969 = vadd.s32 %v5960, 72
        %v5970 = vadd.s32 %v5960, 80
        %v5971 = vadd.s32 %v5960, 88
        %v5972 = vadd.s32 %v5960, 96
        %v5973 = vadd.s32 %v5960, 104
        %v5974 = vadd.s32 %v5960, 112
        %v5975 = vadd.s32 %v5960, 120
        %v5976 = vstv %s5958
        %v5977 = vadd.s32 %v5976, %v5960
        %v5978 = vadd.s32 %v5976, %v5961
        %v5979 = vadd.s32 %v5976, %v5962
        %v5980 = vadd.s32 %v5976, %v5963
        %v5981 = vadd.s32 %v5976, %v5964
        %v5982 = vadd.s32 %v5976, %v5965
        %v5983 = vadd.s32 %v5976, %v5966
        %v5984 = vadd.s32 %v5976, %v5967
        %v5985 = vadd.s32 %v5976, %v5968
        %v5986 = vadd.s32 %v5976, %v5969
        %v5987 = vadd.s32 %v5976, %v5970
        %v5988 = vadd.s32 %v5976, %v5971
        %v5989 = vadd.s32 %v5976, %v5972
        %v5990 = vadd.s32 %v5976, %v5973
        %v5991 = vadd.s32 %v5976, %v5974
        %v5992 = vadd.s32 %v5976, %v5975
        %vm5993 = vcmp.lt.s32.totalorder %v5977, 700
        %vm5994 = vcmp.lt.s32.totalorder %v5978, 700
        %vm5995 = vcmp.lt.s32.totalorder %v5979, 700
        %vm5996 = vcmp.lt.s32.totalorder %v5980, 700
        %vm5997 = vcmp.lt.s32.totalorder %v5981, 700
        %vm5998 = vcmp.lt.s32.totalorder %v5982, 700
        %vm5999 = vcmp.lt.s32.totalorder %v5983, 700
        %vm6000 = vcmp.lt.s32.totalorder %v5984, 700
        %vm6001 = vcmp.lt.s32.totalorder %v5985, 700
        %vm6002 = vcmp.lt.s32.totalorder %v5986, 700
        %vm6003 = vcmp.lt.s32.totalorder %v5987, 700
        %vm6004 = vcmp.lt.s32.totalorder %v5988, 700
        %vm6005 = vcmp.lt.s32.totalorder %v5989, 700
        %vm6006 = vcmp.lt.s32.totalorder %v5990, 700
        %vm6007 = vcmp.lt.s32.totalorder %v5991, 700
        %vm6008 = vcmp.lt.s32.totalorder %v5992, 700
        %v6009 = vsel %vm5993, 1, 0
        %v6010 = vsel %vm5994, 1, 0
        %v6011 = vsel %vm5995, 1, 0
        %v6012 = vsel %vm5996, 1, 0
        %v6013 = vsel %vm5997, 1, 0
        %v6014 = vsel %vm5998, 1, 0
        %v6015 = vsel %vm5999, 1, 0
        %v6016 = vsel %vm6000, 1, 0
        %v6017 = vsel %vm6001, 1, 0
        %v6018 = vsel %vm6002, 1, 0
        %v6019 = vsel %vm6003, 1, 0
        %v6020 = vsel %vm6004, 1, 0
        %v6021 = vsel %vm6005, 1, 0
        %v6022 = vsel %vm6006, 1, 0
        %v6023 = vsel %vm6007, 1, 0
        %v6024 = vsel %vm6008, 1, 0
        %vm6025 = vcmp.eq.s32.totalorder %v6009, 1
        %vm6026 = vcmp.eq.s32.totalorder %v6010, 1
        %vm6027 = vcmp.eq.s32.totalorder %v6011, 1
        %vm6028 = vcmp.eq.s32.totalorder %v6012, 1
        %vm6029 = vcmp.eq.s32.totalorder %v6013, 1
        %vm6030 = vcmp.eq.s32.totalorder %v6014, 1
        %vm6031 = vcmp.eq.s32.totalorder %v6015, 1
        %vm6032 = vcmp.eq.s32.totalorder %v6016, 1
        %vm6033 = vcmp.eq.s32.totalorder %v6017, 1
        %vm6034 = vcmp.eq.s32.totalorder %v6018, 1
        %vm6035 = vcmp.eq.s32.totalorder %v6019, 1
        %vm6036 = vcmp.eq.s32.totalorder %v6020, 1
        %vm6037 = vcmp.eq.s32.totalorder %v6021, 1
        %vm6038 = vcmp.eq.s32.totalorder %v6022, 1
        %vm6039 = vcmp.eq.s32.totalorder %v6023, 1
        %vm6040 = vcmp.eq.s32.totalorder %v6024, 1
        %v6041 = vsel %vm6025, %v5925, 0.0
        %v6042 = vsel %vm6026, %v5927, 0.0
        %v6043 = vsel %vm6027, %v5929, 0.0
        %v6044 = vsel %vm6028, %v5931, 0.0
        %v6045 = vsel %vm6029, %v5933, 0.0
        %v6046 = vsel %vm6030, %v5935, 0.0
        %v6047 = vsel %vm6031, %v5937, 0.0
        %v6048 = vsel %vm6032, %v5939, 0.0
        %v6049 = vsel %vm6033, %v5941, 0.0
        %v6050 = vsel %vm6034, %v5943, 0.0
        %v6051 = vsel %vm6035, %v5945, 0.0
        %v6052 = vsel %vm6036, %v5947, 0.0
        %v6053 = vsel %vm6037, %v5949, 0.0
        %v6054 = vsel %vm6038, %v5951, 0.0
        %v6055 = vsel %vm6039, %v5953, 0.0
        %v6056 = vsel %vm6040, %v5955, 0.0
        %v6057 = vld [vmem:[%s10] sm:$0xff]
        %v6058 = vld [vmem:[%s10 + $0x8] sm:$0xff]
        %v6059 = vld [vmem:[%s10 + $0x10] sm:$0xff]
        %v6060 = vld [vmem:[%s10 + $0x18] sm:$0xff]
        %v6061 = vld [vmem:[%s10 + $0x20] sm:$0xff]
        %v6062 = vld [vmem:[%s10 + $0x28] sm:$0xff]
        %v6063 = vld [vmem:[%s10 + $0x30] sm:$0xff]
        %v6064 = vld [vmem:[%s10 + $0x38] sm:$0xff]
        %v6065 = vld [vmem:[%s10 + $0x40] sm:$0xff]
        %v6066 = vld [vmem:[%s10 + $0x48] sm:$0xff]
        %v6067 = vld [vmem:[%s10 + $0x50] sm:$0xff]
        %v6068 = vld [vmem:[%s10 + $0x58] sm:$0xff]
        %v6069 = vld [vmem:[%s10 + $0x60] sm:$0xff]
        %v6070 = vld [vmem:[%s10 + $0x68] sm:$0xff]
        %v6071 = vld [vmem:[%s10 + $0x70] sm:$0xff]
        %v6072 = vld [vmem:[%s10 + $0x78] sm:$0xff]
        %6073 = vmatprep.subr.mxu0 0.0
        %6074 = vmatpush1.msra.mxu0 %v6072
        %6075 = vmatprep.subr.mxu0 0.0
        %6076 = vmatpush1.msra.mxu0 %v6071
        %6077 = vmatprep.subr.mxu0 0.0
        %6078 = vmatpush1.msra.mxu0 %v6070
        %6079 = vmatprep.subr.mxu0 0.0
        %6080 = vmatpush1.msra.mxu0 %v6069
        %6081 = vmatprep.subr.mxu0 0.0
        %6082 = vmatpush1.msra.mxu0 %v6068
        %6083 = vmatprep.subr.mxu0 0.0
        %6084 = vmatpush1.msra.mxu0 %v6067
        %6085 = vmatprep.subr.mxu0 0.0
        %6086 = vmatpush1.msra.mxu0 %v6066
        %6087 = vmatprep.subr.mxu0 0.0
        %6088 = vmatpush1.msra.mxu0 %v6065
        %6089 = vmatprep.subr.mxu0 0.0
        %6090 = vmatpush1.msra.mxu0 %v6064
        %6091 = vmatprep.subr.mxu0 0.0
        %6092 = vmatpush1.msra.mxu0 %v6063
        %6093 = vmatprep.subr.mxu0 0.0
        %6094 = vmatpush1.msra.mxu0 %v6062
        %6095 = vmatprep.subr.mxu0 0.0
        %6096 = vmatpush1.msra.mxu0 %v6061
        %6097 = vmatprep.subr.mxu0 0.0
        %6098 = vmatpush1.msra.mxu0 %v6060
        %6099 = vmatprep.subr.mxu0 0.0
        %6100 = vmatpush1.msra.mxu0 %v6059
        %6101 = vmatprep.subr.mxu0 0.0
        %6102 = vmatpush1.msra.mxu0 %v6058
        %6103 = vmatprep.subr.mxu0 0.0
        %6104 = vmatpush1.msra.mxu0 %v6057
        %6105 = vmatprep.subr.mxu0 0.0
        %6106 = vmatpush2.msra.mxu0 0.0
        %6107 = vmatprep.subr.mxu0 0.0
        %6108 = vmatpush2.msra.mxu0 0.0
        %6109 = vmatprep.subr.mxu0 0.0
        %6110 = vmatpush2.msra.mxu0 0.0
        %6111 = vmatprep.subr.mxu0 0.0
        %6112 = vmatpush2.msra.mxu0 0.0
        %6113 = vmatprep.subr.mxu0 0.0
        %6114 = vmatpush2.msra.mxu0 0.0
        %6115 = vmatprep.subr.mxu0 0.0
        %6116 = vmatpush2.msra.mxu0 0.0
        %6117 = vmatprep.subr.mxu0 0.0
        %6118 = vmatpush2.msra.mxu0 0.0
        %6119 = vmatprep.subr.mxu0 0.0
        %6120 = vmatpush2.msra.mxu0 0.0
        %6121 = vmatprep.subr.mxu0 0.0
        %6122 = vmatpush2.msra.mxu0 0.0
        %6123 = vmatprep.subr.mxu0 0.0
        %6124 = vmatpush2.msra.mxu0 0.0
        %6125 = vmatprep.subr.mxu0 0.0
        %6126 = vmatpush2.msra.mxu0 0.0
        %6127 = vmatprep.subr.mxu0 0.0
        %6128 = vmatpush2.msra.mxu0 0.0
        %6129 = vmatprep.subr.mxu0 0.0
        %6130 = vmatpush2.msra.mxu0 0.0
        %6131 = vmatprep.subr.mxu0 0.0
        %6132 = vmatpush2.msra.mxu0 0.0
        %6133 = vmatprep.subr.mxu0 0.0
        %6134 = vmatpush2.msra.mxu0 0.0
        %6135 = vmatprep.subr.mxu0 0.0
        %6136 = vmatpush2.msra.mxu0 0.0
        %6137 = vmatprep.mubr.f32.mxu0 0.0
        %6138 = vmatmul.mubr.f32.gmra.mxu0 %v6041
        %v6139 = vpop.f32.mrf.mxu0
        %v6140 = vadd.f32 0.0, %v6139
        %v6141 = vpop.f32.mrf.mxu0
        %6142 = vmatprep.mubr.f32.mxu0 0.0
        %6143 = vmatmul.mubr.f32.gmra.mxu0 %v6042
        %v6144 = vpop.f32.mrf.mxu0
        %v6145 = vadd.f32 0.0, %v6144
        %v6146 = vpop.f32.mrf.mxu0
        %6147 = vmatprep.mubr.f32.mxu0 0.0
        %6148 = vmatmul.mubr.f32.gmra.mxu0 %v6043
        %v6149 = vpop.f32.mrf.mxu0
        %v6150 = vadd.f32 0.0, %v6149
        %v6151 = vpop.f32.mrf.mxu0
        %6152 = vmatprep.mubr.f32.mxu0 0.0
        %6153 = vmatmul.mubr.f32.gmra.mxu0 %v6044
        %v6154 = vpop.f32.mrf.mxu0
        %v6155 = vadd.f32 0.0, %v6154
        %v6156 = vpop.f32.mrf.mxu0
        %6157 = vmatprep.mubr.f32.mxu0 0.0
        %6158 = vmatmul.mubr.f32.gmra.mxu0 %v6045
        %v6159 = vpop.f32.mrf.mxu0
        %v6160 = vadd.f32 0.0, %v6159
        %v6161 = vpop.f32.mrf.mxu0
        %6162 = vmatprep.mubr.f32.mxu0 0.0
        %6163 = vmatmul.mubr.f32.gmra.mxu0 %v6046
        %v6164 = vpop.f32.mrf.mxu0
        %v6165 = vadd.f32 0.0, %v6164
        %v6166 = vpop.f32.mrf.mxu0
        %6167 = vmatprep.mubr.f32.mxu0 0.0
        %6168 = vmatmul.mubr.f32.gmra.mxu0 %v6047
        %v6169 = vpop.f32.mrf.mxu0
        %v6170 = vadd.f32 0.0, %v6169
        %v6171 = vpop.f32.mrf.mxu0
        %6172 = vmatprep.mubr.f32.mxu0 0.0
        %6173 = vmatmul.mubr.f32.gmra.mxu0 %v6048
        %v6174 = vpop.f32.mrf.mxu0
        %v6175 = vadd.f32 0.0, %v6174
        %v6176 = vpop.f32.mrf.mxu0
        %6177 = vmatprep.mubr.f32.mxu0 0.0
        %6178 = vmatmul.mubr.f32.gmra.mxu0 %v6049
        %v6179 = vpop.f32.mrf.mxu0
        %v6180 = vadd.f32 0.0, %v6179
        %v6181 = vpop.f32.mrf.mxu0
        %6182 = vmatprep.mubr.f32.mxu0 0.0
        %6183 = vmatmul.mubr.f32.gmra.mxu0 %v6050
        %v6184 = vpop.f32.mrf.mxu0
        %v6185 = vadd.f32 0.0, %v6184
        %v6186 = vpop.f32.mrf.mxu0
        %6187 = vmatprep.mubr.f32.mxu0 0.0
        %6188 = vmatmul.mubr.f32.gmra.mxu0 %v6051
        %v6189 = vpop.f32.mrf.mxu0
        %v6190 = vadd.f32 0.0, %v6189
        %v6191 = vpop.f32.mrf.mxu0
        %6192 = vmatprep.mubr.f32.mxu0 0.0
        %6193 = vmatmul.mubr.f32.gmra.mxu0 %v6052
        %v6194 = vpop.f32.mrf.mxu0
        %v6195 = vadd.f32 0.0, %v6194
        %v6196 = vpop.f32.mrf.mxu0
        %6197 = vmatprep.mubr.f32.mxu0 0.0
        %6198 = vmatmul.mubr.f32.gmra.mxu0 %v6053
        %v6199 = vpop.f32.mrf.mxu0
        %v6200 = vadd.f32 0.0, %v6199
        %v6201 = vpop.f32.mrf.mxu0
        %6202 = vmatprep.mubr.f32.mxu0 0.0
        %6203 = vmatmul.mubr.f32.gmra.mxu0 %v6054
        %v6204 = vpop.f32.mrf.mxu0
        %v6205 = vadd.f32 0.0, %v6204
        %v6206 = vpop.f32.mrf.mxu0
        %6207 = vmatprep.mubr.f32.mxu0 0.0
        %6208 = vmatmul.mubr.f32.gmra.mxu0 %v6055
        %v6209 = vpop.f32.mrf.mxu0
        %v6210 = vadd.f32 0.0, %v6209
        %v6211 = vpop.f32.mrf.mxu0
        %6212 = vmatprep.mubr.f32.mxu0 0.0
        %6213 = vmatmul.mubr.f32.gmra.mxu0 %v6056
        %v6214 = vpop.f32.mrf.mxu0
        %v6215 = vadd.f32 0.0, %v6214
        %v6216 = vpop.f32.mrf.mxu0
        %6217 = vdwg.mxu0
        %v6218 = vmul.f32 %v5605, %v6140
        %v6219 = vmul.f32 %v5608, %v6145
        %v6220 = vmul.f32 %v5613, %v6150
        %v6221 = vmul.f32 %v5616, %v6155
        %v6222 = vmul.f32 %v5621, %v6160
        %v6223 = vmul.f32 %v5624, %v6165
        %v6224 = vmul.f32 %v5629, %v6170
        %v6225 = vmul.f32 %v5632, %v6175
        %v6226 = vmul.f32 %v5637, %v6180
        %v6227 = vmul.f32 %v5640, %v6185
        %v6228 = vmul.f32 %v5645, %v6190
        %v6229 = vmul.f32 %v5648, %v6195
        %v6230 = vmul.f32 %v5653, %v6200
        %v6231 = vmul.f32 %v5656, %v6205
        %v6232 = vmul.f32 %v5661, %v6210
        %v6233 = vmul.f32 %v5664, %v6215
        %v6234 = vld [vmem:[%s572] sm:$0x1]
        %v6235 = vlaneseq
        %v6236 = vshrl.u32 %v6235, 7
        %v6237 = vsub.s32 0, %v6236
        %v6238 = vrot.slane %v6234, %v6237
        %vm6239 = vcmp.eq.s32.totalorder %v5960, %v6238
        %vm6240 = vcmp.eq.s32.totalorder %v5961, %v6238
        %vm6241 = vcmp.eq.s32.totalorder %v5962, %v6238
        %v6242 = vsel %vm6239, 1, 0
        %v6243 = vsel %vm6240, 1, 0
        %v6244 = vsel %vm6241, 1, 0
        %v6245 = vcvt.s32.f32 %v6242
        %v6246 = vcvt.s32.f32 %v6243
        %v6247 = vcvt.s32.f32 %v6244
        %v6248 = vpack.c.bf16 %v6246, %v6245
        %v6249 = vpack.c.bf16 %v6247, %v6247
        %v6250 = vpack.c.bf16 %v6219, %v6218
        %v6251 = vpack.c.bf16 %v6042, %v6041
        %v6252 = vpack.c.bf16 %v6221, %v6220
        %v6253 = vpack.c.bf16 %v6044, %v6043
        %v6254 = vpack.c.bf16 %v6223, %v6222
        %v6255 = vpack.c.bf16 %v6046, %v6045
        %v6256 = vpack.c.bf16 %v6225, %v6224
        %v6257 = vpack.c.bf16 %v6048, %v6047
        %v6258 = vpack.c.bf16 %v6227, %v6226
        %v6259 = vpack.c.bf16 %v6050, %v6049
        %v6260 = vpack.c.bf16 %v6229, %v6228
        %v6261 = vpack.c.bf16 %v6052, %v6051
        %v6262 = vpack.c.bf16 %v6231, %v6230
        %v6263 = vpack.c.bf16 %v6054, %v6053
        %v6264 = vpack.c.bf16 %v6233, %v6232
        %v6265 = vpack.c.bf16 %v6056, %v6055
        %6266 = vmatprep.subr.bf16.mxu0 %v6265
        %6267 = vmatpush1.bf16.msra.mxu0 %v6264
        %6268 = vmatprep.subr.bf16.mxu0 %v6263
        %6269 = vmatpush1.bf16.msra.mxu0 %v6262
        %6270 = vmatprep.subr.bf16.mxu0 %v6261
        %6271 = vmatpush1.bf16.msra.mxu0 %v6260
        %6272 = vmatprep.subr.bf16.mxu0 %v6259
        %6273 = vmatpush1.bf16.msra.mxu0 %v6258
        %6274 = vmatprep.subr.bf16.mxu0 %v6257
        %6275 = vmatpush1.bf16.msra.mxu0 %v6256
        %6276 = vmatprep.subr.bf16.mxu0 %v6255
        %6277 = vmatpush1.bf16.msra.mxu0 %v6254
        %6278 = vmatprep.subr.bf16.mxu0 %v6253
        %6279 = vmatpush1.bf16.msra.mxu0 %v6252
        %6280 = vmatprep.subr.bf16.mxu0 %v6251
        %6281 = vmatpush1.bf16.msra.mxu0 %v6250
        %6282 = vmatprep.subr.bf16.mxu0 0
        %6283 = vmatpush2.bf16.msra.mxu0 0
        %6284 = vmatprep.subr.bf16.mxu0 0
        %6285 = vmatpush2.bf16.msra.mxu0 0
        %6286 = vmatprep.subr.bf16.mxu0 0
        %6287 = vmatpush2.bf16.msra.mxu0 0
        %6288 = vmatprep.subr.bf16.mxu0 0
        %6289 = vmatpush2.bf16.msra.mxu0 0
        %6290 = vmatprep.subr.bf16.mxu0 0
        %6291 = vmatpush2.bf16.msra.mxu0 0
        %6292 = vmatprep.subr.bf16.mxu0 0
        %6293 = vmatpush2.bf16.msra.mxu0 0
        %6294 = vmatprep.subr.bf16.mxu0 0
        %6295 = vmatpush2.bf16.msra.mxu0 0
        %6296 = vmatprep.subr.bf16.mxu0 0
        %6297 = vmatpush2.bf16.msra.mxu0 0
        %6298 = vmatprep.mubr.bf16.mxu0 0
        %6299 = vmatmul.mubr.bf16.gmra.mxu0 %v6248
        %v6300 = vpop.f32.mrf.mxu0
        %v6301 = vadd.f32 0.0, %v6300
        %v6302 = vpop.f32.mrf.mxu0
        %v6303 = vadd.f32 0.0, %v6302
        %v6304 = vpop.f32.mrf.mxu0
        %v6305 = vadd.f32 0.0, %v6304
        %v6306 = vpop.f32.mrf.mxu0
        %v6307 = vadd.f32 0.0, %v6306
        %6308 = vmatprep.mubr.bf16.mxu0 0
        %6309 = vmatmul.mubr.bf16.gmra.mxu0 %v6249
        %v6310 = vpop.f32.mrf.mxu0
        %v6311 = vadd.f32 0.0, %v6310
        %v6312 = vpop.f32.mrf.mxu0
        %v6313 = vadd.f32 0.0, %v6312
        %v6314 = vpop.f32.mrf.mxu0
        %v6315 = vpop.f32.mrf.mxu0
        %6316 = vdwg.mxu0
        %v6317 = vld [vmem:[#allocation4] sm:$0xff]
        %v6318 = vld [vmem:[#allocation4 + $0x8] sm:$0xff]
        %v6319 = vld [vmem:[#allocation4 + $0x10] sm:$0xff]
        %v6320 = vadd.f32 %v6317, %v6301
        %v6321 = vadd.f32 %v6318, %v6305
        %v6322 = vadd.f32 %v6319, %v6311
        %6323 = vst [vmem:[#allocation4] sm:$0xff] %v6320
        %6324 = vst [vmem:[#allocation4 + $0x8] sm:$0xff] %v6321
        %6325 = vst [vmem:[#allocation4 + $0x10] sm:$0xff] %v6322
        %v6326 = vld [vmem:[#allocation6] sm:$0xff]
        %v6327 = vld [vmem:[#allocation6 + $0x8] sm:$0xff]
        %v6328 = vld [vmem:[#allocation6 + $0x10] sm:$0xff]
        %v6329 = vadd.f32 %v6326, %v6303
        %v6330 = vadd.f32 %v6327, %v6307
        %v6331 = vadd.f32 %v6328, %v6313
        %6332 = vst [vmem:[#allocation6] sm:$0xff] %v6329
        %6333 = vst [vmem:[#allocation6 + $0x8] sm:$0xff] %v6330
        %6334 = vst [vmem:[#allocation6 + $0x10] sm:$0xff] %v6331
        %s6335 = sand.u32 %s27, 1
        %s6336 = scalar_lea.sflag [#allocation5], %s6335
        %s6337 = sand.u32 %s370, 1
        %s6338 = smul.addr %s6337, 128
        %s6339 = scalar_lea.vmem [#allocation8], %s6338
        // Predicated region
        $region69: #{tpu_custom_call.1} parent=63 // pred_check
          %p6340 = pneg %p324
        $region70: #{tpu_custom_call.1} parent=63 // pred_check_branch
          %6342 = sbr.rel (%p6340) target = $region72
        $region71: #{tpu_custom_call.1} parent=63 // pred_region
          %s6344 = ssub.s32 384, 384
          %6345 = vsyncadd [#allocation5], %s6344
          %s6346 = smul.addr %s31, 3
          %s6347 = smul.addr %s6346, 128
          %s6348 = scalar_lea.hbm %s11, %s6347
          %s6349 = sshll.u32 [#allocation4], 4
          %s6350 = int_to_ptr.vmem [resolvable:$true] %s6349
          %6355 = dma.vmem_to_hbm [thread:$0]  %s6350, 384, %s6348, [#allocation5], 128, 128, 8
        $region72: #{tpu_custom_call.1} parent=63 // pred_fallthru
          _
        // Predicated region
        $region73: #{tpu_custom_call.1} parent=63 // pred_check
          %p6356 = pneg %p350
        $region74: #{tpu_custom_call.1} parent=63 // pred_check_branch
          %6358 = sbr.rel (%p6356) target = $region76
        $region75: #{tpu_custom_call.1} parent=63 // pred_region
          %s6360 = ssub.s32 384, 384
          %6361 = vsyncadd [#allocation7], %s6360
          %s6362 = smul.addr %s31, 3
          %s6363 = smul.addr %s6362, 128
          %s6364 = scalar_lea.hbm %s12, %s6363
          %s6365 = sshll.u32 [#allocation6], 4
          %s6366 = int_to_ptr.vmem [resolvable:$true] %s6365
          %6371 = dma.vmem_to_hbm [thread:$0]  %s6366, 384, %s6364, [#allocation7], 128, 128, 8
        $region76: #{tpu_custom_call.1} parent=63 // pred_fallthru
          _
        // Predicated region
        $region77: #{tpu_custom_call.1} parent=63 // pred_check
          %p6372 = pneg %p380
        $region78: #{tpu_custom_call.1} parent=63 // pred_check_branch
          %6374 = sbr.rel (%p6372) target = $region80
        $region79: #{tpu_custom_call.1} parent=63 // pred_region
          %s6375 = smul.u32 %s31, 3
          %s6376 = sadd.s32 %s6375, %s32
          %s6377 = smul.u32 16, %s6376
          %s6379 = ssub.s32 2048, 2048
          %6380 = vsyncadd %s6336, %s6379
          %s6381 = smul.addr %s6377, 128
          %s6382 = scalar_lea.hbm %s13, %s6381
          %s6383 = sshll.u32 %s6339, 4
          %s6384 = int_to_ptr.vmem [resolvable:$true] %s6383
          %6389 = dma.vmem_to_hbm [thread:$0]  %s6384, 2048, %s6382, %s6336, 128, 128, 8
        $region80: #{tpu_custom_call.1} parent=63 // pred_fallthru
          _
        // Predicated region
        $region81: #{tpu_custom_call.1} parent=63 // pred_check
          %p6390 = pneg %p324
        $region82: #{tpu_custom_call.1} parent=63 // pred_check_branch
          %6392 = sbr.rel (%p6390) target = $region84
        $region83: #{tpu_custom_call.1} parent=63 // pred_region
          %6393 = dma.done [#allocation5], 384
        $region84: #{tpu_custom_call.1} parent=63 // pred_fallthru
          _
        // Predicated region
        $region85: #{tpu_custom_call.1} parent=63 // pred_check
          %p6394 = pneg %p350
        $region86: #{tpu_custom_call.1} parent=63 // pred_check_branch
          %6396 = sbr.rel (%p6394) target = $region88
        $region87: #{tpu_custom_call.1} parent=63 // pred_region
          %6397 = dma.done [#allocation7], 384
        $region88: #{tpu_custom_call.1} parent=63 // pred_fallthru
          _
      $region64: #{tpu_custom_call.1} parent=5 // pred_fallthru
        _
      %p6398 = scmp.le.s32.totalorder 2, %s22
      // Predicated region
      $region89: #{tpu_custom_call.1} parent=5 // pred_check
        %p6399 = pneg %p6398
      $region90: #{tpu_custom_call.1} parent=5 // pred_check_branch
        %6401 = sbr.rel (%p6399) target = $region92
      $region91: #{tpu_custom_call.1} parent=5 // pred_region
        %s6402 = ssub.s32 %s22, 2
        // Predicated region
        $region93: #{tpu_custom_call.1} parent=91 // pred_check
          %p6403 = pneg %p386
        $region94: #{tpu_custom_call.1} parent=91 // pred_check_branch
          %6405 = sbr.rel (%p6403) target = $region96
        $region95: #{tpu_custom_call.1} parent=91 // pred_region
          %s6406 = sand.u32 %s28, 1
          %s6407 = scalar_lea.sflag [#allocation5], %s6406
          %s6408 = sand.u32 %s371, 1
          %s6409 = smul.addr %s6408, 128
          %s6410 = scalar_lea.vmem [#allocation8], %s6409
          %6411 = dma.done %s6407, 2048
        $region96: #{tpu_custom_call.1} parent=91 // pred_fallthru
          _
      $region92: #{tpu_custom_call.1} parent=5 // pred_fallthru
        _
    $region6: #{tpu_custom_call.1} parent=1 // loop_footer
      %s26 = sadd.s32 1, %s22
    $region7: #{tpu_custom_call.1} parent=1 // loop_footer_branch
      %21 = sbr.rel target = $region3
    $region8: #{tpu_custom_call.1} parent=1 // loop_exit
      _
    %6412 = vsyncpa [#allocation5], 1
    %s6413 = scalar_lea.sflag [#allocation5], 1
    %6414 = vsyncpa %s6413, 1
    %6415 = vsyncpa [#allocation7], 1

</llo_original>
